<compile_context>
chip_gen: v7x
topology: tpu7x:2x2x1
jax: 0.10.0
libtpu: 0.0.40
codegen_flags: <defaults>
</compile_context>

<pallas_src>
import numpy as np
import jax
import jax.numpy as jnp
from jax.experimental import pallas as pl
from jax.experimental.pallas import tpu as pltpu

BN_EPS = 1e-5
IN_CH = 3
CIN_PAD = 4                               # pad 3 -> 4 so W*Cin = 32*4 = 128 lanes
IMG = 32
CONV_COUT = [8, 8, 16, 16, 32, 32, 32, 64, 64, 64, 64, 64, 64]   # down-scaled VGG16
BLOCK_OF_LAYER = [0, 0, 1, 1, 2, 2, 2, 3, 3, 3, 4, 4, 4]
POOL_AFTER = (1, 3, 6, 9, 12)             # conv index followed by a 2x2 maxpool
H_OF_BLOCK = [32, 16, 8, 4, 2]            # spatial size seen by each conv block
FC1_OUT = 32
NUM_CLASSES = 10
N_LAYERS = 13
N_POOLS = 5


# ---------------------------------------------------------------------------
# The single fused kernel (runs once per batch tile)
# ---------------------------------------------------------------------------
def _vgg16_kernel(*refs):
    out_ref = refs[-1]
    a0_ref = refs[0]
    conv_refs = refs[1:1 + 2 * N_LAYERS]
    pool_refs = refs[1 + 2 * N_LAYERS:1 + 2 * N_LAYERS + 2 * N_POOLS]
    fc1_w_ref, fc1_b_ref, fc3_w_ref, fc3_b_ref = refs[1 + 2 * N_LAYERS + 2 * N_POOLS:-1]

    a = a0_ref[0]                                 # (bt*H0, W0*CIN_PAD) f32
    pool_idx = 0
    for i in range(N_LAYERS):
        H = H_OF_BLOCK[BLOCK_OF_LAYER[i]]
        BH, WC = a.shape                          # BH = bt*H, WC = W*Cin (static)
        mcat_ref = conv_refs[2 * i]               # (3*W*Cin, W*Cout) bf16
        e_ref = conv_refs[2 * i + 1]              # (3, W*Cout) f32: bias/scale/shift

        # --- 3x3 "same" conv as ONE deep-K matmul (row shifts off the MXU) ----
        zrow = jnp.zeros((1, WC), a.dtype)
        a_up = jnp.concatenate([zrow, a[:-1, :]], axis=0)   # row r holds a[r-1]
        a_dn = jnp.concatenate([a[1:, :], zrow], axis=0)    # row r holds a[r+1]
        if BH != H:   # >1 image per batch tile: zero rows that crossed an image
            h = jax.lax.broadcasted_iota(jnp.int32, (BH, 1), 0) % H
            a_up = jnp.where(h == 0, 0.0, a_up)
            a_dn = jnp.where(h == H - 1, 0.0, a_dn)
        a_cat = jnp.concatenate([a_up, a, a_dn], axis=-1).astype(jnp.bfloat16)
        acc = jnp.dot(a_cat, mcat_ref[...], preferred_element_type=jnp.float32)

        if i == 0:          # conv1 -> bn1 -> relu1 (BN scale folded into weights)
            a = jnp.maximum(acc + e_ref[0:1, :], 0.0)
        else:               # conv -> relu -> bn
            a = jnp.maximum(acc + e_ref[0:1, :], 0.0) * e_ref[1:2, :] + e_ref[2:3, :]

        # --- fused 2x2 max-pool ------------------------------------------------
        if i in POOL_AFTER:
            u_ref = pool_refs[2 * pool_idx]       # (bt*H/2, bt*H) bf16 even-row pick
            t_ref = pool_refs[2 * pool_idx + 1]   # (2, W*C, (W/2)*C) bf16 col pick
            WCp = a.shape[1]
            a_nxt = jnp.concatenate([a[1:, :], jnp.zeros((1, WCp), a.dtype)], axis=0)
            rmax = jnp.maximum(a, a_nxt).astype(jnp.bfloat16)   # row-pair max (VPU)
            rsel = jnp.dot(u_ref[...], rmax, preferred_element_type=jnp.float32)
            rsel = rsel.astype(jnp.bfloat16)
            c0 = jnp.dot(rsel, t_ref[0], preferred_element_type=jnp.float32)
            c1 = jnp.dot(rsel, t_ref[1], preferred_element_type=jnp.float32)
            a = jnp.maximum(c0, c1)
            pool_idx += 1

    # ---- classifier: fc1 -> relu14 -> (bn14 folded into fc3) -> fc3 -> logsoftmax
    h1 = jnp.dot(a.astype(jnp.bfloat16), fc1_w_ref[...],
                 preferred_element_type=jnp.float32) + fc1_b_ref[...]
    h1 = jnp.maximum(h1, 0.0)
    z = jnp.dot(h1.astype(jnp.bfloat16), fc3_w_ref[...],
                preferred_element_type=jnp.float32) + fc3_b_ref[...]
    m = jnp.max(z, axis=-1, keepdims=True)
    ez = jnp.exp(z - m)
    out_ref[0] = z - m - jnp.log(jnp.sum(ez, axis=-1, keepdims=True))


# ---------------------------------------------------------------------------
# Host-side construction (numpy, runs once)
# ---------------------------------------------------------------------------
def _conv_mcat(w, W):
    # w: (3, 3, cin, cout) -> (3*W*cin, W*cout); folds x offsets + zero x-padding.
    cin, cout = w.shape[2], w.shape[3]
    m = np.zeros((3, W * cin, W * cout), np.float32)
    for dyi in range(3):
        for w_in in range(W):
            for dx in (-1, 0, 1):
                w_out = w_in - dx
                if 0 <= w_out < W:
                    m[dyi,
                      w_in * cin:(w_in + 1) * cin,
                      w_out * cout:(w_out + 1) * cout] = w[dyi, dx + 1]
    return m.reshape(3 * W * cin, W * cout)


def _pool_u(bt, H):
    # 0/1 even-row selection: out[b*Ho+ho] <- in[b*H + 2*ho]
    Ho = H // 2
    u = np.zeros((bt * Ho, bt * H), np.float32)
    for b in range(bt):
        for ho in range(Ho):
            u[b * Ho + ho, b * H + 2 * ho] = 1.0
    return u


def _pool_t(W, C):
    # 0/1 column selection for width-pair pooling (two shifted selections).
    Wo = W // 2
    t = np.zeros((2, W * C, Wo * C), np.float32)
    eye = np.eye(C, dtype=np.float32)
    for j, dw in enumerate((0, 1)):
        for wo in range(Wo):
            src = (2 * wo + dw) * C
            t[j, src:src + C, wo * C:wo * C + C] = eye
    return t


def build_params(key):
    """Flat tuple of learned parameters (conv mcat/epilogues + fc)."""
    params = []
    cin = IN_CH
    for i, cout in enumerate(CONV_COUT):
        key, k1, k2, k3, k4 = jax.random.split(key, 5)
        fan_in = 9 * cin
        w = jax.random.normal(k1, (3, 3, cin, cout), jnp.float32) * (0.3 / np.sqrt(fan_in))
        bias = 0.01 * jax.random.normal(k2, (cout,), jnp.float32)
        gamma = 1.0 + 0.1 * jax.random.normal(k3, (cout,), jnp.float32)
        beta = 0.01 * jax.random.normal(k4, (cout,), jnp.float32)

        Wsp = H_OF_BLOCK[BLOCK_OF_LAYER[i]]
        w_np = np.asarray(w)
        if i == 0:                                 # pad input channels 3 -> 4
            w_pad = np.zeros((3, 3, CIN_PAD, cout), np.float32)
            w_pad[:, :, :IN_CH, :] = w_np
            w_np = w_pad
        scale = np.asarray(gamma) / np.sqrt(1.0 + BN_EPS)   # eval-mode BN stats
        shift = np.asarray(beta)
        bias_np = np.asarray(bias)

        if i == 0:   # conv1 -> bn1 -> relu1: fold BN scale into weights
            w_np = w_np * scale[None, None, None, :]
            add0 = scale * bias_np + shift
            e = np.stack([np.tile(add0, Wsp),
                          np.ones(Wsp * cout, np.float32),
                          np.zeros(Wsp * cout, np.float32)], axis=0)
        else:        # conv -> relu -> bn
            e = np.stack([np.tile(bias_np, Wsp),
                          np.tile(scale, Wsp),
                          np.tile(shift, Wsp)], axis=0)

        params.append(jnp.asarray(_conv_mcat(w_np, Wsp), jnp.bfloat16))
        params.append(jnp.asarray(e, jnp.float32))
        cin = cout

    feat = CONV_COUT[-1]
    key, k1, k2, k3, k4, k5, k6 = jax.random.split(key, 7)
    w1 = jax.random.normal(k1, (feat, FC1_OUT), jnp.float32) * (0.3 / np.sqrt(feat))
    b1 = 0.01 * jax.random.normal(k2, (FC1_OUT,), jnp.float32)
    g14 = 1.0 + 0.1 * jax.random.normal(k3, (FC1_OUT,), jnp.float32)
    be14 = 0.01 * jax.random.normal(k4, (FC1_OUT,), jnp.float32)
    w3 = jax.random.normal(k5, (FC1_OUT, NUM_CLASSES), jnp.float32) * (0.3 / np.sqrt(FC1_OUT))
    b3 = 0.01 * jax.random.normal(k6, (NUM_CLASSES,), jnp.float32)

    # Fold bn14 (eval stats) into fc3.
    s14 = np.asarray(g14) / np.sqrt(1.0 + BN_EPS)
    w3_np, b3_np = np.asarray(w3), np.asarray(b3)
    w3_f = s14[:, None] * w3_np
    b3_f = np.asarray(be14) @ w3_np + b3_np

    params.append(jnp.asarray(w1, jnp.bfloat16))
    params.append(jnp.asarray(np.asarray(b1)[None, :], jnp.float32))
    params.append(jnp.asarray(w3_f, jnp.bfloat16))
    params.append(jnp.asarray(b3_f[None, :], jnp.float32))
    return tuple(params)


# ---------------------------------------------------------------------------
# Forward pass: one pallas_call, batch-tiled parallel grid
# ---------------------------------------------------------------------------
def vgg16_forward(x_nchw, params, batch_tile=1):
    B = x_nchw.shape[0]
    assert B % batch_tile == 0
    nb = B // batch_tile

    # NCHW -> NHWC, pad channels 3 -> 4, lay out as A[b*H + h, w*C + c].
    x = jnp.transpose(x_nchw, (0, 2, 3, 1)).astype(jnp.float32)
    x = jnp.pad(x, ((0, 0), (0, 0), (0, 0), (0, CIN_PAD - IN_CH)))
    a0 = x.reshape(nb, batch_tile * IMG, IMG * CIN_PAD)

    # Structural 0/1 pooling matrices (exact in bf16), depend only on batch_tile.
    pool_mats = []
    for layer in POOL_AFTER:
        Hs = H_OF_BLOCK[BLOCK_OF_LAYER[layer]]
        C = CONV_COUT[layer]
        pool_mats.append(jnp.asarray(_pool_u(batch_tile, Hs), jnp.bfloat16))
        pool_mats.append(jnp.asarray(_pool_t(Hs, C), jnp.bfloat16))

    conv_params = params[:2 * N_LAYERS]
    fc_params = params[2 * N_LAYERS:]
    args = (a0,) + tuple(conv_params) + tuple(pool_mats) + tuple(fc_params)

    in_specs = [pl.BlockSpec((1, batch_tile * IMG, IMG * CIN_PAD), lambda b: (b, 0, 0))]
    for arr in args[1:]:
        # Weights: full-array blocks with a constant index_map -> fetched once.
        in_specs.append(pl.BlockSpec(arr.shape, lambda b, _nd=arr.ndim: (0,) * _nd))

    out = pl.pallas_call(
        _vgg16_kernel,
        grid=(nb,),
        in_specs=in_specs,
        out_specs=pl.BlockSpec((1, batch_tile, NUM_CLASSES), lambda b: (b, 0, 0)),
        out_shape=jax.ShapeDtypeStruct((nb, batch_tile, NUM_CLASSES), jnp.float32),
        compiler_params=pltpu.CompilerParams(
            dimension_semantics=("parallel",),
            vmem_limit_bytes=32 * 1024 * 1024),
    )(*args)
    return out.reshape(B, NUM_CLASSES)


if __name__ == "__main__":
    key = jax.random.PRNGKey(0)
    pkey, xkey = jax.random.split(key)
    batch = 2
    params = build_params(pkey)
    x = jax.random.normal(xkey, (batch, IN_CH, IMG, IMG), jnp.float32)  # NCHW like PyTorch

    fwd = jax.jit(vgg16_forward, static_argnames=("batch_tile",))
    out = jax.block_until_ready(fwd(x, params, batch_tile=1))

    assert out.shape == (batch, NUM_CLASSES), out.shape
    assert bool(jnp.all(jnp.isfinite(out)))
    # log-softmax rows should sum to ~1 in probability space
    assert bool(jnp.allclose(jnp.sum(jnp.exp(out), axis=-1), 1.0, atol=1e-4))
    print("KERNEL_OK")
</pallas_src>

<mosaic_0001>
module attributes {stable_mosaic.version = 11 : i64} {
  func.func @_vgg16_kernel(%arg0: i32, %arg1: memref<1x32x128xf32, #tpu.memory_space<vmem>>, %arg2: memref<384x256xbf16, #tpu.memory_space<vmem>>, %arg3: memref<3x256xf32, #tpu.memory_space<vmem>>, %arg4: memref<768x256xbf16, #tpu.memory_space<vmem>>, %arg5: memref<3x256xf32, #tpu.memory_space<vmem>>, %arg6: memref<384x256xbf16, #tpu.memory_space<vmem>>, %arg7: memref<3x256xf32, #tpu.memory_space<vmem>>, %arg8: memref<768x256xbf16, #tpu.memory_space<vmem>>, %arg9: memref<3x256xf32, #tpu.memory_space<vmem>>, %arg10: memref<384x256xbf16, #tpu.memory_space<vmem>>, %arg11: memref<3x256xf32, #tpu.memory_space<vmem>>, %arg12: memref<768x256xbf16, #tpu.memory_space<vmem>>, %arg13: memref<3x256xf32, #tpu.memory_space<vmem>>, %arg14: memref<768x256xbf16, #tpu.memory_space<vmem>>, %arg15: memref<3x256xf32, #tpu.memory_space<vmem>>, %arg16: memref<384x256xbf16, #tpu.memory_space<vmem>>, %arg17: memref<3x256xf32, #tpu.memory_space<vmem>>, %arg18: memref<768x256xbf16, #tpu.memory_space<vmem>>, %arg19: memref<3x256xf32, #tpu.memory_space<vmem>>, %arg20: memref<768x256xbf16, #tpu.memory_space<vmem>>, %arg21: memref<3x256xf32, #tpu.memory_space<vmem>>, %arg22: memref<384x128xbf16, #tpu.memory_space<vmem>>, %arg23: memref<3x128xf32, #tpu.memory_space<vmem>>, %arg24: memref<384x128xbf16, #tpu.memory_space<vmem>>, %arg25: memref<3x128xf32, #tpu.memory_space<vmem>>, %arg26: memref<384x128xbf16, #tpu.memory_space<vmem>>, %arg27: memref<3x128xf32, #tpu.memory_space<vmem>>, %arg28: memref<16x32xbf16, #tpu.memory_space<vmem>>, %arg29: memref<2x256x128xbf16, #tpu.memory_space<vmem>>, %arg30: memref<8x16xbf16, #tpu.memory_space<vmem>>, %arg31: memref<2x256x128xbf16, #tpu.memory_space<vmem>>, %arg32: memref<4x8xbf16, #tpu.memory_space<vmem>>, %arg33: memref<2x256x128xbf16, #tpu.memory_space<vmem>>, %arg34: memref<2x4xbf16, #tpu.memory_space<vmem>>, %arg35: memref<2x256x128xbf16, #tpu.memory_space<vmem>>, %arg36: memref<1x2xbf16, #tpu.memory_space<vmem>>, %arg37: memref<2x128x64xbf16, #tpu.memory_space<vmem>>, %arg38: memref<64x32xbf16, #tpu.memory_space<vmem>>, %arg39: memref<1x32xf32, #tpu.memory_space<vmem>>, %arg40: memref<32x10xbf16, #tpu.memory_space<vmem>>, %arg41: memref<1x10xf32, #tpu.memory_space<vmem>>, %arg42: memref<1x1x10xf32, #tpu.memory_space<vmem>>) attributes {dimension_semantics = [#tpu.dimension_semantics<parallel>], iteration_bounds = array<i64: 2>, scalar_prefetch = 0 : i64, scratch_operands = 0 : i64, tpu.core_type = #tpu.core_type<tc>, window_params = [{transform_indices = @transform_0, window_bounds = array<i64: 1, 32, 128>}, {pipeline_mode = #tpu.pipeline_mode<synchronous>, transform_indices = @transform_1, window_bounds = array<i64: 384, 256>}, {pipeline_mode = #tpu.pipeline_mode<synchronous>, transform_indices = @transform_2, window_bounds = array<i64: 3, 256>}, {pipeline_mode = #tpu.pipeline_mode<synchronous>, transform_indices = @transform_3, window_bounds = array<i64: 768, 256>}, {pipeline_mode = #tpu.pipeline_mode<synchronous>, transform_indices = @transform_4, window_bounds = array<i64: 3, 256>}, {pipeline_mode = #tpu.pipeline_mode<synchronous>, transform_indices = @transform_5, window_bounds = array<i64: 384, 256>}, {pipeline_mode = #tpu.pipeline_mode<synchronous>, transform_indices = @transform_6, window_bounds = array<i64: 3, 256>}, {pipeline_mode = #tpu.pipeline_mode<synchronous>, transform_indices = @transform_7, window_bounds = array<i64: 768, 256>}, {pipeline_mode = #tpu.pipeline_mode<synchronous>, transform_indices = @transform_8, window_bounds = array<i64: 3, 256>}, {pipeline_mode = #tpu.pipeline_mode<synchronous>, transform_indices = @transform_9, window_bounds = array<i64: 384, 256>}, {pipeline_mode = #tpu.pipeline_mode<synchronous>, transform_indices = @transform_10, window_bounds = array<i64: 3, 256>}, {pipeline_mode = #tpu.pipeline_mode<synchronous>, transform_indices = @transform_11, window_bounds = array<i64: 768, 256>}, {pipeline_mode = #tpu.pipeline_mode<synchronous>, transform_indices = @transform_12, window_bounds = array<i64: 3, 256>}, {pipeline_mode = #tpu.pipeline_mode<synchronous>, transform_indices = @transform_13, window_bounds = array<i64: 768, 256>}, {pipeline_mode = #tpu.pipeline_mode<synchronous>, transform_indices = @transform_14, window_bounds = array<i64: 3, 256>}, {pipeline_mode = #tpu.pipeline_mode<synchronous>, transform_indices = @transform_15, window_bounds = array<i64: 384, 256>}, {pipeline_mode = #tpu.pipeline_mode<synchronous>, transform_indices = @transform_16, window_bounds = array<i64: 3, 256>}, {pipeline_mode = #tpu.pipeline_mode<synchronous>, transform_indices = @transform_17, window_bounds = array<i64: 768, 256>}, {pipeline_mode = #tpu.pipeline_mode<synchronous>, transform_indices = @transform_18, window_bounds = array<i64: 3, 256>}, {pipeline_mode = #tpu.pipeline_mode<synchronous>, transform_indices = @transform_19, window_bounds = array<i64: 768, 256>}, {pipeline_mode = #tpu.pipeline_mode<synchronous>, transform_indices = @transform_20, window_bounds = array<i64: 3, 256>}, {pipeline_mode = #tpu.pipeline_mode<synchronous>, transform_indices = @transform_21, window_bounds = array<i64: 384, 128>}, {pipeline_mode = #tpu.pipeline_mode<synchronous>, transform_indices = @transform_22, window_bounds = array<i64: 3, 128>}, {pipeline_mode = #tpu.pipeline_mode<synchronous>, transform_indices = @transform_23, window_bounds = array<i64: 384, 128>}, {pipeline_mode = #tpu.pipeline_mode<synchronous>, transform_indices = @transform_24, window_bounds = array<i64: 3, 128>}, {pipeline_mode = #tpu.pipeline_mode<synchronous>, transform_indices = @transform_25, window_bounds = array<i64: 384, 128>}, {pipeline_mode = #tpu.pipeline_mode<synchronous>, transform_indices = @transform_26, window_bounds = array<i64: 3, 128>}, {pipeline_mode = #tpu.pipeline_mode<synchronous>, transform_indices = @transform_27, window_bounds = array<i64: 16, 32>}, {pipeline_mode = #tpu.pipeline_mode<synchronous>, transform_indices = @transform_28, window_bounds = array<i64: 2, 256, 128>}, {pipeline_mode = #tpu.pipeline_mode<synchronous>, transform_indices = @transform_29, window_bounds = array<i64: 8, 16>}, {pipeline_mode = #tpu.pipeline_mode<synchronous>, transform_indices = @transform_30, window_bounds = array<i64: 2, 256, 128>}, {pipeline_mode = #tpu.pipeline_mode<synchronous>, transform_indices = @transform_31, window_bounds = array<i64: 4, 8>}, {pipeline_mode = #tpu.pipeline_mode<synchronous>, transform_indices = @transform_32, window_bounds = array<i64: 2, 256, 128>}, {pipeline_mode = #tpu.pipeline_mode<synchronous>, transform_indices = @transform_33, window_bounds = array<i64: 2, 4>}, {pipeline_mode = #tpu.pipeline_mode<synchronous>, transform_indices = @transform_34, window_bounds = array<i64: 2, 256, 128>}, {pipeline_mode = #tpu.pipeline_mode<synchronous>, transform_indices = @transform_35, window_bounds = array<i64: 1, 2>}, {pipeline_mode = #tpu.pipeline_mode<synchronous>, transform_indices = @transform_36, window_bounds = array<i64: 2, 128, 64>}, {pipeline_mode = #tpu.pipeline_mode<synchronous>, transform_indices = @transform_37, window_bounds = array<i64: 64, 32>}, {pipeline_mode = #tpu.pipeline_mode<synchronous>, transform_indices = @transform_38, window_bounds = array<i64: 1, 32>}, {pipeline_mode = #tpu.pipeline_mode<synchronous>, transform_indices = @transform_39, window_bounds = array<i64: 32, 10>}, {pipeline_mode = #tpu.pipeline_mode<synchronous>, transform_indices = @transform_40, window_bounds = array<i64: 1, 10>}, {transform_indices = @transform_41, window_bounds = array<i64: 1, 1, 10>}]} {
    %c0 = arith.constant 0 : index
    %c0_0 = arith.constant 0 : index
    %c0_1 = arith.constant 0 : index
    %0 = vector.load %arg1[%c0, %c0_0, %c0_1] : memref<1x32x128xf32, #tpu.memory_space<vmem>>, vector<1x32x128xf32>
    %1 = vector.shape_cast %0 : vector<1x32x128xf32> to vector<32x128xf32>
    %cst = arith.constant 0.000000e+00 : f32
    %2 = vector.broadcast %cst : f32 to vector<1x128xf32>
    %3 = vector.extract_strided_slice %1 {offsets = [0, 0], sizes = [31, 128], strides = [1, 1]} : vector<32x128xf32> to vector<31x128xf32>
    %4 = tpu.concatenate %2, %3 in 0 : vector<1x128xf32>, vector<31x128xf32> -> vector<32x128xf32>
    %5 = vector.extract_strided_slice %1 {offsets = [1, 0], sizes = [31, 128], strides = [1, 1]} : vector<32x128xf32> to vector<31x128xf32>
    %6 = tpu.concatenate %5, %2 in 0 : vector<31x128xf32>, vector<1x128xf32> -> vector<32x128xf32>
    %7 = tpu.concatenate %4, %1, %6 in 1 : vector<32x128xf32>, vector<32x128xf32>, vector<32x128xf32> -> vector<32x384xf32>
    %8 = arith.truncf %7 : vector<32x384xf32> to vector<32x384xbf16>
    %c0_2 = arith.constant 0 : index
    %c0_3 = arith.constant 0 : index
    %9 = vector.load %arg2[%c0_2, %c0_3] : memref<384x256xbf16, #tpu.memory_space<vmem>>, vector<384x256xbf16>
    %cst_4 = arith.constant dense<0.000000e+00> : vector<32x256xf32>
    %10 = tpu.matmul %8, %9, %cst_4 {dimension_numbers = #tpu.dot_dimension_numbers<[1], [0], [0], [1], [0, 0, 1, 1], [], []>} : vector<32x384xbf16>, vector<384x256xbf16>, vector<32x256xf32> -> vector<32x256xf32>
    %c0_5 = arith.constant 0 : index
    %c0_6 = arith.constant 0 : index
    %11 = vector.load %arg3[%c0_5, %c0_6] : memref<3x256xf32, #tpu.memory_space<vmem>>, vector<1x256xf32>
    %12 = vector.broadcast %11 : vector<1x256xf32> to vector<32x256xf32>
    %13 = arith.addf %10, %12 : vector<32x256xf32>
    %cst_7 = arith.constant 0.000000e+00 : f32
    %14 = vector.broadcast %cst_7 : f32 to vector<32x256xf32>
    %15 = arith.maximumf %13, %14 : vector<32x256xf32>
    %cst_8 = arith.constant 0.000000e+00 : f32
    %16 = vector.broadcast %cst_8 : f32 to vector<1x256xf32>
    %17 = vector.extract_strided_slice %15 {offsets = [0, 0], sizes = [31, 256], strides = [1, 1]} : vector<32x256xf32> to vector<31x256xf32>
    %18 = tpu.concatenate %16, %17 in 0 : vector<1x256xf32>, vector<31x256xf32> -> vector<32x256xf32>
    %19 = vector.extract_strided_slice %15 {offsets = [1, 0], sizes = [31, 256], strides = [1, 1]} : vector<32x256xf32> to vector<31x256xf32>
    %20 = tpu.concatenate %19, %16 in 0 : vector<31x256xf32>, vector<1x256xf32> -> vector<32x256xf32>
    %21 = tpu.concatenate %18, %15, %20 in 1 : vector<32x256xf32>, vector<32x256xf32>, vector<32x256xf32> -> vector<32x768xf32>
    %22 = arith.truncf %21 : vector<32x768xf32> to vector<32x768xbf16>
    %c0_9 = arith.constant 0 : index
    %c0_10 = arith.constant 0 : index
    %23 = vector.load %arg4[%c0_9, %c0_10] : memref<768x256xbf16, #tpu.memory_space<vmem>>, vector<768x256xbf16>
    %cst_11 = arith.constant dense<0.000000e+00> : vector<32x256xf32>
    %24 = tpu.matmul %22, %23, %cst_11 {dimension_numbers = #tpu.dot_dimension_numbers<[1], [0], [0], [1], [0, 0, 1, 1], [], []>} : vector<32x768xbf16>, vector<768x256xbf16>, vector<32x256xf32> -> vector<32x256xf32>
    %c0_12 = arith.constant 0 : index
    %c0_13 = arith.constant 0 : index
    %25 = vector.load %arg5[%c0_12, %c0_13] : memref<3x256xf32, #tpu.memory_space<vmem>>, vector<1x256xf32>
    %26 = vector.broadcast %25 : vector<1x256xf32> to vector<32x256xf32>
    %27 = arith.addf %24, %26 : vector<32x256xf32>
    %cst_14 = arith.constant 0.000000e+00 : f32
    %28 = vector.broadcast %cst_14 : f32 to vector<32x256xf32>
    %29 = arith.maximumf %27, %28 : vector<32x256xf32>
    %c1 = arith.constant 1 : index
    %c0_15 = arith.constant 0 : index
    %30 = vector.load %arg5[%c1, %c0_15] : memref<3x256xf32, #tpu.memory_space<vmem>>, vector<1x256xf32>
    %31 = vector.broadcast %30 : vector<1x256xf32> to vector<32x256xf32>
    %32 = arith.mulf %29, %31 : vector<32x256xf32>
    %c2 = arith.constant 2 : index
    %c0_16 = arith.constant 0 : index
    %33 = vector.load %arg5[%c2, %c0_16] : memref<3x256xf32, #tpu.memory_space<vmem>>, vector<1x256xf32>
    %34 = vector.broadcast %33 : vector<1x256xf32> to vector<32x256xf32>
    %35 = arith.addf %32, %34 : vector<32x256xf32>
    %36 = vector.extract_strided_slice %35 {offsets = [1, 0], sizes = [31, 256], strides = [1, 1]} : vector<32x256xf32> to vector<31x256xf32>
    %cst_17 = arith.constant 0.000000e+00 : f32
    %37 = vector.broadcast %cst_17 : f32 to vector<1x256xf32>
    %38 = tpu.concatenate %36, %37 in 0 : vector<31x256xf32>, vector<1x256xf32> -> vector<32x256xf32>
    %39 = arith.maximumf %35, %38 : vector<32x256xf32>
    %40 = arith.truncf %39 : vector<32x256xf32> to vector<32x256xbf16>
    %c0_18 = arith.constant 0 : index
    %c0_19 = arith.constant 0 : index
    %41 = vector.load %arg28[%c0_18, %c0_19] : memref<16x32xbf16, #tpu.memory_space<vmem>>, vector<16x32xbf16>
    %cst_20 = arith.constant dense<0.000000e+00> : vector<16x256xf32>
    %42 = tpu.matmul %41, %40, %cst_20 {dimension_numbers = #tpu.dot_dimension_numbers<[1], [0], [0], [1], [0, 0, 1, 1], [], []>} : vector<16x32xbf16>, vector<32x256xbf16>, vector<16x256xf32> -> vector<16x256xf32>
    %43 = arith.truncf %42 : vector<16x256xf32> to vector<16x256xbf16>
    %c0_21 = arith.constant 0 : index
    %c0_22 = arith.constant 0 : index
    %c0_23 = arith.constant 0 : index
    %44 = vector.load %arg29[%c0_21, %c0_22, %c0_23] : memref<2x256x128xbf16, #tpu.memory_space<vmem>>, vector<1x256x128xbf16>
    %45 = vector.shape_cast %44 : vector<1x256x128xbf16> to vector<256x128xbf16>
    %cst_24 = arith.constant dense<0.000000e+00> : vector<16x128xf32>
    %46 = tpu.matmul %43, %45, %cst_24 {dimension_numbers = #tpu.dot_dimension_numbers<[1], [0], [0], [1], [0, 0, 1, 1], [], []>} : vector<16x256xbf16>, vector<256x128xbf16>, vector<16x128xf32> -> vector<16x128xf32>
    %c1_25 = arith.constant 1 : index
    %c0_26 = arith.constant 0 : index
    %c0_27 = arith.constant 0 : index
    %47 = vector.load %arg29[%c1_25, %c0_26, %c0_27] : memref<2x256x128xbf16, #tpu.memory_space<vmem>>, vector<1x256x128xbf16>
    %48 = vector.shape_cast %47 : vector<1x256x128xbf16> to vector<256x128xbf16>
    %cst_28 = arith.constant dense<0.000000e+00> : vector<16x128xf32>
    %49 = tpu.matmul %43, %48, %cst_28 {dimension_numbers = #tpu.dot_dimension_numbers<[1], [0], [0], [1], [0, 0, 1, 1], [], []>} : vector<16x256xbf16>, vector<256x128xbf16>, vector<16x128xf32> -> vector<16x128xf32>
    %50 = arith.maximumf %46, %49 : vector<16x128xf32>
    %cst_29 = arith.constant 0.000000e+00 : f32
    %51 = vector.broadcast %cst_29 : f32 to vector<1x128xf32>
    %52 = vector.extract_strided_slice %50 {offsets = [0, 0], sizes = [15, 128], strides = [1, 1]} : vector<16x128xf32> to vector<15x128xf32>
    %53 = tpu.concatenate %51, %52 in 0 : vector<1x128xf32>, vector<15x128xf32> -> vector<16x128xf32>
    %54 = vector.extract_strided_slice %50 {offsets = [1, 0], sizes = [15, 128], strides = [1, 1]} : vector<16x128xf32> to vector<15x128xf32>
    %55 = tpu.concatenate %54, %51 in 0 : vector<15x128xf32>, vector<1x128xf32> -> vector<16x128xf32>
    %56 = tpu.concatenate %53, %50, %55 in 1 : vector<16x128xf32>, vector<16x128xf32>, vector<16x128xf32> -> vector<16x384xf32>
    %57 = arith.truncf %56 : vector<16x384xf32> to vector<16x384xbf16>
    %c0_30 = arith.constant 0 : index
    %c0_31 = arith.constant 0 : index
    %58 = vector.load %arg6[%c0_30, %c0_31] : memref<384x256xbf16, #tpu.memory_space<vmem>>, vector<384x256xbf16>
    %cst_32 = arith.constant dense<0.000000e+00> : vector<16x256xf32>
    %59 = tpu.matmul %57, %58, %cst_32 {dimension_numbers = #tpu.dot_dimension_numbers<[1], [0], [0], [1], [0, 0, 1, 1], [], []>} : vector<16x384xbf16>, vector<384x256xbf16>, vector<16x256xf32> -> vector<16x256xf32>
    %c0_33 = arith.constant 0 : index
    %c0_34 = arith.constant 0 : index
    %60 = vector.load %arg7[%c0_33, %c0_34] : memref<3x256xf32, #tpu.memory_space<vmem>>, vector<1x256xf32>
    %61 = vector.broadcast %60 : vector<1x256xf32> to vector<16x256xf32>
    %62 = arith.addf %59, %61 : vector<16x256xf32>
    %cst_35 = arith.constant 0.000000e+00 : f32
    %63 = vector.broadcast %cst_35 : f32 to vector<16x256xf32>
    %64 = arith.maximumf %62, %63 : vector<16x256xf32>
    %c1_36 = arith.constant 1 : index
    %c0_37 = arith.constant 0 : index
    %65 = vector.load %arg7[%c1_36, %c0_37] : memref<3x256xf32, #tpu.memory_space<vmem>>, vector<1x256xf32>
    %66 = vector.broadcast %65 : vector<1x256xf32> to vector<16x256xf32>
    %67 = arith.mulf %64, %66 : vector<16x256xf32>
    %c2_38 = arith.constant 2 : index
    %c0_39 = arith.constant 0 : index
    %68 = vector.load %arg7[%c2_38, %c0_39] : memref<3x256xf32, #tpu.memory_space<vmem>>, vector<1x256xf32>
    %69 = vector.broadcast %68 : vector<1x256xf32> to vector<16x256xf32>
    %70 = arith.addf %67, %69 : vector<16x256xf32>
    %cst_40 = arith.constant 0.000000e+00 : f32
    %71 = vector.broadcast %cst_40 : f32 to vector<1x256xf32>
    %72 = vector.extract_strided_slice %70 {offsets = [0, 0], sizes = [15, 256], strides = [1, 1]} : vector<16x256xf32> to vector<15x256xf32>
    %73 = tpu.concatenate %71, %72 in 0 : vector<1x256xf32>, vector<15x256xf32> -> vector<16x256xf32>
    %74 = vector.extract_strided_slice %70 {offsets = [1, 0], sizes = [15, 256], strides = [1, 1]} : vector<16x256xf32> to vector<15x256xf32>
    %75 = tpu.concatenate %74, %71 in 0 : vector<15x256xf32>, vector<1x256xf32> -> vector<16x256xf32>
    %76 = tpu.concatenate %73, %70, %75 in 1 : vector<16x256xf32>, vector<16x256xf32>, vector<16x256xf32> -> vector<16x768xf32>
    %77 = arith.truncf %76 : vector<16x768xf32> to vector<16x768xbf16>
    %c0_41 = arith.constant 0 : index
    %c0_42 = arith.constant 0 : index
    %78 = vector.load %arg8[%c0_41, %c0_42] : memref<768x256xbf16, #tpu.memory_space<vmem>>, vector<768x256xbf16>
    %cst_43 = arith.constant dense<0.000000e+00> : vector<16x256xf32>
    %79 = tpu.matmul %77, %78, %cst_43 {dimension_numbers = #tpu.dot_dimension_numbers<[1], [0], [0], [1], [0, 0, 1, 1], [], []>} : vector<16x768xbf16>, vector<768x256xbf16>, vector<16x256xf32> -> vector<16x256xf32>
    %c0_44 = arith.constant 0 : index
    %c0_45 = arith.constant 0 : index
    %80 = vector.load %arg9[%c0_44, %c0_45] : memref<3x256xf32, #tpu.memory_space<vmem>>, vector<1x256xf32>
    %81 = vector.broadcast %80 : vector<1x256xf32> to vector<16x256xf32>
    %82 = arith.addf %79, %81 : vector<16x256xf32>
    %cst_46 = arith.constant 0.000000e+00 : f32
    %83 = vector.broadcast %cst_46 : f32 to vector<16x256xf32>
    %84 = arith.maximumf %82, %83 : vector<16x256xf32>
    %c1_47 = arith.constant 1 : index
    %c0_48 = arith.constant 0 : index
    %85 = vector.load %arg9[%c1_47, %c0_48] : memref<3x256xf32, #tpu.memory_space<vmem>>, vector<1x256xf32>
    %86 = vector.broadcast %85 : vector<1x256xf32> to vector<16x256xf32>
    %87 = arith.mulf %84, %86 : vector<16x256xf32>
    %c2_49 = arith.constant 2 : index
    %c0_50 = arith.constant 0 : index
    %88 = vector.load %arg9[%c2_49, %c0_50] : memref<3x256xf32, #tpu.memory_space<vmem>>, vector<1x256xf32>
    %89 = vector.broadcast %88 : vector<1x256xf32> to vector<16x256xf32>
    %90 = arith.addf %87, %89 : vector<16x256xf32>
    %91 = vector.extract_strided_slice %90 {offsets = [1, 0], sizes = [15, 256], strides = [1, 1]} : vector<16x256xf32> to vector<15x256xf32>
    %cst_51 = arith.constant 0.000000e+00 : f32
    %92 = vector.broadcast %cst_51 : f32 to vector<1x256xf32>
    %93 = tpu.concatenate %91, %92 in 0 : vector<15x256xf32>, vector<1x256xf32> -> vector<16x256xf32>
    %94 = arith.maximumf %90, %93 : vector<16x256xf32>
    %95 = arith.truncf %94 : vector<16x256xf32> to vector<16x256xbf16>
    %c0_52 = arith.constant 0 : index
    %c0_53 = arith.constant 0 : index
    %96 = vector.load %arg30[%c0_52, %c0_53] : memref<8x16xbf16, #tpu.memory_space<vmem>>, vector<8x16xbf16>
    %cst_54 = arith.constant dense<0.000000e+00> : vector<8x256xf32>
    %97 = tpu.matmul %96, %95, %cst_54 {dimension_numbers = #tpu.dot_dimension_numbers<[1], [0], [0], [1], [0, 0, 1, 1], [], []>} : vector<8x16xbf16>, vector<16x256xbf16>, vector<8x256xf32> -> vector<8x256xf32>
    %98 = arith.truncf %97 : vector<8x256xf32> to vector<8x256xbf16>
    %c0_55 = arith.constant 0 : index
    %c0_56 = arith.constant 0 : index
    %c0_57 = arith.constant 0 : index
    %99 = vector.load %arg31[%c0_55, %c0_56, %c0_57] : memref<2x256x128xbf16, #tpu.memory_space<vmem>>, vector<1x256x128xbf16>
    %100 = vector.shape_cast %99 : vector<1x256x128xbf16> to vector<256x128xbf16>
    %cst_58 = arith.constant dense<0.000000e+00> : vector<8x128xf32>
    %101 = tpu.matmul %98, %100, %cst_58 {dimension_numbers = #tpu.dot_dimension_numbers<[1], [0], [0], [1], [0, 0, 1, 1], [], []>} : vector<8x256xbf16>, vector<256x128xbf16>, vector<8x128xf32> -> vector<8x128xf32>
    %c1_59 = arith.constant 1 : index
    %c0_60 = arith.constant 0 : index
    %c0_61 = arith.constant 0 : index
    %102 = vector.load %arg31[%c1_59, %c0_60, %c0_61] : memref<2x256x128xbf16, #tpu.memory_space<vmem>>, vector<1x256x128xbf16>
    %103 = vector.shape_cast %102 : vector<1x256x128xbf16> to vector<256x128xbf16>
    %cst_62 = arith.constant dense<0.000000e+00> : vector<8x128xf32>
    %104 = tpu.matmul %98, %103, %cst_62 {dimension_numbers = #tpu.dot_dimension_numbers<[1], [0], [0], [1], [0, 0, 1, 1], [], []>} : vector<8x256xbf16>, vector<256x128xbf16>, vector<8x128xf32> -> vector<8x128xf32>
    %105 = arith.maximumf %101, %104 : vector<8x128xf32>
    %cst_63 = arith.constant 0.000000e+00 : f32
    %106 = vector.broadcast %cst_63 : f32 to vector<1x128xf32>
    %107 = vector.extract_strided_slice %105 {offsets = [0, 0], sizes = [7, 128], strides = [1, 1]} : vector<8x128xf32> to vector<7x128xf32>
    %108 = tpu.concatenate %106, %107 in 0 : vector<1x128xf32>, vector<7x128xf32> -> vector<8x128xf32>
    %109 = vector.extract_strided_slice %105 {offsets = [1, 0], sizes = [7, 128], strides = [1, 1]} : vector<8x128xf32> to vector<7x128xf32>
    %110 = tpu.concatenate %109, %106 in 0 : vector<7x128xf32>, vector<1x128xf32> -> vector<8x128xf32>
    %111 = tpu.concatenate %108, %105, %110 in 1 : vector<8x128xf32>, vector<8x128xf32>, vector<8x128xf32> -> vector<8x384xf32>
    %112 = arith.truncf %111 : vector<8x384xf32> to vector<8x384xbf16>
    %c0_64 = arith.constant 0 : index
    %c0_65 = arith.constant 0 : index
    %113 = vector.load %arg10[%c0_64, %c0_65] : memref<384x256xbf16, #tpu.memory_space<vmem>>, vector<384x256xbf16>
    %cst_66 = arith.constant dense<0.000000e+00> : vector<8x256xf32>
    %114 = tpu.matmul %112, %113, %cst_66 {dimension_numbers = #tpu.dot_dimension_numbers<[1], [0], [0], [1], [0, 0, 1, 1], [], []>} : vector<8x384xbf16>, vector<384x256xbf16>, vector<8x256xf32> -> vector<8x256xf32>
    %c0_67 = arith.constant 0 : index
    %c0_68 = arith.constant 0 : index
    %115 = vector.load %arg11[%c0_67, %c0_68] : memref<3x256xf32, #tpu.memory_space<vmem>>, vector<1x256xf32>
    %116 = vector.broadcast %115 : vector<1x256xf32> to vector<8x256xf32>
    %117 = arith.addf %114, %116 : vector<8x256xf32>
    %cst_69 = arith.constant 0.000000e+00 : f32
    %118 = vector.broadcast %cst_69 : f32 to vector<8x256xf32>
    %119 = arith.maximumf %117, %118 : vector<8x256xf32>
    %c1_70 = arith.constant 1 : index
    %c0_71 = arith.constant 0 : index
    %120 = vector.load %arg11[%c1_70, %c0_71] : memref<3x256xf32, #tpu.memory_space<vmem>>, vector<1x256xf32>
    %121 = vector.broadcast %120 : vector<1x256xf32> to vector<8x256xf32>
    %122 = arith.mulf %119, %121 : vector<8x256xf32>
    %c2_72 = arith.constant 2 : index
    %c0_73 = arith.constant 0 : index
    %123 = vector.load %arg11[%c2_72, %c0_73] : memref<3x256xf32, #tpu.memory_space<vmem>>, vector<1x256xf32>
    %124 = vector.broadcast %123 : vector<1x256xf32> to vector<8x256xf32>
    %125 = arith.addf %122, %124 : vector<8x256xf32>
    %cst_74 = arith.constant 0.000000e+00 : f32
    %126 = vector.broadcast %cst_74 : f32 to vector<1x256xf32>
    %127 = vector.extract_strided_slice %125 {offsets = [0, 0], sizes = [7, 256], strides = [1, 1]} : vector<8x256xf32> to vector<7x256xf32>
    %128 = tpu.concatenate %126, %127 in 0 : vector<1x256xf32>, vector<7x256xf32> -> vector<8x256xf32>
    %129 = vector.extract_strided_slice %125 {offsets = [1, 0], sizes = [7, 256], strides = [1, 1]} : vector<8x256xf32> to vector<7x256xf32>
    %130 = tpu.concatenate %129, %126 in 0 : vector<7x256xf32>, vector<1x256xf32> -> vector<8x256xf32>
    %131 = tpu.concatenate %128, %125, %130 in 1 : vector<8x256xf32>, vector<8x256xf32>, vector<8x256xf32> -> vector<8x768xf32>
    %132 = arith.truncf %131 : vector<8x768xf32> to vector<8x768xbf16>
    %c0_75 = arith.constant 0 : index
    %c0_76 = arith.constant 0 : index
    %133 = vector.load %arg12[%c0_75, %c0_76] : memref<768x256xbf16, #tpu.memory_space<vmem>>, vector<768x256xbf16>
    %cst_77 = arith.constant dense<0.000000e+00> : vector<8x256xf32>
    %134 = tpu.matmul %132, %133, %cst_77 {dimension_numbers = #tpu.dot_dimension_numbers<[1], [0], [0], [1], [0, 0, 1, 1], [], []>} : vector<8x768xbf16>, vector<768x256xbf16>, vector<8x256xf32> -> vector<8x256xf32>
    %c0_78 = arith.constant 0 : index
    %c0_79 = arith.constant 0 : index
    %135 = vector.load %arg13[%c0_78, %c0_79] : memref<3x256xf32, #tpu.memory_space<vmem>>, vector<1x256xf32>
    %136 = vector.broadcast %135 : vector<1x256xf32> to vector<8x256xf32>
    %137 = arith.addf %134, %136 : vector<8x256xf32>
    %cst_80 = arith.constant 0.000000e+00 : f32
    %138 = vector.broadcast %cst_80 : f32 to vector<8x256xf32>
    %139 = arith.maximumf %137, %138 : vector<8x256xf32>
    %c1_81 = arith.constant 1 : index
    %c0_82 = arith.constant 0 : index
    %140 = vector.load %arg13[%c1_81, %c0_82] : memref<3x256xf32, #tpu.memory_space<vmem>>, vector<1x256xf32>
    %141 = vector.broadcast %140 : vector<1x256xf32> to vector<8x256xf32>
    %142 = arith.mulf %139, %141 : vector<8x256xf32>
    %c2_83 = arith.constant 2 : index
    %c0_84 = arith.constant 0 : index
    %143 = vector.load %arg13[%c2_83, %c0_84] : memref<3x256xf32, #tpu.memory_space<vmem>>, vector<1x256xf32>
    %144 = vector.broadcast %143 : vector<1x256xf32> to vector<8x256xf32>
    %145 = arith.addf %142, %144 : vector<8x256xf32>
    %cst_85 = arith.constant 0.000000e+00 : f32
    %146 = vector.broadcast %cst_85 : f32 to vector<1x256xf32>
    %147 = vector.extract_strided_slice %145 {offsets = [0, 0], sizes = [7, 256], strides = [1, 1]} : vector<8x256xf32> to vector<7x256xf32>
    %148 = tpu.concatenate %146, %147 in 0 : vector<1x256xf32>, vector<7x256xf32> -> vector<8x256xf32>
    %149 = vector.extract_strided_slice %145 {offsets = [1, 0], sizes = [7, 256], strides = [1, 1]} : vector<8x256xf32> to vector<7x256xf32>
    %150 = tpu.concatenate %149, %146 in 0 : vector<7x256xf32>, vector<1x256xf32> -> vector<8x256xf32>
    %151 = tpu.concatenate %148, %145, %150 in 1 : vector<8x256xf32>, vector<8x256xf32>, vector<8x256xf32> -> vector<8x768xf32>
    %152 = arith.truncf %151 : vector<8x768xf32> to vector<8x768xbf16>
    %c0_86 = arith.constant 0 : index
    %c0_87 = arith.constant 0 : index
    %153 = vector.load %arg14[%c0_86, %c0_87] : memref<768x256xbf16, #tpu.memory_space<vmem>>, vector<768x256xbf16>
    %cst_88 = arith.constant dense<0.000000e+00> : vector<8x256xf32>
    %154 = tpu.matmul %152, %153, %cst_88 {dimension_numbers = #tpu.dot_dimension_numbers<[1], [0], [0], [1], [0, 0, 1, 1], [], []>} : vector<8x768xbf16>, vector<768x256xbf16>, vector<8x256xf32> -> vector<8x256xf32>
    %c0_89 = arith.constant 0 : index
    %c0_90 = arith.constant 0 : index
    %155 = vector.load %arg15[%c0_89, %c0_90] : memref<3x256xf32, #tpu.memory_space<vmem>>, vector<1x256xf32>
    %156 = vector.broadcast %155 : vector<1x256xf32> to vector<8x256xf32>
    %157 = arith.addf %154, %156 : vector<8x256xf32>
    %cst_91 = arith.constant 0.000000e+00 : f32
    %158 = vector.broadcast %cst_91 : f32 to vector<8x256xf32>
    %159 = arith.maximumf %157, %158 : vector<8x256xf32>
    %c1_92 = arith.constant 1 : index
    %c0_93 = arith.constant 0 : index
    %160 = vector.load %arg15[%c1_92, %c0_93] : memref<3x256xf32, #tpu.memory_space<vmem>>, vector<1x256xf32>
    %161 = vector.broadcast %160 : vector<1x256xf32> to vector<8x256xf32>
    %162 = arith.mulf %159, %161 : vector<8x256xf32>
    %c2_94 = arith.constant 2 : index
    %c0_95 = arith.constant 0 : index
    %163 = vector.load %arg15[%c2_94, %c0_95] : memref<3x256xf32, #tpu.memory_space<vmem>>, vector<1x256xf32>
    %164 = vector.broadcast %163 : vector<1x256xf32> to vector<8x256xf32>
    %165 = arith.addf %162, %164 : vector<8x256xf32>
    %166 = vector.extract_strided_slice %165 {offsets = [1, 0], sizes = [7, 256], strides = [1, 1]} : vector<8x256xf32> to vector<7x256xf32>
    %cst_96 = arith.constant 0.000000e+00 : f32
    %167 = vector.broadcast %cst_96 : f32 to vector<1x256xf32>
    %168 = tpu.concatenate %166, %167 in 0 : vector<7x256xf32>, vector<1x256xf32> -> vector<8x256xf32>
    %169 = arith.maximumf %165, %168 : vector<8x256xf32>
    %170 = arith.truncf %169 : vector<8x256xf32> to vector<8x256xbf16>
    %c0_97 = arith.constant 0 : index
    %c0_98 = arith.constant 0 : index
    %171 = vector.load %arg32[%c0_97, %c0_98] : memref<4x8xbf16, #tpu.memory_space<vmem>>, vector<4x8xbf16>
    %cst_99 = arith.constant dense<0.000000e+00> : vector<4x256xf32>
    %172 = tpu.matmul %171, %170, %cst_99 {dimension_numbers = #tpu.dot_dimension_numbers<[1], [0], [0], [1], [0, 0, 1, 1], [], []>} : vector<4x8xbf16>, vector<8x256xbf16>, vector<4x256xf32> -> vector<4x256xf32>
    %173 = arith.truncf %172 : vector<4x256xf32> to vector<4x256xbf16>
    %c0_100 = arith.constant 0 : index
    %c0_101 = arith.constant 0 : index
    %c0_102 = arith.constant 0 : index
    %174 = vector.load %arg33[%c0_100, %c0_101, %c0_102] : memref<2x256x128xbf16, #tpu.memory_space<vmem>>, vector<1x256x128xbf16>
    %175 = vector.shape_cast %174 : vector<1x256x128xbf16> to vector<256x128xbf16>
    %cst_103 = arith.constant dense<0.000000e+00> : vector<4x128xf32>
    %176 = tpu.matmul %173, %175, %cst_103 {dimension_numbers = #tpu.dot_dimension_numbers<[1], [0], [0], [1], [0, 0, 1, 1], [], []>} : vector<4x256xbf16>, vector<256x128xbf16>, vector<4x128xf32> -> vector<4x128xf32>
    %c1_104 = arith.constant 1 : index
    %c0_105 = arith.constant 0 : index
    %c0_106 = arith.constant 0 : index
    %177 = vector.load %arg33[%c1_104, %c0_105, %c0_106] : memref<2x256x128xbf16, #tpu.memory_space<vmem>>, vector<1x256x128xbf16>
    %178 = vector.shape_cast %177 : vector<1x256x128xbf16> to vector<256x128xbf16>
    %cst_107 = arith.constant dense<0.000000e+00> : vector<4x128xf32>
    %179 = tpu.matmul %173, %178, %cst_107 {dimension_numbers = #tpu.dot_dimension_numbers<[1], [0], [0], [1], [0, 0, 1, 1], [], []>} : vector<4x256xbf16>, vector<256x128xbf16>, vector<4x128xf32> -> vector<4x128xf32>
    %180 = arith.maximumf %176, %179 : vector<4x128xf32>
    %cst_108 = arith.constant 0.000000e+00 : f32
    %181 = vector.broadcast %cst_108 : f32 to vector<1x128xf32>
    %182 = vector.extract_strided_slice %180 {offsets = [0, 0], sizes = [3, 128], strides = [1, 1]} : vector<4x128xf32> to vector<3x128xf32>
    %183 = tpu.concatenate %181, %182 in 0 : vector<1x128xf32>, vector<3x128xf32> -> vector<4x128xf32>
    %184 = vector.extract_strided_slice %180 {offsets = [1, 0], sizes = [3, 128], strides = [1, 1]} : vector<4x128xf32> to vector<3x128xf32>
    %185 = tpu.concatenate %184, %181 in 0 : vector<3x128xf32>, vector<1x128xf32> -> vector<4x128xf32>
    %186 = tpu.concatenate %183, %180, %185 in 1 : vector<4x128xf32>, vector<4x128xf32>, vector<4x128xf32> -> vector<4x384xf32>
    %187 = arith.truncf %186 : vector<4x384xf32> to vector<4x384xbf16>
    %c0_109 = arith.constant 0 : index
    %c0_110 = arith.constant 0 : index
    %188 = vector.load %arg16[%c0_109, %c0_110] : memref<384x256xbf16, #tpu.memory_space<vmem>>, vector<384x256xbf16>
    %cst_111 = arith.constant dense<0.000000e+00> : vector<4x256xf32>
    %189 = tpu.matmul %187, %188, %cst_111 {dimension_numbers = #tpu.dot_dimension_numbers<[1], [0], [0], [1], [0, 0, 1, 1], [], []>} : vector<4x384xbf16>, vector<384x256xbf16>, vector<4x256xf32> -> vector<4x256xf32>
    %c0_112 = arith.constant 0 : index
    %c0_113 = arith.constant 0 : index
    %190 = vector.load %arg17[%c0_112, %c0_113] : memref<3x256xf32, #tpu.memory_space<vmem>>, vector<1x256xf32>
    %191 = vector.broadcast %190 : vector<1x256xf32> to vector<4x256xf32>
    %192 = arith.addf %189, %191 : vector<4x256xf32>
    %cst_114 = arith.constant 0.000000e+00 : f32
    %193 = vector.broadcast %cst_114 : f32 to vector<4x256xf32>
    %194 = arith.maximumf %192, %193 : vector<4x256xf32>
    %c1_115 = arith.constant 1 : index
    %c0_116 = arith.constant 0 : index
    %195 = vector.load %arg17[%c1_115, %c0_116] : memref<3x256xf32, #tpu.memory_space<vmem>>, vector<1x256xf32>
    %196 = vector.broadcast %195 : vector<1x256xf32> to vector<4x256xf32>
    %197 = arith.mulf %194, %196 : vector<4x256xf32>
    %c2_117 = arith.constant 2 : index
    %c0_118 = arith.constant 0 : index
    %198 = vector.load %arg17[%c2_117, %c0_118] : memref<3x256xf32, #tpu.memory_space<vmem>>, vector<1x256xf32>
    %199 = vector.broadcast %198 : vector<1x256xf32> to vector<4x256xf32>
    %200 = arith.addf %197, %199 : vector<4x256xf32>
    %cst_119 = arith.constant 0.000000e+00 : f32
    %201 = vector.broadcast %cst_119 : f32 to vector<1x256xf32>
    %202 = vector.extract_strided_slice %200 {offsets = [0, 0], sizes = [3, 256], strides = [1, 1]} : vector<4x256xf32> to vector<3x256xf32>
    %203 = tpu.concatenate %201, %202 in 0 : vector<1x256xf32>, vector<3x256xf32> -> vector<4x256xf32>
    %204 = vector.extract_strided_slice %200 {offsets = [1, 0], sizes = [3, 256], strides = [1, 1]} : vector<4x256xf32> to vector<3x256xf32>
    %205 = tpu.concatenate %204, %201 in 0 : vector<3x256xf32>, vector<1x256xf32> -> vector<4x256xf32>
    %206 = tpu.concatenate %203, %200, %205 in 1 : vector<4x256xf32>, vector<4x256xf32>, vector<4x256xf32> -> vector<4x768xf32>
    %207 = arith.truncf %206 : vector<4x768xf32> to vector<4x768xbf16>
    %c0_120 = arith.constant 0 : index
    %c0_121 = arith.constant 0 : index
    %208 = vector.load %arg18[%c0_120, %c0_121] : memref<768x256xbf16, #tpu.memory_space<vmem>>, vector<768x256xbf16>
    %cst_122 = arith.constant dense<0.000000e+00> : vector<4x256xf32>
    %209 = tpu.matmul %207, %208, %cst_122 {dimension_numbers = #tpu.dot_dimension_numbers<[1], [0], [0], [1], [0, 0, 1, 1], [], []>} : vector<4x768xbf16>, vector<768x256xbf16>, vector<4x256xf32> -> vector<4x256xf32>
    %c0_123 = arith.constant 0 : index
    %c0_124 = arith.constant 0 : index
    %210 = vector.load %arg19[%c0_123, %c0_124] : memref<3x256xf32, #tpu.memory_space<vmem>>, vector<1x256xf32>
    %211 = vector.broadcast %210 : vector<1x256xf32> to vector<4x256xf32>
    %212 = arith.addf %209, %211 : vector<4x256xf32>
    %cst_125 = arith.constant 0.000000e+00 : f32
    %213 = vector.broadcast %cst_125 : f32 to vector<4x256xf32>
    %214 = arith.maximumf %212, %213 : vector<4x256xf32>
    %c1_126 = arith.constant 1 : index
    %c0_127 = arith.constant 0 : index
    %215 = vector.load %arg19[%c1_126, %c0_127] : memref<3x256xf32, #tpu.memory_space<vmem>>, vector<1x256xf32>
    %216 = vector.broadcast %215 : vector<1x256xf32> to vector<4x256xf32>
    %217 = arith.mulf %214, %216 : vector<4x256xf32>
    %c2_128 = arith.constant 2 : index
    %c0_129 = arith.constant 0 : index
    %218 = vector.load %arg19[%c2_128, %c0_129] : memref<3x256xf32, #tpu.memory_space<vmem>>, vector<1x256xf32>
    %219 = vector.broadcast %218 : vector<1x256xf32> to vector<4x256xf32>
    %220 = arith.addf %217, %219 : vector<4x256xf32>
    %cst_130 = arith.constant 0.000000e+00 : f32
    %221 = vector.broadcast %cst_130 : f32 to vector<1x256xf32>
    %222 = vector.extract_strided_slice %220 {offsets = [0, 0], sizes = [3, 256], strides = [1, 1]} : vector<4x256xf32> to vector<3x256xf32>
    %223 = tpu.concatenate %221, %222 in 0 : vector<1x256xf32>, vector<3x256xf32> -> vector<4x256xf32>
    %224 = vector.extract_strided_slice %220 {offsets = [1, 0], sizes = [3, 256], strides = [1, 1]} : vector<4x256xf32> to vector<3x256xf32>
    %225 = tpu.concatenate %224, %221 in 0 : vector<3x256xf32>, vector<1x256xf32> -> vector<4x256xf32>
    %226 = tpu.concatenate %223, %220, %225 in 1 : vector<4x256xf32>, vector<4x256xf32>, vector<4x256xf32> -> vector<4x768xf32>
    %227 = arith.truncf %226 : vector<4x768xf32> to vector<4x768xbf16>
    %c0_131 = arith.constant 0 : index
    %c0_132 = arith.constant 0 : index
    %228 = vector.load %arg20[%c0_131, %c0_132] : memref<768x256xbf16, #tpu.memory_space<vmem>>, vector<768x256xbf16>
    %cst_133 = arith.constant dense<0.000000e+00> : vector<4x256xf32>
    %229 = tpu.matmul %227, %228, %cst_133 {dimension_numbers = #tpu.dot_dimension_numbers<[1], [0], [0], [1], [0, 0, 1, 1], [], []>} : vector<4x768xbf16>, vector<768x256xbf16>, vector<4x256xf32> -> vector<4x256xf32>
    %c0_134 = arith.constant 0 : index
    %c0_135 = arith.constant 0 : index
    %230 = vector.load %arg21[%c0_134, %c0_135] : memref<3x256xf32, #tpu.memory_space<vmem>>, vector<1x256xf32>
    %231 = vector.broadcast %230 : vector<1x256xf32> to vector<4x256xf32>
    %232 = arith.addf %229, %231 : vector<4x256xf32>
    %cst_136 = arith.constant 0.000000e+00 : f32
    %233 = vector.broadcast %cst_136 : f32 to vector<4x256xf32>
    %234 = arith.maximumf %232, %233 : vector<4x256xf32>
    %c1_137 = arith.constant 1 : index
    %c0_138 = arith.constant 0 : index
    %235 = vector.load %arg21[%c1_137, %c0_138] : memref<3x256xf32, #tpu.memory_space<vmem>>, vector<1x256xf32>
    %236 = vector.broadcast %235 : vector<1x256xf32> to vector<4x256xf32>
    %237 = arith.mulf %234, %236 : vector<4x256xf32>
    %c2_139 = arith.constant 2 : index
    %c0_140 = arith.constant 0 : index
    %238 = vector.load %arg21[%c2_139, %c0_140] : memref<3x256xf32, #tpu.memory_space<vmem>>, vector<1x256xf32>
    %239 = vector.broadcast %238 : vector<1x256xf32> to vector<4x256xf32>
    %240 = arith.addf %237, %239 : vector<4x256xf32>
    %241 = vector.extract_strided_slice %240 {offsets = [1, 0], sizes = [3, 256], strides = [1, 1]} : vector<4x256xf32> to vector<3x256xf32>
    %cst_141 = arith.constant 0.000000e+00 : f32
    %242 = vector.broadcast %cst_141 : f32 to vector<1x256xf32>
    %243 = tpu.concatenate %241, %242 in 0 : vector<3x256xf32>, vector<1x256xf32> -> vector<4x256xf32>
    %244 = arith.maximumf %240, %243 : vector<4x256xf32>
    %245 = arith.truncf %244 : vector<4x256xf32> to vector<4x256xbf16>
    %c0_142 = arith.constant 0 : index
    %c0_143 = arith.constant 0 : index
    %246 = vector.load %arg34[%c0_142, %c0_143] : memref<2x4xbf16, #tpu.memory_space<vmem>>, vector<2x4xbf16>
    %cst_144 = arith.constant dense<0.000000e+00> : vector<2x256xf32>
    %247 = tpu.matmul %246, %245, %cst_144 {dimension_numbers = #tpu.dot_dimension_numbers<[1], [0], [0], [1], [0, 0, 1, 1], [], []>} : vector<2x4xbf16>, vector<4x256xbf16>, vector<2x256xf32> -> vector<2x256xf32>
    %248 = arith.truncf %247 : vector<2x256xf32> to vector<2x256xbf16>
    %c0_145 = arith.constant 0 : index
    %c0_146 = arith.constant 0 : index
    %c0_147 = arith.constant 0 : index
    %249 = vector.load %arg35[%c0_145, %c0_146, %c0_147] : memref<2x256x128xbf16, #tpu.memory_space<vmem>>, vector<1x256x128xbf16>
    %250 = vector.shape_cast %249 : vector<1x256x128xbf16> to vector<256x128xbf16>
    %cst_148 = arith.constant dense<0.000000e+00> : vector<2x128xf32>
    %251 = tpu.matmul %248, %250, %cst_148 {dimension_numbers = #tpu.dot_dimension_numbers<[1], [0], [0], [1], [0, 0, 1, 1], [], []>} : vector<2x256xbf16>, vector<256x128xbf16>, vector<2x128xf32> -> vector<2x128xf32>
    %c1_149 = arith.constant 1 : index
    %c0_150 = arith.constant 0 : index
    %c0_151 = arith.constant 0 : index
    %252 = vector.load %arg35[%c1_149, %c0_150, %c0_151] : memref<2x256x128xbf16, #tpu.memory_space<vmem>>, vector<1x256x128xbf16>
    %253 = vector.shape_cast %252 : vector<1x256x128xbf16> to vector<256x128xbf16>
    %cst_152 = arith.constant dense<0.000000e+00> : vector<2x128xf32>
    %254 = tpu.matmul %248, %253, %cst_152 {dimension_numbers = #tpu.dot_dimension_numbers<[1], [0], [0], [1], [0, 0, 1, 1], [], []>} : vector<2x256xbf16>, vector<256x128xbf16>, vector<2x128xf32> -> vector<2x128xf32>
    %255 = arith.maximumf %251, %254 : vector<2x128xf32>
    %cst_153 = arith.constant 0.000000e+00 : f32
    %256 = vector.broadcast %cst_153 : f32 to vector<1x128xf32>
    %257 = vector.extract_strided_slice %255 {offsets = [0, 0], sizes = [1, 128], strides = [1, 1]} : vector<2x128xf32> to vector<1x128xf32>
    %258 = tpu.concatenate %256, %257 in 0 : vector<1x128xf32>, vector<1x128xf32> -> vector<2x128xf32>
    %259 = vector.extract_strided_slice %255 {offsets = [1, 0], sizes = [1, 128], strides = [1, 1]} : vector<2x128xf32> to vector<1x128xf32>
    %260 = tpu.concatenate %259, %256 in 0 : vector<1x128xf32>, vector<1x128xf32> -> vector<2x128xf32>
    %261 = tpu.concatenate %258, %255, %260 in 1 : vector<2x128xf32>, vector<2x128xf32>, vector<2x128xf32> -> vector<2x384xf32>
    %262 = arith.truncf %261 : vector<2x384xf32> to vector<2x384xbf16>
    %c0_154 = arith.constant 0 : index
    %c0_155 = arith.constant 0 : index
    %263 = vector.load %arg22[%c0_154, %c0_155] : memref<384x128xbf16, #tpu.memory_space<vmem>>, vector<384x128xbf16>
    %cst_156 = arith.constant dense<0.000000e+00> : vector<2x128xf32>
    %264 = tpu.matmul %262, %263, %cst_156 {dimension_numbers = #tpu.dot_dimension_numbers<[1], [0], [0], [1], [0, 0, 1, 1], [], []>} : vector<2x384xbf16>, vector<384x128xbf16>, vector<2x128xf32> -> vector<2x128xf32>
    %c0_157 = arith.constant 0 : index
    %c0_158 = arith.constant 0 : index
    %265 = vector.load %arg23[%c0_157, %c0_158] : memref<3x128xf32, #tpu.memory_space<vmem>>, vector<1x128xf32>
    %266 = vector.broadcast %265 : vector<1x128xf32> to vector<2x128xf32>
    %267 = arith.addf %264, %266 : vector<2x128xf32>
    %cst_159 = arith.constant 0.000000e+00 : f32
    %268 = vector.broadcast %cst_159 : f32 to vector<2x128xf32>
    %269 = arith.maximumf %267, %268 : vector<2x128xf32>
    %c1_160 = arith.constant 1 : index
    %c0_161 = arith.constant 0 : index
    %270 = vector.load %arg23[%c1_160, %c0_161] : memref<3x128xf32, #tpu.memory_space<vmem>>, vector<1x128xf32>
    %271 = vector.broadcast %270 : vector<1x128xf32> to vector<2x128xf32>
    %272 = arith.mulf %269, %271 : vector<2x128xf32>
    %c2_162 = arith.constant 2 : index
    %c0_163 = arith.constant 0 : index
    %273 = vector.load %arg23[%c2_162, %c0_163] : memref<3x128xf32, #tpu.memory_space<vmem>>, vector<1x128xf32>
    %274 = vector.broadcast %273 : vector<1x128xf32> to vector<2x128xf32>
    %275 = arith.addf %272, %274 : vector<2x128xf32>
    %cst_164 = arith.constant 0.000000e+00 : f32
    %276 = vector.broadcast %cst_164 : f32 to vector<1x128xf32>
    %277 = vector.extract_strided_slice %275 {offsets = [0, 0], sizes = [1, 128], strides = [1, 1]} : vector<2x128xf32> to vector<1x128xf32>
    %278 = tpu.concatenate %276, %277 in 0 : vector<1x128xf32>, vector<1x128xf32> -> vector<2x128xf32>
    %279 = vector.extract_strided_slice %275 {offsets = [1, 0], sizes = [1, 128], strides = [1, 1]} : vector<2x128xf32> to vector<1x128xf32>
    %280 = tpu.concatenate %279, %276 in 0 : vector<1x128xf32>, vector<1x128xf32> -> vector<2x128xf32>
    %281 = tpu.concatenate %278, %275, %280 in 1 : vector<2x128xf32>, vector<2x128xf32>, vector<2x128xf32> -> vector<2x384xf32>
    %282 = arith.truncf %281 : vector<2x384xf32> to vector<2x384xbf16>
    %c0_165 = arith.constant 0 : index
    %c0_166 = arith.constant 0 : index
    %283 = vector.load %arg24[%c0_165, %c0_166] : memref<384x128xbf16, #tpu.memory_space<vmem>>, vector<384x128xbf16>
    %cst_167 = arith.constant dense<0.000000e+00> : vector<2x128xf32>
    %284 = tpu.matmul %282, %283, %cst_167 {dimension_numbers = #tpu.dot_dimension_numbers<[1], [0], [0], [1], [0, 0, 1, 1], [], []>} : vector<2x384xbf16>, vector<384x128xbf16>, vector<2x128xf32> -> vector<2x128xf32>
    %c0_168 = arith.constant 0 : index
    %c0_169 = arith.constant 0 : index
    %285 = vector.load %arg25[%c0_168, %c0_169] : memref<3x128xf32, #tpu.memory_space<vmem>>, vector<1x128xf32>
    %286 = vector.broadcast %285 : vector<1x128xf32> to vector<2x128xf32>
    %287 = arith.addf %284, %286 : vector<2x128xf32>
    %cst_170 = arith.constant 0.000000e+00 : f32
    %288 = vector.broadcast %cst_170 : f32 to vector<2x128xf32>
    %289 = arith.maximumf %287, %288 : vector<2x128xf32>
    %c1_171 = arith.constant 1 : index
    %c0_172 = arith.constant 0 : index
    %290 = vector.load %arg25[%c1_171, %c0_172] : memref<3x128xf32, #tpu.memory_space<vmem>>, vector<1x128xf32>
    %291 = vector.broadcast %290 : vector<1x128xf32> to vector<2x128xf32>
    %292 = arith.mulf %289, %291 : vector<2x128xf32>
    %c2_173 = arith.constant 2 : index
    %c0_174 = arith.constant 0 : index
    %293 = vector.load %arg25[%c2_173, %c0_174] : memref<3x128xf32, #tpu.memory_space<vmem>>, vector<1x128xf32>
    %294 = vector.broadcast %293 : vector<1x128xf32> to vector<2x128xf32>
    %295 = arith.addf %292, %294 : vector<2x128xf32>
    %cst_175 = arith.constant 0.000000e+00 : f32
    %296 = vector.broadcast %cst_175 : f32 to vector<1x128xf32>
    %297 = vector.extract_strided_slice %295 {offsets = [0, 0], sizes = [1, 128], strides = [1, 1]} : vector<2x128xf32> to vector<1x128xf32>
    %298 = tpu.concatenate %296, %297 in 0 : vector<1x128xf32>, vector<1x128xf32> -> vector<2x128xf32>
    %299 = vector.extract_strided_slice %295 {offsets = [1, 0], sizes = [1, 128], strides = [1, 1]} : vector<2x128xf32> to vector<1x128xf32>
    %300 = tpu.concatenate %299, %296 in 0 : vector<1x128xf32>, vector<1x128xf32> -> vector<2x128xf32>
    %301 = tpu.concatenate %298, %295, %300 in 1 : vector<2x128xf32>, vector<2x128xf32>, vector<2x128xf32> -> vector<2x384xf32>
    %302 = arith.truncf %301 : vector<2x384xf32> to vector<2x384xbf16>
    %c0_176 = arith.constant 0 : index
    %c0_177 = arith.constant 0 : index
    %303 = vector.load %arg26[%c0_176, %c0_177] : memref<384x128xbf16, #tpu.memory_space<vmem>>, vector<384x128xbf16>
    %cst_178 = arith.constant dense<0.000000e+00> : vector<2x128xf32>
    %304 = tpu.matmul %302, %303, %cst_178 {dimension_numbers = #tpu.dot_dimension_numbers<[1], [0], [0], [1], [0, 0, 1, 1], [], []>} : vector<2x384xbf16>, vector<384x128xbf16>, vector<2x128xf32> -> vector<2x128xf32>
    %c0_179 = arith.constant 0 : index
    %c0_180 = arith.constant 0 : index
    %305 = vector.load %arg27[%c0_179, %c0_180] : memref<3x128xf32, #tpu.memory_space<vmem>>, vector<1x128xf32>
    %306 = vector.broadcast %305 : vector<1x128xf32> to vector<2x128xf32>
    %307 = arith.addf %304, %306 : vector<2x128xf32>
    %cst_181 = arith.constant 0.000000e+00 : f32
    %308 = vector.broadcast %cst_181 : f32 to vector<2x128xf32>
    %309 = arith.maximumf %307, %308 : vector<2x128xf32>
    %c1_182 = arith.constant 1 : index
    %c0_183 = arith.constant 0 : index
    %310 = vector.load %arg27[%c1_182, %c0_183] : memref<3x128xf32, #tpu.memory_space<vmem>>, vector<1x128xf32>
    %311 = vector.broadcast %310 : vector<1x128xf32> to vector<2x128xf32>
    %312 = arith.mulf %309, %311 : vector<2x128xf32>
    %c2_184 = arith.constant 2 : index
    %c0_185 = arith.constant 0 : index
    %313 = vector.load %arg27[%c2_184, %c0_185] : memref<3x128xf32, #tpu.memory_space<vmem>>, vector<1x128xf32>
    %314 = vector.broadcast %313 : vector<1x128xf32> to vector<2x128xf32>
    %315 = arith.addf %312, %314 : vector<2x128xf32>
    %316 = vector.extract_strided_slice %315 {offsets = [1, 0], sizes = [1, 128], strides = [1, 1]} : vector<2x128xf32> to vector<1x128xf32>
    %cst_186 = arith.constant 0.000000e+00 : f32
    %317 = vector.broadcast %cst_186 : f32 to vector<1x128xf32>
    %318 = tpu.concatenate %316, %317 in 0 : vector<1x128xf32>, vector<1x128xf32> -> vector<2x128xf32>
    %319 = arith.maximumf %315, %318 : vector<2x128xf32>
    %320 = arith.truncf %319 : vector<2x128xf32> to vector<2x128xbf16>
    %c0_187 = arith.constant 0 : index
    %c0_188 = arith.constant 0 : index
    %321 = vector.load %arg36[%c0_187, %c0_188] : memref<1x2xbf16, #tpu.memory_space<vmem>>, vector<1x2xbf16>
    %cst_189 = arith.constant dense<0.000000e+00> : vector<1x128xf32>
    %322 = tpu.matmul %321, %320, %cst_189 {dimension_numbers = #tpu.dot_dimension_numbers<[1], [0], [0], [1], [0, 0, 1, 1], [], []>} : vector<1x2xbf16>, vector<2x128xbf16>, vector<1x128xf32> -> vector<1x128xf32>
    %323 = arith.truncf %322 : vector<1x128xf32> to vector<1x128xbf16>
    %c0_190 = arith.constant 0 : index
    %c0_191 = arith.constant 0 : index
    %c0_192 = arith.constant 0 : index
    %324 = vector.load %arg37[%c0_190, %c0_191, %c0_192] : memref<2x128x64xbf16, #tpu.memory_space<vmem>>, vector<1x128x64xbf16>
    %325 = vector.shape_cast %324 : vector<1x128x64xbf16> to vector<128x64xbf16>
    %cst_193 = arith.constant dense<0.000000e+00> : vector<1x64xf32>
    %326 = tpu.matmul %323, %325, %cst_193 {dimension_numbers = #tpu.dot_dimension_numbers<[1], [0], [0], [1], [0, 0, 1, 1], [], []>} : vector<1x128xbf16>, vector<128x64xbf16>, vector<1x64xf32> -> vector<1x64xf32>
    %c1_194 = arith.constant 1 : index
    %c0_195 = arith.constant 0 : index
    %c0_196 = arith.constant 0 : index
    %327 = vector.load %arg37[%c1_194, %c0_195, %c0_196] : memref<2x128x64xbf16, #tpu.memory_space<vmem>>, vector<1x128x64xbf16>
    %328 = vector.shape_cast %327 : vector<1x128x64xbf16> to vector<128x64xbf16>
    %cst_197 = arith.constant dense<0.000000e+00> : vector<1x64xf32>
    %329 = tpu.matmul %323, %328, %cst_197 {dimension_numbers = #tpu.dot_dimension_numbers<[1], [0], [0], [1], [0, 0, 1, 1], [], []>} : vector<1x128xbf16>, vector<128x64xbf16>, vector<1x64xf32> -> vector<1x64xf32>
    %330 = arith.maximumf %326, %329 : vector<1x64xf32>
    %331 = arith.truncf %330 : vector<1x64xf32> to vector<1x64xbf16>
    %c0_198 = arith.constant 0 : index
    %c0_199 = arith.constant 0 : index
    %332 = vector.load %arg38[%c0_198, %c0_199] : memref<64x32xbf16, #tpu.memory_space<vmem>>, vector<64x32xbf16>
    %cst_200 = arith.constant dense<0.000000e+00> : vector<1x32xf32>
    %333 = tpu.matmul %331, %332, %cst_200 {dimension_numbers = #tpu.dot_dimension_numbers<[1], [0], [0], [1], [0, 0, 1, 1], [], []>} : vector<1x64xbf16>, vector<64x32xbf16>, vector<1x32xf32> -> vector<1x32xf32>
    %c0_201 = arith.constant 0 : index
    %c0_202 = arith.constant 0 : index
    %334 = vector.load %arg39[%c0_201, %c0_202] : memref<1x32xf32, #tpu.memory_space<vmem>>, vector<1x32xf32>
    %335 = arith.addf %333, %334 : vector<1x32xf32>
    %cst_203 = arith.constant 0.000000e+00 : f32
    %336 = vector.broadcast %cst_203 : f32 to vector<1x32xf32>
    %337 = arith.maximumf %335, %336 : vector<1x32xf32>
    %338 = arith.truncf %337 : vector<1x32xf32> to vector<1x32xbf16>
    %c0_204 = arith.constant 0 : index
    %c0_205 = arith.constant 0 : index
    %339 = vector.load %arg40[%c0_204, %c0_205] : memref<32x10xbf16, #tpu.memory_space<vmem>>, vector<32x10xbf16>
    %cst_206 = arith.constant dense<0.000000e+00> : vector<1x10xf32>
    %340 = tpu.matmul %338, %339, %cst_206 {dimension_numbers = #tpu.dot_dimension_numbers<[1], [0], [0], [1], [0, 0, 1, 1], [], []>} : vector<1x32xbf16>, vector<32x10xbf16>, vector<1x10xf32> -> vector<1x10xf32>
    %c0_207 = arith.constant 0 : index
    %c0_208 = arith.constant 0 : index
    %341 = vector.load %arg41[%c0_207, %c0_208] : memref<1x10xf32, #tpu.memory_space<vmem>>, vector<1x10xf32>
    %342 = arith.addf %340, %341 : vector<1x10xf32>
    %cst_209 = arith.constant dense<0xFF800000> : vector<1xf32>
    %343 = vector.multi_reduction <maximumf>, %342, %cst_209 [1] : vector<1x10xf32> to vector<1xf32>
    %344 = vector.shape_cast %343 : vector<1xf32> to vector<1x1xf32>
    %345 = vector.broadcast %344 : vector<1x1xf32> to vector<1x10xf32>
    %346 = arith.subf %342, %345 : vector<1x10xf32>
    %347 = math.exp %346 : vector<1x10xf32>
    %348 = vector.broadcast %344 : vector<1x1xf32> to vector<1x10xf32>
    %349 = arith.subf %342, %348 : vector<1x10xf32>
    %cst_210 = arith.constant dense<0.000000e+00> : vector<1xf32>
    %350 = vector.multi_reduction <add>, %347, %cst_210 [1] : vector<1x10xf32> to vector<1xf32>
    %351 = vector.shape_cast %350 : vector<1xf32> to vector<1x1xf32>
    %352 = math.log %351 : vector<1x1xf32>
    %353 = vector.broadcast %352 : vector<1x1xf32> to vector<1x10xf32>
    %354 = arith.subf %349, %353 : vector<1x10xf32>
    %c0_211 = arith.constant 0 : index
    %c0_212 = arith.constant 0 : index
    %c0_213 = arith.constant 0 : index
    %355 = vector.load %arg42[%c0_211, %c0_212, %c0_213] : memref<1x1x10xf32, #tpu.memory_space<vmem>>, vector<1x1x10xf32>
    %356 = vector.shape_cast %355 : vector<1x1x10xf32> to vector<1x10xf32>
    %357 = vector.shape_cast %354 : vector<1x10xf32> to vector<1x1x10xf32>
    tpu.vector_store %arg42[%c0_211, %c0_212, %c0_213], %357 {strides = array<i32>} : memref<1x1x10xf32, #tpu.memory_space<vmem>>, vector<1x1x10xf32>,
    return
  }
  func.func @transform_0(%arg0: i32) -> (i32, i32, i32) {
    %c0_i32 = arith.constant 0 : i32
    %c0_i32_0 = arith.constant 0 : i32
    %c0_i32_1 = arith.constant 0 : i32
    return %arg0, %c0_i32, %c0_i32_0 : i32, i32, i32
  }
  func.func @transform_1(%arg0: i32) -> (i32, i32) {
    %c0_i32 = arith.constant 0 : i32
    %c0_i32_0 = arith.constant 0 : i32
    %c0_i32_1 = arith.constant 0 : i32
    return %c0_i32, %c0_i32_0 : i32, i32
  }
  func.func @transform_2(%arg0: i32) -> (i32, i32) {
    %c0_i32 = arith.constant 0 : i32
    %c0_i32_0 = arith.constant 0 : i32
    %c0_i32_1 = arith.constant 0 : i32
    return %c0_i32, %c0_i32_0 : i32, i32
  }
  func.func @transform_3(%arg0: i32) -> (i32, i32) {
    %c0_i32 = arith.constant 0 : i32
    %c0_i32_0 = arith.constant 0 : i32
    %c0_i32_1 = arith.constant 0 : i32
    return %c0_i32, %c0_i32_0 : i32, i32
  }
  func.func @transform_4(%arg0: i32) -> (i32, i32) {
    %c0_i32 = arith.constant 0 : i32
    %c0_i32_0 = arith.constant 0 : i32
    %c0_i32_1 = arith.constant 0 : i32
    return %c0_i32, %c0_i32_0 : i32, i32
  }
  func.func @transform_5(%arg0: i32) -> (i32, i32) {
    %c0_i32 = arith.constant 0 : i32
    %c0_i32_0 = arith.constant 0 : i32
    %c0_i32_1 = arith.constant 0 : i32
    return %c0_i32, %c0_i32_0 : i32, i32
  }
  func.func @transform_6(%arg0: i32) -> (i32, i32) {
    %c0_i32 = arith.constant 0 : i32
    %c0_i32_0 = arith.constant 0 : i32
    %c0_i32_1 = arith.constant 0 : i32
    return %c0_i32, %c0_i32_0 : i32, i32
  }
  func.func @transform_7(%arg0: i32) -> (i32, i32) {
    %c0_i32 = arith.constant 0 : i32
    %c0_i32_0 = arith.constant 0 : i32
    %c0_i32_1 = arith.constant 0 : i32
    return %c0_i32, %c0_i32_0 : i32, i32
  }
  func.func @transform_8(%arg0: i32) -> (i32, i32) {
    %c0_i32 = arith.constant 0 : i32
    %c0_i32_0 = arith.constant 0 : i32
    %c0_i32_1 = arith.constant 0 : i32
    return %c0_i32, %c0_i32_0 : i32, i32
  }
  func.func @transform_9(%arg0: i32) -> (i32, i32) {
    %c0_i32 = arith.constant 0 : i32
    %c0_i32_0 = arith.constant 0 : i32
    %c0_i32_1 = arith.constant 0 : i32
    return %c0_i32, %c0_i32_0 : i32, i32
  }
  func.func @transform_10(%arg0: i32) -> (i32, i32) {
    %c0_i32 = arith.constant 0 : i32
    %c0_i32_0 = arith.constant 0 : i32
    %c0_i32_1 = arith.constant 0 : i32
    return %c0_i32, %c0_i32_0 : i32, i32
  }
  func.func @transform_11(%arg0: i32) -> (i32, i32) {
    %c0_i32 = arith.constant 0 : i32
    %c0_i32_0 = arith.constant 0 : i32
    %c0_i32_1 = arith.constant 0 : i32
    return %c0_i32, %c0_i32_0 : i32, i32
  }
  func.func @transform_12(%arg0: i32) -> (i32, i32) {
    %c0_i32 = arith.constant 0 : i32
    %c0_i32_0 = arith.constant 0 : i32
    %c0_i32_1 = arith.constant 0 : i32
    return %c0_i32, %c0_i32_0 : i32, i32
  }
  func.func @transform_13(%arg0: i32) -> (i32, i32) {
    %c0_i32 = arith.constant 0 : i32
    %c0_i32_0 = arith.constant 0 : i32
    %c0_i32_1 = arith.constant 0 : i32
    return %c0_i32, %c0_i32_0 : i32, i32
  }
  func.func @transform_14(%arg0: i32) -> (i32, i32) {
    %c0_i32 = arith.constant 0 : i32
    %c0_i32_0 = arith.constant 0 : i32
    %c0_i32_1 = arith.constant 0 : i32
    return %c0_i32, %c0_i32_0 : i32, i32
  }
  func.func @transform_15(%arg0: i32) -> (i32, i32) {
    %c0_i32 = arith.constant 0 : i32
    %c0_i32_0 = arith.constant 0 : i32
    %c0_i32_1 = arith.constant 0 : i32
    return %c0_i32, %c0_i32_0 : i32, i32
  }
  func.func @transform_16(%arg0: i32) -> (i32, i32) {
    %c0_i32 = arith.constant 0 : i32
    %c0_i32_0 = arith.constant 0 : i32
    %c0_i32_1 = arith.constant 0 : i32
    return %c0_i32, %c0_i32_0 : i32, i32
  }
  func.func @transform_17(%arg0: i32) -> (i32, i32) {
    %c0_i32 = arith.constant 0 : i32
    %c0_i32_0 = arith.constant 0 : i32
    %c0_i32_1 = arith.constant 0 : i32
    return %c0_i32, %c0_i32_0 : i32, i32
  }
  func.func @transform_18(%arg0: i32) -> (i32, i32) {
    %c0_i32 = arith.constant 0 : i32
    %c0_i32_0 = arith.constant 0 : i32
    %c0_i32_1 = arith.constant 0 : i32
    return %c0_i32, %c0_i32_0 : i32, i32
  }
  func.func @transform_19(%arg0: i32) -> (i32, i32) {
    %c0_i32 = arith.constant 0 : i32
    %c0_i32_0 = arith.constant 0 : i32
    %c0_i32_1 = arith.constant 0 : i32
    return %c0_i32, %c0_i32_0 : i32, i32
  }
  func.func @transform_20(%arg0: i32) -> (i32, i32) {
    %c0_i32 = arith.constant 0 : i32
    %c0_i32_0 = arith.constant 0 : i32
    %c0_i32_1 = arith.constant 0 : i32
    return %c0_i32, %c0_i32_0 : i32, i32
  }
  func.func @transform_21(%arg0: i32) -> (i32, i32) {
    %c0_i32 = arith.constant 0 : i32
    %c0_i32_0 = arith.constant 0 : i32
    %c0_i32_1 = arith.constant 0 : i32
    return %c0_i32, %c0_i32_0 : i32, i32
  }
  func.func @transform_22(%arg0: i32) -> (i32, i32) {
    %c0_i32 = arith.constant 0 : i32
    %c0_i32_0 = arith.constant 0 : i32
    %c0_i32_1 = arith.constant 0 : i32
    return %c0_i32, %c0_i32_0 : i32, i32
  }
  func.func @transform_23(%arg0: i32) -> (i32, i32) {
    %c0_i32 = arith.constant 0 : i32
    %c0_i32_0 = arith.constant 0 : i32
    %c0_i32_1 = arith.constant 0 : i32
    return %c0_i32, %c0_i32_0 : i32, i32
  }
  func.func @transform_24(%arg0: i32) -> (i32, i32) {
    %c0_i32 = arith.constant 0 : i32
    %c0_i32_0 = arith.constant 0 : i32
    %c0_i32_1 = arith.constant 0 : i32
    return %c0_i32, %c0_i32_0 : i32, i32
  }
  func.func @transform_25(%arg0: i32) -> (i32, i32) {
    %c0_i32 = arith.constant 0 : i32
    %c0_i32_0 = arith.constant 0 : i32
    %c0_i32_1 = arith.constant 0 : i32
    return %c0_i32, %c0_i32_0 : i32, i32
  }
  func.func @transform_26(%arg0: i32) -> (i32, i32) {
    %c0_i32 = arith.constant 0 : i32
    %c0_i32_0 = arith.constant 0 : i32
    %c0_i32_1 = arith.constant 0 : i32
    return %c0_i32, %c0_i32_0 : i32, i32
  }
  func.func @transform_27(%arg0: i32) -> (i32, i32) {
    %c0_i32 = arith.constant 0 : i32
    %c0_i32_0 = arith.constant 0 : i32
    %c0_i32_1 = arith.constant 0 : i32
    return %c0_i32, %c0_i32_0 : i32, i32
  }
  func.func @transform_28(%arg0: i32) -> (i32, i32, i32) {
    %c0_i32 = arith.constant 0 : i32
    %c0_i32_0 = arith.constant 0 : i32
    %c0_i32_1 = arith.constant 0 : i32
    %c0_i32_2 = arith.constant 0 : i32
    return %c0_i32, %c0_i32_0, %c0_i32_1 : i32, i32, i32
  }
  func.func @transform_29(%arg0: i32) -> (i32, i32) {
    %c0_i32 = arith.constant 0 : i32
    %c0_i32_0 = arith.constant 0 : i32
    %c0_i32_1 = arith.constant 0 : i32
    return %c0_i32, %c0_i32_0 : i32, i32
  }
  func.func @transform_30(%arg0: i32) -> (i32, i32, i32) {
    %c0_i32 = arith.constant 0 : i32
    %c0_i32_0 = arith.constant 0 : i32
    %c0_i32_1 = arith.constant 0 : i32
    %c0_i32_2 = arith.constant 0 : i32
    return %c0_i32, %c0_i32_0, %c0_i32_1 : i32, i32, i32
  }
  func.func @transform_31(%arg0: i32) -> (i32, i32) {
    %c0_i32 = arith.constant 0 : i32
    %c0_i32_0 = arith.constant 0 : i32
    %c0_i32_1 = arith.constant 0 : i32
    return %c0_i32, %c0_i32_0 : i32, i32
  }
  func.func @transform_32(%arg0: i32) -> (i32, i32, i32) {
    %c0_i32 = arith.constant 0 : i32
    %c0_i32_0 = arith.constant 0 : i32
    %c0_i32_1 = arith.constant 0 : i32
    %c0_i32_2 = arith.constant 0 : i32
    return %c0_i32, %c0_i32_0, %c0_i32_1 : i32, i32, i32
  }
  func.func @transform_33(%arg0: i32) -> (i32, i32) {
    %c0_i32 = arith.constant 0 : i32
    %c0_i32_0 = arith.constant 0 : i32
    %c0_i32_1 = arith.constant 0 : i32
    return %c0_i32, %c0_i32_0 : i32, i32
  }
  func.func @transform_34(%arg0: i32) -> (i32, i32, i32) {
    %c0_i32 = arith.constant 0 : i32
    %c0_i32_0 = arith.constant 0 : i32
    %c0_i32_1 = arith.constant 0 : i32
    %c0_i32_2 = arith.constant 0 : i32
    return %c0_i32, %c0_i32_0, %c0_i32_1 : i32, i32, i32
  }
  func.func @transform_35(%arg0: i32) -> (i32, i32) {
    %c0_i32 = arith.constant 0 : i32
    %c0_i32_0 = arith.constant 0 : i32
    %c0_i32_1 = arith.constant 0 : i32
    return %c0_i32, %c0_i32_0 : i32, i32
  }
  func.func @transform_36(%arg0: i32) -> (i32, i32, i32) {
    %c0_i32 = arith.constant 0 : i32
    %c0_i32_0 = arith.constant 0 : i32
    %c0_i32_1 = arith.constant 0 : i32
    %c0_i32_2 = arith.constant 0 : i32
    return %c0_i32, %c0_i32_0, %c0_i32_1 : i32, i32, i32
  }
  func.func @transform_37(%arg0: i32) -> (i32, i32) {
    %c0_i32 = arith.constant 0 : i32
    %c0_i32_0 = arith.constant 0 : i32
    %c0_i32_1 = arith.constant 0 : i32
    return %c0_i32, %c0_i32_0 : i32, i32
  }
  func.func @transform_38(%arg0: i32) -> (i32, i32) {
    %c0_i32 = arith.constant 0 : i32
    %c0_i32_0 = arith.constant 0 : i32
    %c0_i32_1 = arith.constant 0 : i32
    return %c0_i32, %c0_i32_0 : i32, i32
  }
  func.func @transform_39(%arg0: i32) -> (i32, i32) {
    %c0_i32 = arith.constant 0 : i32
    %c0_i32_0 = arith.constant 0 : i32
    %c0_i32_1 = arith.constant 0 : i32
    return %c0_i32, %c0_i32_0 : i32, i32
  }
  func.func @transform_40(%arg0: i32) -> (i32, i32) {
    %c0_i32 = arith.constant 0 : i32
    %c0_i32_0 = arith.constant 0 : i32
    %c0_i32_1 = arith.constant 0 : i32
    return %c0_i32, %c0_i32_0 : i32, i32
  }
  func.func @transform_41(%arg0: i32) -> (i32, i32, i32) {
    %c0_i32 = arith.constant 0 : i32
    %c0_i32_0 = arith.constant 0 : i32
    %c0_i32_1 = arith.constant 0 : i32
    return %arg0, %c0_i32, %c0_i32_0 : i32, i32, i32
  }
}

</mosaic_0001>

<llo_original>
// kernel: vgg16_forward.1
$region0: #{vgg16_forward.1}
  #allocation0 [shape = 'u32[]', space=smem, size = 0x4, offset = 0x4, fixed_abs, tag = 'smem constant byte address 0x4 - core index']
  #allocation1 [shape = 'u32[144,128]{1,0:T(1,128)}', space=vmem, size = 0x12000, scoped, tag = 'internal scratch']
  %s0 = inlined_call_operand.smem [shape: u32[42], index: -1, kind: input, shape index: {}]
  %s1 = sld [smem:[%s0]]
  %s2 = scalar_lea.smem %s0, 1
  %s3 = sld [smem:[%s2]]
  %s4 = scalar_lea.smem %s0, 2
  %s5 = sld [smem:[%s4]]
  %s6 = scalar_lea.smem %s0, 3
  %s7 = sld [smem:[%s6]]
  %s8 = scalar_lea.smem %s0, 4
  %s9 = sld [smem:[%s8]]
  %s10 = scalar_lea.smem %s0, 5
  %s11 = sld [smem:[%s10]]
  %s12 = scalar_lea.smem %s0, 6
  %s13 = sld [smem:[%s12]]
  %s14 = scalar_lea.smem %s0, 7
  %s15 = sld [smem:[%s14]]
  %s16 = scalar_lea.smem %s0, 8
  %s17 = sld [smem:[%s16]]
  %s18 = scalar_lea.smem %s0, 9
  %s19 = sld [smem:[%s18]]
  %s20 = scalar_lea.smem %s0, 10
  %s21 = sld [smem:[%s20]]
  %s22 = scalar_lea.smem %s0, 11
  %s23 = sld [smem:[%s22]]
  %s24 = scalar_lea.smem %s0, 12
  %s25 = sld [smem:[%s24]]
  %s26 = scalar_lea.smem %s0, 13
  %s27 = sld [smem:[%s26]]
  %s28 = scalar_lea.smem %s0, 14
  %s29 = sld [smem:[%s28]]
  %s30 = scalar_lea.smem %s0, 15
  %s31 = sld [smem:[%s30]]
  %s32 = scalar_lea.smem %s0, 16
  %s33 = sld [smem:[%s32]]
  %s34 = scalar_lea.smem %s0, 17
  %s35 = sld [smem:[%s34]]
  %s36 = scalar_lea.smem %s0, 18
  %s37 = sld [smem:[%s36]]
  %s38 = scalar_lea.smem %s0, 19
  %s39 = sld [smem:[%s38]]
  %s40 = scalar_lea.smem %s0, 20
  %s41 = sld [smem:[%s40]]
  %s42 = scalar_lea.smem %s0, 21
  %s43 = sld [smem:[%s42]]
  %s44 = scalar_lea.smem %s0, 22
  %s45 = sld [smem:[%s44]]
  %s46 = scalar_lea.smem %s0, 23
  %s47 = sld [smem:[%s46]]
  %s48 = scalar_lea.smem %s0, 24
  %s49 = sld [smem:[%s48]]
  %s50 = scalar_lea.smem %s0, 25
  %s51 = sld [smem:[%s50]]
  %s52 = scalar_lea.smem %s0, 26
  %s53 = sld [smem:[%s52]]
  %s54 = scalar_lea.smem %s0, 27
  %s55 = sld [smem:[%s54]]
  %s56 = scalar_lea.smem %s0, 28
  %s57 = sld [smem:[%s56]]
  %s58 = scalar_lea.smem %s0, 29
  %s59 = sld [smem:[%s58]]
  %s60 = scalar_lea.smem %s0, 30
  %s61 = sld [smem:[%s60]]
  %s62 = scalar_lea.smem %s0, 31
  %s63 = sld [smem:[%s62]]
  %s64 = scalar_lea.smem %s0, 32
  %s65 = sld [smem:[%s64]]
  %s66 = scalar_lea.smem %s0, 33
  %s67 = sld [smem:[%s66]]
  %s68 = scalar_lea.smem %s0, 34
  %s69 = sld [smem:[%s68]]
  %s70 = scalar_lea.smem %s0, 35
  %s71 = sld [smem:[%s70]]
  %s72 = scalar_lea.smem %s0, 36
  %s73 = sld [smem:[%s72]]
  %s74 = scalar_lea.smem %s0, 37
  %s75 = sld [smem:[%s74]]
  %s76 = scalar_lea.smem %s0, 38
  %s77 = sld [smem:[%s76]]
  %s78 = scalar_lea.smem %s0, 39
  %s79 = sld [smem:[%s78]]
  %s80 = scalar_lea.smem %s0, 40
  %s81 = sld [smem:[%s80]]
  %s82 = scalar_lea.smem %s0, 41
  %s83 = sld [smem:[%s82]]
  %s84 = sld [smem:[#allocation0]]
  $region305: #{vgg16_forward.1} parent=0
    _
  %s86 = ssub.s32 1, %s84
  %s87 = scalar_select 0, %s86, %s84
  $region1: #{vgg16_forward.1} parent=0
    #allocation2 [shape = 'u8[4096]{0}', space=vmem, size = 0x1000, scoped, tag = 'input window, operand 4, single buffered']
    #allocation3 [shape = 's32[2]{0}', space=sflag, size = 0x8, scoped, tag = 'scoped memory for vgg16_forward.1']
    #allocation4 [shape = 's32[2]{0}', space=sflag, size = 0x8, scoped, tag = 'scoped memory for vgg16_forward.1']
    #allocation5 [shape = 'u8[196608]{0}', space=vmem, size = 0x30000, scoped, tag = 'input window, operand 5, single buffered']
    #allocation6 [shape = 's32[1]{0}', space=sflag, size = 0x4, scoped, tag = 'scoped memory for vgg16_forward.1']
    #allocation7 [shape = 'u8[4096]{0}', space=vmem, size = 0x1000, scoped, tag = 'input window, operand 6, single buffered']
    #allocation8 [shape = 'u8[393216]{0}', space=vmem, size = 0x60000, scoped, tag = 'input window, operand 7, single buffered']
    #allocation9 [shape = 's32[1]{0}', space=sflag, size = 0x4, scoped, tag = 'scoped memory for vgg16_forward.1']
    #allocation10 [shape = 'u8[4096]{0}', space=vmem, size = 0x1000, scoped, tag = 'input window, operand 8, single buffered']
    #allocation11 [shape = 'u8[196608]{0}', space=vmem, size = 0x30000, scoped, tag = 'input window, operand 9, single buffered']
    #allocation12 [shape = 's32[1]{0}', space=sflag, size = 0x4, scoped, tag = 'scoped memory for vgg16_forward.1']
    #allocation13 [shape = 'u8[4096]{0}', space=vmem, size = 0x1000, scoped, tag = 'input window, operand 10, single buffered']
    #allocation14 [shape = 'u8[393216]{0}', space=vmem, size = 0x60000, scoped, tag = 'input window, operand 11, single buffered']
    #allocation15 [shape = 's32[1]{0}', space=sflag, size = 0x4, scoped, tag = 'scoped memory for vgg16_forward.1']
    #allocation16 [shape = 'u8[393216]{0}', space=vmem, size = 0x60000, scoped, tag = 'input window, operand 13, single buffered']
    #allocation17 [shape = 'u8[196608]{0}', space=vmem, size = 0x30000, scoped, tag = 'input window, operand 15, single buffered']
    #allocation18 [shape = 's32[1]{0}', space=sflag, size = 0x4, scoped, tag = 'scoped memory for vgg16_forward.1']
    #allocation19 [shape = 'u8[4096]{0}', space=vmem, size = 0x1000, scoped, tag = 'input window, operand 16, single buffered']
    #allocation20 [shape = 'u8[393216]{0}', space=vmem, size = 0x60000, scoped, tag = 'input window, operand 17, single buffered']
    #allocation21 [shape = 's32[1]{0}', space=sflag, size = 0x4, scoped, tag = 'scoped memory for vgg16_forward.1']
    #allocation22 [shape = 'u8[4096]{0}', space=vmem, size = 0x1000, scoped, tag = 'input window, operand 18, single buffered']
    #allocation23 [shape = 'u8[393216]{0}', space=vmem, size = 0x60000, scoped, tag = 'input window, operand 19, single buffered']
    #allocation24 [shape = 's32[1]{0}', space=sflag, size = 0x4, scoped, tag = 'scoped memory for vgg16_forward.1']
    #allocation25 [shape = 'u8[4096]{0}', space=vmem, size = 0x1000, scoped, tag = 'input window, operand 20, single buffered']
    #allocation26 [shape = 'u8[98304]{0}', space=vmem, size = 0x18000, scoped, tag = 'input window, operand 21, single buffered']
    #allocation27 [shape = 's32[1]{0}', space=sflag, size = 0x4, scoped, tag = 'scoped memory for vgg16_forward.1']
    #allocation28 [shape = 'u8[2048]{0}', space=vmem, size = 0x800, scoped, tag = 'input window, operand 22, single buffered']
    #allocation29 [shape = 'u8[98304]{0}', space=vmem, size = 0x18000, scoped, tag = 'input window, operand 23, single buffered']
    #allocation30 [shape = 's32[1]{0}', space=sflag, size = 0x4, scoped, tag = 'scoped memory for vgg16_forward.1']
    #allocation31 [shape = 'u8[2048]{0}', space=vmem, size = 0x800, scoped, tag = 'input window, operand 24, single buffered']
    #allocation32 [shape = 'u8[98304]{0}', space=vmem, size = 0x18000, scoped, tag = 'input window, operand 25, single buffered']
    #allocation33 [shape = 's32[1]{0}', space=sflag, size = 0x4, scoped, tag = 'scoped memory for vgg16_forward.1']
    #allocation34 [shape = 'u8[2048]{0}', space=vmem, size = 0x800, scoped, tag = 'input window, operand 26, single buffered']
    #allocation35 [shape = 'u8[131072]{0}', space=vmem, size = 0x20000, scoped, tag = 'input window, operand 30, single buffered']
    #allocation36 [shape = 's32[1]{0}', space=sflag, size = 0x4, scoped, tag = 'scoped memory for vgg16_forward.1']
    #allocation37 [shape = 'u8[131072]{0}', space=vmem, size = 0x20000, scoped, tag = 'input window, operand 32, single buffered']
    #allocation38 [shape = 'u8[131072]{0}', space=vmem, size = 0x20000, scoped, tag = 'input window, operand 34, single buffered']
    #allocation39 [shape = 's32[1]{0}', space=sflag, size = 0x4, scoped, tag = 'scoped memory for vgg16_forward.1']
    #allocation40 [shape = 'u8[65536]{0}', space=vmem, size = 0x10000, scoped, tag = 'input window, operand 36, single buffered']
    #allocation41 [shape = 'u8[512]{0}', space=vmem, size = 0x400, scoped, tag = 'input window, operand 38, single buffered']
    #allocation42 [shape = 's32[1]{0}', space=sflag, size = 0x4, scoped, tag = 'scoped memory for vgg16_forward.1']
    #allocation43 [shape = 'u8[512]{0}', space=vmem, size = 0x400, scoped, tag = 'input window, operand 40, single buffered']
    #allocation44 [shape = 'u8[1024]{0}', space=vmem, size = 0x400, scoped, tag = 'output window, operand 0']
    %88 = vsyncpa [#allocation3], 0
    %89 = vsyncpa [#allocation6], 0
    %90 = vsyncpa [#allocation9], 0
    %91 = vsyncpa [#allocation12], 0
    %92 = vsyncpa [#allocation15], 0
    %93 = vsyncpa [#allocation18], 0
    %94 = vsyncpa [#allocation21], 0
    %95 = vsyncpa [#allocation24], 0
    %96 = vsyncpa [#allocation27], 0
    %97 = vsyncpa [#allocation30], 0
    %98 = vsyncpa [#allocation33], 0
    %99 = vsyncpa [#allocation36], 0
    %100 = vsyncpa [#allocation39], 0
    %101 = vsyncpa [#allocation42], 0
    %102 = vsyncpa [#allocation4], 0
    %s103 = scalar_lea.sflag [#allocation4], 1
    %104 = vsyncpa %s103, 0
    loop: start=0, step=1, limit=4
    $region2: #{vgg16_forward.1} parent=1 // loop_pre_header
      _
    $region3: #{vgg16_forward.1} parent=1 // loop_header
      %s106 = sphi 0, %s110
      %p107 = scmp.ge.s32.totalorder %s106, 4
      %s116 = sphi 0, %s118
      %s119 = sphi 0, %s116
      %s120 = sphi 0, %s119
      %s136 = sphi 0, %s120
      %s140 = sphi 0, %s140
      %s142 = sphi 0, %s140
      %s143 = sphi 0, %s142
      %s157 = sphi 0, %s143
      %s161 = sphi 0, %s161
      %s163 = sphi 0, %s161
      %s164 = sphi 0, %s163
      %s178 = sphi 0, %s164
      %s182 = sphi 0, %s182
      %s184 = sphi 0, %s182
      %s185 = sphi 0, %s184
      %s199 = sphi 0, %s185
      %s203 = sphi 0, %s203
      %s205 = sphi 0, %s203
      %s206 = sphi 0, %s205
      %s220 = sphi 0, %s206
      %s224 = sphi 0, %s224
      %s226 = sphi 0, %s224
      %s227 = sphi 0, %s226
      %s241 = sphi 0, %s227
      %s245 = sphi 0, %s245
      %s247 = sphi 0, %s245
      %s248 = sphi 0, %s247
      %s262 = sphi 0, %s248
      %s266 = sphi 0, %s266
      %s268 = sphi 0, %s266
      %s269 = sphi 0, %s268
      %s283 = sphi 0, %s269
      %s287 = sphi 0, %s287
      %s289 = sphi 0, %s287
      %s290 = sphi 0, %s289
      %s304 = sphi 0, %s290
      %s308 = sphi 0, %s308
      %s310 = sphi 0, %s308
      %s311 = sphi 0, %s310
      %s325 = sphi 0, %s311
      %s329 = sphi 0, %s329
      %s331 = sphi 0, %s329
      %s332 = sphi 0, %s331
      %s346 = sphi 0, %s332
      %s350 = sphi 0, %s350
      %s352 = sphi 0, %s350
      %s353 = sphi 0, %s352
      %s367 = sphi 0, %s353
      %s371 = sphi 0, %s371
      %s373 = sphi 0, %s371
      %s374 = sphi 0, %s373
      %s388 = sphi 0, %s374
      %s392 = sphi 0, %s392
      %s394 = sphi 0, %s392
      %s395 = sphi 0, %s394
      %s409 = sphi 0, %s395
      %s413 = sphi 0, %s413
      %s415 = sphi 0, %s413
      %s416 = sphi 0, %s415
      %s430 = sphi 0, %s416
      %s434 = sphi 0, %s434
      %s436 = sphi 0, %s434
      %s437 = sphi 0, %s436
      %s451 = sphi 0, %s437
      %s455 = sphi 0, %s455
      %s457 = sphi 0, %s455
      %s458 = sphi 0, %s457
      %s472 = sphi 0, %s458
      %s476 = sphi 0, %s476
      %s478 = sphi 0, %s476
      %s479 = sphi 0, %s478
      %s493 = sphi 0, %s479
      %s497 = sphi 0, %s497
      %s499 = sphi 0, %s497
      %s500 = sphi 0, %s499
      %s514 = sphi 0, %s500
      %s518 = sphi 0, %s518
      %s520 = sphi 0, %s518
      %s521 = sphi 0, %s520
      %s535 = sphi 0, %s521
      %s539 = sphi 0, %s539
      %s541 = sphi 0, %s539
      %s542 = sphi 0, %s541
      %s556 = sphi 0, %s542
      %s560 = sphi 0, %s560
      %s562 = sphi 0, %s560
      %s563 = sphi 0, %s562
      %s577 = sphi 0, %s563
      %s581 = sphi 0, %s581
      %s583 = sphi 0, %s581
      %s584 = sphi 0, %s583
      %s598 = sphi 0, %s584
      %s602 = sphi 0, %s602
      %s604 = sphi 0, %s602
      %s605 = sphi 0, %s604
      %s619 = sphi 0, %s605
      %s623 = sphi 0, %s623
      %s625 = sphi 0, %s623
      %s626 = sphi 0, %s625
      %s640 = sphi 0, %s626
      %s644 = sphi 0, %s644
      %s646 = sphi 0, %s644
      %s647 = sphi 0, %s646
      %s661 = sphi 0, %s647
      %s665 = sphi 0, %s665
      %s667 = sphi 0, %s665
      %s668 = sphi 0, %s667
      %s682 = sphi 0, %s668
      %s686 = sphi 0, %s686
      %s688 = sphi 0, %s686
      %s689 = sphi 0, %s688
      %s703 = sphi 0, %s689
      %s707 = sphi 0, %s707
      %s709 = sphi 0, %s707
      %s710 = sphi 0, %s709
      %s724 = sphi 0, %s710
      %s728 = sphi 0, %s728
      %s730 = sphi 0, %s728
      %s731 = sphi 0, %s730
      %s745 = sphi 0, %s731
      %s749 = sphi 0, %s749
      %s751 = sphi 0, %s749
      %s752 = sphi 0, %s751
      %s766 = sphi 0, %s752
      %s770 = sphi 0, %s770
      %s772 = sphi 0, %s770
      %s773 = sphi 0, %s772
      %s787 = sphi 0, %s773
      %s791 = sphi 0, %s791
      %s793 = sphi 0, %s791
      %s794 = sphi 0, %s793
      %s808 = sphi 0, %s794
      %s812 = sphi 0, %s812
      %s814 = sphi 0, %s812
      %s815 = sphi 0, %s814
      %s829 = sphi 0, %s815
      %s833 = sphi 0, %s833
      %s835 = sphi 0, %s833
      %s836 = sphi 0, %s835
      %s850 = sphi 0, %s836
      %s854 = sphi 0, %s854
      %s856 = sphi 0, %s854
      %s857 = sphi 0, %s856
      %s871 = sphi 0, %s857
      %s875 = sphi 0, %s875
      %s877 = sphi 0, %s875
      %s878 = sphi 0, %s877
      %s892 = sphi 0, %s878
      %s896 = sphi 0, %s896
      %s898 = sphi 0, %s896
      %s899 = sphi 0, %s898
      %s913 = sphi 0, %s899
      %s917 = sphi 0, %s917
      %s919 = sphi 0, %s917
      %s920 = sphi 0, %s919
      %s934 = sphi 0, %s920
      %s938 = sphi 0, %s938
      %s940 = sphi 0, %s938
      %s941 = sphi 0, %s940
      %s955 = sphi 0, %s941
      %s959 = sphi 0, %s959
      %s961 = sphi 0, %s959
      %s962 = sphi 0, %s961
      %s976 = sphi 0, %s962
      %s982 = sphi 0, %s984
      %s985 = sphi 0, %s982
      %s986 = sphi 0, %s985
      %s1002 = sphi 0, %s986
    $region4: #{vgg16_forward.1} parent=1 // loop_header_branch
      %109 = sbr.rel (%p107) target = $region8
    $region5: #{vgg16_forward.1} parent=1 // loop_body
      %s111 = ssub.s32 %s106, 1
      %s112 = ssub.s32 %s106, 2
      %s113 = sadd.s32 %s106, 1
      %s114 = ssub.s32 %s106, %s113
      %p115 = scmp.eq.s32.totalorder %s114, 0
      %s117 = sadd.s32 %s116, 1
      %s118 = scalar_select %p115, %s116, %s117
      %p121 = pneg %p115
      %p122 = scmp.eq.s32.totalorder %s106, 1
      %p123 = por %p121, %p122
      %p124 = scmp.ne.s32.totalorder %s116, %s119
      %p125 = scmp.eq.s32.totalorder %s106, 0
      %p126 = por %p124, %p125
      %p127 = scmp.ne.s32.totalorder %s116, %s119
      %p128 = scmp.eq.s32.totalorder %s111, 1
      %p129 = por %p127, %p128
      %p130 = scmp.ne.s32.totalorder %s119, %s120
      %p131 = scmp.eq.s32.totalorder %s111, 0
      %p132 = por %p130, %p131
      %p133 = scmp.ne.s32.totalorder %s119, %s120
      %p134 = scmp.eq.s32.totalorder %s112, 1
      %p135 = por %p133, %p134
      %p137 = scmp.ne.s32.totalorder %s120, %s136
      %p138 = scmp.eq.s32.totalorder %s112, 0
      %p139 = por %p137, %p138
      %s141 = sadd.s32 %s140, 1
      %p144 = scmp.eq.s32.totalorder %s106, 1
      %p145 = scmp.ne.s32.totalorder %s140, %s142
      %p146 = scmp.eq.s32.totalorder %s106, 0
      %p147 = por %p145, %p146
      %p148 = scmp.ne.s32.totalorder %s140, %s142
      %p149 = scmp.eq.s32.totalorder %s111, 1
      %p150 = por %p148, %p149
      %p151 = scmp.ne.s32.totalorder %s142, %s143
      %p152 = scmp.eq.s32.totalorder %s111, 0
      %p153 = por %p151, %p152
      %p154 = scmp.ne.s32.totalorder %s142, %s143
      %p155 = scmp.eq.s32.totalorder %s112, 1
      %p156 = por %p154, %p155
      %p158 = scmp.ne.s32.totalorder %s143, %s157
      %p159 = scmp.eq.s32.totalorder %s112, 0
      %p160 = por %p158, %p159
      %s162 = sadd.s32 %s161, 1
      %p165 = scmp.eq.s32.totalorder %s106, 1
      %p166 = scmp.ne.s32.totalorder %s161, %s163
      %p167 = scmp.eq.s32.totalorder %s106, 0
      %p168 = por %p166, %p167
      %p169 = scmp.ne.s32.totalorder %s161, %s163
      %p170 = scmp.eq.s32.totalorder %s111, 1
      %p171 = por %p169, %p170
      %p172 = scmp.ne.s32.totalorder %s163, %s164
      %p173 = scmp.eq.s32.totalorder %s111, 0
      %p174 = por %p172, %p173
      %p175 = scmp.ne.s32.totalorder %s163, %s164
      %p176 = scmp.eq.s32.totalorder %s112, 1
      %p177 = por %p175, %p176
      %p179 = scmp.ne.s32.totalorder %s164, %s178
      %p180 = scmp.eq.s32.totalorder %s112, 0
      %p181 = por %p179, %p180
      %s183 = sadd.s32 %s182, 1
      %p186 = scmp.eq.s32.totalorder %s106, 1
      %p187 = scmp.ne.s32.totalorder %s182, %s184
      %p188 = scmp.eq.s32.totalorder %s106, 0
      %p189 = por %p187, %p188
      %p190 = scmp.ne.s32.totalorder %s182, %s184
      %p191 = scmp.eq.s32.totalorder %s111, 1
      %p192 = por %p190, %p191
      %p193 = scmp.ne.s32.totalorder %s184, %s185
      %p194 = scmp.eq.s32.totalorder %s111, 0
      %p195 = por %p193, %p194
      %p196 = scmp.ne.s32.totalorder %s184, %s185
      %p197 = scmp.eq.s32.totalorder %s112, 1
      %p198 = por %p196, %p197
      %p200 = scmp.ne.s32.totalorder %s185, %s199
      %p201 = scmp.eq.s32.totalorder %s112, 0
      %p202 = por %p200, %p201
      %s204 = sadd.s32 %s203, 1
      %p207 = scmp.eq.s32.totalorder %s106, 1
      %p208 = scmp.ne.s32.totalorder %s203, %s205
      %p209 = scmp.eq.s32.totalorder %s106, 0
      %p210 = por %p208, %p209
      %p211 = scmp.ne.s32.totalorder %s203, %s205
      %p212 = scmp.eq.s32.totalorder %s111, 1
      %p213 = por %p211, %p212
      %p214 = scmp.ne.s32.totalorder %s205, %s206
      %p215 = scmp.eq.s32.totalorder %s111, 0
      %p216 = por %p214, %p215
      %p217 = scmp.ne.s32.totalorder %s205, %s206
      %p218 = scmp.eq.s32.totalorder %s112, 1
      %p219 = por %p217, %p218
      %p221 = scmp.ne.s32.totalorder %s206, %s220
      %p222 = scmp.eq.s32.totalorder %s112, 0
      %p223 = por %p221, %p222
      %s225 = sadd.s32 %s224, 1
      %p228 = scmp.eq.s32.totalorder %s106, 1
      %p229 = scmp.ne.s32.totalorder %s224, %s226
      %p230 = scmp.eq.s32.totalorder %s106, 0
      %p231 = por %p229, %p230
      %p232 = scmp.ne.s32.totalorder %s224, %s226
      %p233 = scmp.eq.s32.totalorder %s111, 1
      %p234 = por %p232, %p233
      %p235 = scmp.ne.s32.totalorder %s226, %s227
      %p236 = scmp.eq.s32.totalorder %s111, 0
      %p237 = por %p235, %p236
      %p238 = scmp.ne.s32.totalorder %s226, %s227
      %p239 = scmp.eq.s32.totalorder %s112, 1
      %p240 = por %p238, %p239
      %p242 = scmp.ne.s32.totalorder %s227, %s241
      %p243 = scmp.eq.s32.totalorder %s112, 0
      %p244 = por %p242, %p243
      %s246 = sadd.s32 %s245, 1
      %p249 = scmp.eq.s32.totalorder %s106, 1
      %p250 = scmp.ne.s32.totalorder %s245, %s247
      %p251 = scmp.eq.s32.totalorder %s106, 0
      %p252 = por %p250, %p251
      %p253 = scmp.ne.s32.totalorder %s245, %s247
      %p254 = scmp.eq.s32.totalorder %s111, 1
      %p255 = por %p253, %p254
      %p256 = scmp.ne.s32.totalorder %s247, %s248
      %p257 = scmp.eq.s32.totalorder %s111, 0
      %p258 = por %p256, %p257
      %p259 = scmp.ne.s32.totalorder %s247, %s248
      %p260 = scmp.eq.s32.totalorder %s112, 1
      %p261 = por %p259, %p260
      %p263 = scmp.ne.s32.totalorder %s248, %s262
      %p264 = scmp.eq.s32.totalorder %s112, 0
      %p265 = por %p263, %p264
      %s267 = sadd.s32 %s266, 1
      %p270 = scmp.eq.s32.totalorder %s106, 1
      %p271 = scmp.ne.s32.totalorder %s266, %s268
      %p272 = scmp.eq.s32.totalorder %s106, 0
      %p273 = por %p271, %p272
      %p274 = scmp.ne.s32.totalorder %s266, %s268
      %p275 = scmp.eq.s32.totalorder %s111, 1
      %p276 = por %p274, %p275
      %p277 = scmp.ne.s32.totalorder %s268, %s269
      %p278 = scmp.eq.s32.totalorder %s111, 0
      %p279 = por %p277, %p278
      %p280 = scmp.ne.s32.totalorder %s268, %s269
      %p281 = scmp.eq.s32.totalorder %s112, 1
      %p282 = por %p280, %p281
      %p284 = scmp.ne.s32.totalorder %s269, %s283
      %p285 = scmp.eq.s32.totalorder %s112, 0
      %p286 = por %p284, %p285
      %s288 = sadd.s32 %s287, 1
      %p291 = scmp.eq.s32.totalorder %s106, 1
      %p292 = scmp.ne.s32.totalorder %s287, %s289
      %p293 = scmp.eq.s32.totalorder %s106, 0
      %p294 = por %p292, %p293
      %p295 = scmp.ne.s32.totalorder %s287, %s289
      %p296 = scmp.eq.s32.totalorder %s111, 1
      %p297 = por %p295, %p296
      %p298 = scmp.ne.s32.totalorder %s289, %s290
      %p299 = scmp.eq.s32.totalorder %s111, 0
      %p300 = por %p298, %p299
      %p301 = scmp.ne.s32.totalorder %s289, %s290
      %p302 = scmp.eq.s32.totalorder %s112, 1
      %p303 = por %p301, %p302
      %p305 = scmp.ne.s32.totalorder %s290, %s304
      %p306 = scmp.eq.s32.totalorder %s112, 0
      %p307 = por %p305, %p306
      %s309 = sadd.s32 %s308, 1
      %p312 = scmp.eq.s32.totalorder %s106, 1
      %p313 = scmp.ne.s32.totalorder %s308, %s310
      %p314 = scmp.eq.s32.totalorder %s106, 0
      %p315 = por %p313, %p314
      %p316 = scmp.ne.s32.totalorder %s308, %s310
      %p317 = scmp.eq.s32.totalorder %s111, 1
      %p318 = por %p316, %p317
      %p319 = scmp.ne.s32.totalorder %s310, %s311
      %p320 = scmp.eq.s32.totalorder %s111, 0
      %p321 = por %p319, %p320
      %p322 = scmp.ne.s32.totalorder %s310, %s311
      %p323 = scmp.eq.s32.totalorder %s112, 1
      %p324 = por %p322, %p323
      %p326 = scmp.ne.s32.totalorder %s311, %s325
      %p327 = scmp.eq.s32.totalorder %s112, 0
      %p328 = por %p326, %p327
      %s330 = sadd.s32 %s329, 1
      %p333 = scmp.eq.s32.totalorder %s106, 1
      %p334 = scmp.ne.s32.totalorder %s329, %s331
      %p335 = scmp.eq.s32.totalorder %s106, 0
      %p336 = por %p334, %p335
      %p337 = scmp.ne.s32.totalorder %s329, %s331
      %p338 = scmp.eq.s32.totalorder %s111, 1
      %p339 = por %p337, %p338
      %p340 = scmp.ne.s32.totalorder %s331, %s332
      %p341 = scmp.eq.s32.totalorder %s111, 0
      %p342 = por %p340, %p341
      %p343 = scmp.ne.s32.totalorder %s331, %s332
      %p344 = scmp.eq.s32.totalorder %s112, 1
      %p345 = por %p343, %p344
      %p347 = scmp.ne.s32.totalorder %s332, %s346
      %p348 = scmp.eq.s32.totalorder %s112, 0
      %p349 = por %p347, %p348
      %s351 = sadd.s32 %s350, 1
      %p354 = scmp.eq.s32.totalorder %s106, 1
      %p355 = scmp.ne.s32.totalorder %s350, %s352
      %p356 = scmp.eq.s32.totalorder %s106, 0
      %p357 = por %p355, %p356
      %p358 = scmp.ne.s32.totalorder %s350, %s352
      %p359 = scmp.eq.s32.totalorder %s111, 1
      %p360 = por %p358, %p359
      %p361 = scmp.ne.s32.totalorder %s352, %s353
      %p362 = scmp.eq.s32.totalorder %s111, 0
      %p363 = por %p361, %p362
      %p364 = scmp.ne.s32.totalorder %s352, %s353
      %p365 = scmp.eq.s32.totalorder %s112, 1
      %p366 = por %p364, %p365
      %p368 = scmp.ne.s32.totalorder %s353, %s367
      %p369 = scmp.eq.s32.totalorder %s112, 0
      %p370 = por %p368, %p369
      %s372 = sadd.s32 %s371, 1
      %p375 = scmp.eq.s32.totalorder %s106, 1
      %p376 = scmp.ne.s32.totalorder %s371, %s373
      %p377 = scmp.eq.s32.totalorder %s106, 0
      %p378 = por %p376, %p377
      %p379 = scmp.ne.s32.totalorder %s371, %s373
      %p380 = scmp.eq.s32.totalorder %s111, 1
      %p381 = por %p379, %p380
      %p382 = scmp.ne.s32.totalorder %s373, %s374
      %p383 = scmp.eq.s32.totalorder %s111, 0
      %p384 = por %p382, %p383
      %p385 = scmp.ne.s32.totalorder %s373, %s374
      %p386 = scmp.eq.s32.totalorder %s112, 1
      %p387 = por %p385, %p386
      %p389 = scmp.ne.s32.totalorder %s374, %s388
      %p390 = scmp.eq.s32.totalorder %s112, 0
      %p391 = por %p389, %p390
      %s393 = sadd.s32 %s392, 1
      %p396 = scmp.eq.s32.totalorder %s106, 1
      %p397 = scmp.ne.s32.totalorder %s392, %s394
      %p398 = scmp.eq.s32.totalorder %s106, 0
      %p399 = por %p397, %p398
      %p400 = scmp.ne.s32.totalorder %s392, %s394
      %p401 = scmp.eq.s32.totalorder %s111, 1
      %p402 = por %p400, %p401
      %p403 = scmp.ne.s32.totalorder %s394, %s395
      %p404 = scmp.eq.s32.totalorder %s111, 0
      %p405 = por %p403, %p404
      %p406 = scmp.ne.s32.totalorder %s394, %s395
      %p407 = scmp.eq.s32.totalorder %s112, 1
      %p408 = por %p406, %p407
      %p410 = scmp.ne.s32.totalorder %s395, %s409
      %p411 = scmp.eq.s32.totalorder %s112, 0
      %p412 = por %p410, %p411
      %s414 = sadd.s32 %s413, 1
      %p417 = scmp.eq.s32.totalorder %s106, 1
      %p418 = scmp.ne.s32.totalorder %s413, %s415
      %p419 = scmp.eq.s32.totalorder %s106, 0
      %p420 = por %p418, %p419
      %p421 = scmp.ne.s32.totalorder %s413, %s415
      %p422 = scmp.eq.s32.totalorder %s111, 1
      %p423 = por %p421, %p422
      %p424 = scmp.ne.s32.totalorder %s415, %s416
      %p425 = scmp.eq.s32.totalorder %s111, 0
      %p426 = por %p424, %p425
      %p427 = scmp.ne.s32.totalorder %s415, %s416
      %p428 = scmp.eq.s32.totalorder %s112, 1
      %p429 = por %p427, %p428
      %p431 = scmp.ne.s32.totalorder %s416, %s430
      %p432 = scmp.eq.s32.totalorder %s112, 0
      %p433 = por %p431, %p432
      %s435 = sadd.s32 %s434, 1
      %p438 = scmp.eq.s32.totalorder %s106, 1
      %p439 = scmp.ne.s32.totalorder %s434, %s436
      %p440 = scmp.eq.s32.totalorder %s106, 0
      %p441 = por %p439, %p440
      %p442 = scmp.ne.s32.totalorder %s434, %s436
      %p443 = scmp.eq.s32.totalorder %s111, 1
      %p444 = por %p442, %p443
      %p445 = scmp.ne.s32.totalorder %s436, %s437
      %p446 = scmp.eq.s32.totalorder %s111, 0
      %p447 = por %p445, %p446
      %p448 = scmp.ne.s32.totalorder %s436, %s437
      %p449 = scmp.eq.s32.totalorder %s112, 1
      %p450 = por %p448, %p449
      %p452 = scmp.ne.s32.totalorder %s437, %s451
      %p453 = scmp.eq.s32.totalorder %s112, 0
      %p454 = por %p452, %p453
      %s456 = sadd.s32 %s455, 1
      %p459 = scmp.eq.s32.totalorder %s106, 1
      %p460 = scmp.ne.s32.totalorder %s455, %s457
      %p461 = scmp.eq.s32.totalorder %s106, 0
      %p462 = por %p460, %p461
      %p463 = scmp.ne.s32.totalorder %s455, %s457
      %p464 = scmp.eq.s32.totalorder %s111, 1
      %p465 = por %p463, %p464
      %p466 = scmp.ne.s32.totalorder %s457, %s458
      %p467 = scmp.eq.s32.totalorder %s111, 0
      %p468 = por %p466, %p467
      %p469 = scmp.ne.s32.totalorder %s457, %s458
      %p470 = scmp.eq.s32.totalorder %s112, 1
      %p471 = por %p469, %p470
      %p473 = scmp.ne.s32.totalorder %s458, %s472
      %p474 = scmp.eq.s32.totalorder %s112, 0
      %p475 = por %p473, %p474
      %s477 = sadd.s32 %s476, 1
      %p480 = scmp.eq.s32.totalorder %s106, 1
      %p481 = scmp.ne.s32.totalorder %s476, %s478
      %p482 = scmp.eq.s32.totalorder %s106, 0
      %p483 = por %p481, %p482
      %p484 = scmp.ne.s32.totalorder %s476, %s478
      %p485 = scmp.eq.s32.totalorder %s111, 1
      %p486 = por %p484, %p485
      %p487 = scmp.ne.s32.totalorder %s478, %s479
      %p488 = scmp.eq.s32.totalorder %s111, 0
      %p489 = por %p487, %p488
      %p490 = scmp.ne.s32.totalorder %s478, %s479
      %p491 = scmp.eq.s32.totalorder %s112, 1
      %p492 = por %p490, %p491
      %p494 = scmp.ne.s32.totalorder %s479, %s493
      %p495 = scmp.eq.s32.totalorder %s112, 0
      %p496 = por %p494, %p495
      %s498 = sadd.s32 %s497, 1
      %p501 = scmp.eq.s32.totalorder %s106, 1
      %p502 = scmp.ne.s32.totalorder %s497, %s499
      %p503 = scmp.eq.s32.totalorder %s106, 0
      %p504 = por %p502, %p503
      %p505 = scmp.ne.s32.totalorder %s497, %s499
      %p506 = scmp.eq.s32.totalorder %s111, 1
      %p507 = por %p505, %p506
      %p508 = scmp.ne.s32.totalorder %s499, %s500
      %p509 = scmp.eq.s32.totalorder %s111, 0
      %p510 = por %p508, %p509
      %p511 = scmp.ne.s32.totalorder %s499, %s500
      %p512 = scmp.eq.s32.totalorder %s112, 1
      %p513 = por %p511, %p512
      %p515 = scmp.ne.s32.totalorder %s500, %s514
      %p516 = scmp.eq.s32.totalorder %s112, 0
      %p517 = por %p515, %p516
      %s519 = sadd.s32 %s518, 1
      %p522 = scmp.eq.s32.totalorder %s106, 1
      %p523 = scmp.ne.s32.totalorder %s518, %s520
      %p524 = scmp.eq.s32.totalorder %s106, 0
      %p525 = por %p523, %p524
      %p526 = scmp.ne.s32.totalorder %s518, %s520
      %p527 = scmp.eq.s32.totalorder %s111, 1
      %p528 = por %p526, %p527
      %p529 = scmp.ne.s32.totalorder %s520, %s521
      %p530 = scmp.eq.s32.totalorder %s111, 0
      %p531 = por %p529, %p530
      %p532 = scmp.ne.s32.totalorder %s520, %s521
      %p533 = scmp.eq.s32.totalorder %s112, 1
      %p534 = por %p532, %p533
      %p536 = scmp.ne.s32.totalorder %s521, %s535
      %p537 = scmp.eq.s32.totalorder %s112, 0
      %p538 = por %p536, %p537
      %s540 = sadd.s32 %s539, 1
      %p543 = scmp.eq.s32.totalorder %s106, 1
      %p544 = scmp.ne.s32.totalorder %s539, %s541
      %p545 = scmp.eq.s32.totalorder %s106, 0
      %p546 = por %p544, %p545
      %p547 = scmp.ne.s32.totalorder %s539, %s541
      %p548 = scmp.eq.s32.totalorder %s111, 1
      %p549 = por %p547, %p548
      %p550 = scmp.ne.s32.totalorder %s541, %s542
      %p551 = scmp.eq.s32.totalorder %s111, 0
      %p552 = por %p550, %p551
      %p553 = scmp.ne.s32.totalorder %s541, %s542
      %p554 = scmp.eq.s32.totalorder %s112, 1
      %p555 = por %p553, %p554
      %p557 = scmp.ne.s32.totalorder %s542, %s556
      %p558 = scmp.eq.s32.totalorder %s112, 0
      %p559 = por %p557, %p558
      %s561 = sadd.s32 %s560, 1
      %p564 = scmp.eq.s32.totalorder %s106, 1
      %p565 = scmp.ne.s32.totalorder %s560, %s562
      %p566 = scmp.eq.s32.totalorder %s106, 0
      %p567 = por %p565, %p566
      %p568 = scmp.ne.s32.totalorder %s560, %s562
      %p569 = scmp.eq.s32.totalorder %s111, 1
      %p570 = por %p568, %p569
      %p571 = scmp.ne.s32.totalorder %s562, %s563
      %p572 = scmp.eq.s32.totalorder %s111, 0
      %p573 = por %p571, %p572
      %p574 = scmp.ne.s32.totalorder %s562, %s563
      %p575 = scmp.eq.s32.totalorder %s112, 1
      %p576 = por %p574, %p575
      %p578 = scmp.ne.s32.totalorder %s563, %s577
      %p579 = scmp.eq.s32.totalorder %s112, 0
      %p580 = por %p578, %p579
      %s582 = sadd.s32 %s581, 1
      %p585 = scmp.eq.s32.totalorder %s106, 1
      %p586 = scmp.ne.s32.totalorder %s581, %s583
      %p587 = scmp.eq.s32.totalorder %s106, 0
      %p588 = por %p586, %p587
      %p589 = scmp.ne.s32.totalorder %s581, %s583
      %p590 = scmp.eq.s32.totalorder %s111, 1
      %p591 = por %p589, %p590
      %p592 = scmp.ne.s32.totalorder %s583, %s584
      %p593 = scmp.eq.s32.totalorder %s111, 0
      %p594 = por %p592, %p593
      %p595 = scmp.ne.s32.totalorder %s583, %s584
      %p596 = scmp.eq.s32.totalorder %s112, 1
      %p597 = por %p595, %p596
      %p599 = scmp.ne.s32.totalorder %s584, %s598
      %p600 = scmp.eq.s32.totalorder %s112, 0
      %p601 = por %p599, %p600
      %s603 = sadd.s32 %s602, 1
      %p606 = scmp.eq.s32.totalorder %s106, 1
      %p607 = scmp.ne.s32.totalorder %s602, %s604
      %p608 = scmp.eq.s32.totalorder %s106, 0
      %p609 = por %p607, %p608
      %p610 = scmp.ne.s32.totalorder %s602, %s604
      %p611 = scmp.eq.s32.totalorder %s111, 1
      %p612 = por %p610, %p611
      %p613 = scmp.ne.s32.totalorder %s604, %s605
      %p614 = scmp.eq.s32.totalorder %s111, 0
      %p615 = por %p613, %p614
      %p616 = scmp.ne.s32.totalorder %s604, %s605
      %p617 = scmp.eq.s32.totalorder %s112, 1
      %p618 = por %p616, %p617
      %p620 = scmp.ne.s32.totalorder %s605, %s619
      %p621 = scmp.eq.s32.totalorder %s112, 0
      %p622 = por %p620, %p621
      %s624 = sadd.s32 %s623, 1
      %p627 = scmp.eq.s32.totalorder %s106, 1
      %p628 = scmp.ne.s32.totalorder %s623, %s625
      %p629 = scmp.eq.s32.totalorder %s106, 0
      %p630 = por %p628, %p629
      %p631 = scmp.ne.s32.totalorder %s623, %s625
      %p632 = scmp.eq.s32.totalorder %s111, 1
      %p633 = por %p631, %p632
      %p634 = scmp.ne.s32.totalorder %s625, %s626
      %p635 = scmp.eq.s32.totalorder %s111, 0
      %p636 = por %p634, %p635
      %p637 = scmp.ne.s32.totalorder %s625, %s626
      %p638 = scmp.eq.s32.totalorder %s112, 1
      %p639 = por %p637, %p638
      %p641 = scmp.ne.s32.totalorder %s626, %s640
      %p642 = scmp.eq.s32.totalorder %s112, 0
      %p643 = por %p641, %p642
      %s645 = sadd.s32 %s644, 1
      %p648 = scmp.eq.s32.totalorder %s106, 1
      %p649 = scmp.ne.s32.totalorder %s644, %s646
      %p650 = scmp.eq.s32.totalorder %s106, 0
      %p651 = por %p649, %p650
      %p652 = scmp.ne.s32.totalorder %s644, %s646
      %p653 = scmp.eq.s32.totalorder %s111, 1
      %p654 = por %p652, %p653
      %p655 = scmp.ne.s32.totalorder %s646, %s647
      %p656 = scmp.eq.s32.totalorder %s111, 0
      %p657 = por %p655, %p656
      %p658 = scmp.ne.s32.totalorder %s646, %s647
      %p659 = scmp.eq.s32.totalorder %s112, 1
      %p660 = por %p658, %p659
      %p662 = scmp.ne.s32.totalorder %s647, %s661
      %p663 = scmp.eq.s32.totalorder %s112, 0
      %p664 = por %p662, %p663
      %s666 = sadd.s32 %s665, 1
      %p669 = scmp.eq.s32.totalorder %s106, 1
      %p670 = scmp.ne.s32.totalorder %s665, %s667
      %p671 = scmp.eq.s32.totalorder %s106, 0
      %p672 = por %p670, %p671
      %p673 = scmp.ne.s32.totalorder %s665, %s667
      %p674 = scmp.eq.s32.totalorder %s111, 1
      %p675 = por %p673, %p674
      %p676 = scmp.ne.s32.totalorder %s667, %s668
      %p677 = scmp.eq.s32.totalorder %s111, 0
      %p678 = por %p676, %p677
      %p679 = scmp.ne.s32.totalorder %s667, %s668
      %p680 = scmp.eq.s32.totalorder %s112, 1
      %p681 = por %p679, %p680
      %p683 = scmp.ne.s32.totalorder %s668, %s682
      %p684 = scmp.eq.s32.totalorder %s112, 0
      %p685 = por %p683, %p684
      %s687 = sadd.s32 %s686, 1
      %p690 = scmp.eq.s32.totalorder %s106, 1
      %p691 = scmp.ne.s32.totalorder %s686, %s688
      %p692 = scmp.eq.s32.totalorder %s106, 0
      %p693 = por %p691, %p692
      %p694 = scmp.ne.s32.totalorder %s686, %s688
      %p695 = scmp.eq.s32.totalorder %s111, 1
      %p696 = por %p694, %p695
      %p697 = scmp.ne.s32.totalorder %s688, %s689
      %p698 = scmp.eq.s32.totalorder %s111, 0
      %p699 = por %p697, %p698
      %p700 = scmp.ne.s32.totalorder %s688, %s689
      %p701 = scmp.eq.s32.totalorder %s112, 1
      %p702 = por %p700, %p701
      %p704 = scmp.ne.s32.totalorder %s689, %s703
      %p705 = scmp.eq.s32.totalorder %s112, 0
      %p706 = por %p704, %p705
      %s708 = sadd.s32 %s707, 1
      %p711 = scmp.eq.s32.totalorder %s106, 1
      %p712 = scmp.ne.s32.totalorder %s707, %s709
      %p713 = scmp.eq.s32.totalorder %s106, 0
      %p714 = por %p712, %p713
      %p715 = scmp.ne.s32.totalorder %s707, %s709
      %p716 = scmp.eq.s32.totalorder %s111, 1
      %p717 = por %p715, %p716
      %p718 = scmp.ne.s32.totalorder %s709, %s710
      %p719 = scmp.eq.s32.totalorder %s111, 0
      %p720 = por %p718, %p719
      %p721 = scmp.ne.s32.totalorder %s709, %s710
      %p722 = scmp.eq.s32.totalorder %s112, 1
      %p723 = por %p721, %p722
      %p725 = scmp.ne.s32.totalorder %s710, %s724
      %p726 = scmp.eq.s32.totalorder %s112, 0
      %p727 = por %p725, %p726
      %s729 = sadd.s32 %s728, 1
      %p732 = scmp.eq.s32.totalorder %s106, 1
      %p733 = scmp.ne.s32.totalorder %s728, %s730
      %p734 = scmp.eq.s32.totalorder %s106, 0
      %p735 = por %p733, %p734
      %p736 = scmp.ne.s32.totalorder %s728, %s730
      %p737 = scmp.eq.s32.totalorder %s111, 1
      %p738 = por %p736, %p737
      %p739 = scmp.ne.s32.totalorder %s730, %s731
      %p740 = scmp.eq.s32.totalorder %s111, 0
      %p741 = por %p739, %p740
      %p742 = scmp.ne.s32.totalorder %s730, %s731
      %p743 = scmp.eq.s32.totalorder %s112, 1
      %p744 = por %p742, %p743
      %p746 = scmp.ne.s32.totalorder %s731, %s745
      %p747 = scmp.eq.s32.totalorder %s112, 0
      %p748 = por %p746, %p747
      %s750 = sadd.s32 %s749, 1
      %p753 = scmp.eq.s32.totalorder %s106, 1
      %p754 = scmp.ne.s32.totalorder %s749, %s751
      %p755 = scmp.eq.s32.totalorder %s106, 0
      %p756 = por %p754, %p755
      %p757 = scmp.ne.s32.totalorder %s749, %s751
      %p758 = scmp.eq.s32.totalorder %s111, 1
      %p759 = por %p757, %p758
      %p760 = scmp.ne.s32.totalorder %s751, %s752
      %p761 = scmp.eq.s32.totalorder %s111, 0
      %p762 = por %p760, %p761
      %p763 = scmp.ne.s32.totalorder %s751, %s752
      %p764 = scmp.eq.s32.totalorder %s112, 1
      %p765 = por %p763, %p764
      %p767 = scmp.ne.s32.totalorder %s752, %s766
      %p768 = scmp.eq.s32.totalorder %s112, 0
      %p769 = por %p767, %p768
      %s771 = sadd.s32 %s770, 1
      %p774 = scmp.eq.s32.totalorder %s106, 1
      %p775 = scmp.ne.s32.totalorder %s770, %s772
      %p776 = scmp.eq.s32.totalorder %s106, 0
      %p777 = por %p775, %p776
      %p778 = scmp.ne.s32.totalorder %s770, %s772
      %p779 = scmp.eq.s32.totalorder %s111, 1
      %p780 = por %p778, %p779
      %p781 = scmp.ne.s32.totalorder %s772, %s773
      %p782 = scmp.eq.s32.totalorder %s111, 0
      %p783 = por %p781, %p782
      %p784 = scmp.ne.s32.totalorder %s772, %s773
      %p785 = scmp.eq.s32.totalorder %s112, 1
      %p786 = por %p784, %p785
      %p788 = scmp.ne.s32.totalorder %s773, %s787
      %p789 = scmp.eq.s32.totalorder %s112, 0
      %p790 = por %p788, %p789
      %s792 = sadd.s32 %s791, 1
      %p795 = scmp.eq.s32.totalorder %s106, 1
      %p796 = scmp.ne.s32.totalorder %s791, %s793
      %p797 = scmp.eq.s32.totalorder %s106, 0
      %p798 = por %p796, %p797
      %p799 = scmp.ne.s32.totalorder %s791, %s793
      %p800 = scmp.eq.s32.totalorder %s111, 1
      %p801 = por %p799, %p800
      %p802 = scmp.ne.s32.totalorder %s793, %s794
      %p803 = scmp.eq.s32.totalorder %s111, 0
      %p804 = por %p802, %p803
      %p805 = scmp.ne.s32.totalorder %s793, %s794
      %p806 = scmp.eq.s32.totalorder %s112, 1
      %p807 = por %p805, %p806
      %p809 = scmp.ne.s32.totalorder %s794, %s808
      %p810 = scmp.eq.s32.totalorder %s112, 0
      %p811 = por %p809, %p810
      %s813 = sadd.s32 %s812, 1
      %p816 = scmp.eq.s32.totalorder %s106, 1
      %p817 = scmp.ne.s32.totalorder %s812, %s814
      %p818 = scmp.eq.s32.totalorder %s106, 0
      %p819 = por %p817, %p818
      %p820 = scmp.ne.s32.totalorder %s812, %s814
      %p821 = scmp.eq.s32.totalorder %s111, 1
      %p822 = por %p820, %p821
      %p823 = scmp.ne.s32.totalorder %s814, %s815
      %p824 = scmp.eq.s32.totalorder %s111, 0
      %p825 = por %p823, %p824
      %p826 = scmp.ne.s32.totalorder %s814, %s815
      %p827 = scmp.eq.s32.totalorder %s112, 1
      %p828 = por %p826, %p827
      %p830 = scmp.ne.s32.totalorder %s815, %s829
      %p831 = scmp.eq.s32.totalorder %s112, 0
      %p832 = por %p830, %p831
      %s834 = sadd.s32 %s833, 1
      %p837 = scmp.eq.s32.totalorder %s106, 1
      %p838 = scmp.ne.s32.totalorder %s833, %s835
      %p839 = scmp.eq.s32.totalorder %s106, 0
      %p840 = por %p838, %p839
      %p841 = scmp.ne.s32.totalorder %s833, %s835
      %p842 = scmp.eq.s32.totalorder %s111, 1
      %p843 = por %p841, %p842
      %p844 = scmp.ne.s32.totalorder %s835, %s836
      %p845 = scmp.eq.s32.totalorder %s111, 0
      %p846 = por %p844, %p845
      %p847 = scmp.ne.s32.totalorder %s835, %s836
      %p848 = scmp.eq.s32.totalorder %s112, 1
      %p849 = por %p847, %p848
      %p851 = scmp.ne.s32.totalorder %s836, %s850
      %p852 = scmp.eq.s32.totalorder %s112, 0
      %p853 = por %p851, %p852
      %s855 = sadd.s32 %s854, 1
      %p858 = scmp.eq.s32.totalorder %s106, 1
      %p859 = scmp.ne.s32.totalorder %s854, %s856
      %p860 = scmp.eq.s32.totalorder %s106, 0
      %p861 = por %p859, %p860
      %p862 = scmp.ne.s32.totalorder %s854, %s856
      %p863 = scmp.eq.s32.totalorder %s111, 1
      %p864 = por %p862, %p863
      %p865 = scmp.ne.s32.totalorder %s856, %s857
      %p866 = scmp.eq.s32.totalorder %s111, 0
      %p867 = por %p865, %p866
      %p868 = scmp.ne.s32.totalorder %s856, %s857
      %p869 = scmp.eq.s32.totalorder %s112, 1
      %p870 = por %p868, %p869
      %p872 = scmp.ne.s32.totalorder %s857, %s871
      %p873 = scmp.eq.s32.totalorder %s112, 0
      %p874 = por %p872, %p873
      %s876 = sadd.s32 %s875, 1
      %p879 = scmp.eq.s32.totalorder %s106, 1
      %p880 = scmp.ne.s32.totalorder %s875, %s877
      %p881 = scmp.eq.s32.totalorder %s106, 0
      %p882 = por %p880, %p881
      %p883 = scmp.ne.s32.totalorder %s875, %s877
      %p884 = scmp.eq.s32.totalorder %s111, 1
      %p885 = por %p883, %p884
      %p886 = scmp.ne.s32.totalorder %s877, %s878
      %p887 = scmp.eq.s32.totalorder %s111, 0
      %p888 = por %p886, %p887
      %p889 = scmp.ne.s32.totalorder %s877, %s878
      %p890 = scmp.eq.s32.totalorder %s112, 1
      %p891 = por %p889, %p890
      %p893 = scmp.ne.s32.totalorder %s878, %s892
      %p894 = scmp.eq.s32.totalorder %s112, 0
      %p895 = por %p893, %p894
      %s897 = sadd.s32 %s896, 1
      %p900 = scmp.eq.s32.totalorder %s106, 1
      %p901 = scmp.ne.s32.totalorder %s896, %s898
      %p902 = scmp.eq.s32.totalorder %s106, 0
      %p903 = por %p901, %p902
      %p904 = scmp.ne.s32.totalorder %s896, %s898
      %p905 = scmp.eq.s32.totalorder %s111, 1
      %p906 = por %p904, %p905
      %p907 = scmp.ne.s32.totalorder %s898, %s899
      %p908 = scmp.eq.s32.totalorder %s111, 0
      %p909 = por %p907, %p908
      %p910 = scmp.ne.s32.totalorder %s898, %s899
      %p911 = scmp.eq.s32.totalorder %s112, 1
      %p912 = por %p910, %p911
      %p914 = scmp.ne.s32.totalorder %s899, %s913
      %p915 = scmp.eq.s32.totalorder %s112, 0
      %p916 = por %p914, %p915
      %s918 = sadd.s32 %s917, 1
      %p921 = scmp.eq.s32.totalorder %s106, 1
      %p922 = scmp.ne.s32.totalorder %s917, %s919
      %p923 = scmp.eq.s32.totalorder %s106, 0
      %p924 = por %p922, %p923
      %p925 = scmp.ne.s32.totalorder %s917, %s919
      %p926 = scmp.eq.s32.totalorder %s111, 1
      %p927 = por %p925, %p926
      %p928 = scmp.ne.s32.totalorder %s919, %s920
      %p929 = scmp.eq.s32.totalorder %s111, 0
      %p930 = por %p928, %p929
      %p931 = scmp.ne.s32.totalorder %s919, %s920
      %p932 = scmp.eq.s32.totalorder %s112, 1
      %p933 = por %p931, %p932
      %p935 = scmp.ne.s32.totalorder %s920, %s934
      %p936 = scmp.eq.s32.totalorder %s112, 0
      %p937 = por %p935, %p936
      %s939 = sadd.s32 %s938, 1
      %p942 = scmp.eq.s32.totalorder %s106, 1
      %p943 = scmp.ne.s32.totalorder %s938, %s940
      %p944 = scmp.eq.s32.totalorder %s106, 0
      %p945 = por %p943, %p944
      %p946 = scmp.ne.s32.totalorder %s938, %s940
      %p947 = scmp.eq.s32.totalorder %s111, 1
      %p948 = por %p946, %p947
      %p949 = scmp.ne.s32.totalorder %s940, %s941
      %p950 = scmp.eq.s32.totalorder %s111, 0
      %p951 = por %p949, %p950
      %p952 = scmp.ne.s32.totalorder %s940, %s941
      %p953 = scmp.eq.s32.totalorder %s112, 1
      %p954 = por %p952, %p953
      %p956 = scmp.ne.s32.totalorder %s941, %s955
      %p957 = scmp.eq.s32.totalorder %s112, 0
      %p958 = por %p956, %p957
      %s960 = sadd.s32 %s959, 1
      %p963 = scmp.eq.s32.totalorder %s106, 1
      %p964 = scmp.ne.s32.totalorder %s959, %s961
      %p965 = scmp.eq.s32.totalorder %s106, 0
      %p966 = por %p964, %p965
      %p967 = scmp.ne.s32.totalorder %s959, %s961
      %p968 = scmp.eq.s32.totalorder %s111, 1
      %p969 = por %p967, %p968
      %p970 = scmp.ne.s32.totalorder %s961, %s962
      %p971 = scmp.eq.s32.totalorder %s111, 0
      %p972 = por %p970, %p971
      %p973 = scmp.ne.s32.totalorder %s961, %s962
      %p974 = scmp.eq.s32.totalorder %s112, 1
      %p975 = por %p973, %p974
      %p977 = scmp.ne.s32.totalorder %s962, %s976
      %p978 = scmp.eq.s32.totalorder %s112, 0
      %p979 = por %p977, %p978
      %s980 = ssub.s32 %s106, %s113
      %p981 = scmp.eq.s32.totalorder %s980, 0
      %s983 = sadd.s32 %s982, 1
      %s984 = scalar_select %p981, %s982, %s983
      %p987 = pneg %p981
      %p988 = scmp.eq.s32.totalorder %s106, 1
      %p989 = por %p987, %p988
      %p990 = scmp.ne.s32.totalorder %s982, %s985
      %p991 = scmp.eq.s32.totalorder %s106, 0
      %p992 = por %p990, %p991
      %p993 = scmp.ne.s32.totalorder %s982, %s985
      %p994 = scmp.eq.s32.totalorder %s111, 1
      %p995 = por %p993, %p994
      %p996 = scmp.ne.s32.totalorder %s985, %s986
      %p997 = scmp.eq.s32.totalorder %s111, 0
      %p998 = por %p996, %p997
      %p999 = scmp.ne.s32.totalorder %s985, %s986
      %p1000 = scmp.eq.s32.totalorder %s112, 1
      %p1001 = por %p999, %p1000
      %p1003 = scmp.ne.s32.totalorder %s986, %s1002
      %p1004 = scmp.eq.s32.totalorder %s112, 0
      %p1005 = por %p1003, %p1004
      %p1006 = scmp.le.s32.totalorder 1, %s106
      %p1007 = scmp.lt.s32.totalorder %s106, 3
      %p1008 = pnand %p1006, %p1007
      %p1009 = pneg %p1008
      // Predicated region
      $region9: #{vgg16_forward.1} parent=5 // pred_check
        _
      $region10: #{vgg16_forward.1} parent=5 // pred_check_branch
        %1011 = sbr.rel (%p1008) target = $region12
      $region11: #{vgg16_forward.1} parent=5 // pred_region
        %s1012 = ssub.s32 %s106, 1
        // Predicated region
        $region13: #{vgg16_forward.1} parent=11 // pred_check
          %p1013 = pneg %p153
        $region14: #{vgg16_forward.1} parent=11 // pred_check_branch
          %1015 = sbr.rel (%p1013) target = $region16
        $region15: #{vgg16_forward.1} parent=11 // pred_region
          _
        $region16: #{vgg16_forward.1} parent=11 // pred_fallthru
          _
        // Predicated region
        $region17: #{vgg16_forward.1} parent=11 // pred_check
          %p1016 = pneg %p174
        $region18: #{vgg16_forward.1} parent=11 // pred_check_branch
          %1018 = sbr.rel (%p1016) target = $region20
        $region19: #{vgg16_forward.1} parent=11 // pred_region
          _
        $region20: #{vgg16_forward.1} parent=11 // pred_fallthru
          _
        // Predicated region
        $region21: #{vgg16_forward.1} parent=11 // pred_check
          %p1019 = pneg %p195
        $region22: #{vgg16_forward.1} parent=11 // pred_check_branch
          %1021 = sbr.rel (%p1019) target = $region24
        $region23: #{vgg16_forward.1} parent=11 // pred_region
          _
        $region24: #{vgg16_forward.1} parent=11 // pred_fallthru
          _
        // Predicated region
        $region25: #{vgg16_forward.1} parent=11 // pred_check
          %p1022 = pneg %p216
        $region26: #{vgg16_forward.1} parent=11 // pred_check_branch
          %1024 = sbr.rel (%p1022) target = $region28
        $region27: #{vgg16_forward.1} parent=11 // pred_region
          %s1026 = ssub.s32 128, 128
          %1027 = vsyncadd [#allocation3], %s1026
          %s1029 = sshll.u32 [#allocation2], 4
          %s1030 = int_to_ptr.vmem [resolvable:$true] %s1029
          %1032 = dma.hbm_to_vmem [thread:$0]  %s9, 128, %s1030, [#allocation3]
        $region28: #{vgg16_forward.1} parent=11 // pred_fallthru
          _
        // Predicated region
        $region29: #{vgg16_forward.1} parent=11 // pred_check
          %p1033 = pneg %p237
        $region30: #{vgg16_forward.1} parent=11 // pred_check_branch
          %1035 = sbr.rel (%p1033) target = $region32
        $region31: #{vgg16_forward.1} parent=11 // pred_region
          %s1037 = ssub.s32 6144, 6144
          %1038 = vsyncadd [#allocation6], %s1037
          %s1039 = sshll.u32 [#allocation5], 4
          %s1040 = int_to_ptr.vmem [resolvable:$true] %s1039
          %1045 = dma.hbm_to_vmem [thread:$0]  %s11, 6144, %s1040, [#allocation6], 128, 128, 8
        $region32: #{vgg16_forward.1} parent=11 // pred_fallthru
          _
        // Predicated region
        $region33: #{vgg16_forward.1} parent=11 // pred_check
          %p1046 = pneg %p258
        $region34: #{vgg16_forward.1} parent=11 // pred_check_branch
          %1048 = sbr.rel (%p1046) target = $region36
        $region35: #{vgg16_forward.1} parent=11 // pred_region
          %s1050 = ssub.s32 128, 128
          %1051 = vsyncadd [#allocation6], %s1050
          %s1053 = sshll.u32 [#allocation7], 4
          %s1054 = int_to_ptr.vmem [resolvable:$true] %s1053
          %1056 = dma.hbm_to_vmem [thread:$0]  %s13, 128, %s1054, [#allocation6]
        $region36: #{vgg16_forward.1} parent=11 // pred_fallthru
          _
        // Predicated region
        $region37: #{vgg16_forward.1} parent=11 // pred_check
          %p1057 = pneg %p279
        $region38: #{vgg16_forward.1} parent=11 // pred_check_branch
          %1059 = sbr.rel (%p1057) target = $region40
        $region39: #{vgg16_forward.1} parent=11 // pred_region
          %s1061 = ssub.s32 12288, 12288
          %1062 = vsyncadd [#allocation9], %s1061
          %s1063 = sshll.u32 [#allocation8], 4
          %s1064 = int_to_ptr.vmem [resolvable:$true] %s1063
          %1069 = dma.hbm_to_vmem [thread:$0]  %s15, 12288, %s1064, [#allocation9], 128, 128, 8
        $region40: #{vgg16_forward.1} parent=11 // pred_fallthru
          _
        // Predicated region
        $region41: #{vgg16_forward.1} parent=11 // pred_check
          %p1070 = pneg %p300
        $region42: #{vgg16_forward.1} parent=11 // pred_check_branch
          %1072 = sbr.rel (%p1070) target = $region44
        $region43: #{vgg16_forward.1} parent=11 // pred_region
          %s1074 = ssub.s32 128, 128
          %1075 = vsyncadd [#allocation9], %s1074
          %s1077 = sshll.u32 [#allocation10], 4
          %s1078 = int_to_ptr.vmem [resolvable:$true] %s1077
          %1080 = dma.hbm_to_vmem [thread:$0]  %s17, 128, %s1078, [#allocation9]
        $region44: #{vgg16_forward.1} parent=11 // pred_fallthru
          _
        // Predicated region
        $region45: #{vgg16_forward.1} parent=11 // pred_check
          %p1081 = pneg %p321
        $region46: #{vgg16_forward.1} parent=11 // pred_check_branch
          %1083 = sbr.rel (%p1081) target = $region48
        $region47: #{vgg16_forward.1} parent=11 // pred_region
          %s1085 = ssub.s32 6144, 6144
          %1086 = vsyncadd [#allocation12], %s1085
          %s1087 = sshll.u32 [#allocation11], 4
          %s1088 = int_to_ptr.vmem [resolvable:$true] %s1087
          %1093 = dma.hbm_to_vmem [thread:$0]  %s19, 6144, %s1088, [#allocation12], 128, 128, 8
        $region48: #{vgg16_forward.1} parent=11 // pred_fallthru
          _
        // Predicated region
        $region49: #{vgg16_forward.1} parent=11 // pred_check
          %p1094 = pneg %p342
        $region50: #{vgg16_forward.1} parent=11 // pred_check_branch
          %1096 = sbr.rel (%p1094) target = $region52
        $region51: #{vgg16_forward.1} parent=11 // pred_region
          %s1098 = ssub.s32 128, 128
          %1099 = vsyncadd [#allocation12], %s1098
          %s1101 = sshll.u32 [#allocation13], 4
          %s1102 = int_to_ptr.vmem [resolvable:$true] %s1101
          %1104 = dma.hbm_to_vmem [thread:$0]  %s21, 128, %s1102, [#allocation12]
        $region52: #{vgg16_forward.1} parent=11 // pred_fallthru
          _
        // Predicated region
        $region53: #{vgg16_forward.1} parent=11 // pred_check
          %p1105 = pneg %p363
        $region54: #{vgg16_forward.1} parent=11 // pred_check_branch
          %1107 = sbr.rel (%p1105) target = $region56
        $region55: #{vgg16_forward.1} parent=11 // pred_region
          %s1109 = ssub.s32 12288, 12288
          %1110 = vsyncadd [#allocation15], %s1109
          %s1111 = sshll.u32 [#allocation14], 4
          %s1112 = int_to_ptr.vmem [resolvable:$true] %s1111
          %1117 = dma.hbm_to_vmem [thread:$0]  %s23, 12288, %s1112, [#allocation15], 128, 128, 8
        $region56: #{vgg16_forward.1} parent=11 // pred_fallthru
          _
        // Predicated region
        $region57: #{vgg16_forward.1} parent=11 // pred_check
          %p1118 = pneg %p384
        $region58: #{vgg16_forward.1} parent=11 // pred_check_branch
          %1120 = sbr.rel (%p1118) target = $region60
        $region59: #{vgg16_forward.1} parent=11 // pred_region
          _
        $region60: #{vgg16_forward.1} parent=11 // pred_fallthru
          _
        // Predicated region
        $region61: #{vgg16_forward.1} parent=11 // pred_check
          %p1121 = pneg %p405
        $region62: #{vgg16_forward.1} parent=11 // pred_check_branch
          %1123 = sbr.rel (%p1121) target = $region64
        $region63: #{vgg16_forward.1} parent=11 // pred_region
          %s1125 = ssub.s32 12288, 12288
          %1126 = vsyncadd [#allocation15], %s1125
          %s1127 = sshll.u32 [#allocation16], 4
          %s1128 = int_to_ptr.vmem [resolvable:$true] %s1127
          %1133 = dma.hbm_to_vmem [thread:$0]  %s27, 12288, %s1128, [#allocation15], 128, 128, 8
        $region64: #{vgg16_forward.1} parent=11 // pred_fallthru
          _
        // Predicated region
        $region65: #{vgg16_forward.1} parent=11 // pred_check
          %p1134 = pneg %p426
        $region66: #{vgg16_forward.1} parent=11 // pred_check_branch
          %1136 = sbr.rel (%p1134) target = $region68
        $region67: #{vgg16_forward.1} parent=11 // pred_region
          _
        $region68: #{vgg16_forward.1} parent=11 // pred_fallthru
          _
        // Predicated region
        $region69: #{vgg16_forward.1} parent=11 // pred_check
          %p1137 = pneg %p447
        $region70: #{vgg16_forward.1} parent=11 // pred_check_branch
          %1139 = sbr.rel (%p1137) target = $region72
        $region71: #{vgg16_forward.1} parent=11 // pred_region
          %s1141 = ssub.s32 6144, 6144
          %1142 = vsyncadd [#allocation18], %s1141
          %s1143 = sshll.u32 [#allocation17], 4
          %s1144 = int_to_ptr.vmem [resolvable:$true] %s1143
          %1149 = dma.hbm_to_vmem [thread:$0]  %s31, 6144, %s1144, [#allocation18], 128, 128, 8
        $region72: #{vgg16_forward.1} parent=11 // pred_fallthru
          _
        // Predicated region
        $region73: #{vgg16_forward.1} parent=11 // pred_check
          %p1150 = pneg %p468
        $region74: #{vgg16_forward.1} parent=11 // pred_check_branch
          %1152 = sbr.rel (%p1150) target = $region76
        $region75: #{vgg16_forward.1} parent=11 // pred_region
          %s1154 = ssub.s32 128, 128
          %1155 = vsyncadd [#allocation18], %s1154
          %s1157 = sshll.u32 [#allocation19], 4
          %s1158 = int_to_ptr.vmem [resolvable:$true] %s1157
          %1160 = dma.hbm_to_vmem [thread:$0]  %s33, 128, %s1158, [#allocation18]
        $region76: #{vgg16_forward.1} parent=11 // pred_fallthru
          _
        // Predicated region
        $region77: #{vgg16_forward.1} parent=11 // pred_check
          %p1161 = pneg %p489
        $region78: #{vgg16_forward.1} parent=11 // pred_check_branch
          %1163 = sbr.rel (%p1161) target = $region80
        $region79: #{vgg16_forward.1} parent=11 // pred_region
          %s1165 = ssub.s32 12288, 12288
          %1166 = vsyncadd [#allocation21], %s1165
          %s1167 = sshll.u32 [#allocation20], 4
          %s1168 = int_to_ptr.vmem [resolvable:$true] %s1167
          %1173 = dma.hbm_to_vmem [thread:$0]  %s35, 12288, %s1168, [#allocation21], 128, 128, 8
        $region80: #{vgg16_forward.1} parent=11 // pred_fallthru
          _
        // Predicated region
        $region81: #{vgg16_forward.1} parent=11 // pred_check
          %p1174 = pneg %p510
        $region82: #{vgg16_forward.1} parent=11 // pred_check_branch
          %1176 = sbr.rel (%p1174) target = $region84
        $region83: #{vgg16_forward.1} parent=11 // pred_region
          %s1178 = ssub.s32 128, 128
          %1179 = vsyncadd [#allocation21], %s1178
          %s1181 = sshll.u32 [#allocation22], 4
          %s1182 = int_to_ptr.vmem [resolvable:$true] %s1181
          %1184 = dma.hbm_to_vmem [thread:$0]  %s37, 128, %s1182, [#allocation21]
        $region84: #{vgg16_forward.1} parent=11 // pred_fallthru
          _
        // Predicated region
        $region85: #{vgg16_forward.1} parent=11 // pred_check
          %p1185 = pneg %p531
        $region86: #{vgg16_forward.1} parent=11 // pred_check_branch
          %1187 = sbr.rel (%p1185) target = $region88
        $region87: #{vgg16_forward.1} parent=11 // pred_region
          %s1189 = ssub.s32 12288, 12288
          %1190 = vsyncadd [#allocation24], %s1189
          %s1191 = sshll.u32 [#allocation23], 4
          %s1192 = int_to_ptr.vmem [resolvable:$true] %s1191
          %1197 = dma.hbm_to_vmem [thread:$0]  %s39, 12288, %s1192, [#allocation24], 128, 128, 8
        $region88: #{vgg16_forward.1} parent=11 // pred_fallthru
          _
        // Predicated region
        $region89: #{vgg16_forward.1} parent=11 // pred_check
          %p1198 = pneg %p552
        $region90: #{vgg16_forward.1} parent=11 // pred_check_branch
          %1200 = sbr.rel (%p1198) target = $region92
        $region91: #{vgg16_forward.1} parent=11 // pred_region
          %s1202 = ssub.s32 128, 128
          %1203 = vsyncadd [#allocation24], %s1202
          %s1205 = sshll.u32 [#allocation25], 4
          %s1206 = int_to_ptr.vmem [resolvable:$true] %s1205
          %1208 = dma.hbm_to_vmem [thread:$0]  %s41, 128, %s1206, [#allocation24]
        $region92: #{vgg16_forward.1} parent=11 // pred_fallthru
          _
        // Predicated region
        $region93: #{vgg16_forward.1} parent=11 // pred_check
          %p1209 = pneg %p573
        $region94: #{vgg16_forward.1} parent=11 // pred_check_branch
          %1211 = sbr.rel (%p1209) target = $region96
        $region95: #{vgg16_forward.1} parent=11 // pred_region
          %s1213 = ssub.s32 3072, 3072
          %1214 = vsyncadd [#allocation27], %s1213
          %s1215 = sshll.u32 [#allocation26], 4
          %s1216 = int_to_ptr.vmem [resolvable:$true] %s1215
          %1221 = dma.hbm_to_vmem [thread:$0]  %s43, 3072, %s1216, [#allocation27], 64, 64, 4
        $region96: #{vgg16_forward.1} parent=11 // pred_fallthru
          _
        // Predicated region
        $region97: #{vgg16_forward.1} parent=11 // pred_check
          %p1222 = pneg %p594
        $region98: #{vgg16_forward.1} parent=11 // pred_check_branch
          %1224 = sbr.rel (%p1222) target = $region100
        $region99: #{vgg16_forward.1} parent=11 // pred_region
          %s1226 = ssub.s32 64, 64
          %1227 = vsyncadd [#allocation27], %s1226
          %s1229 = sshll.u32 [#allocation28], 4
          %s1230 = int_to_ptr.vmem [resolvable:$true] %s1229
          %1232 = dma.hbm_to_vmem [thread:$0]  %s45, 64, %s1230, [#allocation27]
        $region100: #{vgg16_forward.1} parent=11 // pred_fallthru
          _
        // Predicated region
        $region101: #{vgg16_forward.1} parent=11 // pred_check
          %p1233 = pneg %p615
        $region102: #{vgg16_forward.1} parent=11 // pred_check_branch
          %1235 = sbr.rel (%p1233) target = $region104
        $region103: #{vgg16_forward.1} parent=11 // pred_region
          %s1237 = ssub.s32 3072, 3072
          %1238 = vsyncadd [#allocation30], %s1237
          %s1239 = sshll.u32 [#allocation29], 4
          %s1240 = int_to_ptr.vmem [resolvable:$true] %s1239
          %1245 = dma.hbm_to_vmem [thread:$0]  %s47, 3072, %s1240, [#allocation30], 64, 64, 4
        $region104: #{vgg16_forward.1} parent=11 // pred_fallthru
          _
        // Predicated region
        $region105: #{vgg16_forward.1} parent=11 // pred_check
          %p1246 = pneg %p636
        $region106: #{vgg16_forward.1} parent=11 // pred_check_branch
          %1248 = sbr.rel (%p1246) target = $region108
        $region107: #{vgg16_forward.1} parent=11 // pred_region
          %s1250 = ssub.s32 64, 64
          %1251 = vsyncadd [#allocation30], %s1250
          %s1253 = sshll.u32 [#allocation31], 4
          %s1254 = int_to_ptr.vmem [resolvable:$true] %s1253
          %1256 = dma.hbm_to_vmem [thread:$0]  %s49, 64, %s1254, [#allocation30]
        $region108: #{vgg16_forward.1} parent=11 // pred_fallthru
          _
        // Predicated region
        $region109: #{vgg16_forward.1} parent=11 // pred_check
          %p1257 = pneg %p657
        $region110: #{vgg16_forward.1} parent=11 // pred_check_branch
          %1259 = sbr.rel (%p1257) target = $region112
        $region111: #{vgg16_forward.1} parent=11 // pred_region
          %s1261 = ssub.s32 3072, 3072
          %1262 = vsyncadd [#allocation33], %s1261
          %s1263 = sshll.u32 [#allocation32], 4
          %s1264 = int_to_ptr.vmem [resolvable:$true] %s1263
          %1269 = dma.hbm_to_vmem [thread:$0]  %s51, 3072, %s1264, [#allocation33], 64, 64, 4
        $region112: #{vgg16_forward.1} parent=11 // pred_fallthru
          _
        // Predicated region
        $region113: #{vgg16_forward.1} parent=11 // pred_check
          %p1270 = pneg %p678
        $region114: #{vgg16_forward.1} parent=11 // pred_check_branch
          %1272 = sbr.rel (%p1270) target = $region116
        $region115: #{vgg16_forward.1} parent=11 // pred_region
          %s1274 = ssub.s32 64, 64
          %1275 = vsyncadd [#allocation33], %s1274
          %s1277 = sshll.u32 [#allocation34], 4
          %s1278 = int_to_ptr.vmem [resolvable:$true] %s1277
          %1280 = dma.hbm_to_vmem [thread:$0]  %s53, 64, %s1278, [#allocation33]
        $region116: #{vgg16_forward.1} parent=11 // pred_fallthru
          _
        // Predicated region
        $region117: #{vgg16_forward.1} parent=11 // pred_check
          %p1281 = pneg %p699
        $region118: #{vgg16_forward.1} parent=11 // pred_check_branch
          %1283 = sbr.rel (%p1281) target = $region120
        $region119: #{vgg16_forward.1} parent=11 // pred_region
          _
        $region120: #{vgg16_forward.1} parent=11 // pred_fallthru
          _
        // Predicated region
        $region121: #{vgg16_forward.1} parent=11 // pred_check
          %p1284 = pneg %p720
        $region122: #{vgg16_forward.1} parent=11 // pred_check_branch
          %1286 = sbr.rel (%p1284) target = $region124
        $region123: #{vgg16_forward.1} parent=11 // pred_region
          _
        $region124: #{vgg16_forward.1} parent=11 // pred_fallthru
          _
        // Predicated region
        $region125: #{vgg16_forward.1} parent=11 // pred_check
          %p1287 = pneg %p741
        $region126: #{vgg16_forward.1} parent=11 // pred_check_branch
          %1289 = sbr.rel (%p1287) target = $region128
        $region127: #{vgg16_forward.1} parent=11 // pred_region
          _
        $region128: #{vgg16_forward.1} parent=11 // pred_fallthru
          _
        // Predicated region
        $region129: #{vgg16_forward.1} parent=11 // pred_check
          %p1290 = pneg %p762
        $region130: #{vgg16_forward.1} parent=11 // pred_check_branch
          %1292 = sbr.rel (%p1290) target = $region132
        $region131: #{vgg16_forward.1} parent=11 // pred_region
          %s1294 = ssub.s32 4096, 4096
          %1295 = vsyncadd [#allocation36], %s1294
          %s1296 = sshll.u32 [#allocation35], 4
          %s1297 = int_to_ptr.vmem [resolvable:$true] %s1296
          %1302 = dma.hbm_to_vmem [thread:$0]  %s61, 4096, %s1297, [#allocation36], 64, 64, 4
        $region132: #{vgg16_forward.1} parent=11 // pred_fallthru
          _
        // Predicated region
        $region133: #{vgg16_forward.1} parent=11 // pred_check
          %p1303 = pneg %p783
        $region134: #{vgg16_forward.1} parent=11 // pred_check_branch
          %1305 = sbr.rel (%p1303) target = $region136
        $region135: #{vgg16_forward.1} parent=11 // pred_region
          _
        $region136: #{vgg16_forward.1} parent=11 // pred_fallthru
          _
        // Predicated region
        $region137: #{vgg16_forward.1} parent=11 // pred_check
          %p1306 = pneg %p804
        $region138: #{vgg16_forward.1} parent=11 // pred_check_branch
          %1308 = sbr.rel (%p1306) target = $region140
        $region139: #{vgg16_forward.1} parent=11 // pred_region
          %s1310 = ssub.s32 4096, 4096
          %1311 = vsyncadd [#allocation36], %s1310
          %s1312 = sshll.u32 [#allocation37], 4
          %s1313 = int_to_ptr.vmem [resolvable:$true] %s1312
          %1318 = dma.hbm_to_vmem [thread:$0]  %s65, 4096, %s1313, [#allocation36], 64, 64, 4
        $region140: #{vgg16_forward.1} parent=11 // pred_fallthru
          _
        // Predicated region
        $region141: #{vgg16_forward.1} parent=11 // pred_check
          %p1319 = pneg %p825
        $region142: #{vgg16_forward.1} parent=11 // pred_check_branch
          %1321 = sbr.rel (%p1319) target = $region144
        $region143: #{vgg16_forward.1} parent=11 // pred_region
          _
        $region144: #{vgg16_forward.1} parent=11 // pred_fallthru
          _
        // Predicated region
        $region145: #{vgg16_forward.1} parent=11 // pred_check
          %p1322 = pneg %p846
        $region146: #{vgg16_forward.1} parent=11 // pred_check_branch
          %1324 = sbr.rel (%p1322) target = $region148
        $region147: #{vgg16_forward.1} parent=11 // pred_region
          %s1326 = ssub.s32 4096, 4096
          %1327 = vsyncadd [#allocation39], %s1326
          %s1328 = sshll.u32 [#allocation38], 4
          %s1329 = int_to_ptr.vmem [resolvable:$true] %s1328
          %1334 = dma.hbm_to_vmem [thread:$0]  %s69, 4096, %s1329, [#allocation39], 64, 64, 4
        $region148: #{vgg16_forward.1} parent=11 // pred_fallthru
          _
        // Predicated region
        $region149: #{vgg16_forward.1} parent=11 // pred_check
          %p1335 = pneg %p867
        $region150: #{vgg16_forward.1} parent=11 // pred_check_branch
          %1337 = sbr.rel (%p1335) target = $region152
        $region151: #{vgg16_forward.1} parent=11 // pred_region
          _
        $region152: #{vgg16_forward.1} parent=11 // pred_fallthru
          _
        // Predicated region
        $region153: #{vgg16_forward.1} parent=11 // pred_check
          %p1338 = pneg %p888
        $region154: #{vgg16_forward.1} parent=11 // pred_check_branch
          %1340 = sbr.rel (%p1338) target = $region156
        $region155: #{vgg16_forward.1} parent=11 // pred_region
          %s1342 = ssub.s32 2048, 2048
          %1343 = vsyncadd [#allocation39], %s1342
          %s1344 = sshll.u32 [#allocation40], 4
          %s1345 = int_to_ptr.vmem [resolvable:$true] %s1344
          %1350 = dma.hbm_to_vmem [thread:$0]  %s73, 2048, %s1345, [#allocation39], 64, 64, 4
        $region156: #{vgg16_forward.1} parent=11 // pred_fallthru
          _
        // Predicated region
        $region157: #{vgg16_forward.1} parent=11 // pred_check
          %p1351 = pneg %p909
        $region158: #{vgg16_forward.1} parent=11 // pred_check_branch
          %1353 = sbr.rel (%p1351) target = $region160
        $region159: #{vgg16_forward.1} parent=11 // pred_region
          _
        $region160: #{vgg16_forward.1} parent=11 // pred_fallthru
          _
        // Predicated region
        $region161: #{vgg16_forward.1} parent=11 // pred_check
          %p1354 = pneg %p930
        $region162: #{vgg16_forward.1} parent=11 // pred_check_branch
          %1356 = sbr.rel (%p1354) target = $region164
        $region163: #{vgg16_forward.1} parent=11 // pred_region
          %s1358 = ssub.s32 16, 16
          %1359 = vsyncadd [#allocation42], %s1358
          %s1361 = sshll.u32 [#allocation41], 4
          %s1362 = int_to_ptr.vmem [resolvable:$true] %s1361
          %1364 = dma.hbm_to_vmem [thread:$0]  %s77, 16, %s1362, [#allocation42]
        $region164: #{vgg16_forward.1} parent=11 // pred_fallthru
          _
        // Predicated region
        $region165: #{vgg16_forward.1} parent=11 // pred_check
          %p1365 = pneg %p951
        $region166: #{vgg16_forward.1} parent=11 // pred_check_branch
          %1367 = sbr.rel (%p1365) target = $region168
        $region167: #{vgg16_forward.1} parent=11 // pred_region
          _
        $region168: #{vgg16_forward.1} parent=11 // pred_fallthru
          _
        // Predicated region
        $region169: #{vgg16_forward.1} parent=11 // pred_check
          %p1368 = pneg %p972
        $region170: #{vgg16_forward.1} parent=11 // pred_check_branch
          %1370 = sbr.rel (%p1368) target = $region172
        $region171: #{vgg16_forward.1} parent=11 // pred_region
          %s1372 = ssub.s32 16, 16
          %1373 = vsyncadd [#allocation42], %s1372
          %s1375 = sshll.u32 [#allocation43], 4
          %s1376 = int_to_ptr.vmem [resolvable:$true] %s1375
          %1378 = dma.hbm_to_vmem [thread:$0]  %s81, 16, %s1376, [#allocation42]
        $region172: #{vgg16_forward.1} parent=11 // pred_fallthru
          _
      $region12: #{vgg16_forward.1} parent=5 // pred_fallthru
        _
      %p1379 = scmp.lt.s32.totalorder %s106, 2
      // Predicated region
      $region173: #{vgg16_forward.1} parent=5 // pred_check
        %p1380 = pneg %p1379
      $region174: #{vgg16_forward.1} parent=5 // pred_check_branch
        %1382 = sbr.rel (%p1380) target = $region176
      $region175: #{vgg16_forward.1} parent=5 // pred_region
        // Predicated region
        $region177: #{vgg16_forward.1} parent=175 // pred_check
          %p1383 = pneg %p126
        $region178: #{vgg16_forward.1} parent=175 // pred_check_branch
          %1385 = sbr.rel (%p1383) target = $region180
        $region179: #{vgg16_forward.1} parent=175 // pred_region
          %p1386 = scmp.lt.s32.totalorder %s106, 1
          %s1387 = scalar_select %p1386, %s106, 1
          %s1388 = smul.addr %s1387, 4
          %s1389 = smul.addr %s1388, 8
          %s1390 = scalar_lea.vmem %s1, %s1389
        $region180: #{vgg16_forward.1} parent=175 // pred_fallthru
          _
      $region176: #{vgg16_forward.1} parent=5 // pred_fallthru
        _
      %p1391 = scmp.le.s32.totalorder 1, %s106
      %p1392 = scmp.lt.s32.totalorder %s106, 3
      %p1393 = pnand %p1391, %p1392
      %p1394 = pneg %p1393
      // Predicated region
      $region181: #{vgg16_forward.1} parent=5 // pred_check
        _
      $region182: #{vgg16_forward.1} parent=5 // pred_check_branch
        %1396 = sbr.rel (%p1393) target = $region184
      $region183: #{vgg16_forward.1} parent=5 // pred_region
        %s1397 = ssub.s32 %s106, 1
        // Predicated region
        $region185: #{vgg16_forward.1} parent=183 // pred_check
          %p1398 = pneg %p216
        $region186: #{vgg16_forward.1} parent=183 // pred_check_branch
          %1400 = sbr.rel (%p1398) target = $region188
        $region187: #{vgg16_forward.1} parent=183 // pred_region
          %1401 = dma.done [#allocation3], 128
        $region188: #{vgg16_forward.1} parent=183 // pred_fallthru
          _
        // Predicated region
        $region189: #{vgg16_forward.1} parent=183 // pred_check
          %p1402 = pneg %p237
        $region190: #{vgg16_forward.1} parent=183 // pred_check_branch
          %1404 = sbr.rel (%p1402) target = $region192
        $region191: #{vgg16_forward.1} parent=183 // pred_region
          %1405 = dma.done [#allocation6], 6144
        $region192: #{vgg16_forward.1} parent=183 // pred_fallthru
          _
        // Predicated region
        $region193: #{vgg16_forward.1} parent=183 // pred_check
          %p1406 = pneg %p258
        $region194: #{vgg16_forward.1} parent=183 // pred_check_branch
          %1408 = sbr.rel (%p1406) target = $region196
        $region195: #{vgg16_forward.1} parent=183 // pred_region
          %1409 = dma.done [#allocation6], 128
        $region196: #{vgg16_forward.1} parent=183 // pred_fallthru
          _
        // Predicated region
        $region197: #{vgg16_forward.1} parent=183 // pred_check
          %p1410 = pneg %p279
        $region198: #{vgg16_forward.1} parent=183 // pred_check_branch
          %1412 = sbr.rel (%p1410) target = $region200
        $region199: #{vgg16_forward.1} parent=183 // pred_region
          %1413 = dma.done [#allocation9], 12288
        $region200: #{vgg16_forward.1} parent=183 // pred_fallthru
          _
        // Predicated region
        $region201: #{vgg16_forward.1} parent=183 // pred_check
          %p1414 = pneg %p300
        $region202: #{vgg16_forward.1} parent=183 // pred_check_branch
          %1416 = sbr.rel (%p1414) target = $region204
        $region203: #{vgg16_forward.1} parent=183 // pred_region
          %1417 = dma.done [#allocation9], 128
        $region204: #{vgg16_forward.1} parent=183 // pred_fallthru
          _
        // Predicated region
        $region205: #{vgg16_forward.1} parent=183 // pred_check
          %p1418 = pneg %p321
        $region206: #{vgg16_forward.1} parent=183 // pred_check_branch
          %1420 = sbr.rel (%p1418) target = $region208
        $region207: #{vgg16_forward.1} parent=183 // pred_region
          %1421 = dma.done [#allocation12], 6144
        $region208: #{vgg16_forward.1} parent=183 // pred_fallthru
          _
        // Predicated region
        $region209: #{vgg16_forward.1} parent=183 // pred_check
          %p1422 = pneg %p342
        $region210: #{vgg16_forward.1} parent=183 // pred_check_branch
          %1424 = sbr.rel (%p1422) target = $region212
        $region211: #{vgg16_forward.1} parent=183 // pred_region
          %1425 = dma.done [#allocation12], 128
        $region212: #{vgg16_forward.1} parent=183 // pred_fallthru
          _
        // Predicated region
        $region213: #{vgg16_forward.1} parent=183 // pred_check
          %p1426 = pneg %p363
        $region214: #{vgg16_forward.1} parent=183 // pred_check_branch
          %1428 = sbr.rel (%p1426) target = $region216
        $region215: #{vgg16_forward.1} parent=183 // pred_region
          %1429 = dma.done [#allocation15], 12288
        $region216: #{vgg16_forward.1} parent=183 // pred_fallthru
          _
        // Predicated region
        $region217: #{vgg16_forward.1} parent=183 // pred_check
          %p1430 = pneg %p405
        $region218: #{vgg16_forward.1} parent=183 // pred_check_branch
          %1432 = sbr.rel (%p1430) target = $region220
        $region219: #{vgg16_forward.1} parent=183 // pred_region
          %1433 = dma.done [#allocation15], 12288
        $region220: #{vgg16_forward.1} parent=183 // pred_fallthru
          _
        // Predicated region
        $region221: #{vgg16_forward.1} parent=183 // pred_check
          %p1434 = pneg %p447
        $region222: #{vgg16_forward.1} parent=183 // pred_check_branch
          %1436 = sbr.rel (%p1434) target = $region224
        $region223: #{vgg16_forward.1} parent=183 // pred_region
          %1437 = dma.done [#allocation18], 6144
        $region224: #{vgg16_forward.1} parent=183 // pred_fallthru
          _
        // Predicated region
        $region225: #{vgg16_forward.1} parent=183 // pred_check
          %p1438 = pneg %p468
        $region226: #{vgg16_forward.1} parent=183 // pred_check_branch
          %1440 = sbr.rel (%p1438) target = $region228
        $region227: #{vgg16_forward.1} parent=183 // pred_region
          %1441 = dma.done [#allocation18], 128
        $region228: #{vgg16_forward.1} parent=183 // pred_fallthru
          _
        // Predicated region
        $region229: #{vgg16_forward.1} parent=183 // pred_check
          %p1442 = pneg %p489
        $region230: #{vgg16_forward.1} parent=183 // pred_check_branch
          %1444 = sbr.rel (%p1442) target = $region232
        $region231: #{vgg16_forward.1} parent=183 // pred_region
          %1445 = dma.done [#allocation21], 12288
        $region232: #{vgg16_forward.1} parent=183 // pred_fallthru
          _
        // Predicated region
        $region233: #{vgg16_forward.1} parent=183 // pred_check
          %p1446 = pneg %p510
        $region234: #{vgg16_forward.1} parent=183 // pred_check_branch
          %1448 = sbr.rel (%p1446) target = $region236
        $region235: #{vgg16_forward.1} parent=183 // pred_region
          %1449 = dma.done [#allocation21], 128
        $region236: #{vgg16_forward.1} parent=183 // pred_fallthru
          _
        // Predicated region
        $region237: #{vgg16_forward.1} parent=183 // pred_check
          %p1450 = pneg %p531
        $region238: #{vgg16_forward.1} parent=183 // pred_check_branch
          %1452 = sbr.rel (%p1450) target = $region240
        $region239: #{vgg16_forward.1} parent=183 // pred_region
          %1453 = dma.done [#allocation24], 12288
        $region240: #{vgg16_forward.1} parent=183 // pred_fallthru
          _
        // Predicated region
        $region241: #{vgg16_forward.1} parent=183 // pred_check
          %p1454 = pneg %p552
        $region242: #{vgg16_forward.1} parent=183 // pred_check_branch
          %1456 = sbr.rel (%p1454) target = $region244
        $region243: #{vgg16_forward.1} parent=183 // pred_region
          %1457 = dma.done [#allocation24], 128
        $region244: #{vgg16_forward.1} parent=183 // pred_fallthru
          _
        // Predicated region
        $region245: #{vgg16_forward.1} parent=183 // pred_check
          %p1458 = pneg %p573
        $region246: #{vgg16_forward.1} parent=183 // pred_check_branch
          %1460 = sbr.rel (%p1458) target = $region248
        $region247: #{vgg16_forward.1} parent=183 // pred_region
          %1461 = dma.done [#allocation27], 3072
        $region248: #{vgg16_forward.1} parent=183 // pred_fallthru
          _
        // Predicated region
        $region249: #{vgg16_forward.1} parent=183 // pred_check
          %p1462 = pneg %p594
        $region250: #{vgg16_forward.1} parent=183 // pred_check_branch
          %1464 = sbr.rel (%p1462) target = $region252
        $region251: #{vgg16_forward.1} parent=183 // pred_region
          %1465 = dma.done [#allocation27], 64
        $region252: #{vgg16_forward.1} parent=183 // pred_fallthru
          _
        // Predicated region
        $region253: #{vgg16_forward.1} parent=183 // pred_check
          %p1466 = pneg %p615
        $region254: #{vgg16_forward.1} parent=183 // pred_check_branch
          %1468 = sbr.rel (%p1466) target = $region256
        $region255: #{vgg16_forward.1} parent=183 // pred_region
          %1469 = dma.done [#allocation30], 3072
        $region256: #{vgg16_forward.1} parent=183 // pred_fallthru
          _
        // Predicated region
        $region257: #{vgg16_forward.1} parent=183 // pred_check
          %p1470 = pneg %p636
        $region258: #{vgg16_forward.1} parent=183 // pred_check_branch
          %1472 = sbr.rel (%p1470) target = $region260
        $region259: #{vgg16_forward.1} parent=183 // pred_region
          %1473 = dma.done [#allocation30], 64
        $region260: #{vgg16_forward.1} parent=183 // pred_fallthru
          _
        // Predicated region
        $region261: #{vgg16_forward.1} parent=183 // pred_check
          %p1474 = pneg %p657
        $region262: #{vgg16_forward.1} parent=183 // pred_check_branch
          %1476 = sbr.rel (%p1474) target = $region264
        $region263: #{vgg16_forward.1} parent=183 // pred_region
          %1477 = dma.done [#allocation33], 3072
        $region264: #{vgg16_forward.1} parent=183 // pred_fallthru
          _
        // Predicated region
        $region265: #{vgg16_forward.1} parent=183 // pred_check
          %p1478 = pneg %p678
        $region266: #{vgg16_forward.1} parent=183 // pred_check_branch
          %1480 = sbr.rel (%p1478) target = $region268
        $region267: #{vgg16_forward.1} parent=183 // pred_region
          %1481 = dma.done [#allocation33], 64
        $region268: #{vgg16_forward.1} parent=183 // pred_fallthru
          _
        // Predicated region
        $region269: #{vgg16_forward.1} parent=183 // pred_check
          %p1482 = pneg %p762
        $region270: #{vgg16_forward.1} parent=183 // pred_check_branch
          %1484 = sbr.rel (%p1482) target = $region272
        $region271: #{vgg16_forward.1} parent=183 // pred_region
          %1485 = dma.done [#allocation36], 4096
        $region272: #{vgg16_forward.1} parent=183 // pred_fallthru
          _
        // Predicated region
        $region273: #{vgg16_forward.1} parent=183 // pred_check
          %p1486 = pneg %p804
        $region274: #{vgg16_forward.1} parent=183 // pred_check_branch
          %1488 = sbr.rel (%p1486) target = $region276
        $region275: #{vgg16_forward.1} parent=183 // pred_region
          %1489 = dma.done [#allocation36], 4096
        $region276: #{vgg16_forward.1} parent=183 // pred_fallthru
          _
        // Predicated region
        $region277: #{vgg16_forward.1} parent=183 // pred_check
          %p1490 = pneg %p846
        $region278: #{vgg16_forward.1} parent=183 // pred_check_branch
          %1492 = sbr.rel (%p1490) target = $region280
        $region279: #{vgg16_forward.1} parent=183 // pred_region
          %1493 = dma.done [#allocation39], 4096
        $region280: #{vgg16_forward.1} parent=183 // pred_fallthru
          _
        // Predicated region
        $region281: #{vgg16_forward.1} parent=183 // pred_check
          %p1494 = pneg %p888
        $region282: #{vgg16_forward.1} parent=183 // pred_check_branch
          %1496 = sbr.rel (%p1494) target = $region284
        $region283: #{vgg16_forward.1} parent=183 // pred_region
          %1497 = dma.done [#allocation39], 2048
        $region284: #{vgg16_forward.1} parent=183 // pred_fallthru
          _
        // Predicated region
        $region285: #{vgg16_forward.1} parent=183 // pred_check
          %p1498 = pneg %p930
        $region286: #{vgg16_forward.1} parent=183 // pred_check_branch
          %1500 = sbr.rel (%p1498) target = $region288
        $region287: #{vgg16_forward.1} parent=183 // pred_region
          %1501 = dma.done [#allocation42], 16
        $region288: #{vgg16_forward.1} parent=183 // pred_fallthru
          _
        // Predicated region
        $region289: #{vgg16_forward.1} parent=183 // pred_check
          %p1502 = pneg %p972
        $region290: #{vgg16_forward.1} parent=183 // pred_check_branch
          %1504 = sbr.rel (%p1502) target = $region292
        $region291: #{vgg16_forward.1} parent=183 // pred_region
          %1505 = dma.done [#allocation42], 16
        $region292: #{vgg16_forward.1} parent=183 // pred_fallthru
          _
        %p1506 = scmp.lt.s32.totalorder %s111, 1
        %s1507 = scalar_select %p1506, %s111, 1
        %s1508 = smul.addr %s1507, 4
        %s1509 = smul.addr %s1508, 8
        %s1510 = scalar_lea.vmem %s1, %s1509
        %p1511 = pneg %p132
        %p1512 = pneg %p129
        %p1513 = pneg %p153
        %p1514 = pneg %p150
        %p1515 = pneg %p174
        %p1516 = pneg %p171
        %p1517 = pneg %p195
        %p1518 = pneg %p192
        %p1519 = pneg %p216
        %p1520 = pneg %p213
        %p1521 = pneg %p237
        %p1522 = pneg %p234
        %p1523 = pneg %p258
        %p1524 = pneg %p255
        %p1525 = pneg %p279
        %p1526 = pneg %p276
        %p1527 = pneg %p300
        %p1528 = pneg %p297
        %p1529 = pneg %p321
        %p1530 = pneg %p318
        %p1531 = pneg %p342
        %p1532 = pneg %p339
        %p1533 = pneg %p363
        %p1534 = pneg %p360
        %p1535 = pneg %p384
        %p1536 = pneg %p381
        %p1537 = pneg %p405
        %p1538 = pneg %p402
        %p1539 = pneg %p426
        %p1540 = pneg %p423
        %p1541 = pneg %p447
        %p1542 = pneg %p444
        %p1543 = pneg %p468
        %p1544 = pneg %p465
        %p1545 = pneg %p489
        %p1546 = pneg %p486
        %p1547 = pneg %p510
        %p1548 = pneg %p507
        %p1549 = pneg %p531
        %p1550 = pneg %p528
        %p1551 = pneg %p552
        %p1552 = pneg %p549
        %p1553 = pneg %p573
        %p1554 = pneg %p570
        %p1555 = pneg %p594
        %p1556 = pneg %p591
        %p1557 = pneg %p615
        %p1558 = pneg %p612
        %p1559 = pneg %p636
        %p1560 = pneg %p633
        %p1561 = pneg %p657
        %p1562 = pneg %p654
        %p1563 = pneg %p678
        %p1564 = pneg %p675
        %p1565 = pneg %p699
        %p1566 = pneg %p696
        %p1567 = pneg %p720
        %p1568 = pneg %p717
        %p1569 = pneg %p741
        %p1570 = pneg %p738
        %p1571 = pneg %p762
        %p1572 = pneg %p759
        %p1573 = pneg %p783
        %p1574 = pneg %p780
        %p1575 = pneg %p804
        %p1576 = pneg %p801
        %p1577 = pneg %p825
        %p1578 = pneg %p822
        %p1579 = pneg %p846
        %p1580 = pneg %p843
        %p1581 = pneg %p867
        %p1582 = pneg %p864
        %p1583 = pneg %p888
        %p1584 = pneg %p885
        %p1585 = pneg %p909
        %p1586 = pneg %p906
        %p1587 = pneg %p930
        %p1588 = pneg %p927
        %p1589 = pneg %p951
        %p1590 = pneg %p948
        %p1591 = pneg %p972
        %p1592 = pneg %p969
        %p1593 = pneg %p998
        %p1594 = pneg %p995
        %s1595 = sand.u32 %s985, 1
        %s1596 = scalar_lea.sflag [#allocation4], %s1595
        %s1597 = sand.u32 %s985, 1
        %s1598 = scalar_lea.vmem [#allocation44], %s1597
        %p1599 = scmp.lt.s32.totalorder %s111, 1
        %s1600 = scalar_select %p1599, %s111, 1
        %s1601 = smul.addr %s1600, 4
        %s1602 = smul.addr %s1601, 8
        %s1603 = scalar_lea.vmem %s1, %s1602
        %v1605 = vld [vmem:[%s1603] sm:$0xff]
        %v1606 = vld [vmem:[%s1603 + $0x8] sm:$0xff]
        %v1607 = vld [vmem:[%s1603 + $0x10] sm:$0xff]
        %v1608 = vld [vmem:[%s1603 + $0x18] sm:$0xff]
        %vm1613 = vcmask 1040384
        %v1614 = vrot.slane %v1605, 7
        %v1615 = vrot.slane %v1606, 7
        %v1616 = vsel %vm1613, %v1614, %v1615
        %v1617 = vrot.slane %v1607, 7
        %v1618 = vsel %vm1613, %v1615, %v1617
        %v1619 = vrot.slane %v1608, 7
        %v1620 = vsel %vm1613, %v1617, %v1619
        %v1625 = vsel %vm1613, 0.0, %v1614
        %vm1626 = vcmask 1046528
        %v1627 = vrot.slane %v1605, 1
        %v1628 = vrot.slane %v1606, 1
        %v1629 = vsel %vm1626, %v1627, %v1628
        %v1630 = vrot.slane %v1607, 1
        %v1631 = vsel %vm1626, %v1628, %v1630
        %v1632 = vrot.slane %v1608, 1
        %v1633 = vsel %vm1626, %v1630, %v1632
        %v1638 = vsel %vm1626, %v1632, 0.0
        %v1639 = vpack.c.bf16 %v1616, %v1625
        %v1640 = vpack.c.bf16 %v1606, %v1605
        %v1641 = vpack.c.bf16 %v1631, %v1629
        %v1642 = vpack.c.bf16 %v1620, %v1618
        %v1643 = vpack.c.bf16 %v1608, %v1607
        %v1644 = vpack.c.bf16 %v1638, %v1633
        %v1645 = vld [vmem:[%s3] sm:$0xff]
        %v1646 = vld [vmem:[%s3 + $0x8] sm:$0xff]
        %v1647 = vld [vmem:[%s3 + $0x10] sm:$0xff]
        %v1648 = vld [vmem:[%s3 + $0x18] sm:$0xff]
        %v1649 = vld [vmem:[%s3 + $0x20] sm:$0xff]
        %v1650 = vld [vmem:[%s3 + $0x28] sm:$0xff]
        %v1651 = vld [vmem:[%s3 + $0x30] sm:$0xff]
        %v1652 = vld [vmem:[%s3 + $0x38] sm:$0xff]
        %v1653 = vld [vmem:[%s3 + $0x40] sm:$0xff]
        %v1654 = vld [vmem:[%s3 + $0x48] sm:$0xff]
        %v1655 = vld [vmem:[%s3 + $0x50] sm:$0xff]
        %v1656 = vld [vmem:[%s3 + $0x58] sm:$0xff]
        %v1657 = vld [vmem:[%s3 + $0x60] sm:$0xff]
        %v1658 = vld [vmem:[%s3 + $0x68] sm:$0xff]
        %v1659 = vld [vmem:[%s3 + $0x70] sm:$0xff]
        %v1660 = vld [vmem:[%s3 + $0x78] sm:$0xff]
        %v1661 = vld [vmem:[%s3 + $0x80] sm:$0xff]
        %v1662 = vld [vmem:[%s3 + $0x88] sm:$0xff]
        %v1663 = vld [vmem:[%s3 + $0x90] sm:$0xff]
        %v1664 = vld [vmem:[%s3 + $0x98] sm:$0xff]
        %v1665 = vld [vmem:[%s3 + $0xa0] sm:$0xff]
        %v1666 = vld [vmem:[%s3 + $0xa8] sm:$0xff]
        %v1667 = vld [vmem:[%s3 + $0xb0] sm:$0xff]
        %v1668 = vld [vmem:[%s3 + $0xb8] sm:$0xff]
        %v1669 = vld [vmem:[%s3 + $0xc0] sm:$0xff]
        %v1670 = vld [vmem:[%s3 + $0xc8] sm:$0xff]
        %v1671 = vld [vmem:[%s3 + $0xd0] sm:$0xff]
        %v1672 = vld [vmem:[%s3 + $0xd8] sm:$0xff]
        %v1673 = vld [vmem:[%s3 + $0xe0] sm:$0xff]
        %v1674 = vld [vmem:[%s3 + $0xe8] sm:$0xff]
        %v1675 = vld [vmem:[%s3 + $0xf0] sm:$0xff]
        %v1676 = vld [vmem:[%s3 + $0xf8] sm:$0xff]
        %v1677 = vld [vmem:[%s3 + $0x100] sm:$0xff]
        %v1678 = vld [vmem:[%s3 + $0x108] sm:$0xff]
        %v1679 = vld [vmem:[%s3 + $0x110] sm:$0xff]
        %v1680 = vld [vmem:[%s3 + $0x118] sm:$0xff]
        %v1681 = vld [vmem:[%s3 + $0x120] sm:$0xff]
        %v1682 = vld [vmem:[%s3 + $0x128] sm:$0xff]
        %v1683 = vld [vmem:[%s3 + $0x130] sm:$0xff]
        %v1684 = vld [vmem:[%s3 + $0x138] sm:$0xff]
        %v1685 = vld [vmem:[%s3 + $0x140] sm:$0xff]
        %v1686 = vld [vmem:[%s3 + $0x148] sm:$0xff]
        %v1687 = vld [vmem:[%s3 + $0x150] sm:$0xff]
        %v1688 = vld [vmem:[%s3 + $0x158] sm:$0xff]
        %v1689 = vld [vmem:[%s3 + $0x160] sm:$0xff]
        %v1690 = vld [vmem:[%s3 + $0x168] sm:$0xff]
        %v1691 = vld [vmem:[%s3 + $0x170] sm:$0xff]
        %v1692 = vld [vmem:[%s3 + $0x178] sm:$0xff]
        %v1693 = vld [vmem:[%s5] ss:$4 sm:$0x3]
        %v1695 = vlaneseq
        %v1696 = vshrl.u32 %v1695, 7
        %v1697 = vsub.s32 0, %v1696
        %v1698 = vrot.slane %v1693, %v1697
        %v1699 = vlaneseq
        %v1700 = vshrl.u32 %v1699, 7
        %v1701 = vsub.s32 1, %v1700
        %v1702 = vrot.slane %v1693, %v1701
        %v1753 = vunpack.c.l.b16 %v1645
        %v1754 = vunpack.c.h.b16 %v1645
        %v1755 = vunpack.c.l.b16 %v1646
        %v1756 = vunpack.c.h.b16 %v1646
        %v1757 = vunpack.c.l.b16 %v1647
        %v1758 = vunpack.c.h.b16 %v1647
        %v1759 = vunpack.c.l.b16 %v1648
        %v1760 = vunpack.c.h.b16 %v1648
        %v1761 = vunpack.c.l.b16 %v1649
        %v1762 = vunpack.c.h.b16 %v1649
        %v1763 = vunpack.c.l.b16 %v1650
        %v1764 = vunpack.c.h.b16 %v1650
        %v1765 = vunpack.c.l.b16 %v1651
        %v1766 = vunpack.c.h.b16 %v1651
        %v1767 = vunpack.c.l.b16 %v1652
        %v1768 = vunpack.c.h.b16 %v1652
        %v1769 = vunpack.c.l.b16 %v1653
        %v1770 = vunpack.c.h.b16 %v1653
        %v1771 = vunpack.c.l.b16 %v1654
        %v1772 = vunpack.c.h.b16 %v1654
        %v1773 = vunpack.c.l.b16 %v1655
        %v1774 = vunpack.c.h.b16 %v1655
        %v1775 = vunpack.c.l.b16 %v1656
        %v1776 = vunpack.c.h.b16 %v1656
        %v1777 = vunpack.c.l.b16 %v1657
        %v1778 = vunpack.c.h.b16 %v1657
        %v1779 = vunpack.c.l.b16 %v1658
        %v1780 = vunpack.c.h.b16 %v1658
        %v1781 = vunpack.c.l.b16 %v1659
        %v1782 = vunpack.c.h.b16 %v1659
        %v1783 = vunpack.c.l.b16 %v1660
        %v1784 = vunpack.c.h.b16 %v1660
        %v1785 = vunpack.c.l.b16 %v1661
        %v1786 = vunpack.c.h.b16 %v1661
        %v1787 = vunpack.c.l.b16 %v1662
        %v1788 = vunpack.c.h.b16 %v1662
        %v1789 = vunpack.c.l.b16 %v1663
        %v1790 = vunpack.c.h.b16 %v1663
        %v1791 = vunpack.c.l.b16 %v1664
        %v1792 = vunpack.c.h.b16 %v1664
        %v1793 = vunpack.c.l.b16 %v1665
        %v1794 = vunpack.c.h.b16 %v1665
        %v1795 = vunpack.c.l.b16 %v1666
        %v1796 = vunpack.c.h.b16 %v1666
        %v1797 = vunpack.c.l.b16 %v1667
        %v1798 = vunpack.c.h.b16 %v1667
        %v1799 = vunpack.c.l.b16 %v1668
        %v1800 = vunpack.c.h.b16 %v1668
        %v1801 = vunpack.c.l.b16 %v1669
        %v1802 = vunpack.c.h.b16 %v1669
        %v1803 = vunpack.c.l.b16 %v1670
        %v1804 = vunpack.c.h.b16 %v1670
        %v1805 = vunpack.c.l.b16 %v1671
        %v1806 = vunpack.c.h.b16 %v1671
        %v1807 = vunpack.c.l.b16 %v1672
        %v1808 = vunpack.c.h.b16 %v1672
        %v1809 = vunpack.c.l.b16 %v1673
        %v1810 = vunpack.c.h.b16 %v1673
        %v1811 = vunpack.c.l.b16 %v1674
        %v1812 = vunpack.c.h.b16 %v1674
        %v1813 = vunpack.c.l.b16 %v1675
        %v1814 = vunpack.c.h.b16 %v1675
        %v1815 = vunpack.c.l.b16 %v1676
        %v1816 = vunpack.c.h.b16 %v1676
        %v1817 = vunpack.c.l.b16 %v1677
        %v1818 = vunpack.c.h.b16 %v1677
        %v1819 = vunpack.c.l.b16 %v1678
        %v1820 = vunpack.c.h.b16 %v1678
        %v1821 = vunpack.c.l.b16 %v1679
        %v1822 = vunpack.c.h.b16 %v1679
        %v1823 = vunpack.c.l.b16 %v1680
        %v1824 = vunpack.c.h.b16 %v1680
        %v1825 = vunpack.c.l.b16 %v1681
        %v1826 = vunpack.c.h.b16 %v1681
        %v1827 = vunpack.c.l.b16 %v1682
        %v1828 = vunpack.c.h.b16 %v1682
        %v1829 = vunpack.c.l.b16 %v1683
        %v1830 = vunpack.c.h.b16 %v1683
        %v1831 = vunpack.c.l.b16 %v1684
        %v1832 = vunpack.c.h.b16 %v1684
        %v1833 = vunpack.c.l.b16 %v1685
        %v1834 = vunpack.c.h.b16 %v1685
        %v1835 = vunpack.c.l.b16 %v1686
        %v1836 = vunpack.c.h.b16 %v1686
        %v1837 = vunpack.c.l.b16 %v1687
        %v1838 = vunpack.c.h.b16 %v1687
        %v1839 = vunpack.c.l.b16 %v1688
        %v1840 = vunpack.c.h.b16 %v1688
        %v1841 = vunpack.c.l.b16 %v1689
        %v1842 = vunpack.c.h.b16 %v1689
        %v1843 = vunpack.c.l.b16 %v1690
        %v1844 = vunpack.c.h.b16 %v1690
        %v1845 = vunpack.c.l.b16 %v1691
        %v1846 = vunpack.c.h.b16 %v1691
        %v1847 = vunpack.c.l.b16 %v1692
        %v1848 = vunpack.c.h.b16 %v1692
        %v1849 = vpack.c.b16 %v1755, %v1753
        %v1850 = vpack.c.b16 %v1756, %v1754
        %v1851 = vpack.c.b16 %v1759, %v1757
        %v1852 = vpack.c.b16 %v1760, %v1758
        %v1853 = vpack.c.b16 %v1763, %v1761
        %v1854 = vpack.c.b16 %v1764, %v1762
        %v1855 = vpack.c.b16 %v1767, %v1765
        %v1856 = vpack.c.b16 %v1768, %v1766
        %v1857 = vpack.c.b16 %v1771, %v1769
        %v1858 = vpack.c.b16 %v1772, %v1770
        %v1859 = vpack.c.b16 %v1775, %v1773
        %v1860 = vpack.c.b16 %v1776, %v1774
        %v1861 = vpack.c.b16 %v1779, %v1777
        %v1862 = vpack.c.b16 %v1780, %v1778
        %v1863 = vpack.c.b16 %v1783, %v1781
        %v1864 = vpack.c.b16 %v1784, %v1782
        %v1865 = vpack.c.b16 %v1787, %v1785
        %v1866 = vpack.c.b16 %v1788, %v1786
        %v1867 = vpack.c.b16 %v1791, %v1789
        %v1868 = vpack.c.b16 %v1792, %v1790
        %v1869 = vpack.c.b16 %v1795, %v1793
        %v1870 = vpack.c.b16 %v1796, %v1794
        %v1871 = vpack.c.b16 %v1799, %v1797
        %v1872 = vpack.c.b16 %v1800, %v1798
        %v1873 = vpack.c.b16 %v1803, %v1801
        %v1874 = vpack.c.b16 %v1804, %v1802
        %v1875 = vpack.c.b16 %v1807, %v1805
        %v1876 = vpack.c.b16 %v1808, %v1806
        %v1877 = vpack.c.b16 %v1811, %v1809
        %v1878 = vpack.c.b16 %v1812, %v1810
        %v1879 = vpack.c.b16 %v1815, %v1813
        %v1880 = vpack.c.b16 %v1816, %v1814
        %v1881 = vpack.c.b16 %v1819, %v1817
        %v1882 = vpack.c.b16 %v1820, %v1818
        %v1883 = vpack.c.b16 %v1823, %v1821
        %v1884 = vpack.c.b16 %v1824, %v1822
        %v1885 = vpack.c.b16 %v1827, %v1825
        %v1886 = vpack.c.b16 %v1828, %v1826
        %v1887 = vpack.c.b16 %v1831, %v1829
        %v1888 = vpack.c.b16 %v1832, %v1830
        %v1889 = vpack.c.b16 %v1835, %v1833
        %v1890 = vpack.c.b16 %v1836, %v1834
        %v1891 = vpack.c.b16 %v1839, %v1837
        %v1892 = vpack.c.b16 %v1840, %v1838
        %v1893 = vpack.c.b16 %v1843, %v1841
        %v1894 = vpack.c.b16 %v1844, %v1842
        %v1895 = vpack.c.b16 %v1847, %v1845
        %v1896 = vpack.c.b16 %v1848, %v1846
        %1945 = vmatprep.subr.bf16.mxu0 %v1850
        %1946 = vmatpush1.bf16.msra.mxu0 %v1849
        %1947 = vmatprep.subr.bf16.mxu0 %v1852
        %1948 = vmatpush1.bf16.msra.mxu0 %v1851
        %1949 = vmatprep.subr.bf16.mxu0 %v1854
        %1950 = vmatpush1.bf16.msra.mxu0 %v1853
        %1951 = vmatprep.subr.bf16.mxu0 %v1856
        %1952 = vmatpush1.bf16.msra.mxu0 %v1855
        %1953 = vmatprep.subr.bf16.mxu0 %v1858
        %1954 = vmatpush1.bf16.msra.mxu0 %v1857
        %1955 = vmatprep.subr.bf16.mxu0 %v1860
        %1956 = vmatpush1.bf16.msra.mxu0 %v1859
        %1957 = vmatprep.subr.bf16.mxu0 %v1862
        %1958 = vmatpush1.bf16.msra.mxu0 %v1861
        %1959 = vmatprep.subr.bf16.mxu0 %v1864
        %1960 = vmatpush1.bf16.msra.mxu0 %v1863
        %1961 = vmatprep.subr.bf16.mxu0 %v1866
        %1962 = vmatpush1.bf16.msra.mxu0 %v1865
        %1963 = vmatprep.subr.bf16.mxu0 %v1868
        %1964 = vmatpush1.bf16.msra.mxu0 %v1867
        %1965 = vmatprep.subr.bf16.mxu0 %v1870
        %1966 = vmatpush1.bf16.msra.mxu0 %v1869
        %1967 = vmatprep.subr.bf16.mxu0 %v1872
        %1968 = vmatpush1.bf16.msra.mxu0 %v1871
        %1969 = vmatprep.subr.bf16.mxu0 %v1874
        %1970 = vmatpush1.bf16.msra.mxu0 %v1873
        %1971 = vmatprep.subr.bf16.mxu0 %v1876
        %1972 = vmatpush1.bf16.msra.mxu0 %v1875
        %1973 = vmatprep.subr.bf16.mxu0 %v1878
        %1974 = vmatpush1.bf16.msra.mxu0 %v1877
        %1975 = vmatprep.subr.bf16.mxu0 %v1880
        %1976 = vmatpush1.bf16.msra.mxu0 %v1879
        %1977 = vmatprep.mubr.bf16.mxu0 %v1640
        %1978 = vmatmul.mubr.bf16.gmra.mrb[0].mxu0 %v1639
        %v1979 = vpop.f32.mrb[0].mxu0
        %v1980 = vadd.f32 %v1698, %v1979
        %v1981 = vpop.f32.mrb[0].mxu0
        %v1982 = vadd.f32 %v1702, %v1981
        %v1983 = vpop.f32.mrb[0].mxu0
        %v1984 = vadd.f32 %v1698, %v1983
        %v1985 = vpop.f32.mrb[0].mxu0
        %v1986 = vadd.f32 %v1702, %v1985
        %1987 = vmatprep.mubr.bf16.mxu0 %v1643
        %1988 = vmatmul.mubr.bf16.gmra.mrb[0].mxu0 %v1642
        %v1989 = vpop.f32.mrb[0].mxu0
        %v1990 = vadd.f32 %v1698, %v1989
        %v1991 = vpop.f32.mrb[0].mxu0
        %v1992 = vadd.f32 %v1702, %v1991
        %v1993 = vpop.f32.mrb[0].mxu0
        %v1994 = vadd.f32 %v1698, %v1993
        %v1995 = vpop.f32.mrb[0].mxu0
        %v1996 = vadd.f32 %v1702, %v1995
        %1997 = vdwg.mxu0
        %1998 = vmatprep.subr.bf16.mxu0 %v1882
        %1999 = vmatpush1.bf16.msra.mxu0 %v1881
        %2000 = vmatprep.subr.bf16.mxu0 %v1884
        %2001 = vmatpush1.bf16.msra.mxu0 %v1883
        %2002 = vmatprep.subr.bf16.mxu0 %v1886
        %2003 = vmatpush1.bf16.msra.mxu0 %v1885
        %2004 = vmatprep.subr.bf16.mxu0 %v1888
        %2005 = vmatpush1.bf16.msra.mxu0 %v1887
        %2006 = vmatprep.subr.bf16.mxu0 %v1890
        %2007 = vmatpush1.bf16.msra.mxu0 %v1889
        %2008 = vmatprep.subr.bf16.mxu0 %v1892
        %2009 = vmatpush1.bf16.msra.mxu0 %v1891
        %2010 = vmatprep.subr.bf16.mxu0 %v1894
        %2011 = vmatpush1.bf16.msra.mxu0 %v1893
        %2012 = vmatprep.subr.bf16.mxu0 %v1896
        %2013 = vmatpush1.bf16.msra.mxu0 %v1895
        %2014 = vmatprep.subr.bf16.mxu0 0
        %2015 = vmatpush1.bf16.msra.mxu0 0
        %2016 = vmatprep.subr.bf16.mxu0 0
        %2017 = vmatpush1.bf16.msra.mxu0 0
        %2018 = vmatprep.subr.bf16.mxu0 0
        %2019 = vmatpush1.bf16.msra.mxu0 0
        %2020 = vmatprep.subr.bf16.mxu0 0
        %2021 = vmatpush1.bf16.msra.mxu0 0
        %2022 = vmatprep.subr.bf16.mxu0 0
        %2023 = vmatpush1.bf16.msra.mxu0 0
        %2024 = vmatprep.subr.bf16.mxu0 0
        %2025 = vmatpush1.bf16.msra.mxu0 0
        %2026 = vmatprep.subr.bf16.mxu0 0
        %2027 = vmatpush1.bf16.msra.mxu0 0
        %2028 = vmatprep.subr.bf16.mxu0 0
        %2029 = vmatpush1.bf16.msra.mxu0 0
        %2030 = vmatprep.mubr.bf16.mxu0 0
        %2031 = vmatmul.mubr.bf16.gmra.mrb[0].mxu0 %v1641
        %v2032 = vpop.f32.mrb[0].mxu0
        %v2033 = vadd.f32 %v1980, %v2032
        %v2034 = vpop.f32.mrb[0].mxu0
        %v2035 = vadd.f32 %v1982, %v2034
        %v2036 = vpop.f32.mrb[0].mxu0
        %v2037 = vadd.f32 %v1984, %v2036
        %v2038 = vpop.f32.mrb[0].mxu0
        %v2039 = vadd.f32 %v1986, %v2038
        %2040 = vmatprep.mubr.bf16.mxu0 0
        %2041 = vmatmul.mubr.bf16.gmra.mrb[0].mxu0 %v1644
        %v2042 = vpop.f32.mrb[0].mxu0
        %v2043 = vadd.f32 %v1990, %v2042
        %v2044 = vpop.f32.mrb[0].mxu0
        %v2045 = vadd.f32 %v1992, %v2044
        %v2046 = vpop.f32.mrb[0].mxu0
        %v2047 = vadd.f32 %v1994, %v2046
        %v2048 = vpop.f32.mrb[0].mxu0
        %v2049 = vadd.f32 %v1996, %v2048
        %2050 = vdwg.mxu0
        %v2051 = vmax.f32 %v2033, 0.0
        %v2052 = vmax.f32 %v2035, 0.0
        %v2053 = vmax.f32 %v2037, 0.0
        %v2054 = vmax.f32 %v2039, 0.0
        %v2055 = vmax.f32 %v2043, 0.0
        %v2056 = vmax.f32 %v2045, 0.0
        %v2057 = vmax.f32 %v2047, 0.0
        %v2058 = vmax.f32 %v2049, 0.0
        %v2067 = vrot.slane %v2051, 7
        %v2068 = vrot.slane %v2052, 7
        %v2069 = vrot.slane %v2053, 7
        %v2070 = vsel %vm1613, %v2067, %v2069
        %v2071 = vrot.slane %v2054, 7
        %v2072 = vsel %vm1613, %v2068, %v2071
        %v2073 = vrot.slane %v2055, 7
        %v2074 = vsel %vm1613, %v2069, %v2073
        %v2075 = vrot.slane %v2056, 7
        %v2076 = vsel %vm1613, %v2071, %v2075
        %v2077 = vrot.slane %v2057, 7
        %v2078 = vsel %vm1613, %v2073, %v2077
        %v2079 = vrot.slane %v2058, 7
        %v2080 = vsel %vm1613, %v2075, %v2079
        %v2089 = vsel %vm1613, 0.0, %v2067
        %v2090 = vsel %vm1613, 0.0, %v2068
        %v2091 = vrot.slane %v2051, 1
        %v2092 = vrot.slane %v2053, 1
        %v2093 = vsel %vm1626, %v2091, %v2092
        %v2094 = vrot.slane %v2052, 1
        %v2095 = vrot.slane %v2054, 1
        %v2096 = vsel %vm1626, %v2094, %v2095
        %v2097 = vrot.slane %v2055, 1
        %v2098 = vsel %vm1626, %v2092, %v2097
        %v2099 = vrot.slane %v2056, 1
        %v2100 = vsel %vm1626, %v2095, %v2099
        %v2101 = vrot.slane %v2057, 1
        %v2102 = vsel %vm1626, %v2097, %v2101
        %v2103 = vrot.slane %v2058, 1
        %v2104 = vsel %vm1626, %v2099, %v2103
        %v2113 = vsel %vm1626, %v2101, 0.0
        %v2114 = vsel %vm1626, %v2103, 0.0
        %v2115 = vpack.c.bf16 %v2070, %v2089
        %v2116 = vpack.c.bf16 %v2072, %v2090
        %v2117 = vpack.c.bf16 %v2053, %v2051
        %v2118 = vpack.c.bf16 %v2054, %v2052
        %v2119 = vpack.c.bf16 %v2098, %v2093
        %v2120 = vpack.c.bf16 %v2100, %v2096
        %v2121 = vpack.c.bf16 %v2078, %v2074
        %v2122 = vpack.c.bf16 %v2080, %v2076
        %v2123 = vpack.c.bf16 %v2057, %v2055
        %v2124 = vpack.c.bf16 %v2058, %v2056
        %v2125 = vpack.c.bf16 %v2113, %v2102
        %v2126 = vpack.c.bf16 %v2114, %v2104
        %v2127 = vld [vmem:[%s7] sm:$0xff]
        %v2128 = vld [vmem:[%s7 + $0x8] sm:$0xff]
        %v2129 = vld [vmem:[%s7 + $0x10] sm:$0xff]
        %v2130 = vld [vmem:[%s7 + $0x18] sm:$0xff]
        %v2131 = vld [vmem:[%s7 + $0x20] sm:$0xff]
        %v2132 = vld [vmem:[%s7 + $0x28] sm:$0xff]
        %v2133 = vld [vmem:[%s7 + $0x30] sm:$0xff]
        %v2134 = vld [vmem:[%s7 + $0x38] sm:$0xff]
        %v2135 = vld [vmem:[%s7 + $0x40] sm:$0xff]
        %v2136 = vld [vmem:[%s7 + $0x48] sm:$0xff]
        %v2137 = vld [vmem:[%s7 + $0x50] sm:$0xff]
        %v2138 = vld [vmem:[%s7 + $0x58] sm:$0xff]
        %v2139 = vld [vmem:[%s7 + $0x60] sm:$0xff]
        %v2140 = vld [vmem:[%s7 + $0x68] sm:$0xff]
        %v2141 = vld [vmem:[%s7 + $0x70] sm:$0xff]
        %v2142 = vld [vmem:[%s7 + $0x78] sm:$0xff]
        %v2143 = vld [vmem:[%s7 + $0x80] sm:$0xff]
        %v2144 = vld [vmem:[%s7 + $0x88] sm:$0xff]
        %v2145 = vld [vmem:[%s7 + $0x90] sm:$0xff]
        %v2146 = vld [vmem:[%s7 + $0x98] sm:$0xff]
        %v2147 = vld [vmem:[%s7 + $0xa0] sm:$0xff]
        %v2148 = vld [vmem:[%s7 + $0xa8] sm:$0xff]
        %v2149 = vld [vmem:[%s7 + $0xb0] sm:$0xff]
        %v2150 = vld [vmem:[%s7 + $0xb8] sm:$0xff]
        %v2151 = vld [vmem:[%s7 + $0xc0] sm:$0xff]
        %v2152 = vld [vmem:[%s7 + $0xc8] sm:$0xff]
        %v2153 = vld [vmem:[%s7 + $0xd0] sm:$0xff]
        %v2154 = vld [vmem:[%s7 + $0xd8] sm:$0xff]
        %v2155 = vld [vmem:[%s7 + $0xe0] sm:$0xff]
        %v2156 = vld [vmem:[%s7 + $0xe8] sm:$0xff]
        %v2157 = vld [vmem:[%s7 + $0xf0] sm:$0xff]
        %v2158 = vld [vmem:[%s7 + $0xf8] sm:$0xff]
        %v2159 = vld [vmem:[%s7 + $0x100] sm:$0xff]
        %v2160 = vld [vmem:[%s7 + $0x108] sm:$0xff]
        %v2161 = vld [vmem:[%s7 + $0x110] sm:$0xff]
        %v2162 = vld [vmem:[%s7 + $0x118] sm:$0xff]
        %v2163 = vld [vmem:[%s7 + $0x120] sm:$0xff]
        %v2164 = vld [vmem:[%s7 + $0x128] sm:$0xff]
        %v2165 = vld [vmem:[%s7 + $0x130] sm:$0xff]
        %v2166 = vld [vmem:[%s7 + $0x138] sm:$0xff]
        %v2167 = vld [vmem:[%s7 + $0x140] sm:$0xff]
        %v2168 = vld [vmem:[%s7 + $0x148] sm:$0xff]
        %v2169 = vld [vmem:[%s7 + $0x150] sm:$0xff]
        %v2170 = vld [vmem:[%s7 + $0x158] sm:$0xff]
        %v2171 = vld [vmem:[%s7 + $0x160] sm:$0xff]
        %v2172 = vld [vmem:[%s7 + $0x168] sm:$0xff]
        %v2173 = vld [vmem:[%s7 + $0x170] sm:$0xff]
        %v2174 = vld [vmem:[%s7 + $0x178] sm:$0xff]
        %v2175 = vld [vmem:[%s7 + $0x180] sm:$0xff]
        %v2176 = vld [vmem:[%s7 + $0x188] sm:$0xff]
        %v2177 = vld [vmem:[%s7 + $0x190] sm:$0xff]
        %v2178 = vld [vmem:[%s7 + $0x198] sm:$0xff]
        %v2179 = vld [vmem:[%s7 + $0x1a0] sm:$0xff]
        %v2180 = vld [vmem:[%s7 + $0x1a8] sm:$0xff]
        %v2181 = vld [vmem:[%s7 + $0x1b0] sm:$0xff]
        %v2182 = vld [vmem:[%s7 + $0x1b8] sm:$0xff]
        %v2183 = vld [vmem:[%s7 + $0x1c0] sm:$0xff]
        %v2184 = vld [vmem:[%s7 + $0x1c8] sm:$0xff]
        %v2185 = vld [vmem:[%s7 + $0x1d0] sm:$0xff]
        %v2186 = vld [vmem:[%s7 + $0x1d8] sm:$0xff]
        %v2187 = vld [vmem:[%s7 + $0x1e0] sm:$0xff]
        %v2188 = vld [vmem:[%s7 + $0x1e8] sm:$0xff]
        %v2189 = vld [vmem:[%s7 + $0x1f0] sm:$0xff]
        %v2190 = vld [vmem:[%s7 + $0x1f8] sm:$0xff]
        %v2191 = vld [vmem:[%s7 + $0x200] sm:$0xff]
        %v2192 = vld [vmem:[%s7 + $0x208] sm:$0xff]
        %v2193 = vld [vmem:[%s7 + $0x210] sm:$0xff]
        %v2194 = vld [vmem:[%s7 + $0x218] sm:$0xff]
        %v2195 = vld [vmem:[%s7 + $0x220] sm:$0xff]
        %v2196 = vld [vmem:[%s7 + $0x228] sm:$0xff]
        %v2197 = vld [vmem:[%s7 + $0x230] sm:$0xff]
        %v2198 = vld [vmem:[%s7 + $0x238] sm:$0xff]
        %v2199 = vld [vmem:[%s7 + $0x240] sm:$0xff]
        %v2200 = vld [vmem:[%s7 + $0x248] sm:$0xff]
        %v2201 = vld [vmem:[%s7 + $0x250] sm:$0xff]
        %v2202 = vld [vmem:[%s7 + $0x258] sm:$0xff]
        %v2203 = vld [vmem:[%s7 + $0x260] sm:$0xff]
        %v2204 = vld [vmem:[%s7 + $0x268] sm:$0xff]
        %v2205 = vld [vmem:[%s7 + $0x270] sm:$0xff]
        %v2206 = vld [vmem:[%s7 + $0x278] sm:$0xff]
        %v2207 = vld [vmem:[%s7 + $0x280] sm:$0xff]
        %v2208 = vld [vmem:[%s7 + $0x288] sm:$0xff]
        %v2209 = vld [vmem:[%s7 + $0x290] sm:$0xff]
        %v2210 = vld [vmem:[%s7 + $0x298] sm:$0xff]
        %v2211 = vld [vmem:[%s7 + $0x2a0] sm:$0xff]
        %v2212 = vld [vmem:[%s7 + $0x2a8] sm:$0xff]
        %v2213 = vld [vmem:[%s7 + $0x2b0] sm:$0xff]
        %v2214 = vld [vmem:[%s7 + $0x2b8] sm:$0xff]
        %v2215 = vld [vmem:[%s7 + $0x2c0] sm:$0xff]
        %v2216 = vld [vmem:[%s7 + $0x2c8] sm:$0xff]
        %v2217 = vld [vmem:[%s7 + $0x2d0] sm:$0xff]
        %v2218 = vld [vmem:[%s7 + $0x2d8] sm:$0xff]
        %v2219 = vld [vmem:[%s7 + $0x2e0] sm:$0xff]
        %v2220 = vld [vmem:[%s7 + $0x2e8] sm:$0xff]
        %v2221 = vld [vmem:[%s7 + $0x2f0] sm:$0xff]
        %v2222 = vld [vmem:[%s7 + $0x2f8] sm:$0xff]
        %v2223 = vld [vmem:[#allocation2] ss:$4 sm:$0x3]
        %v2225 = vlaneseq
        %v2226 = vshrl.u32 %v2225, 7
        %v2227 = vsub.s32 0, %v2226
        %v2228 = vrot.slane %v2223, %v2227
        %v2229 = vlaneseq
        %v2230 = vshrl.u32 %v2229, 7
        %v2231 = vsub.s32 1, %v2230
        %v2232 = vrot.slane %v2223, %v2231
        %v2331 = vunpack.c.l.b16 %v2127
        %v2332 = vunpack.c.h.b16 %v2127
        %v2333 = vunpack.c.l.b16 %v2128
        %v2334 = vunpack.c.h.b16 %v2128
        %v2335 = vunpack.c.l.b16 %v2129
        %v2336 = vunpack.c.h.b16 %v2129
        %v2337 = vunpack.c.l.b16 %v2130
        %v2338 = vunpack.c.h.b16 %v2130
        %v2339 = vunpack.c.l.b16 %v2131
        %v2340 = vunpack.c.h.b16 %v2131
        %v2341 = vunpack.c.l.b16 %v2132
        %v2342 = vunpack.c.h.b16 %v2132
        %v2343 = vunpack.c.l.b16 %v2133
        %v2344 = vunpack.c.h.b16 %v2133
        %v2345 = vunpack.c.l.b16 %v2134
        %v2346 = vunpack.c.h.b16 %v2134
        %v2347 = vunpack.c.l.b16 %v2135
        %v2348 = vunpack.c.h.b16 %v2135
        %v2349 = vunpack.c.l.b16 %v2136
        %v2350 = vunpack.c.h.b16 %v2136
        %v2351 = vunpack.c.l.b16 %v2137
        %v2352 = vunpack.c.h.b16 %v2137
        %v2353 = vunpack.c.l.b16 %v2138
        %v2354 = vunpack.c.h.b16 %v2138
        %v2355 = vunpack.c.l.b16 %v2139
        %v2356 = vunpack.c.h.b16 %v2139
        %v2357 = vunpack.c.l.b16 %v2140
        %v2358 = vunpack.c.h.b16 %v2140
        %v2359 = vunpack.c.l.b16 %v2141
        %v2360 = vunpack.c.h.b16 %v2141
        %v2361 = vunpack.c.l.b16 %v2142
        %v2362 = vunpack.c.h.b16 %v2142
        %v2363 = vunpack.c.l.b16 %v2143
        %v2364 = vunpack.c.h.b16 %v2143
        %v2365 = vunpack.c.l.b16 %v2144
        %v2366 = vunpack.c.h.b16 %v2144
        %v2367 = vunpack.c.l.b16 %v2145
        %v2368 = vunpack.c.h.b16 %v2145
        %v2369 = vunpack.c.l.b16 %v2146
        %v2370 = vunpack.c.h.b16 %v2146
        %v2371 = vunpack.c.l.b16 %v2147
        %v2372 = vunpack.c.h.b16 %v2147
        %v2373 = vunpack.c.l.b16 %v2148
        %v2374 = vunpack.c.h.b16 %v2148
        %v2375 = vunpack.c.l.b16 %v2149
        %v2376 = vunpack.c.h.b16 %v2149
        %v2377 = vunpack.c.l.b16 %v2150
        %v2378 = vunpack.c.h.b16 %v2150
        %v2379 = vunpack.c.l.b16 %v2151
        %v2380 = vunpack.c.h.b16 %v2151
        %v2381 = vunpack.c.l.b16 %v2152
        %v2382 = vunpack.c.h.b16 %v2152
        %v2383 = vunpack.c.l.b16 %v2153
        %v2384 = vunpack.c.h.b16 %v2153
        %v2385 = vunpack.c.l.b16 %v2154
        %v2386 = vunpack.c.h.b16 %v2154
        %v2387 = vunpack.c.l.b16 %v2155
        %v2388 = vunpack.c.h.b16 %v2155
        %v2389 = vunpack.c.l.b16 %v2156
        %v2390 = vunpack.c.h.b16 %v2156
        %v2391 = vunpack.c.l.b16 %v2157
        %v2392 = vunpack.c.h.b16 %v2157
        %v2393 = vunpack.c.l.b16 %v2158
        %v2394 = vunpack.c.h.b16 %v2158
        %v2395 = vunpack.c.l.b16 %v2159
        %v2396 = vunpack.c.h.b16 %v2159
        %v2397 = vunpack.c.l.b16 %v2160
        %v2398 = vunpack.c.h.b16 %v2160
        %v2399 = vunpack.c.l.b16 %v2161
        %v2400 = vunpack.c.h.b16 %v2161
        %v2401 = vunpack.c.l.b16 %v2162
        %v2402 = vunpack.c.h.b16 %v2162
        %v2403 = vunpack.c.l.b16 %v2163
        %v2404 = vunpack.c.h.b16 %v2163
        %v2405 = vunpack.c.l.b16 %v2164
        %v2406 = vunpack.c.h.b16 %v2164
        %v2407 = vunpack.c.l.b16 %v2165
        %v2408 = vunpack.c.h.b16 %v2165
        %v2409 = vunpack.c.l.b16 %v2166
        %v2410 = vunpack.c.h.b16 %v2166
        %v2411 = vunpack.c.l.b16 %v2167
        %v2412 = vunpack.c.h.b16 %v2167
        %v2413 = vunpack.c.l.b16 %v2168
        %v2414 = vunpack.c.h.b16 %v2168
        %v2415 = vunpack.c.l.b16 %v2169
        %v2416 = vunpack.c.h.b16 %v2169
        %v2417 = vunpack.c.l.b16 %v2170
        %v2418 = vunpack.c.h.b16 %v2170
        %v2419 = vunpack.c.l.b16 %v2171
        %v2420 = vunpack.c.h.b16 %v2171
        %v2421 = vunpack.c.l.b16 %v2172
        %v2422 = vunpack.c.h.b16 %v2172
        %v2423 = vunpack.c.l.b16 %v2173
        %v2424 = vunpack.c.h.b16 %v2173
        %v2425 = vunpack.c.l.b16 %v2174
        %v2426 = vunpack.c.h.b16 %v2174
        %v2427 = vunpack.c.l.b16 %v2175
        %v2428 = vunpack.c.h.b16 %v2175
        %v2429 = vunpack.c.l.b16 %v2176
        %v2430 = vunpack.c.h.b16 %v2176
        %v2431 = vunpack.c.l.b16 %v2177
        %v2432 = vunpack.c.h.b16 %v2177
        %v2433 = vunpack.c.l.b16 %v2178
        %v2434 = vunpack.c.h.b16 %v2178
        %v2435 = vunpack.c.l.b16 %v2179
        %v2436 = vunpack.c.h.b16 %v2179
        %v2437 = vunpack.c.l.b16 %v2180
        %v2438 = vunpack.c.h.b16 %v2180
        %v2439 = vunpack.c.l.b16 %v2181
        %v2440 = vunpack.c.h.b16 %v2181
        %v2441 = vunpack.c.l.b16 %v2182
        %v2442 = vunpack.c.h.b16 %v2182
        %v2443 = vunpack.c.l.b16 %v2183
        %v2444 = vunpack.c.h.b16 %v2183
        %v2445 = vunpack.c.l.b16 %v2184
        %v2446 = vunpack.c.h.b16 %v2184
        %v2447 = vunpack.c.l.b16 %v2185
        %v2448 = vunpack.c.h.b16 %v2185
        %v2449 = vunpack.c.l.b16 %v2186
        %v2450 = vunpack.c.h.b16 %v2186
        %v2451 = vunpack.c.l.b16 %v2187
        %v2452 = vunpack.c.h.b16 %v2187
        %v2453 = vunpack.c.l.b16 %v2188
        %v2454 = vunpack.c.h.b16 %v2188
        %v2455 = vunpack.c.l.b16 %v2189
        %v2456 = vunpack.c.h.b16 %v2189
        %v2457 = vunpack.c.l.b16 %v2190
        %v2458 = vunpack.c.h.b16 %v2190
        %v2459 = vunpack.c.l.b16 %v2191
        %v2460 = vunpack.c.h.b16 %v2191
        %v2461 = vunpack.c.l.b16 %v2192
        %v2462 = vunpack.c.h.b16 %v2192
        %v2463 = vunpack.c.l.b16 %v2193
        %v2464 = vunpack.c.h.b16 %v2193
        %v2465 = vunpack.c.l.b16 %v2194
        %v2466 = vunpack.c.h.b16 %v2194
        %v2467 = vunpack.c.l.b16 %v2195
        %v2468 = vunpack.c.h.b16 %v2195
        %v2469 = vunpack.c.l.b16 %v2196
        %v2470 = vunpack.c.h.b16 %v2196
        %v2471 = vunpack.c.l.b16 %v2197
        %v2472 = vunpack.c.h.b16 %v2197
        %v2473 = vunpack.c.l.b16 %v2198
        %v2474 = vunpack.c.h.b16 %v2198
        %v2475 = vunpack.c.l.b16 %v2199
        %v2476 = vunpack.c.h.b16 %v2199
        %v2477 = vunpack.c.l.b16 %v2200
        %v2478 = vunpack.c.h.b16 %v2200
        %v2479 = vunpack.c.l.b16 %v2201
        %v2480 = vunpack.c.h.b16 %v2201
        %v2481 = vunpack.c.l.b16 %v2202
        %v2482 = vunpack.c.h.b16 %v2202
        %v2483 = vunpack.c.l.b16 %v2203
        %v2484 = vunpack.c.h.b16 %v2203
        %v2485 = vunpack.c.l.b16 %v2204
        %v2486 = vunpack.c.h.b16 %v2204
        %v2487 = vunpack.c.l.b16 %v2205
        %v2488 = vunpack.c.h.b16 %v2205
        %v2489 = vunpack.c.l.b16 %v2206
        %v2490 = vunpack.c.h.b16 %v2206
        %v2491 = vunpack.c.l.b16 %v2207
        %v2492 = vunpack.c.h.b16 %v2207
        %v2493 = vunpack.c.l.b16 %v2208
        %v2494 = vunpack.c.h.b16 %v2208
        %v2495 = vunpack.c.l.b16 %v2209
        %v2496 = vunpack.c.h.b16 %v2209
        %v2497 = vunpack.c.l.b16 %v2210
        %v2498 = vunpack.c.h.b16 %v2210
        %v2499 = vunpack.c.l.b16 %v2211
        %v2500 = vunpack.c.h.b16 %v2211
        %v2501 = vunpack.c.l.b16 %v2212
        %v2502 = vunpack.c.h.b16 %v2212
        %v2503 = vunpack.c.l.b16 %v2213
        %v2504 = vunpack.c.h.b16 %v2213
        %v2505 = vunpack.c.l.b16 %v2214
        %v2506 = vunpack.c.h.b16 %v2214
        %v2507 = vunpack.c.l.b16 %v2215
        %v2508 = vunpack.c.h.b16 %v2215
        %v2509 = vunpack.c.l.b16 %v2216
        %v2510 = vunpack.c.h.b16 %v2216
        %v2511 = vunpack.c.l.b16 %v2217
        %v2512 = vunpack.c.h.b16 %v2217
        %v2513 = vunpack.c.l.b16 %v2218
        %v2514 = vunpack.c.h.b16 %v2218
        %v2515 = vunpack.c.l.b16 %v2219
        %v2516 = vunpack.c.h.b16 %v2219
        %v2517 = vunpack.c.l.b16 %v2220
        %v2518 = vunpack.c.h.b16 %v2220
        %v2519 = vunpack.c.l.b16 %v2221
        %v2520 = vunpack.c.h.b16 %v2221
        %v2521 = vunpack.c.l.b16 %v2222
        %v2522 = vunpack.c.h.b16 %v2222
        %v2523 = vpack.c.b16 %v2333, %v2331
        %v2524 = vpack.c.b16 %v2334, %v2332
        %v2525 = vpack.c.b16 %v2337, %v2335
        %v2526 = vpack.c.b16 %v2338, %v2336
        %v2527 = vpack.c.b16 %v2341, %v2339
        %v2528 = vpack.c.b16 %v2342, %v2340
        %v2529 = vpack.c.b16 %v2345, %v2343
        %v2530 = vpack.c.b16 %v2346, %v2344
        %v2531 = vpack.c.b16 %v2349, %v2347
        %v2532 = vpack.c.b16 %v2350, %v2348
        %v2533 = vpack.c.b16 %v2353, %v2351
        %v2534 = vpack.c.b16 %v2354, %v2352
        %v2535 = vpack.c.b16 %v2357, %v2355
        %v2536 = vpack.c.b16 %v2358, %v2356
        %v2537 = vpack.c.b16 %v2361, %v2359
        %v2538 = vpack.c.b16 %v2362, %v2360
        %v2539 = vpack.c.b16 %v2365, %v2363
        %v2540 = vpack.c.b16 %v2366, %v2364
        %v2541 = vpack.c.b16 %v2369, %v2367
        %v2542 = vpack.c.b16 %v2370, %v2368
        %v2543 = vpack.c.b16 %v2373, %v2371
        %v2544 = vpack.c.b16 %v2374, %v2372
        %v2545 = vpack.c.b16 %v2377, %v2375
        %v2546 = vpack.c.b16 %v2378, %v2376
        %v2547 = vpack.c.b16 %v2381, %v2379
        %v2548 = vpack.c.b16 %v2382, %v2380
        %v2549 = vpack.c.b16 %v2385, %v2383
        %v2550 = vpack.c.b16 %v2386, %v2384
        %v2551 = vpack.c.b16 %v2389, %v2387
        %v2552 = vpack.c.b16 %v2390, %v2388
        %v2553 = vpack.c.b16 %v2393, %v2391
        %v2554 = vpack.c.b16 %v2394, %v2392
        %v2555 = vpack.c.b16 %v2397, %v2395
        %v2556 = vpack.c.b16 %v2398, %v2396
        %v2557 = vpack.c.b16 %v2401, %v2399
        %v2558 = vpack.c.b16 %v2402, %v2400
        %v2559 = vpack.c.b16 %v2405, %v2403
        %v2560 = vpack.c.b16 %v2406, %v2404
        %v2561 = vpack.c.b16 %v2409, %v2407
        %v2562 = vpack.c.b16 %v2410, %v2408
        %v2563 = vpack.c.b16 %v2413, %v2411
        %v2564 = vpack.c.b16 %v2414, %v2412
        %v2565 = vpack.c.b16 %v2417, %v2415
        %v2566 = vpack.c.b16 %v2418, %v2416
        %v2567 = vpack.c.b16 %v2421, %v2419
        %v2568 = vpack.c.b16 %v2422, %v2420
        %v2569 = vpack.c.b16 %v2425, %v2423
        %v2570 = vpack.c.b16 %v2426, %v2424
        %v2571 = vpack.c.b16 %v2429, %v2427
        %v2572 = vpack.c.b16 %v2430, %v2428
        %v2573 = vpack.c.b16 %v2433, %v2431
        %v2574 = vpack.c.b16 %v2434, %v2432
        %v2575 = vpack.c.b16 %v2437, %v2435
        %v2576 = vpack.c.b16 %v2438, %v2436
        %v2577 = vpack.c.b16 %v2441, %v2439
        %v2578 = vpack.c.b16 %v2442, %v2440
        %v2579 = vpack.c.b16 %v2445, %v2443
        %v2580 = vpack.c.b16 %v2446, %v2444
        %v2581 = vpack.c.b16 %v2449, %v2447
        %v2582 = vpack.c.b16 %v2450, %v2448
        %v2583 = vpack.c.b16 %v2453, %v2451
        %v2584 = vpack.c.b16 %v2454, %v2452
        %v2585 = vpack.c.b16 %v2457, %v2455
        %v2586 = vpack.c.b16 %v2458, %v2456
        %v2587 = vpack.c.b16 %v2461, %v2459
        %v2588 = vpack.c.b16 %v2462, %v2460
        %v2589 = vpack.c.b16 %v2465, %v2463
        %v2590 = vpack.c.b16 %v2466, %v2464
        %v2591 = vpack.c.b16 %v2469, %v2467
        %v2592 = vpack.c.b16 %v2470, %v2468
        %v2593 = vpack.c.b16 %v2473, %v2471
        %v2594 = vpack.c.b16 %v2474, %v2472
        %v2595 = vpack.c.b16 %v2477, %v2475
        %v2596 = vpack.c.b16 %v2478, %v2476
        %v2597 = vpack.c.b16 %v2481, %v2479
        %v2598 = vpack.c.b16 %v2482, %v2480
        %v2599 = vpack.c.b16 %v2485, %v2483
        %v2600 = vpack.c.b16 %v2486, %v2484
        %v2601 = vpack.c.b16 %v2489, %v2487
        %v2602 = vpack.c.b16 %v2490, %v2488
        %v2603 = vpack.c.b16 %v2493, %v2491
        %v2604 = vpack.c.b16 %v2494, %v2492
        %v2605 = vpack.c.b16 %v2497, %v2495
        %v2606 = vpack.c.b16 %v2498, %v2496
        %v2607 = vpack.c.b16 %v2501, %v2499
        %v2608 = vpack.c.b16 %v2502, %v2500
        %v2609 = vpack.c.b16 %v2505, %v2503
        %v2610 = vpack.c.b16 %v2506, %v2504
        %v2611 = vpack.c.b16 %v2509, %v2507
        %v2612 = vpack.c.b16 %v2510, %v2508
        %v2613 = vpack.c.b16 %v2513, %v2511
        %v2614 = vpack.c.b16 %v2514, %v2512
        %v2615 = vpack.c.b16 %v2517, %v2515
        %v2616 = vpack.c.b16 %v2518, %v2516
        %v2617 = vpack.c.b16 %v2521, %v2519
        %v2618 = vpack.c.b16 %v2522, %v2520
        %2715 = vmatprep.subr.bf16.mxu0 %v2524
        %2716 = vmatpush1.bf16.msra.mxu0 %v2523
        %2717 = vmatprep.subr.bf16.mxu0 %v2526
        %2718 = vmatpush1.bf16.msra.mxu0 %v2525
        %2719 = vmatprep.subr.bf16.mxu0 %v2528
        %2720 = vmatpush1.bf16.msra.mxu0 %v2527
        %2721 = vmatprep.subr.bf16.mxu0 %v2530
        %2722 = vmatpush1.bf16.msra.mxu0 %v2529
        %2723 = vmatprep.subr.bf16.mxu0 %v2532
        %2724 = vmatpush1.bf16.msra.mxu0 %v2531
        %2725 = vmatprep.subr.bf16.mxu0 %v2534
        %2726 = vmatpush1.bf16.msra.mxu0 %v2533
        %2727 = vmatprep.subr.bf16.mxu0 %v2536
        %2728 = vmatpush1.bf16.msra.mxu0 %v2535
        %2729 = vmatprep.subr.bf16.mxu0 %v2538
        %2730 = vmatpush1.bf16.msra.mxu0 %v2537
        %2731 = vmatprep.subr.bf16.mxu0 %v2540
        %2732 = vmatpush1.bf16.msra.mxu0 %v2539
        %2733 = vmatprep.subr.bf16.mxu0 %v2542
        %2734 = vmatpush1.bf16.msra.mxu0 %v2541
        %2735 = vmatprep.subr.bf16.mxu0 %v2544
        %2736 = vmatpush1.bf16.msra.mxu0 %v2543
        %2737 = vmatprep.subr.bf16.mxu0 %v2546
        %2738 = vmatpush1.bf16.msra.mxu0 %v2545
        %2739 = vmatprep.subr.bf16.mxu0 %v2548
        %2740 = vmatpush1.bf16.msra.mxu0 %v2547
        %2741 = vmatprep.subr.bf16.mxu0 %v2550
        %2742 = vmatpush1.bf16.msra.mxu0 %v2549
        %2743 = vmatprep.subr.bf16.mxu0 %v2552
        %2744 = vmatpush1.bf16.msra.mxu0 %v2551
        %2745 = vmatprep.subr.bf16.mxu0 %v2554
        %2746 = vmatpush1.bf16.msra.mxu0 %v2553
        %2747 = vmatprep.mubr.bf16.mxu0 %v2116
        %2748 = vmatmul.mubr.bf16.gmra.mrb[0].mxu0 %v2115
        %v2749 = vpop.f32.mrb[0].mxu0
        %v2750 = vadd.f32 %v2228, %v2749
        %v2751 = vpop.f32.mrb[0].mxu0
        %v2752 = vadd.f32 %v2232, %v2751
        %v2753 = vpop.f32.mrb[0].mxu0
        %v2754 = vadd.f32 %v2228, %v2753
        %v2755 = vpop.f32.mrb[0].mxu0
        %v2756 = vadd.f32 %v2232, %v2755
        %2757 = vmatprep.mubr.bf16.mxu0 %v2122
        %2758 = vmatmul.mubr.bf16.gmra.mrb[0].mxu0 %v2121
        %v2759 = vpop.f32.mrb[0].mxu0
        %v2760 = vadd.f32 %v2228, %v2759
        %v2761 = vpop.f32.mrb[0].mxu0
        %v2762 = vadd.f32 %v2232, %v2761
        %v2763 = vpop.f32.mrb[0].mxu0
        %v2764 = vadd.f32 %v2228, %v2763
        %v2765 = vpop.f32.mrb[0].mxu0
        %v2766 = vadd.f32 %v2232, %v2765
        %2767 = vdwg.mxu0
        %2768 = vmatprep.subr.bf16.mxu0 %v2556
        %2769 = vmatpush1.bf16.msra.mxu0 %v2555
        %2770 = vmatprep.subr.bf16.mxu0 %v2558
        %2771 = vmatpush1.bf16.msra.mxu0 %v2557
        %2772 = vmatprep.subr.bf16.mxu0 %v2560
        %2773 = vmatpush1.bf16.msra.mxu0 %v2559
        %2774 = vmatprep.subr.bf16.mxu0 %v2562
        %2775 = vmatpush1.bf16.msra.mxu0 %v2561
        %2776 = vmatprep.subr.bf16.mxu0 %v2564
        %2777 = vmatpush1.bf16.msra.mxu0 %v2563
        %2778 = vmatprep.subr.bf16.mxu0 %v2566
        %2779 = vmatpush1.bf16.msra.mxu0 %v2565
        %2780 = vmatprep.subr.bf16.mxu0 %v2568
        %2781 = vmatpush1.bf16.msra.mxu0 %v2567
        %2782 = vmatprep.subr.bf16.mxu0 %v2570
        %2783 = vmatpush1.bf16.msra.mxu0 %v2569
        %2784 = vmatprep.subr.bf16.mxu0 %v2572
        %2785 = vmatpush1.bf16.msra.mxu0 %v2571
        %2786 = vmatprep.subr.bf16.mxu0 %v2574
        %2787 = vmatpush1.bf16.msra.mxu0 %v2573
        %2788 = vmatprep.subr.bf16.mxu0 %v2576
        %2789 = vmatpush1.bf16.msra.mxu0 %v2575
        %2790 = vmatprep.subr.bf16.mxu0 %v2578
        %2791 = vmatpush1.bf16.msra.mxu0 %v2577
        %2792 = vmatprep.subr.bf16.mxu0 %v2580
        %2793 = vmatpush1.bf16.msra.mxu0 %v2579
        %2794 = vmatprep.subr.bf16.mxu0 %v2582
        %2795 = vmatpush1.bf16.msra.mxu0 %v2581
        %2796 = vmatprep.subr.bf16.mxu0 %v2584
        %2797 = vmatpush1.bf16.msra.mxu0 %v2583
        %2798 = vmatprep.subr.bf16.mxu0 %v2586
        %2799 = vmatpush1.bf16.msra.mxu0 %v2585
        %2800 = vmatprep.mubr.bf16.mxu0 %v2118
        %2801 = vmatmul.mubr.bf16.gmra.mrb[0].mxu0 %v2117
        %v2802 = vpop.f32.mrb[0].mxu0
        %v2803 = vadd.f32 %v2750, %v2802
        %v2804 = vpop.f32.mrb[0].mxu0
        %v2805 = vadd.f32 %v2752, %v2804
        %v2806 = vpop.f32.mrb[0].mxu0
        %v2807 = vadd.f32 %v2754, %v2806
        %v2808 = vpop.f32.mrb[0].mxu0
        %v2809 = vadd.f32 %v2756, %v2808
        %2810 = vmatprep.mubr.bf16.mxu0 %v2124
        %2811 = vmatmul.mubr.bf16.gmra.mrb[0].mxu0 %v2123
        %v2812 = vpop.f32.mrb[0].mxu0
        %v2813 = vadd.f32 %v2760, %v2812
        %v2814 = vpop.f32.mrb[0].mxu0
        %v2815 = vadd.f32 %v2762, %v2814
        %v2816 = vpop.f32.mrb[0].mxu0
        %v2817 = vadd.f32 %v2764, %v2816
        %v2818 = vpop.f32.mrb[0].mxu0
        %v2819 = vadd.f32 %v2766, %v2818
        %2820 = vdwg.mxu0
        %2821 = vmatprep.subr.bf16.mxu0 %v2588
        %2822 = vmatpush1.bf16.msra.mxu0 %v2587
        %2823 = vmatprep.subr.bf16.mxu0 %v2590
        %2824 = vmatpush1.bf16.msra.mxu0 %v2589
        %2825 = vmatprep.subr.bf16.mxu0 %v2592
        %2826 = vmatpush1.bf16.msra.mxu0 %v2591
        %2827 = vmatprep.subr.bf16.mxu0 %v2594
        %2828 = vmatpush1.bf16.msra.mxu0 %v2593
        %2829 = vmatprep.subr.bf16.mxu0 %v2596
        %2830 = vmatpush1.bf16.msra.mxu0 %v2595
        %2831 = vmatprep.subr.bf16.mxu0 %v2598
        %2832 = vmatpush1.bf16.msra.mxu0 %v2597
        %2833 = vmatprep.subr.bf16.mxu0 %v2600
        %2834 = vmatpush1.bf16.msra.mxu0 %v2599
        %2835 = vmatprep.subr.bf16.mxu0 %v2602
        %2836 = vmatpush1.bf16.msra.mxu0 %v2601
        %2837 = vmatprep.subr.bf16.mxu0 %v2604
        %2838 = vmatpush1.bf16.msra.mxu0 %v2603
        %2839 = vmatprep.subr.bf16.mxu0 %v2606
        %2840 = vmatpush1.bf16.msra.mxu0 %v2605
        %2841 = vmatprep.subr.bf16.mxu0 %v2608
        %2842 = vmatpush1.bf16.msra.mxu0 %v2607
        %2843 = vmatprep.subr.bf16.mxu0 %v2610
        %2844 = vmatpush1.bf16.msra.mxu0 %v2609
        %2845 = vmatprep.subr.bf16.mxu0 %v2612
        %2846 = vmatpush1.bf16.msra.mxu0 %v2611
        %2847 = vmatprep.subr.bf16.mxu0 %v2614
        %2848 = vmatpush1.bf16.msra.mxu0 %v2613
        %2849 = vmatprep.subr.bf16.mxu0 %v2616
        %2850 = vmatpush1.bf16.msra.mxu0 %v2615
        %2851 = vmatprep.subr.bf16.mxu0 %v2618
        %2852 = vmatpush1.bf16.msra.mxu0 %v2617
        %2853 = vmatprep.mubr.bf16.mxu0 %v2120
        %2854 = vmatmul.mubr.bf16.gmra.mrb[0].mxu0 %v2119
        %v2855 = vpop.f32.mrb[0].mxu0
        %v2856 = vadd.f32 %v2803, %v2855
        %v2857 = vpop.f32.mrb[0].mxu0
        %v2858 = vadd.f32 %v2805, %v2857
        %v2859 = vpop.f32.mrb[0].mxu0
        %v2860 = vadd.f32 %v2807, %v2859
        %v2861 = vpop.f32.mrb[0].mxu0
        %v2862 = vadd.f32 %v2809, %v2861
        %2863 = vmatprep.mubr.bf16.mxu0 %v2126
        %2864 = vmatmul.mubr.bf16.gmra.mrb[0].mxu0 %v2125
        %v2865 = vpop.f32.mrb[0].mxu0
        %v2866 = vadd.f32 %v2813, %v2865
        %v2867 = vpop.f32.mrb[0].mxu0
        %v2868 = vadd.f32 %v2815, %v2867
        %v2869 = vpop.f32.mrb[0].mxu0
        %v2870 = vadd.f32 %v2817, %v2869
        %v2871 = vpop.f32.mrb[0].mxu0
        %v2872 = vadd.f32 %v2819, %v2871
        %2873 = vdwg.mxu0
        %v2874 = vmax.f32 %v2856, 0.0
        %v2875 = vmax.f32 %v2858, 0.0
        %v2876 = vmax.f32 %v2860, 0.0
        %v2877 = vmax.f32 %v2862, 0.0
        %v2878 = vmax.f32 %v2866, 0.0
        %v2879 = vmax.f32 %v2868, 0.0
        %v2880 = vmax.f32 %v2870, 0.0
        %v2881 = vmax.f32 %v2872, 0.0
        %s2882 = scalar_lea.vmem [#allocation2], 1
        %v2883 = vld [vmem:[%s2882] ss:$4 sm:$0x3]
        %v2885 = vlaneseq
        %v2886 = vshrl.u32 %v2885, 7
        %v2887 = vsub.s32 0, %v2886
        %v2888 = vrot.slane %v2883, %v2887
        %v2889 = vlaneseq
        %v2890 = vshrl.u32 %v2889, 7
        %v2891 = vsub.s32 1, %v2890
        %v2892 = vrot.slane %v2883, %v2891
        %v2895 = vmul.f32 %v2874, %v2888
        %v2896 = vmul.f32 %v2875, %v2892
        %v2897 = vmul.f32 %v2876, %v2888
        %v2898 = vmul.f32 %v2877, %v2892
        %v2899 = vmul.f32 %v2878, %v2888
        %v2900 = vmul.f32 %v2879, %v2892
        %v2901 = vmul.f32 %v2880, %v2888
        %v2902 = vmul.f32 %v2881, %v2892
        %s2903 = scalar_lea.vmem [#allocation2], 2
        %v2904 = vld [vmem:[%s2903] ss:$4 sm:$0x3]
        %v2906 = vlaneseq
        %v2907 = vshrl.u32 %v2906, 7
        %v2908 = vsub.s32 0, %v2907
        %v2909 = vrot.slane %v2904, %v2908
        %v2910 = vlaneseq
        %v2911 = vshrl.u32 %v2910, 7
        %v2912 = vsub.s32 1, %v2911
        %v2913 = vrot.slane %v2904, %v2912
        %v2916 = vadd.f32 %v2895, %v2909
        %v2917 = vadd.f32 %v2896, %v2913
        %v2918 = vadd.f32 %v2897, %v2909
        %v2919 = vadd.f32 %v2898, %v2913
        %v2920 = vadd.f32 %v2899, %v2909
        %v2921 = vadd.f32 %v2900, %v2913
        %v2922 = vadd.f32 %v2901, %v2909
        %v2923 = vadd.f32 %v2902, %v2913
        %v2932 = vrot.slane %v2916, 1
        %v2933 = vrot.slane %v2918, 1
        %v2934 = vsel %vm1626, %v2932, %v2933
        %v2935 = vrot.slane %v2917, 1
        %v2936 = vrot.slane %v2919, 1
        %v2937 = vsel %vm1626, %v2935, %v2936
        %v2938 = vrot.slane %v2920, 1
        %v2939 = vsel %vm1626, %v2933, %v2938
        %v2940 = vrot.slane %v2921, 1
        %v2941 = vsel %vm1626, %v2936, %v2940
        %v2942 = vrot.slane %v2922, 1
        %v2943 = vsel %vm1626, %v2938, %v2942
        %v2944 = vrot.slane %v2923, 1
        %v2945 = vsel %vm1626, %v2940, %v2944
        %v2954 = vsel %vm1626, %v2942, 0.0
        %v2955 = vsel %vm1626, %v2944, 0.0
        %v2956 = vmax.f32 %v2916, %v2934
        %v2957 = vmax.f32 %v2917, %v2937
        %v2958 = vmax.f32 %v2918, %v2939
        %v2959 = vmax.f32 %v2919, %v2941
        %v2960 = vmax.f32 %v2920, %v2943
        %v2961 = vmax.f32 %v2921, %v2945
        %v2962 = vmax.f32 %v2922, %v2954
        %v2963 = vmax.f32 %v2923, %v2955
        %v2964 = vpack.c.bf16 %v2958, %v2956
        %v2965 = vpack.c.bf16 %v2959, %v2957
        %v2966 = vpack.c.bf16 %v2962, %v2960
        %v2967 = vpack.c.bf16 %v2963, %v2961
        %v2968 = vld [vmem:[%s55] sm:$0xf]
        %v2969 = vld [vmem:[%s55 + $0x4] sm:$0xf]
        %v2972 = vunpack.c.l.b16 %v2968
        %v2973 = vunpack.c.l.b16 %v2969
        %v2974 = vpack.c.b16 %v2973, %v2972
        %vm2975 = vcmask 261120
        %v2977 = vsel %vm2975, %v2974, 0
        %2979 = vmatprep.subr.bf16.mxu0 %v2965
        %2980 = vmatpush1.bf16.msra.mxu0 %v2964
        %2981 = vmatprep.subr.bf16.mxu0 %v2967
        %2982 = vmatpush1.bf16.msra.mxu0 %v2966
        %2983 = vmatprep.subr.bf16.mxu0 0
        %2984 = vmatpush1.bf16.msra.mxu0 0
        %2985 = vmatprep.subr.bf16.mxu0 0
        %2986 = vmatpush1.bf16.msra.mxu0 0
        %2987 = vmatprep.subr.bf16.mxu0 0
        %2988 = vmatpush1.bf16.msra.mxu0 0
        %2989 = vmatprep.subr.bf16.mxu0 0
        %2990 = vmatpush1.bf16.msra.mxu0 0
        %2991 = vmatprep.subr.bf16.mxu0 0
        %2992 = vmatpush1.bf16.msra.mxu0 0
        %2993 = vmatprep.subr.bf16.mxu0 0
        %2994 = vmatpush1.bf16.msra.mxu0 0
        %2995 = vmatprep.subr.bf16.mxu0 0
        %2996 = vmatpush1.bf16.msra.mxu0 0
        %2997 = vmatprep.subr.bf16.mxu0 0
        %2998 = vmatpush1.bf16.msra.mxu0 0
        %2999 = vmatprep.subr.bf16.mxu0 0
        %3000 = vmatpush1.bf16.msra.mxu0 0
        %3001 = vmatprep.subr.bf16.mxu0 0
        %3002 = vmatpush1.bf16.msra.mxu0 0
        %3003 = vmatprep.subr.bf16.mxu0 0
        %3004 = vmatpush1.bf16.msra.mxu0 0
        %3005 = vmatprep.subr.bf16.mxu0 0
        %3006 = vmatpush1.bf16.msra.mxu0 0
        %3007 = vmatprep.subr.bf16.mxu0 0
        %3008 = vmatpush1.bf16.msra.mxu0 0
        %3009 = vmatprep.subr.bf16.mxu0 0
        %3010 = vmatpush1.bf16.msra.mxu0 0
        %3011 = vmatprep.mubr.bf16.mxu0 0
        %3012 = vmatmul.mubr.bf16.gmra.mrb[0].mxu0 %v2977
        %v3013 = vpop.f32.mrb[0].mxu0
        %v3014 = vadd.f32 0.0, %v3013
        %v3015 = vpop.f32.mrb[0].mxu0
        %v3016 = vadd.f32 0.0, %v3015
        %v3017 = vpop.f32.mrb[0].mxu0
        %v3018 = vadd.f32 0.0, %v3017
        %v3019 = vpop.f32.mrb[0].mxu0
        %v3020 = vadd.f32 0.0, %v3019
        %3021 = vdwg.mxu0
        %v3022 = vpack.c.bf16 %v3018, %v3014
        %v3023 = vpack.c.bf16 %v3020, %v3016
        %v3024 = vld [vmem:[%s57] sm:$0xf]
        %v3025 = vld [vmem:[%s57 + $0x4] sm:$0xf]
        %v3026 = vld [vmem:[%s57 + $0x8] sm:$0xf]
        %v3027 = vld [vmem:[%s57 + $0xc] sm:$0xf]
        %v3028 = vld [vmem:[%s57 + $0x10] sm:$0xf]
        %v3029 = vld [vmem:[%s57 + $0x14] sm:$0xf]
        %v3030 = vld [vmem:[%s57 + $0x18] sm:$0xf]
        %v3031 = vld [vmem:[%s57 + $0x1c] sm:$0xf]
        %v3032 = vld [vmem:[%s57 + $0x20] sm:$0xf]
        %v3033 = vld [vmem:[%s57 + $0x24] sm:$0xf]
        %v3034 = vld [vmem:[%s57 + $0x28] sm:$0xf]
        %v3035 = vld [vmem:[%s57 + $0x2c] sm:$0xf]
        %v3036 = vld [vmem:[%s57 + $0x30] sm:$0xf]
        %v3037 = vld [vmem:[%s57 + $0x34] sm:$0xf]
        %v3038 = vld [vmem:[%s57 + $0x38] sm:$0xf]
        %v3039 = vld [vmem:[%s57 + $0x3c] sm:$0xf]
        %v3040 = vld [vmem:[%s57 + $0x40] sm:$0xf]
        %v3041 = vld [vmem:[%s57 + $0x44] sm:$0xf]
        %v3042 = vld [vmem:[%s57 + $0x48] sm:$0xf]
        %v3043 = vld [vmem:[%s57 + $0x4c] sm:$0xf]
        %v3044 = vld [vmem:[%s57 + $0x50] sm:$0xf]
        %v3045 = vld [vmem:[%s57 + $0x54] sm:$0xf]
        %v3046 = vld [vmem:[%s57 + $0x58] sm:$0xf]
        %v3047 = vld [vmem:[%s57 + $0x5c] sm:$0xf]
        %v3048 = vld [vmem:[%s57 + $0x60] sm:$0xf]
        %v3049 = vld [vmem:[%s57 + $0x64] sm:$0xf]
        %v3050 = vld [vmem:[%s57 + $0x68] sm:$0xf]
        %v3051 = vld [vmem:[%s57 + $0x6c] sm:$0xf]
        %v3052 = vld [vmem:[%s57 + $0x70] sm:$0xf]
        %v3053 = vld [vmem:[%s57 + $0x74] sm:$0xf]
        %v3054 = vld [vmem:[%s57 + $0x78] sm:$0xf]
        %v3055 = vld [vmem:[%s57 + $0x7c] sm:$0xf]
        %v3088 = vunpack.c.l.b16 %v3024
        %v3089 = vunpack.c.l.b16 %v3025
        %v3090 = vunpack.c.l.b16 %v3026
        %v3091 = vunpack.c.l.b16 %v3027
        %v3092 = vunpack.c.l.b16 %v3028
        %v3093 = vunpack.c.l.b16 %v3029
        %v3094 = vunpack.c.l.b16 %v3030
        %v3095 = vunpack.c.l.b16 %v3031
        %v3096 = vunpack.c.l.b16 %v3032
        %v3097 = vunpack.c.l.b16 %v3033
        %v3098 = vunpack.c.l.b16 %v3034
        %v3099 = vunpack.c.l.b16 %v3035
        %v3100 = vunpack.c.l.b16 %v3036
        %v3101 = vunpack.c.l.b16 %v3037
        %v3102 = vunpack.c.l.b16 %v3038
        %v3103 = vunpack.c.l.b16 %v3039
        %v3104 = vunpack.c.l.b16 %v3040
        %v3105 = vunpack.c.l.b16 %v3041
        %v3106 = vunpack.c.l.b16 %v3042
        %v3107 = vunpack.c.l.b16 %v3043
        %v3108 = vunpack.c.l.b16 %v3044
        %v3109 = vunpack.c.l.b16 %v3045
        %v3110 = vunpack.c.l.b16 %v3046
        %v3111 = vunpack.c.l.b16 %v3047
        %v3112 = vunpack.c.l.b16 %v3048
        %v3113 = vunpack.c.l.b16 %v3049
        %v3114 = vunpack.c.l.b16 %v3050
        %v3115 = vunpack.c.l.b16 %v3051
        %v3116 = vunpack.c.l.b16 %v3052
        %v3117 = vunpack.c.l.b16 %v3053
        %v3118 = vunpack.c.l.b16 %v3054
        %v3119 = vunpack.c.l.b16 %v3055
        %v3120 = vpack.c.b16 %v3089, %v3088
        %v3121 = vpack.c.b16 %v3091, %v3090
        %v3122 = vpack.c.b16 %v3093, %v3092
        %v3123 = vpack.c.b16 %v3095, %v3094
        %v3124 = vpack.c.b16 %v3097, %v3096
        %v3125 = vpack.c.b16 %v3099, %v3098
        %v3126 = vpack.c.b16 %v3101, %v3100
        %v3127 = vpack.c.b16 %v3103, %v3102
        %v3128 = vpack.c.b16 %v3105, %v3104
        %v3129 = vpack.c.b16 %v3107, %v3106
        %v3130 = vpack.c.b16 %v3109, %v3108
        %v3131 = vpack.c.b16 %v3111, %v3110
        %v3132 = vpack.c.b16 %v3113, %v3112
        %v3133 = vpack.c.b16 %v3115, %v3114
        %v3134 = vpack.c.b16 %v3117, %v3116
        %v3135 = vpack.c.b16 %v3119, %v3118
        %3152 = vmatprep.subr.bf16.mxu0 0
        %3153 = vmatpush1.bf16.msra.mxu0 %v3120
        %3154 = vmatprep.subr.bf16.mxu0 0
        %3155 = vmatpush1.bf16.msra.mxu0 %v3121
        %3156 = vmatprep.subr.bf16.mxu0 0
        %3157 = vmatpush1.bf16.msra.mxu0 %v3122
        %3158 = vmatprep.subr.bf16.mxu0 0
        %3159 = vmatpush1.bf16.msra.mxu0 %v3123
        %3160 = vmatprep.subr.bf16.mxu0 0
        %3161 = vmatpush1.bf16.msra.mxu0 %v3124
        %3162 = vmatprep.subr.bf16.mxu0 0
        %3163 = vmatpush1.bf16.msra.mxu0 %v3125
        %3164 = vmatprep.subr.bf16.mxu0 0
        %3165 = vmatpush1.bf16.msra.mxu0 %v3126
        %3166 = vmatprep.subr.bf16.mxu0 0
        %3167 = vmatpush1.bf16.msra.mxu0 %v3127
        %3168 = vmatprep.subr.bf16.mxu0 0
        %3169 = vmatpush1.bf16.msra.mxu0 %v3128
        %3170 = vmatprep.subr.bf16.mxu0 0
        %3171 = vmatpush1.bf16.msra.mxu0 %v3129
        %3172 = vmatprep.subr.bf16.mxu0 0
        %3173 = vmatpush1.bf16.msra.mxu0 %v3130
        %3174 = vmatprep.subr.bf16.mxu0 0
        %3175 = vmatpush1.bf16.msra.mxu0 %v3131
        %3176 = vmatprep.subr.bf16.mxu0 0
        %3177 = vmatpush1.bf16.msra.mxu0 %v3132
        %3178 = vmatprep.subr.bf16.mxu0 0
        %3179 = vmatpush1.bf16.msra.mxu0 %v3133
        %3180 = vmatprep.subr.bf16.mxu0 0
        %3181 = vmatpush1.bf16.msra.mxu0 %v3134
        %3182 = vmatprep.subr.bf16.mxu0 0
        %3183 = vmatpush1.bf16.msra.mxu0 %v3135
        %3184 = vmatprep.mubr.bf16.mxu0 %v3023
        %3185 = vmatmul.mubr.bf16.gmra.mrb[0].mxu0 %v3022
        %v3186 = vpop.f32.mrb[0].mxu0
        %v3187 = vadd.f32 0.0, %v3186
        %v3188 = vpop.f32.mrb[0].mxu0
        %v3189 = vpop.f32.mrb[0].mxu0
        %v3190 = vadd.f32 0.0, %v3189
        %v3191 = vpop.f32.mrb[0].mxu0
        %3192 = vdwg.mxu0
        %s3193 = scalar_lea.vmem %s57, 128
        %v3194 = vld [vmem:[%s3193] sm:$0xf]
        %v3195 = vld [vmem:[%s3193 + $0x4] sm:$0xf]
        %v3196 = vld [vmem:[%s3193 + $0x8] sm:$0xf]
        %v3197 = vld [vmem:[%s3193 + $0xc] sm:$0xf]
        %v3198 = vld [vmem:[%s3193 + $0x10] sm:$0xf]
        %v3199 = vld [vmem:[%s3193 + $0x14] sm:$0xf]
        %v3200 = vld [vmem:[%s3193 + $0x18] sm:$0xf]
        %v3201 = vld [vmem:[%s3193 + $0x1c] sm:$0xf]
        %v3202 = vld [vmem:[%s3193 + $0x20] sm:$0xf]
        %v3203 = vld [vmem:[%s3193 + $0x24] sm:$0xf]
        %v3204 = vld [vmem:[%s3193 + $0x28] sm:$0xf]
        %v3205 = vld [vmem:[%s3193 + $0x2c] sm:$0xf]
        %v3206 = vld [vmem:[%s3193 + $0x30] sm:$0xf]
        %v3207 = vld [vmem:[%s3193 + $0x34] sm:$0xf]
        %v3208 = vld [vmem:[%s3193 + $0x38] sm:$0xf]
        %v3209 = vld [vmem:[%s3193 + $0x3c] sm:$0xf]
        %v3210 = vld [vmem:[%s3193 + $0x40] sm:$0xf]
        %v3211 = vld [vmem:[%s3193 + $0x44] sm:$0xf]
        %v3212 = vld [vmem:[%s3193 + $0x48] sm:$0xf]
        %v3213 = vld [vmem:[%s3193 + $0x4c] sm:$0xf]
        %v3214 = vld [vmem:[%s3193 + $0x50] sm:$0xf]
        %v3215 = vld [vmem:[%s3193 + $0x54] sm:$0xf]
        %v3216 = vld [vmem:[%s3193 + $0x58] sm:$0xf]
        %v3217 = vld [vmem:[%s3193 + $0x5c] sm:$0xf]
        %v3218 = vld [vmem:[%s3193 + $0x60] sm:$0xf]
        %v3219 = vld [vmem:[%s3193 + $0x64] sm:$0xf]
        %v3220 = vld [vmem:[%s3193 + $0x68] sm:$0xf]
        %v3221 = vld [vmem:[%s3193 + $0x6c] sm:$0xf]
        %v3222 = vld [vmem:[%s3193 + $0x70] sm:$0xf]
        %v3223 = vld [vmem:[%s3193 + $0x74] sm:$0xf]
        %v3224 = vld [vmem:[%s3193 + $0x78] sm:$0xf]
        %v3225 = vld [vmem:[%s3193 + $0x7c] sm:$0xf]
        %v3258 = vunpack.c.l.b16 %v3194
        %v3259 = vunpack.c.l.b16 %v3195
        %v3260 = vunpack.c.l.b16 %v3196
        %v3261 = vunpack.c.l.b16 %v3197
        %v3262 = vunpack.c.l.b16 %v3198
        %v3263 = vunpack.c.l.b16 %v3199
        %v3264 = vunpack.c.l.b16 %v3200
        %v3265 = vunpack.c.l.b16 %v3201
        %v3266 = vunpack.c.l.b16 %v3202
        %v3267 = vunpack.c.l.b16 %v3203
        %v3268 = vunpack.c.l.b16 %v3204
        %v3269 = vunpack.c.l.b16 %v3205
        %v3270 = vunpack.c.l.b16 %v3206
        %v3271 = vunpack.c.l.b16 %v3207
        %v3272 = vunpack.c.l.b16 %v3208
        %v3273 = vunpack.c.l.b16 %v3209
        %v3274 = vunpack.c.l.b16 %v3210
        %v3275 = vunpack.c.l.b16 %v3211
        %v3276 = vunpack.c.l.b16 %v3212
        %v3277 = vunpack.c.l.b16 %v3213
        %v3278 = vunpack.c.l.b16 %v3214
        %v3279 = vunpack.c.l.b16 %v3215
        %v3280 = vunpack.c.l.b16 %v3216
        %v3281 = vunpack.c.l.b16 %v3217
        %v3282 = vunpack.c.l.b16 %v3218
        %v3283 = vunpack.c.l.b16 %v3219
        %v3284 = vunpack.c.l.b16 %v3220
        %v3285 = vunpack.c.l.b16 %v3221
        %v3286 = vunpack.c.l.b16 %v3222
        %v3287 = vunpack.c.l.b16 %v3223
        %v3288 = vunpack.c.l.b16 %v3224
        %v3289 = vunpack.c.l.b16 %v3225
        %v3290 = vpack.c.b16 %v3259, %v3258
        %v3291 = vpack.c.b16 %v3261, %v3260
        %v3292 = vpack.c.b16 %v3263, %v3262
        %v3293 = vpack.c.b16 %v3265, %v3264
        %v3294 = vpack.c.b16 %v3267, %v3266
        %v3295 = vpack.c.b16 %v3269, %v3268
        %v3296 = vpack.c.b16 %v3271, %v3270
        %v3297 = vpack.c.b16 %v3273, %v3272
        %v3298 = vpack.c.b16 %v3275, %v3274
        %v3299 = vpack.c.b16 %v3277, %v3276
        %v3300 = vpack.c.b16 %v3279, %v3278
        %v3301 = vpack.c.b16 %v3281, %v3280
        %v3302 = vpack.c.b16 %v3283, %v3282
        %v3303 = vpack.c.b16 %v3285, %v3284
        %v3304 = vpack.c.b16 %v3287, %v3286
        %v3305 = vpack.c.b16 %v3289, %v3288
        %3322 = vmatprep.subr.bf16.mxu0 0
        %3323 = vmatpush1.bf16.msra.mxu0 %v3290
        %3324 = vmatprep.subr.bf16.mxu0 0
        %3325 = vmatpush1.bf16.msra.mxu0 %v3291
        %3326 = vmatprep.subr.bf16.mxu0 0
        %3327 = vmatpush1.bf16.msra.mxu0 %v3292
        %3328 = vmatprep.subr.bf16.mxu0 0
        %3329 = vmatpush1.bf16.msra.mxu0 %v3293
        %3330 = vmatprep.subr.bf16.mxu0 0
        %3331 = vmatpush1.bf16.msra.mxu0 %v3294
        %3332 = vmatprep.subr.bf16.mxu0 0
        %3333 = vmatpush1.bf16.msra.mxu0 %v3295
        %3334 = vmatprep.subr.bf16.mxu0 0
        %3335 = vmatpush1.bf16.msra.mxu0 %v3296
        %3336 = vmatprep.subr.bf16.mxu0 0
        %3337 = vmatpush1.bf16.msra.mxu0 %v3297
        %3338 = vmatprep.subr.bf16.mxu0 0
        %3339 = vmatpush1.bf16.msra.mxu0 %v3298
        %3340 = vmatprep.subr.bf16.mxu0 0
        %3341 = vmatpush1.bf16.msra.mxu0 %v3299
        %3342 = vmatprep.subr.bf16.mxu0 0
        %3343 = vmatpush1.bf16.msra.mxu0 %v3300
        %3344 = vmatprep.subr.bf16.mxu0 0
        %3345 = vmatpush1.bf16.msra.mxu0 %v3301
        %3346 = vmatprep.subr.bf16.mxu0 0
        %3347 = vmatpush1.bf16.msra.mxu0 %v3302
        %3348 = vmatprep.subr.bf16.mxu0 0
        %3349 = vmatpush1.bf16.msra.mxu0 %v3303
        %3350 = vmatprep.subr.bf16.mxu0 0
        %3351 = vmatpush1.bf16.msra.mxu0 %v3304
        %3352 = vmatprep.subr.bf16.mxu0 0
        %3353 = vmatpush1.bf16.msra.mxu0 %v3305
        %3354 = vmatprep.mubr.bf16.mxu0 %v3023
        %3355 = vmatmul.mubr.bf16.gmra.mrb[0].mxu0 %v3022
        %v3356 = vpop.f32.mrb[0].mxu0
        %v3357 = vadd.f32 0.0, %v3356
        %v3358 = vpop.f32.mrb[0].mxu0
        %v3359 = vpop.f32.mrb[0].mxu0
        %v3360 = vadd.f32 0.0, %v3359
        %v3361 = vpop.f32.mrb[0].mxu0
        %3362 = vdwg.mxu0
        %v3363 = vmax.f32 %v3187, %v3357
        %v3364 = vmax.f32 %v3190, %v3360
        %v3367 = vrot.slane %v3363, 7
        %v3368 = vrot.slane %v3364, 7
        %v3369 = vsel %vm1613, %v3367, %v3368
        %v3372 = vsel %vm1613, 0.0, %v3367
        %v3373 = vrot.slane %v3363, 1
        %v3374 = vrot.slane %v3364, 1
        %v3375 = vsel %vm1626, %v3373, %v3374
        %v3378 = vsel %vm1626, %v3374, 0.0
        %v3379 = vpack.c.bf16 %v3369, %v3372
        %v3380 = vpack.c.bf16 %v3364, %v3363
        %v3381 = vpack.c.bf16 %v3378, %v3375
        %v3382 = vld [vmem:[#allocation5] sm:$0xff]
        %v3383 = vld [vmem:[#allocation5 + $0x8] sm:$0xff]
        %v3384 = vld [vmem:[#allocation5 + $0x10] sm:$0xff]
        %v3385 = vld [vmem:[#allocation5 + $0x18] sm:$0xff]
        %v3386 = vld [vmem:[#allocation5 + $0x20] sm:$0xff]
        %v3387 = vld [vmem:[#allocation5 + $0x28] sm:$0xff]
        %v3388 = vld [vmem:[#allocation5 + $0x30] sm:$0xff]
        %v3389 = vld [vmem:[#allocation5 + $0x38] sm:$0xff]
        %v3390 = vld [vmem:[#allocation5 + $0x40] sm:$0xff]
        %v3391 = vld [vmem:[#allocation5 + $0x48] sm:$0xff]
        %v3392 = vld [vmem:[#allocation5 + $0x50] sm:$0xff]
        %v3393 = vld [vmem:[#allocation5 + $0x58] sm:$0xff]
        %v3394 = vld [vmem:[#allocation5 + $0x60] sm:$0xff]
        %v3395 = vld [vmem:[#allocation5 + $0x68] sm:$0xff]
        %v3396 = vld [vmem:[#allocation5 + $0x70] sm:$0xff]
        %v3397 = vld [vmem:[#allocation5 + $0x78] sm:$0xff]
        %v3398 = vld [vmem:[#allocation5 + $0x80] sm:$0xff]
        %v3399 = vld [vmem:[#allocation5 + $0x88] sm:$0xff]
        %v3400 = vld [vmem:[#allocation5 + $0x90] sm:$0xff]
        %v3401 = vld [vmem:[#allocation5 + $0x98] sm:$0xff]
        %v3402 = vld [vmem:[#allocation5 + $0xa0] sm:$0xff]
        %v3403 = vld [vmem:[#allocation5 + $0xa8] sm:$0xff]
        %v3404 = vld [vmem:[#allocation5 + $0xb0] sm:$0xff]
        %v3405 = vld [vmem:[#allocation5 + $0xb8] sm:$0xff]
        %v3406 = vld [vmem:[#allocation5 + $0xc0] sm:$0xff]
        %v3407 = vld [vmem:[#allocation5 + $0xc8] sm:$0xff]
        %v3408 = vld [vmem:[#allocation5 + $0xd0] sm:$0xff]
        %v3409 = vld [vmem:[#allocation5 + $0xd8] sm:$0xff]
        %v3410 = vld [vmem:[#allocation5 + $0xe0] sm:$0xff]
        %v3411 = vld [vmem:[#allocation5 + $0xe8] sm:$0xff]
        %v3412 = vld [vmem:[#allocation5 + $0xf0] sm:$0xff]
        %v3413 = vld [vmem:[#allocation5 + $0xf8] sm:$0xff]
        %v3414 = vld [vmem:[#allocation5 + $0x100] sm:$0xff]
        %v3415 = vld [vmem:[#allocation5 + $0x108] sm:$0xff]
        %v3416 = vld [vmem:[#allocation5 + $0x110] sm:$0xff]
        %v3417 = vld [vmem:[#allocation5 + $0x118] sm:$0xff]
        %v3418 = vld [vmem:[#allocation5 + $0x120] sm:$0xff]
        %v3419 = vld [vmem:[#allocation5 + $0x128] sm:$0xff]
        %v3420 = vld [vmem:[#allocation5 + $0x130] sm:$0xff]
        %v3421 = vld [vmem:[#allocation5 + $0x138] sm:$0xff]
        %v3422 = vld [vmem:[#allocation5 + $0x140] sm:$0xff]
        %v3423 = vld [vmem:[#allocation5 + $0x148] sm:$0xff]
        %v3424 = vld [vmem:[#allocation5 + $0x150] sm:$0xff]
        %v3425 = vld [vmem:[#allocation5 + $0x158] sm:$0xff]
        %v3426 = vld [vmem:[#allocation5 + $0x160] sm:$0xff]
        %v3427 = vld [vmem:[#allocation5 + $0x168] sm:$0xff]
        %v3428 = vld [vmem:[#allocation5 + $0x170] sm:$0xff]
        %v3429 = vld [vmem:[#allocation5 + $0x178] sm:$0xff]
        %v3430 = vld [vmem:[#allocation7] ss:$4 sm:$0x3]
        %v3432 = vlaneseq
        %v3433 = vshrl.u32 %v3432, 7
        %v3434 = vsub.s32 0, %v3433
        %v3435 = vrot.slane %v3430, %v3434
        %v3436 = vlaneseq
        %v3437 = vshrl.u32 %v3436, 7
        %v3438 = vsub.s32 1, %v3437
        %v3439 = vrot.slane %v3430, %v3438
        %v3490 = vunpack.c.l.b16 %v3382
        %v3491 = vunpack.c.h.b16 %v3382
        %v3492 = vunpack.c.l.b16 %v3383
        %v3493 = vunpack.c.h.b16 %v3383
        %v3494 = vunpack.c.l.b16 %v3384
        %v3495 = vunpack.c.h.b16 %v3384
        %v3496 = vunpack.c.l.b16 %v3385
        %v3497 = vunpack.c.h.b16 %v3385
        %v3498 = vunpack.c.l.b16 %v3386
        %v3499 = vunpack.c.h.b16 %v3386
        %v3500 = vunpack.c.l.b16 %v3387
        %v3501 = vunpack.c.h.b16 %v3387
        %v3502 = vunpack.c.l.b16 %v3388
        %v3503 = vunpack.c.h.b16 %v3388
        %v3504 = vunpack.c.l.b16 %v3389
        %v3505 = vunpack.c.h.b16 %v3389
        %v3506 = vunpack.c.l.b16 %v3390
        %v3507 = vunpack.c.h.b16 %v3390
        %v3508 = vunpack.c.l.b16 %v3391
        %v3509 = vunpack.c.h.b16 %v3391
        %v3510 = vunpack.c.l.b16 %v3392
        %v3511 = vunpack.c.h.b16 %v3392
        %v3512 = vunpack.c.l.b16 %v3393
        %v3513 = vunpack.c.h.b16 %v3393
        %v3514 = vunpack.c.l.b16 %v3394
        %v3515 = vunpack.c.h.b16 %v3394
        %v3516 = vunpack.c.l.b16 %v3395
        %v3517 = vunpack.c.h.b16 %v3395
        %v3518 = vunpack.c.l.b16 %v3396
        %v3519 = vunpack.c.h.b16 %v3396
        %v3520 = vunpack.c.l.b16 %v3397
        %v3521 = vunpack.c.h.b16 %v3397
        %v3522 = vunpack.c.l.b16 %v3398
        %v3523 = vunpack.c.h.b16 %v3398
        %v3524 = vunpack.c.l.b16 %v3399
        %v3525 = vunpack.c.h.b16 %v3399
        %v3526 = vunpack.c.l.b16 %v3400
        %v3527 = vunpack.c.h.b16 %v3400
        %v3528 = vunpack.c.l.b16 %v3401
        %v3529 = vunpack.c.h.b16 %v3401
        %v3530 = vunpack.c.l.b16 %v3402
        %v3531 = vunpack.c.h.b16 %v3402
        %v3532 = vunpack.c.l.b16 %v3403
        %v3533 = vunpack.c.h.b16 %v3403
        %v3534 = vunpack.c.l.b16 %v3404
        %v3535 = vunpack.c.h.b16 %v3404
        %v3536 = vunpack.c.l.b16 %v3405
        %v3537 = vunpack.c.h.b16 %v3405
        %v3538 = vunpack.c.l.b16 %v3406
        %v3539 = vunpack.c.h.b16 %v3406
        %v3540 = vunpack.c.l.b16 %v3407
        %v3541 = vunpack.c.h.b16 %v3407
        %v3542 = vunpack.c.l.b16 %v3408
        %v3543 = vunpack.c.h.b16 %v3408
        %v3544 = vunpack.c.l.b16 %v3409
        %v3545 = vunpack.c.h.b16 %v3409
        %v3546 = vunpack.c.l.b16 %v3410
        %v3547 = vunpack.c.h.b16 %v3410
        %v3548 = vunpack.c.l.b16 %v3411
        %v3549 = vunpack.c.h.b16 %v3411
        %v3550 = vunpack.c.l.b16 %v3412
        %v3551 = vunpack.c.h.b16 %v3412
        %v3552 = vunpack.c.l.b16 %v3413
        %v3553 = vunpack.c.h.b16 %v3413
        %v3554 = vunpack.c.l.b16 %v3414
        %v3555 = vunpack.c.h.b16 %v3414
        %v3556 = vunpack.c.l.b16 %v3415
        %v3557 = vunpack.c.h.b16 %v3415
        %v3558 = vunpack.c.l.b16 %v3416
        %v3559 = vunpack.c.h.b16 %v3416
        %v3560 = vunpack.c.l.b16 %v3417
        %v3561 = vunpack.c.h.b16 %v3417
        %v3562 = vunpack.c.l.b16 %v3418
        %v3563 = vunpack.c.h.b16 %v3418
        %v3564 = vunpack.c.l.b16 %v3419
        %v3565 = vunpack.c.h.b16 %v3419
        %v3566 = vunpack.c.l.b16 %v3420
        %v3567 = vunpack.c.h.b16 %v3420
        %v3568 = vunpack.c.l.b16 %v3421
        %v3569 = vunpack.c.h.b16 %v3421
        %v3570 = vunpack.c.l.b16 %v3422
        %v3571 = vunpack.c.h.b16 %v3422
        %v3572 = vunpack.c.l.b16 %v3423
        %v3573 = vunpack.c.h.b16 %v3423
        %v3574 = vunpack.c.l.b16 %v3424
        %v3575 = vunpack.c.h.b16 %v3424
        %v3576 = vunpack.c.l.b16 %v3425
        %v3577 = vunpack.c.h.b16 %v3425
        %v3578 = vunpack.c.l.b16 %v3426
        %v3579 = vunpack.c.h.b16 %v3426
        %v3580 = vunpack.c.l.b16 %v3427
        %v3581 = vunpack.c.h.b16 %v3427
        %v3582 = vunpack.c.l.b16 %v3428
        %v3583 = vunpack.c.h.b16 %v3428
        %v3584 = vunpack.c.l.b16 %v3429
        %v3585 = vunpack.c.h.b16 %v3429
        %v3586 = vpack.c.b16 %v3492, %v3490
        %v3587 = vpack.c.b16 %v3493, %v3491
        %v3588 = vpack.c.b16 %v3496, %v3494
        %v3589 = vpack.c.b16 %v3497, %v3495
        %v3590 = vpack.c.b16 %v3500, %v3498
        %v3591 = vpack.c.b16 %v3501, %v3499
        %v3592 = vpack.c.b16 %v3504, %v3502
        %v3593 = vpack.c.b16 %v3505, %v3503
        %v3594 = vpack.c.b16 %v3508, %v3506
        %v3595 = vpack.c.b16 %v3509, %v3507
        %v3596 = vpack.c.b16 %v3512, %v3510
        %v3597 = vpack.c.b16 %v3513, %v3511
        %v3598 = vpack.c.b16 %v3516, %v3514
        %v3599 = vpack.c.b16 %v3517, %v3515
        %v3600 = vpack.c.b16 %v3520, %v3518
        %v3601 = vpack.c.b16 %v3521, %v3519
        %v3602 = vpack.c.b16 %v3524, %v3522
        %v3603 = vpack.c.b16 %v3525, %v3523
        %v3604 = vpack.c.b16 %v3528, %v3526
        %v3605 = vpack.c.b16 %v3529, %v3527
        %v3606 = vpack.c.b16 %v3532, %v3530
        %v3607 = vpack.c.b16 %v3533, %v3531
        %v3608 = vpack.c.b16 %v3536, %v3534
        %v3609 = vpack.c.b16 %v3537, %v3535
        %v3610 = vpack.c.b16 %v3540, %v3538
        %v3611 = vpack.c.b16 %v3541, %v3539
        %v3612 = vpack.c.b16 %v3544, %v3542
        %v3613 = vpack.c.b16 %v3545, %v3543
        %v3614 = vpack.c.b16 %v3548, %v3546
        %v3615 = vpack.c.b16 %v3549, %v3547
        %v3616 = vpack.c.b16 %v3552, %v3550
        %v3617 = vpack.c.b16 %v3553, %v3551
        %v3618 = vpack.c.b16 %v3556, %v3554
        %v3619 = vpack.c.b16 %v3557, %v3555
        %v3620 = vpack.c.b16 %v3560, %v3558
        %v3621 = vpack.c.b16 %v3561, %v3559
        %v3622 = vpack.c.b16 %v3564, %v3562
        %v3623 = vpack.c.b16 %v3565, %v3563
        %v3624 = vpack.c.b16 %v3568, %v3566
        %v3625 = vpack.c.b16 %v3569, %v3567
        %v3626 = vpack.c.b16 %v3572, %v3570
        %v3627 = vpack.c.b16 %v3573, %v3571
        %v3628 = vpack.c.b16 %v3576, %v3574
        %v3629 = vpack.c.b16 %v3577, %v3575
        %v3630 = vpack.c.b16 %v3580, %v3578
        %v3631 = vpack.c.b16 %v3581, %v3579
        %v3632 = vpack.c.b16 %v3584, %v3582
        %v3633 = vpack.c.b16 %v3585, %v3583
        %3682 = vmatprep.subr.bf16.mxu0 %v3587
        %3683 = vmatpush1.bf16.msra.mxu0 %v3586
        %3684 = vmatprep.subr.bf16.mxu0 %v3589
        %3685 = vmatpush1.bf16.msra.mxu0 %v3588
        %3686 = vmatprep.subr.bf16.mxu0 %v3591
        %3687 = vmatpush1.bf16.msra.mxu0 %v3590
        %3688 = vmatprep.subr.bf16.mxu0 %v3593
        %3689 = vmatpush1.bf16.msra.mxu0 %v3592
        %3690 = vmatprep.subr.bf16.mxu0 %v3595
        %3691 = vmatpush1.bf16.msra.mxu0 %v3594
        %3692 = vmatprep.subr.bf16.mxu0 %v3597
        %3693 = vmatpush1.bf16.msra.mxu0 %v3596
        %3694 = vmatprep.subr.bf16.mxu0 %v3599
        %3695 = vmatpush1.bf16.msra.mxu0 %v3598
        %3696 = vmatprep.subr.bf16.mxu0 %v3601
        %3697 = vmatpush1.bf16.msra.mxu0 %v3600
        %3698 = vmatprep.subr.bf16.mxu0 %v3603
        %3699 = vmatpush1.bf16.msra.mxu0 %v3602
        %3700 = vmatprep.subr.bf16.mxu0 %v3605
        %3701 = vmatpush1.bf16.msra.mxu0 %v3604
        %3702 = vmatprep.subr.bf16.mxu0 %v3607
        %3703 = vmatpush1.bf16.msra.mxu0 %v3606
        %3704 = vmatprep.subr.bf16.mxu0 %v3609
        %3705 = vmatpush1.bf16.msra.mxu0 %v3608
        %3706 = vmatprep.subr.bf16.mxu0 %v3611
        %3707 = vmatpush1.bf16.msra.mxu0 %v3610
        %3708 = vmatprep.subr.bf16.mxu0 %v3613
        %3709 = vmatpush1.bf16.msra.mxu0 %v3612
        %3710 = vmatprep.subr.bf16.mxu0 %v3615
        %3711 = vmatpush1.bf16.msra.mxu0 %v3614
        %3712 = vmatprep.subr.bf16.mxu0 %v3617
        %3713 = vmatpush1.bf16.msra.mxu0 %v3616
        %3714 = vmatprep.mubr.bf16.mxu0 %v3380
        %3715 = vmatmul.mubr.bf16.gmra.mrb[0].mxu0 %v3379
        %v3716 = vpop.f32.mrb[0].mxu0
        %v3717 = vadd.f32 %v3435, %v3716
        %v3718 = vpop.f32.mrb[0].mxu0
        %v3719 = vadd.f32 %v3439, %v3718
        %v3720 = vpop.f32.mrb[0].mxu0
        %v3721 = vadd.f32 %v3435, %v3720
        %v3722 = vpop.f32.mrb[0].mxu0
        %v3723 = vadd.f32 %v3439, %v3722
        %3724 = vdwg.mxu0
        %3725 = vmatprep.subr.bf16.mxu0 %v3619
        %3726 = vmatpush1.bf16.msra.mxu0 %v3618
        %3727 = vmatprep.subr.bf16.mxu0 %v3621
        %3728 = vmatpush1.bf16.msra.mxu0 %v3620
        %3729 = vmatprep.subr.bf16.mxu0 %v3623
        %3730 = vmatpush1.bf16.msra.mxu0 %v3622
        %3731 = vmatprep.subr.bf16.mxu0 %v3625
        %3732 = vmatpush1.bf16.msra.mxu0 %v3624
        %3733 = vmatprep.subr.bf16.mxu0 %v3627
        %3734 = vmatpush1.bf16.msra.mxu0 %v3626
        %3735 = vmatprep.subr.bf16.mxu0 %v3629
        %3736 = vmatpush1.bf16.msra.mxu0 %v3628
        %3737 = vmatprep.subr.bf16.mxu0 %v3631
        %3738 = vmatpush1.bf16.msra.mxu0 %v3630
        %3739 = vmatprep.subr.bf16.mxu0 %v3633
        %3740 = vmatpush1.bf16.msra.mxu0 %v3632
        %3741 = vmatprep.subr.bf16.mxu0 0
        %3742 = vmatpush1.bf16.msra.mxu0 0
        %3743 = vmatprep.subr.bf16.mxu0 0
        %3744 = vmatpush1.bf16.msra.mxu0 0
        %3745 = vmatprep.subr.bf16.mxu0 0
        %3746 = vmatpush1.bf16.msra.mxu0 0
        %3747 = vmatprep.subr.bf16.mxu0 0
        %3748 = vmatpush1.bf16.msra.mxu0 0
        %3749 = vmatprep.subr.bf16.mxu0 0
        %3750 = vmatpush1.bf16.msra.mxu0 0
        %3751 = vmatprep.subr.bf16.mxu0 0
        %3752 = vmatpush1.bf16.msra.mxu0 0
        %3753 = vmatprep.subr.bf16.mxu0 0
        %3754 = vmatpush1.bf16.msra.mxu0 0
        %3755 = vmatprep.subr.bf16.mxu0 0
        %3756 = vmatpush1.bf16.msra.mxu0 0
        %3757 = vmatprep.mubr.bf16.mxu0 0
        %3758 = vmatmul.mubr.bf16.gmra.mrb[0].mxu0 %v3381
        %v3759 = vpop.f32.mrb[0].mxu0
        %v3760 = vadd.f32 %v3717, %v3759
        %v3761 = vpop.f32.mrb[0].mxu0
        %v3762 = vadd.f32 %v3719, %v3761
        %v3763 = vpop.f32.mrb[0].mxu0
        %v3764 = vadd.f32 %v3721, %v3763
        %v3765 = vpop.f32.mrb[0].mxu0
        %v3766 = vadd.f32 %v3723, %v3765
        %3767 = vdwg.mxu0
        %v3768 = vmax.f32 %v3760, 0.0
        %v3769 = vmax.f32 %v3762, 0.0
        %v3770 = vmax.f32 %v3764, 0.0
        %v3771 = vmax.f32 %v3766, 0.0
        %s3772 = scalar_lea.vmem [#allocation7], 1
        %v3773 = vld [vmem:[%s3772] ss:$4 sm:$0x3]
        %v3775 = vlaneseq
        %v3776 = vshrl.u32 %v3775, 7
        %v3777 = vsub.s32 0, %v3776
        %v3778 = vrot.slane %v3773, %v3777
        %v3779 = vlaneseq
        %v3780 = vshrl.u32 %v3779, 7
        %v3781 = vsub.s32 1, %v3780
        %v3782 = vrot.slane %v3773, %v3781
        %v3785 = vmul.f32 %v3768, %v3778
        %v3786 = vmul.f32 %v3769, %v3782
        %v3787 = vmul.f32 %v3770, %v3778
        %v3788 = vmul.f32 %v3771, %v3782
        %s3789 = scalar_lea.vmem [#allocation7], 2
        %v3790 = vld [vmem:[%s3789] ss:$4 sm:$0x3]
        %v3792 = vlaneseq
        %v3793 = vshrl.u32 %v3792, 7
        %v3794 = vsub.s32 0, %v3793
        %v3795 = vrot.slane %v3790, %v3794
        %v3796 = vlaneseq
        %v3797 = vshrl.u32 %v3796, 7
        %v3798 = vsub.s32 1, %v3797
        %v3799 = vrot.slane %v3790, %v3798
        %v3802 = vadd.f32 %v3785, %v3795
        %v3803 = vadd.f32 %v3786, %v3799
        %v3804 = vadd.f32 %v3787, %v3795
        %v3805 = vadd.f32 %v3788, %v3799
        %v3810 = vrot.slane %v3802, 7
        %v3811 = vrot.slane %v3803, 7
        %v3812 = vrot.slane %v3804, 7
        %v3813 = vsel %vm1613, %v3810, %v3812
        %v3814 = vrot.slane %v3805, 7
        %v3815 = vsel %vm1613, %v3811, %v3814
        %v3820 = vsel %vm1613, 0.0, %v3810
        %v3821 = vsel %vm1613, 0.0, %v3811
        %v3822 = vrot.slane %v3802, 1
        %v3823 = vrot.slane %v3804, 1
        %v3824 = vsel %vm1626, %v3822, %v3823
        %v3825 = vrot.slane %v3803, 1
        %v3826 = vrot.slane %v3805, 1
        %v3827 = vsel %vm1626, %v3825, %v3826
        %v3832 = vsel %vm1626, %v3823, 0.0
        %v3833 = vsel %vm1626, %v3826, 0.0
        %v3834 = vpack.c.bf16 %v3813, %v3820
        %v3835 = vpack.c.bf16 %v3815, %v3821
        %v3836 = vpack.c.bf16 %v3804, %v3802
        %v3837 = vpack.c.bf16 %v3805, %v3803
        %v3838 = vpack.c.bf16 %v3832, %v3824
        %v3839 = vpack.c.bf16 %v3833, %v3827
        %v3840 = vld [vmem:[#allocation8] sm:$0xff]
        %v3841 = vld [vmem:[#allocation8 + $0x8] sm:$0xff]
        %v3842 = vld [vmem:[#allocation8 + $0x10] sm:$0xff]
        %v3843 = vld [vmem:[#allocation8 + $0x18] sm:$0xff]
        %v3844 = vld [vmem:[#allocation8 + $0x20] sm:$0xff]
        %v3845 = vld [vmem:[#allocation8 + $0x28] sm:$0xff]
        %v3846 = vld [vmem:[#allocation8 + $0x30] sm:$0xff]
        %v3847 = vld [vmem:[#allocation8 + $0x38] sm:$0xff]
        %v3848 = vld [vmem:[#allocation8 + $0x40] sm:$0xff]
        %v3849 = vld [vmem:[#allocation8 + $0x48] sm:$0xff]
        %v3850 = vld [vmem:[#allocation8 + $0x50] sm:$0xff]
        %v3851 = vld [vmem:[#allocation8 + $0x58] sm:$0xff]
        %v3852 = vld [vmem:[#allocation8 + $0x60] sm:$0xff]
        %v3853 = vld [vmem:[#allocation8 + $0x68] sm:$0xff]
        %v3854 = vld [vmem:[#allocation8 + $0x70] sm:$0xff]
        %v3855 = vld [vmem:[#allocation8 + $0x78] sm:$0xff]
        %v3856 = vld [vmem:[#allocation8 + $0x80] sm:$0xff]
        %v3857 = vld [vmem:[#allocation8 + $0x88] sm:$0xff]
        %v3858 = vld [vmem:[#allocation8 + $0x90] sm:$0xff]
        %v3859 = vld [vmem:[#allocation8 + $0x98] sm:$0xff]
        %v3860 = vld [vmem:[#allocation8 + $0xa0] sm:$0xff]
        %v3861 = vld [vmem:[#allocation8 + $0xa8] sm:$0xff]
        %v3862 = vld [vmem:[#allocation8 + $0xb0] sm:$0xff]
        %v3863 = vld [vmem:[#allocation8 + $0xb8] sm:$0xff]
        %v3864 = vld [vmem:[#allocation8 + $0xc0] sm:$0xff]
        %v3865 = vld [vmem:[#allocation8 + $0xc8] sm:$0xff]
        %v3866 = vld [vmem:[#allocation8 + $0xd0] sm:$0xff]
        %v3867 = vld [vmem:[#allocation8 + $0xd8] sm:$0xff]
        %v3868 = vld [vmem:[#allocation8 + $0xe0] sm:$0xff]
        %v3869 = vld [vmem:[#allocation8 + $0xe8] sm:$0xff]
        %v3870 = vld [vmem:[#allocation8 + $0xf0] sm:$0xff]
        %v3871 = vld [vmem:[#allocation8 + $0xf8] sm:$0xff]
        %v3872 = vld [vmem:[#allocation8 + $0x100] sm:$0xff]
        %v3873 = vld [vmem:[#allocation8 + $0x108] sm:$0xff]
        %v3874 = vld [vmem:[#allocation8 + $0x110] sm:$0xff]
        %v3875 = vld [vmem:[#allocation8 + $0x118] sm:$0xff]
        %v3876 = vld [vmem:[#allocation8 + $0x120] sm:$0xff]
        %v3877 = vld [vmem:[#allocation8 + $0x128] sm:$0xff]
        %v3878 = vld [vmem:[#allocation8 + $0x130] sm:$0xff]
        %v3879 = vld [vmem:[#allocation8 + $0x138] sm:$0xff]
        %v3880 = vld [vmem:[#allocation8 + $0x140] sm:$0xff]
        %v3881 = vld [vmem:[#allocation8 + $0x148] sm:$0xff]
        %v3882 = vld [vmem:[#allocation8 + $0x150] sm:$0xff]
        %v3883 = vld [vmem:[#allocation8 + $0x158] sm:$0xff]
        %v3884 = vld [vmem:[#allocation8 + $0x160] sm:$0xff]
        %v3885 = vld [vmem:[#allocation8 + $0x168] sm:$0xff]
        %v3886 = vld [vmem:[#allocation8 + $0x170] sm:$0xff]
        %v3887 = vld [vmem:[#allocation8 + $0x178] sm:$0xff]
        %v3888 = vld [vmem:[#allocation8 + $0x180] sm:$0xff]
        %v3889 = vld [vmem:[#allocation8 + $0x188] sm:$0xff]
        %v3890 = vld [vmem:[#allocation8 + $0x190] sm:$0xff]
        %v3891 = vld [vmem:[#allocation8 + $0x198] sm:$0xff]
        %v3892 = vld [vmem:[#allocation8 + $0x1a0] sm:$0xff]
        %v3893 = vld [vmem:[#allocation8 + $0x1a8] sm:$0xff]
        %v3894 = vld [vmem:[#allocation8 + $0x1b0] sm:$0xff]
        %v3895 = vld [vmem:[#allocation8 + $0x1b8] sm:$0xff]
        %v3896 = vld [vmem:[#allocation8 + $0x1c0] sm:$0xff]
        %v3897 = vld [vmem:[#allocation8 + $0x1c8] sm:$0xff]
        %v3898 = vld [vmem:[#allocation8 + $0x1d0] sm:$0xff]
        %v3899 = vld [vmem:[#allocation8 + $0x1d8] sm:$0xff]
        %v3900 = vld [vmem:[#allocation8 + $0x1e0] sm:$0xff]
        %v3901 = vld [vmem:[#allocation8 + $0x1e8] sm:$0xff]
        %v3902 = vld [vmem:[#allocation8 + $0x1f0] sm:$0xff]
        %v3903 = vld [vmem:[#allocation8 + $0x1f8] sm:$0xff]
        %v3904 = vld [vmem:[#allocation8 + $0x200] sm:$0xff]
        %v3905 = vld [vmem:[#allocation8 + $0x208] sm:$0xff]
        %v3906 = vld [vmem:[#allocation8 + $0x210] sm:$0xff]
        %v3907 = vld [vmem:[#allocation8 + $0x218] sm:$0xff]
        %v3908 = vld [vmem:[#allocation8 + $0x220] sm:$0xff]
        %v3909 = vld [vmem:[#allocation8 + $0x228] sm:$0xff]
        %v3910 = vld [vmem:[#allocation8 + $0x230] sm:$0xff]
        %v3911 = vld [vmem:[#allocation8 + $0x238] sm:$0xff]
        %v3912 = vld [vmem:[#allocation8 + $0x240] sm:$0xff]
        %v3913 = vld [vmem:[#allocation8 + $0x248] sm:$0xff]
        %v3914 = vld [vmem:[#allocation8 + $0x250] sm:$0xff]
        %v3915 = vld [vmem:[#allocation8 + $0x258] sm:$0xff]
        %v3916 = vld [vmem:[#allocation8 + $0x260] sm:$0xff]
        %v3917 = vld [vmem:[#allocation8 + $0x268] sm:$0xff]
        %v3918 = vld [vmem:[#allocation8 + $0x270] sm:$0xff]
        %v3919 = vld [vmem:[#allocation8 + $0x278] sm:$0xff]
        %v3920 = vld [vmem:[#allocation8 + $0x280] sm:$0xff]
        %v3921 = vld [vmem:[#allocation8 + $0x288] sm:$0xff]
        %v3922 = vld [vmem:[#allocation8 + $0x290] sm:$0xff]
        %v3923 = vld [vmem:[#allocation8 + $0x298] sm:$0xff]
        %v3924 = vld [vmem:[#allocation8 + $0x2a0] sm:$0xff]
        %v3925 = vld [vmem:[#allocation8 + $0x2a8] sm:$0xff]
        %v3926 = vld [vmem:[#allocation8 + $0x2b0] sm:$0xff]
        %v3927 = vld [vmem:[#allocation8 + $0x2b8] sm:$0xff]
        %v3928 = vld [vmem:[#allocation8 + $0x2c0] sm:$0xff]
        %v3929 = vld [vmem:[#allocation8 + $0x2c8] sm:$0xff]
        %v3930 = vld [vmem:[#allocation8 + $0x2d0] sm:$0xff]
        %v3931 = vld [vmem:[#allocation8 + $0x2d8] sm:$0xff]
        %v3932 = vld [vmem:[#allocation8 + $0x2e0] sm:$0xff]
        %v3933 = vld [vmem:[#allocation8 + $0x2e8] sm:$0xff]
        %v3934 = vld [vmem:[#allocation8 + $0x2f0] sm:$0xff]
        %v3935 = vld [vmem:[#allocation8 + $0x2f8] sm:$0xff]
        %v3936 = vld [vmem:[#allocation10] ss:$4 sm:$0x3]
        %v3938 = vlaneseq
        %v3939 = vshrl.u32 %v3938, 7
        %v3940 = vsub.s32 0, %v3939
        %v3941 = vrot.slane %v3936, %v3940
        %v3942 = vlaneseq
        %v3943 = vshrl.u32 %v3942, 7
        %v3944 = vsub.s32 1, %v3943
        %v3945 = vrot.slane %v3936, %v3944
        %v4044 = vunpack.c.l.b16 %v3840
        %v4045 = vunpack.c.h.b16 %v3840
        %v4046 = vunpack.c.l.b16 %v3841
        %v4047 = vunpack.c.h.b16 %v3841
        %v4048 = vunpack.c.l.b16 %v3842
        %v4049 = vunpack.c.h.b16 %v3842
        %v4050 = vunpack.c.l.b16 %v3843
        %v4051 = vunpack.c.h.b16 %v3843
        %v4052 = vunpack.c.l.b16 %v3844
        %v4053 = vunpack.c.h.b16 %v3844
        %v4054 = vunpack.c.l.b16 %v3845
        %v4055 = vunpack.c.h.b16 %v3845
        %v4056 = vunpack.c.l.b16 %v3846
        %v4057 = vunpack.c.h.b16 %v3846
        %v4058 = vunpack.c.l.b16 %v3847
        %v4059 = vunpack.c.h.b16 %v3847
        %v4060 = vunpack.c.l.b16 %v3848
        %v4061 = vunpack.c.h.b16 %v3848
        %v4062 = vunpack.c.l.b16 %v3849
        %v4063 = vunpack.c.h.b16 %v3849
        %v4064 = vunpack.c.l.b16 %v3850
        %v4065 = vunpack.c.h.b16 %v3850
        %v4066 = vunpack.c.l.b16 %v3851
        %v4067 = vunpack.c.h.b16 %v3851
        %v4068 = vunpack.c.l.b16 %v3852
        %v4069 = vunpack.c.h.b16 %v3852
        %v4070 = vunpack.c.l.b16 %v3853
        %v4071 = vunpack.c.h.b16 %v3853
        %v4072 = vunpack.c.l.b16 %v3854
        %v4073 = vunpack.c.h.b16 %v3854
        %v4074 = vunpack.c.l.b16 %v3855
        %v4075 = vunpack.c.h.b16 %v3855
        %v4076 = vunpack.c.l.b16 %v3856
        %v4077 = vunpack.c.h.b16 %v3856
        %v4078 = vunpack.c.l.b16 %v3857
        %v4079 = vunpack.c.h.b16 %v3857
        %v4080 = vunpack.c.l.b16 %v3858
        %v4081 = vunpack.c.h.b16 %v3858
        %v4082 = vunpack.c.l.b16 %v3859
        %v4083 = vunpack.c.h.b16 %v3859
        %v4084 = vunpack.c.l.b16 %v3860
        %v4085 = vunpack.c.h.b16 %v3860
        %v4086 = vunpack.c.l.b16 %v3861
        %v4087 = vunpack.c.h.b16 %v3861
        %v4088 = vunpack.c.l.b16 %v3862
        %v4089 = vunpack.c.h.b16 %v3862
        %v4090 = vunpack.c.l.b16 %v3863
        %v4091 = vunpack.c.h.b16 %v3863
        %v4092 = vunpack.c.l.b16 %v3864
        %v4093 = vunpack.c.h.b16 %v3864
        %v4094 = vunpack.c.l.b16 %v3865
        %v4095 = vunpack.c.h.b16 %v3865
        %v4096 = vunpack.c.l.b16 %v3866
        %v4097 = vunpack.c.h.b16 %v3866
        %v4098 = vunpack.c.l.b16 %v3867
        %v4099 = vunpack.c.h.b16 %v3867
        %v4100 = vunpack.c.l.b16 %v3868
        %v4101 = vunpack.c.h.b16 %v3868
        %v4102 = vunpack.c.l.b16 %v3869
        %v4103 = vunpack.c.h.b16 %v3869
        %v4104 = vunpack.c.l.b16 %v3870
        %v4105 = vunpack.c.h.b16 %v3870
        %v4106 = vunpack.c.l.b16 %v3871
        %v4107 = vunpack.c.h.b16 %v3871
        %v4108 = vunpack.c.l.b16 %v3872
        %v4109 = vunpack.c.h.b16 %v3872
        %v4110 = vunpack.c.l.b16 %v3873
        %v4111 = vunpack.c.h.b16 %v3873
        %v4112 = vunpack.c.l.b16 %v3874
        %v4113 = vunpack.c.h.b16 %v3874
        %v4114 = vunpack.c.l.b16 %v3875
        %v4115 = vunpack.c.h.b16 %v3875
        %v4116 = vunpack.c.l.b16 %v3876
        %v4117 = vunpack.c.h.b16 %v3876
        %v4118 = vunpack.c.l.b16 %v3877
        %v4119 = vunpack.c.h.b16 %v3877
        %v4120 = vunpack.c.l.b16 %v3878
        %v4121 = vunpack.c.h.b16 %v3878
        %v4122 = vunpack.c.l.b16 %v3879
        %v4123 = vunpack.c.h.b16 %v3879
        %v4124 = vunpack.c.l.b16 %v3880
        %v4125 = vunpack.c.h.b16 %v3880
        %v4126 = vunpack.c.l.b16 %v3881
        %v4127 = vunpack.c.h.b16 %v3881
        %v4128 = vunpack.c.l.b16 %v3882
        %v4129 = vunpack.c.h.b16 %v3882
        %v4130 = vunpack.c.l.b16 %v3883
        %v4131 = vunpack.c.h.b16 %v3883
        %v4132 = vunpack.c.l.b16 %v3884
        %v4133 = vunpack.c.h.b16 %v3884
        %v4134 = vunpack.c.l.b16 %v3885
        %v4135 = vunpack.c.h.b16 %v3885
        %v4136 = vunpack.c.l.b16 %v3886
        %v4137 = vunpack.c.h.b16 %v3886
        %v4138 = vunpack.c.l.b16 %v3887
        %v4139 = vunpack.c.h.b16 %v3887
        %v4140 = vunpack.c.l.b16 %v3888
        %v4141 = vunpack.c.h.b16 %v3888
        %v4142 = vunpack.c.l.b16 %v3889
        %v4143 = vunpack.c.h.b16 %v3889
        %v4144 = vunpack.c.l.b16 %v3890
        %v4145 = vunpack.c.h.b16 %v3890
        %v4146 = vunpack.c.l.b16 %v3891
        %v4147 = vunpack.c.h.b16 %v3891
        %v4148 = vunpack.c.l.b16 %v3892
        %v4149 = vunpack.c.h.b16 %v3892
        %v4150 = vunpack.c.l.b16 %v3893
        %v4151 = vunpack.c.h.b16 %v3893
        %v4152 = vunpack.c.l.b16 %v3894
        %v4153 = vunpack.c.h.b16 %v3894
        %v4154 = vunpack.c.l.b16 %v3895
        %v4155 = vunpack.c.h.b16 %v3895
        %v4156 = vunpack.c.l.b16 %v3896
        %v4157 = vunpack.c.h.b16 %v3896
        %v4158 = vunpack.c.l.b16 %v3897
        %v4159 = vunpack.c.h.b16 %v3897
        %v4160 = vunpack.c.l.b16 %v3898
        %v4161 = vunpack.c.h.b16 %v3898
        %v4162 = vunpack.c.l.b16 %v3899
        %v4163 = vunpack.c.h.b16 %v3899
        %v4164 = vunpack.c.l.b16 %v3900
        %v4165 = vunpack.c.h.b16 %v3900
        %v4166 = vunpack.c.l.b16 %v3901
        %v4167 = vunpack.c.h.b16 %v3901
        %v4168 = vunpack.c.l.b16 %v3902
        %v4169 = vunpack.c.h.b16 %v3902
        %v4170 = vunpack.c.l.b16 %v3903
        %v4171 = vunpack.c.h.b16 %v3903
        %v4172 = vunpack.c.l.b16 %v3904
        %v4173 = vunpack.c.h.b16 %v3904
        %v4174 = vunpack.c.l.b16 %v3905
        %v4175 = vunpack.c.h.b16 %v3905
        %v4176 = vunpack.c.l.b16 %v3906
        %v4177 = vunpack.c.h.b16 %v3906
        %v4178 = vunpack.c.l.b16 %v3907
        %v4179 = vunpack.c.h.b16 %v3907
        %v4180 = vunpack.c.l.b16 %v3908
        %v4181 = vunpack.c.h.b16 %v3908
        %v4182 = vunpack.c.l.b16 %v3909
        %v4183 = vunpack.c.h.b16 %v3909
        %v4184 = vunpack.c.l.b16 %v3910
        %v4185 = vunpack.c.h.b16 %v3910
        %v4186 = vunpack.c.l.b16 %v3911
        %v4187 = vunpack.c.h.b16 %v3911
        %v4188 = vunpack.c.l.b16 %v3912
        %v4189 = vunpack.c.h.b16 %v3912
        %v4190 = vunpack.c.l.b16 %v3913
        %v4191 = vunpack.c.h.b16 %v3913
        %v4192 = vunpack.c.l.b16 %v3914
        %v4193 = vunpack.c.h.b16 %v3914
        %v4194 = vunpack.c.l.b16 %v3915
        %v4195 = vunpack.c.h.b16 %v3915
        %v4196 = vunpack.c.l.b16 %v3916
        %v4197 = vunpack.c.h.b16 %v3916
        %v4198 = vunpack.c.l.b16 %v3917
        %v4199 = vunpack.c.h.b16 %v3917
        %v4200 = vunpack.c.l.b16 %v3918
        %v4201 = vunpack.c.h.b16 %v3918
        %v4202 = vunpack.c.l.b16 %v3919
        %v4203 = vunpack.c.h.b16 %v3919
        %v4204 = vunpack.c.l.b16 %v3920
        %v4205 = vunpack.c.h.b16 %v3920
        %v4206 = vunpack.c.l.b16 %v3921
        %v4207 = vunpack.c.h.b16 %v3921
        %v4208 = vunpack.c.l.b16 %v3922
        %v4209 = vunpack.c.h.b16 %v3922
        %v4210 = vunpack.c.l.b16 %v3923
        %v4211 = vunpack.c.h.b16 %v3923
        %v4212 = vunpack.c.l.b16 %v3924
        %v4213 = vunpack.c.h.b16 %v3924
        %v4214 = vunpack.c.l.b16 %v3925
        %v4215 = vunpack.c.h.b16 %v3925
        %v4216 = vunpack.c.l.b16 %v3926
        %v4217 = vunpack.c.h.b16 %v3926
        %v4218 = vunpack.c.l.b16 %v3927
        %v4219 = vunpack.c.h.b16 %v3927
        %v4220 = vunpack.c.l.b16 %v3928
        %v4221 = vunpack.c.h.b16 %v3928
        %v4222 = vunpack.c.l.b16 %v3929
        %v4223 = vunpack.c.h.b16 %v3929
        %v4224 = vunpack.c.l.b16 %v3930
        %v4225 = vunpack.c.h.b16 %v3930
        %v4226 = vunpack.c.l.b16 %v3931
        %v4227 = vunpack.c.h.b16 %v3931
        %v4228 = vunpack.c.l.b16 %v3932
        %v4229 = vunpack.c.h.b16 %v3932
        %v4230 = vunpack.c.l.b16 %v3933
        %v4231 = vunpack.c.h.b16 %v3933
        %v4232 = vunpack.c.l.b16 %v3934
        %v4233 = vunpack.c.h.b16 %v3934
        %v4234 = vunpack.c.l.b16 %v3935
        %v4235 = vunpack.c.h.b16 %v3935
        %v4236 = vpack.c.b16 %v4046, %v4044
        %v4237 = vpack.c.b16 %v4047, %v4045
        %v4238 = vpack.c.b16 %v4050, %v4048
        %v4239 = vpack.c.b16 %v4051, %v4049
        %v4240 = vpack.c.b16 %v4054, %v4052
        %v4241 = vpack.c.b16 %v4055, %v4053
        %v4242 = vpack.c.b16 %v4058, %v4056
        %v4243 = vpack.c.b16 %v4059, %v4057
        %v4244 = vpack.c.b16 %v4062, %v4060
        %v4245 = vpack.c.b16 %v4063, %v4061
        %v4246 = vpack.c.b16 %v4066, %v4064
        %v4247 = vpack.c.b16 %v4067, %v4065
        %v4248 = vpack.c.b16 %v4070, %v4068
        %v4249 = vpack.c.b16 %v4071, %v4069
        %v4250 = vpack.c.b16 %v4074, %v4072
        %v4251 = vpack.c.b16 %v4075, %v4073
        %v4252 = vpack.c.b16 %v4078, %v4076
        %v4253 = vpack.c.b16 %v4079, %v4077
        %v4254 = vpack.c.b16 %v4082, %v4080
        %v4255 = vpack.c.b16 %v4083, %v4081
        %v4256 = vpack.c.b16 %v4086, %v4084
        %v4257 = vpack.c.b16 %v4087, %v4085
        %v4258 = vpack.c.b16 %v4090, %v4088
        %v4259 = vpack.c.b16 %v4091, %v4089
        %v4260 = vpack.c.b16 %v4094, %v4092
        %v4261 = vpack.c.b16 %v4095, %v4093
        %v4262 = vpack.c.b16 %v4098, %v4096
        %v4263 = vpack.c.b16 %v4099, %v4097
        %v4264 = vpack.c.b16 %v4102, %v4100
        %v4265 = vpack.c.b16 %v4103, %v4101
        %v4266 = vpack.c.b16 %v4106, %v4104
        %v4267 = vpack.c.b16 %v4107, %v4105
        %v4268 = vpack.c.b16 %v4110, %v4108
        %v4269 = vpack.c.b16 %v4111, %v4109
        %v4270 = vpack.c.b16 %v4114, %v4112
        %v4271 = vpack.c.b16 %v4115, %v4113
        %v4272 = vpack.c.b16 %v4118, %v4116
        %v4273 = vpack.c.b16 %v4119, %v4117
        %v4274 = vpack.c.b16 %v4122, %v4120
        %v4275 = vpack.c.b16 %v4123, %v4121
        %v4276 = vpack.c.b16 %v4126, %v4124
        %v4277 = vpack.c.b16 %v4127, %v4125
        %v4278 = vpack.c.b16 %v4130, %v4128
        %v4279 = vpack.c.b16 %v4131, %v4129
        %v4280 = vpack.c.b16 %v4134, %v4132
        %v4281 = vpack.c.b16 %v4135, %v4133
        %v4282 = vpack.c.b16 %v4138, %v4136
        %v4283 = vpack.c.b16 %v4139, %v4137
        %v4284 = vpack.c.b16 %v4142, %v4140
        %v4285 = vpack.c.b16 %v4143, %v4141
        %v4286 = vpack.c.b16 %v4146, %v4144
        %v4287 = vpack.c.b16 %v4147, %v4145
        %v4288 = vpack.c.b16 %v4150, %v4148
        %v4289 = vpack.c.b16 %v4151, %v4149
        %v4290 = vpack.c.b16 %v4154, %v4152
        %v4291 = vpack.c.b16 %v4155, %v4153
        %v4292 = vpack.c.b16 %v4158, %v4156
        %v4293 = vpack.c.b16 %v4159, %v4157
        %v4294 = vpack.c.b16 %v4162, %v4160
        %v4295 = vpack.c.b16 %v4163, %v4161
        %v4296 = vpack.c.b16 %v4166, %v4164
        %v4297 = vpack.c.b16 %v4167, %v4165
        %v4298 = vpack.c.b16 %v4170, %v4168
        %v4299 = vpack.c.b16 %v4171, %v4169
        %v4300 = vpack.c.b16 %v4174, %v4172
        %v4301 = vpack.c.b16 %v4175, %v4173
        %v4302 = vpack.c.b16 %v4178, %v4176
        %v4303 = vpack.c.b16 %v4179, %v4177
        %v4304 = vpack.c.b16 %v4182, %v4180
        %v4305 = vpack.c.b16 %v4183, %v4181
        %v4306 = vpack.c.b16 %v4186, %v4184
        %v4307 = vpack.c.b16 %v4187, %v4185
        %v4308 = vpack.c.b16 %v4190, %v4188
        %v4309 = vpack.c.b16 %v4191, %v4189
        %v4310 = vpack.c.b16 %v4194, %v4192
        %v4311 = vpack.c.b16 %v4195, %v4193
        %v4312 = vpack.c.b16 %v4198, %v4196
        %v4313 = vpack.c.b16 %v4199, %v4197
        %v4314 = vpack.c.b16 %v4202, %v4200
        %v4315 = vpack.c.b16 %v4203, %v4201
        %v4316 = vpack.c.b16 %v4206, %v4204
        %v4317 = vpack.c.b16 %v4207, %v4205
        %v4318 = vpack.c.b16 %v4210, %v4208
        %v4319 = vpack.c.b16 %v4211, %v4209
        %v4320 = vpack.c.b16 %v4214, %v4212
        %v4321 = vpack.c.b16 %v4215, %v4213
        %v4322 = vpack.c.b16 %v4218, %v4216
        %v4323 = vpack.c.b16 %v4219, %v4217
        %v4324 = vpack.c.b16 %v4222, %v4220
        %v4325 = vpack.c.b16 %v4223, %v4221
        %v4326 = vpack.c.b16 %v4226, %v4224
        %v4327 = vpack.c.b16 %v4227, %v4225
        %v4328 = vpack.c.b16 %v4230, %v4228
        %v4329 = vpack.c.b16 %v4231, %v4229
        %v4330 = vpack.c.b16 %v4234, %v4232
        %v4331 = vpack.c.b16 %v4235, %v4233
        %4428 = vmatprep.subr.bf16.mxu0 %v4237
        %4429 = vmatpush1.bf16.msra.mxu0 %v4236
        %4430 = vmatprep.subr.bf16.mxu0 %v4239
        %4431 = vmatpush1.bf16.msra.mxu0 %v4238
        %4432 = vmatprep.subr.bf16.mxu0 %v4241
        %4433 = vmatpush1.bf16.msra.mxu0 %v4240
        %4434 = vmatprep.subr.bf16.mxu0 %v4243
        %4435 = vmatpush1.bf16.msra.mxu0 %v4242
        %4436 = vmatprep.subr.bf16.mxu0 %v4245
        %4437 = vmatpush1.bf16.msra.mxu0 %v4244
        %4438 = vmatprep.subr.bf16.mxu0 %v4247
        %4439 = vmatpush1.bf16.msra.mxu0 %v4246
        %4440 = vmatprep.subr.bf16.mxu0 %v4249
        %4441 = vmatpush1.bf16.msra.mxu0 %v4248
        %4442 = vmatprep.subr.bf16.mxu0 %v4251
        %4443 = vmatpush1.bf16.msra.mxu0 %v4250
        %4444 = vmatprep.subr.bf16.mxu0 %v4253
        %4445 = vmatpush1.bf16.msra.mxu0 %v4252
        %4446 = vmatprep.subr.bf16.mxu0 %v4255
        %4447 = vmatpush1.bf16.msra.mxu0 %v4254
        %4448 = vmatprep.subr.bf16.mxu0 %v4257
        %4449 = vmatpush1.bf16.msra.mxu0 %v4256
        %4450 = vmatprep.subr.bf16.mxu0 %v4259
        %4451 = vmatpush1.bf16.msra.mxu0 %v4258
        %4452 = vmatprep.subr.bf16.mxu0 %v4261
        %4453 = vmatpush1.bf16.msra.mxu0 %v4260
        %4454 = vmatprep.subr.bf16.mxu0 %v4263
        %4455 = vmatpush1.bf16.msra.mxu0 %v4262
        %4456 = vmatprep.subr.bf16.mxu0 %v4265
        %4457 = vmatpush1.bf16.msra.mxu0 %v4264
        %4458 = vmatprep.subr.bf16.mxu0 %v4267
        %4459 = vmatpush1.bf16.msra.mxu0 %v4266
        %4460 = vmatprep.mubr.bf16.mxu0 %v3835
        %4461 = vmatmul.mubr.bf16.gmra.mrb[0].mxu0 %v3834
        %v4462 = vpop.f32.mrb[0].mxu0
        %v4463 = vadd.f32 %v3941, %v4462
        %v4464 = vpop.f32.mrb[0].mxu0
        %v4465 = vadd.f32 %v3945, %v4464
        %v4466 = vpop.f32.mrb[0].mxu0
        %v4467 = vadd.f32 %v3941, %v4466
        %v4468 = vpop.f32.mrb[0].mxu0
        %v4469 = vadd.f32 %v3945, %v4468
        %4470 = vdwg.mxu0
        %4471 = vmatprep.subr.bf16.mxu0 %v4269
        %4472 = vmatpush1.bf16.msra.mxu0 %v4268
        %4473 = vmatprep.subr.bf16.mxu0 %v4271
        %4474 = vmatpush1.bf16.msra.mxu0 %v4270
        %4475 = vmatprep.subr.bf16.mxu0 %v4273
        %4476 = vmatpush1.bf16.msra.mxu0 %v4272
        %4477 = vmatprep.subr.bf16.mxu0 %v4275
        %4478 = vmatpush1.bf16.msra.mxu0 %v4274
        %4479 = vmatprep.subr.bf16.mxu0 %v4277
        %4480 = vmatpush1.bf16.msra.mxu0 %v4276
        %4481 = vmatprep.subr.bf16.mxu0 %v4279
        %4482 = vmatpush1.bf16.msra.mxu0 %v4278
        %4483 = vmatprep.subr.bf16.mxu0 %v4281
        %4484 = vmatpush1.bf16.msra.mxu0 %v4280
        %4485 = vmatprep.subr.bf16.mxu0 %v4283
        %4486 = vmatpush1.bf16.msra.mxu0 %v4282
        %4487 = vmatprep.subr.bf16.mxu0 %v4285
        %4488 = vmatpush1.bf16.msra.mxu0 %v4284
        %4489 = vmatprep.subr.bf16.mxu0 %v4287
        %4490 = vmatpush1.bf16.msra.mxu0 %v4286
        %4491 = vmatprep.subr.bf16.mxu0 %v4289
        %4492 = vmatpush1.bf16.msra.mxu0 %v4288
        %4493 = vmatprep.subr.bf16.mxu0 %v4291
        %4494 = vmatpush1.bf16.msra.mxu0 %v4290
        %4495 = vmatprep.subr.bf16.mxu0 %v4293
        %4496 = vmatpush1.bf16.msra.mxu0 %v4292
        %4497 = vmatprep.subr.bf16.mxu0 %v4295
        %4498 = vmatpush1.bf16.msra.mxu0 %v4294
        %4499 = vmatprep.subr.bf16.mxu0 %v4297
        %4500 = vmatpush1.bf16.msra.mxu0 %v4296
        %4501 = vmatprep.subr.bf16.mxu0 %v4299
        %4502 = vmatpush1.bf16.msra.mxu0 %v4298
        %4503 = vmatprep.mubr.bf16.mxu0 %v3837
        %4504 = vmatmul.mubr.bf16.gmra.mrb[0].mxu0 %v3836
        %v4505 = vpop.f32.mrb[0].mxu0
        %v4506 = vadd.f32 %v4463, %v4505
        %v4507 = vpop.f32.mrb[0].mxu0
        %v4508 = vadd.f32 %v4465, %v4507
        %v4509 = vpop.f32.mrb[0].mxu0
        %v4510 = vadd.f32 %v4467, %v4509
        %v4511 = vpop.f32.mrb[0].mxu0
        %v4512 = vadd.f32 %v4469, %v4511
        %4513 = vdwg.mxu0
        %4514 = vmatprep.subr.bf16.mxu0 %v4301
        %4515 = vmatpush1.bf16.msra.mxu0 %v4300
        %4516 = vmatprep.subr.bf16.mxu0 %v4303
        %4517 = vmatpush1.bf16.msra.mxu0 %v4302
        %4518 = vmatprep.subr.bf16.mxu0 %v4305
        %4519 = vmatpush1.bf16.msra.mxu0 %v4304
        %4520 = vmatprep.subr.bf16.mxu0 %v4307
        %4521 = vmatpush1.bf16.msra.mxu0 %v4306
        %4522 = vmatprep.subr.bf16.mxu0 %v4309
        %4523 = vmatpush1.bf16.msra.mxu0 %v4308
        %4524 = vmatprep.subr.bf16.mxu0 %v4311
        %4525 = vmatpush1.bf16.msra.mxu0 %v4310
        %4526 = vmatprep.subr.bf16.mxu0 %v4313
        %4527 = vmatpush1.bf16.msra.mxu0 %v4312
        %4528 = vmatprep.subr.bf16.mxu0 %v4315
        %4529 = vmatpush1.bf16.msra.mxu0 %v4314
        %4530 = vmatprep.subr.bf16.mxu0 %v4317
        %4531 = vmatpush1.bf16.msra.mxu0 %v4316
        %4532 = vmatprep.subr.bf16.mxu0 %v4319
        %4533 = vmatpush1.bf16.msra.mxu0 %v4318
        %4534 = vmatprep.subr.bf16.mxu0 %v4321
        %4535 = vmatpush1.bf16.msra.mxu0 %v4320
        %4536 = vmatprep.subr.bf16.mxu0 %v4323
        %4537 = vmatpush1.bf16.msra.mxu0 %v4322
        %4538 = vmatprep.subr.bf16.mxu0 %v4325
        %4539 = vmatpush1.bf16.msra.mxu0 %v4324
        %4540 = vmatprep.subr.bf16.mxu0 %v4327
        %4541 = vmatpush1.bf16.msra.mxu0 %v4326
        %4542 = vmatprep.subr.bf16.mxu0 %v4329
        %4543 = vmatpush1.bf16.msra.mxu0 %v4328
        %4544 = vmatprep.subr.bf16.mxu0 %v4331
        %4545 = vmatpush1.bf16.msra.mxu0 %v4330
        %4546 = vmatprep.mubr.bf16.mxu0 %v3839
        %4547 = vmatmul.mubr.bf16.gmra.mrb[0].mxu0 %v3838
        %v4548 = vpop.f32.mrb[0].mxu0
        %v4549 = vadd.f32 %v4506, %v4548
        %v4550 = vpop.f32.mrb[0].mxu0
        %v4551 = vadd.f32 %v4508, %v4550
        %v4552 = vpop.f32.mrb[0].mxu0
        %v4553 = vadd.f32 %v4510, %v4552
        %v4554 = vpop.f32.mrb[0].mxu0
        %v4555 = vadd.f32 %v4512, %v4554
        %4556 = vdwg.mxu0
        %v4557 = vmax.f32 %v4549, 0.0
        %v4558 = vmax.f32 %v4551, 0.0
        %v4559 = vmax.f32 %v4553, 0.0
        %v4560 = vmax.f32 %v4555, 0.0
        %s4561 = scalar_lea.vmem [#allocation10], 1
        %v4562 = vld [vmem:[%s4561] ss:$4 sm:$0x3]
        %v4564 = vlaneseq
        %v4565 = vshrl.u32 %v4564, 7
        %v4566 = vsub.s32 0, %v4565
        %v4567 = vrot.slane %v4562, %v4566
        %v4568 = vlaneseq
        %v4569 = vshrl.u32 %v4568, 7
        %v4570 = vsub.s32 1, %v4569
        %v4571 = vrot.slane %v4562, %v4570
        %v4574 = vmul.f32 %v4557, %v4567
        %v4575 = vmul.f32 %v4558, %v4571
        %v4576 = vmul.f32 %v4559, %v4567
        %v4577 = vmul.f32 %v4560, %v4571
        %s4578 = scalar_lea.vmem [#allocation10], 2
        %v4579 = vld [vmem:[%s4578] ss:$4 sm:$0x3]
        %v4581 = vlaneseq
        %v4582 = vshrl.u32 %v4581, 7
        %v4583 = vsub.s32 0, %v4582
        %v4584 = vrot.slane %v4579, %v4583
        %v4585 = vlaneseq
        %v4586 = vshrl.u32 %v4585, 7
        %v4587 = vsub.s32 1, %v4586
        %v4588 = vrot.slane %v4579, %v4587
        %v4591 = vadd.f32 %v4574, %v4584
        %v4592 = vadd.f32 %v4575, %v4588
        %v4593 = vadd.f32 %v4576, %v4584
        %v4594 = vadd.f32 %v4577, %v4588
        %v4599 = vrot.slane %v4591, 1
        %v4600 = vrot.slane %v4593, 1
        %v4601 = vsel %vm1626, %v4599, %v4600
        %v4602 = vrot.slane %v4592, 1
        %v4603 = vrot.slane %v4594, 1
        %v4604 = vsel %vm1626, %v4602, %v4603
        %v4609 = vsel %vm1626, %v4600, 0.0
        %v4610 = vsel %vm1626, %v4603, 0.0
        %v4611 = vmax.f32 %v4591, %v4601
        %v4612 = vmax.f32 %v4592, %v4604
        %v4613 = vmax.f32 %v4593, %v4609
        %v4614 = vmax.f32 %v4594, %v4610
        %v4615 = vpack.c.bf16 %v4613, %v4611
        %v4616 = vpack.c.bf16 %v4614, %v4612
        %v4617 = vld [vmem:[%s59] sm:$0xf]
        %vm4618 = vcmask 130048
        %v4620 = vsel %vm4618, %v4617, 0
        %4622 = vmatprep.subr.bf16.mxu0 %v4616
        %4623 = vmatpush1.bf16.msra.mxu0 %v4615
        %4624 = vmatprep.subr.bf16.mxu0 0
        %4625 = vmatpush1.bf16.msra.mxu0 0
        %4626 = vmatprep.subr.bf16.mxu0 0
        %4627 = vmatpush1.bf16.msra.mxu0 0
        %4628 = vmatprep.subr.bf16.mxu0 0
        %4629 = vmatpush1.bf16.msra.mxu0 0
        %4630 = vmatprep.subr.bf16.mxu0 0
        %4631 = vmatpush1.bf16.msra.mxu0 0
        %4632 = vmatprep.subr.bf16.mxu0 0
        %4633 = vmatpush1.bf16.msra.mxu0 0
        %4634 = vmatprep.subr.bf16.mxu0 0
        %4635 = vmatpush1.bf16.msra.mxu0 0
        %4636 = vmatprep.subr.bf16.mxu0 0
        %4637 = vmatpush1.bf16.msra.mxu0 0
        %4638 = vmatprep.subr.bf16.mxu0 0
        %4639 = vmatpush1.bf16.msra.mxu0 0
        %4640 = vmatprep.subr.bf16.mxu0 0
        %4641 = vmatpush1.bf16.msra.mxu0 0
        %4642 = vmatprep.subr.bf16.mxu0 0
        %4643 = vmatpush1.bf16.msra.mxu0 0
        %4644 = vmatprep.subr.bf16.mxu0 0
        %4645 = vmatpush1.bf16.msra.mxu0 0
        %4646 = vmatprep.subr.bf16.mxu0 0
        %4647 = vmatpush1.bf16.msra.mxu0 0
        %4648 = vmatprep.subr.bf16.mxu0 0
        %4649 = vmatpush1.bf16.msra.mxu0 0
        %4650 = vmatprep.subr.bf16.mxu0 0
        %4651 = vmatpush1.bf16.msra.mxu0 0
        %4652 = vmatprep.subr.bf16.mxu0 0
        %4653 = vmatpush1.bf16.msra.mxu0 0
        %4654 = vmatprep.mubr.bf16.mxu0 0
        %4655 = vmatmul.mubr.bf16.gmra.mrb[0].mxu0 %v4620
        %v4656 = vpop.f32.mrb[0].mxu0
        %v4657 = vadd.f32 0.0, %v4656
        %v4658 = vpop.f32.mrb[0].mxu0
        %v4659 = vadd.f32 0.0, %v4658
        %v4660 = vpop.f32.mrb[0].mxu0
        %v4661 = vpop.f32.mrb[0].mxu0
        %4662 = vdwg.mxu0
        %v4663 = vpack.c.bf16 %v4657, %v4657
        %v4664 = vpack.c.bf16 %v4659, %v4659
        %v4665 = vld [vmem:[#allocation35] sm:$0xf]
        %v4666 = vld [vmem:[#allocation35 + $0x4] sm:$0xf]
        %v4667 = vld [vmem:[#allocation35 + $0x8] sm:$0xf]
        %v4668 = vld [vmem:[#allocation35 + $0xc] sm:$0xf]
        %v4669 = vld [vmem:[#allocation35 + $0x10] sm:$0xf]
        %v4670 = vld [vmem:[#allocation35 + $0x14] sm:$0xf]
        %v4671 = vld [vmem:[#allocation35 + $0x18] sm:$0xf]
        %v4672 = vld [vmem:[#allocation35 + $0x1c] sm:$0xf]
        %v4673 = vld [vmem:[#allocation35 + $0x20] sm:$0xf]
        %v4674 = vld [vmem:[#allocation35 + $0x24] sm:$0xf]
        %v4675 = vld [vmem:[#allocation35 + $0x28] sm:$0xf]
        %v4676 = vld [vmem:[#allocation35 + $0x2c] sm:$0xf]
        %v4677 = vld [vmem:[#allocation35 + $0x30] sm:$0xf]
        %v4678 = vld [vmem:[#allocation35 + $0x34] sm:$0xf]
        %v4679 = vld [vmem:[#allocation35 + $0x38] sm:$0xf]
        %v4680 = vld [vmem:[#allocation35 + $0x3c] sm:$0xf]
        %v4681 = vld [vmem:[#allocation35 + $0x40] sm:$0xf]
        %v4682 = vld [vmem:[#allocation35 + $0x44] sm:$0xf]
        %v4683 = vld [vmem:[#allocation35 + $0x48] sm:$0xf]
        %v4684 = vld [vmem:[#allocation35 + $0x4c] sm:$0xf]
        %v4685 = vld [vmem:[#allocation35 + $0x50] sm:$0xf]
        %v4686 = vld [vmem:[#allocation35 + $0x54] sm:$0xf]
        %v4687 = vld [vmem:[#allocation35 + $0x58] sm:$0xf]
        %v4688 = vld [vmem:[#allocation35 + $0x5c] sm:$0xf]
        %v4689 = vld [vmem:[#allocation35 + $0x60] sm:$0xf]
        %v4690 = vld [vmem:[#allocation35 + $0x64] sm:$0xf]
        %v4691 = vld [vmem:[#allocation35 + $0x68] sm:$0xf]
        %v4692 = vld [vmem:[#allocation35 + $0x6c] sm:$0xf]
        %v4693 = vld [vmem:[#allocation35 + $0x70] sm:$0xf]
        %v4694 = vld [vmem:[#allocation35 + $0x74] sm:$0xf]
        %v4695 = vld [vmem:[#allocation35 + $0x78] sm:$0xf]
        %v4696 = vld [vmem:[#allocation35 + $0x7c] sm:$0xf]
        %v4729 = vunpack.c.l.b16 %v4665
        %v4730 = vunpack.c.l.b16 %v4666
        %v4731 = vunpack.c.l.b16 %v4667
        %v4732 = vunpack.c.l.b16 %v4668
        %v4733 = vunpack.c.l.b16 %v4669
        %v4734 = vunpack.c.l.b16 %v4670
        %v4735 = vunpack.c.l.b16 %v4671
        %v4736 = vunpack.c.l.b16 %v4672
        %v4737 = vunpack.c.l.b16 %v4673
        %v4738 = vunpack.c.l.b16 %v4674
        %v4739 = vunpack.c.l.b16 %v4675
        %v4740 = vunpack.c.l.b16 %v4676
        %v4741 = vunpack.c.l.b16 %v4677
        %v4742 = vunpack.c.l.b16 %v4678
        %v4743 = vunpack.c.l.b16 %v4679
        %v4744 = vunpack.c.l.b16 %v4680
        %v4745 = vunpack.c.l.b16 %v4681
        %v4746 = vunpack.c.l.b16 %v4682
        %v4747 = vunpack.c.l.b16 %v4683
        %v4748 = vunpack.c.l.b16 %v4684
        %v4749 = vunpack.c.l.b16 %v4685
        %v4750 = vunpack.c.l.b16 %v4686
        %v4751 = vunpack.c.l.b16 %v4687
        %v4752 = vunpack.c.l.b16 %v4688
        %v4753 = vunpack.c.l.b16 %v4689
        %v4754 = vunpack.c.l.b16 %v4690
        %v4755 = vunpack.c.l.b16 %v4691
        %v4756 = vunpack.c.l.b16 %v4692
        %v4757 = vunpack.c.l.b16 %v4693
        %v4758 = vunpack.c.l.b16 %v4694
        %v4759 = vunpack.c.l.b16 %v4695
        %v4760 = vunpack.c.l.b16 %v4696
        %v4761 = vpack.c.b16 %v4730, %v4729
        %v4762 = vpack.c.b16 %v4732, %v4731
        %v4763 = vpack.c.b16 %v4734, %v4733
        %v4764 = vpack.c.b16 %v4736, %v4735
        %v4765 = vpack.c.b16 %v4738, %v4737
        %v4766 = vpack.c.b16 %v4740, %v4739
        %v4767 = vpack.c.b16 %v4742, %v4741
        %v4768 = vpack.c.b16 %v4744, %v4743
        %v4769 = vpack.c.b16 %v4746, %v4745
        %v4770 = vpack.c.b16 %v4748, %v4747
        %v4771 = vpack.c.b16 %v4750, %v4749
        %v4772 = vpack.c.b16 %v4752, %v4751
        %v4773 = vpack.c.b16 %v4754, %v4753
        %v4774 = vpack.c.b16 %v4756, %v4755
        %v4775 = vpack.c.b16 %v4758, %v4757
        %v4776 = vpack.c.b16 %v4760, %v4759
        %4793 = vmatprep.subr.bf16.mxu0 0
        %4794 = vmatpush1.bf16.msra.mxu0 %v4761
        %4795 = vmatprep.subr.bf16.mxu0 0
        %4796 = vmatpush1.bf16.msra.mxu0 %v4762
        %4797 = vmatprep.subr.bf16.mxu0 0
        %4798 = vmatpush1.bf16.msra.mxu0 %v4763
        %4799 = vmatprep.subr.bf16.mxu0 0
        %4800 = vmatpush1.bf16.msra.mxu0 %v4764
        %4801 = vmatprep.subr.bf16.mxu0 0
        %4802 = vmatpush1.bf16.msra.mxu0 %v4765
        %4803 = vmatprep.subr.bf16.mxu0 0
        %4804 = vmatpush1.bf16.msra.mxu0 %v4766
        %4805 = vmatprep.subr.bf16.mxu0 0
        %4806 = vmatpush1.bf16.msra.mxu0 %v4767
        %4807 = vmatprep.subr.bf16.mxu0 0
        %4808 = vmatpush1.bf16.msra.mxu0 %v4768
        %4809 = vmatprep.subr.bf16.mxu0 0
        %4810 = vmatpush1.bf16.msra.mxu0 %v4769
        %4811 = vmatprep.subr.bf16.mxu0 0
        %4812 = vmatpush1.bf16.msra.mxu0 %v4770
        %4813 = vmatprep.subr.bf16.mxu0 0
        %4814 = vmatpush1.bf16.msra.mxu0 %v4771
        %4815 = vmatprep.subr.bf16.mxu0 0
        %4816 = vmatpush1.bf16.msra.mxu0 %v4772
        %4817 = vmatprep.subr.bf16.mxu0 0
        %4818 = vmatpush1.bf16.msra.mxu0 %v4773
        %4819 = vmatprep.subr.bf16.mxu0 0
        %4820 = vmatpush1.bf16.msra.mxu0 %v4774
        %4821 = vmatprep.subr.bf16.mxu0 0
        %4822 = vmatpush1.bf16.msra.mxu0 %v4775
        %4823 = vmatprep.subr.bf16.mxu0 0
        %4824 = vmatpush1.bf16.msra.mxu0 %v4776
        %4825 = vmatprep.mubr.bf16.mxu0 %v4664
        %4826 = vmatmul.mubr.bf16.gmra.mrb[0].mxu0 %v4663
        %v4827 = vpop.f32.mrb[0].mxu0
        %v4828 = vadd.f32 0.0, %v4827
        %v4829 = vpop.f32.mrb[0].mxu0
        %v4830 = vpop.f32.mrb[0].mxu0
        %v4831 = vpop.f32.mrb[0].mxu0
        %4832 = vdwg.mxu0
        %s4833 = scalar_lea.vmem [#allocation35], 128
        %v4834 = vld [vmem:[%s4833] sm:$0xf]
        %v4835 = vld [vmem:[%s4833 + $0x4] sm:$0xf]
        %v4836 = vld [vmem:[%s4833 + $0x8] sm:$0xf]
        %v4837 = vld [vmem:[%s4833 + $0xc] sm:$0xf]
        %v4838 = vld [vmem:[%s4833 + $0x10] sm:$0xf]
        %v4839 = vld [vmem:[%s4833 + $0x14] sm:$0xf]
        %v4840 = vld [vmem:[%s4833 + $0x18] sm:$0xf]
        %v4841 = vld [vmem:[%s4833 + $0x1c] sm:$0xf]
        %v4842 = vld [vmem:[%s4833 + $0x20] sm:$0xf]
        %v4843 = vld [vmem:[%s4833 + $0x24] sm:$0xf]
        %v4844 = vld [vmem:[%s4833 + $0x28] sm:$0xf]
        %v4845 = vld [vmem:[%s4833 + $0x2c] sm:$0xf]
        %v4846 = vld [vmem:[%s4833 + $0x30] sm:$0xf]
        %v4847 = vld [vmem:[%s4833 + $0x34] sm:$0xf]
        %v4848 = vld [vmem:[%s4833 + $0x38] sm:$0xf]
        %v4849 = vld [vmem:[%s4833 + $0x3c] sm:$0xf]
        %v4850 = vld [vmem:[%s4833 + $0x40] sm:$0xf]
        %v4851 = vld [vmem:[%s4833 + $0x44] sm:$0xf]
        %v4852 = vld [vmem:[%s4833 + $0x48] sm:$0xf]
        %v4853 = vld [vmem:[%s4833 + $0x4c] sm:$0xf]
        %v4854 = vld [vmem:[%s4833 + $0x50] sm:$0xf]
        %v4855 = vld [vmem:[%s4833 + $0x54] sm:$0xf]
        %v4856 = vld [vmem:[%s4833 + $0x58] sm:$0xf]
        %v4857 = vld [vmem:[%s4833 + $0x5c] sm:$0xf]
        %v4858 = vld [vmem:[%s4833 + $0x60] sm:$0xf]
        %v4859 = vld [vmem:[%s4833 + $0x64] sm:$0xf]
        %v4860 = vld [vmem:[%s4833 + $0x68] sm:$0xf]
        %v4861 = vld [vmem:[%s4833 + $0x6c] sm:$0xf]
        %v4862 = vld [vmem:[%s4833 + $0x70] sm:$0xf]
        %v4863 = vld [vmem:[%s4833 + $0x74] sm:$0xf]
        %v4864 = vld [vmem:[%s4833 + $0x78] sm:$0xf]
        %v4865 = vld [vmem:[%s4833 + $0x7c] sm:$0xf]
        %v4898 = vunpack.c.l.b16 %v4834
        %v4899 = vunpack.c.l.b16 %v4835
        %v4900 = vunpack.c.l.b16 %v4836
        %v4901 = vunpack.c.l.b16 %v4837
        %v4902 = vunpack.c.l.b16 %v4838
        %v4903 = vunpack.c.l.b16 %v4839
        %v4904 = vunpack.c.l.b16 %v4840
        %v4905 = vunpack.c.l.b16 %v4841
        %v4906 = vunpack.c.l.b16 %v4842
        %v4907 = vunpack.c.l.b16 %v4843
        %v4908 = vunpack.c.l.b16 %v4844
        %v4909 = vunpack.c.l.b16 %v4845
        %v4910 = vunpack.c.l.b16 %v4846
        %v4911 = vunpack.c.l.b16 %v4847
        %v4912 = vunpack.c.l.b16 %v4848
        %v4913 = vunpack.c.l.b16 %v4849
        %v4914 = vunpack.c.l.b16 %v4850
        %v4915 = vunpack.c.l.b16 %v4851
        %v4916 = vunpack.c.l.b16 %v4852
        %v4917 = vunpack.c.l.b16 %v4853
        %v4918 = vunpack.c.l.b16 %v4854
        %v4919 = vunpack.c.l.b16 %v4855
        %v4920 = vunpack.c.l.b16 %v4856
        %v4921 = vunpack.c.l.b16 %v4857
        %v4922 = vunpack.c.l.b16 %v4858
        %v4923 = vunpack.c.l.b16 %v4859
        %v4924 = vunpack.c.l.b16 %v4860
        %v4925 = vunpack.c.l.b16 %v4861
        %v4926 = vunpack.c.l.b16 %v4862
        %v4927 = vunpack.c.l.b16 %v4863
        %v4928 = vunpack.c.l.b16 %v4864
        %v4929 = vunpack.c.l.b16 %v4865
        %v4930 = vpack.c.b16 %v4899, %v4898
        %v4931 = vpack.c.b16 %v4901, %v4900
        %v4932 = vpack.c.b16 %v4903, %v4902
        %v4933 = vpack.c.b16 %v4905, %v4904
        %v4934 = vpack.c.b16 %v4907, %v4906
        %v4935 = vpack.c.b16 %v4909, %v4908
        %v4936 = vpack.c.b16 %v4911, %v4910
        %v4937 = vpack.c.b16 %v4913, %v4912
        %v4938 = vpack.c.b16 %v4915, %v4914
        %v4939 = vpack.c.b16 %v4917, %v4916
        %v4940 = vpack.c.b16 %v4919, %v4918
        %v4941 = vpack.c.b16 %v4921, %v4920
        %v4942 = vpack.c.b16 %v4923, %v4922
        %v4943 = vpack.c.b16 %v4925, %v4924
        %v4944 = vpack.c.b16 %v4927, %v4926
        %v4945 = vpack.c.b16 %v4929, %v4928
        %4962 = vmatprep.subr.bf16.mxu0 0
        %4963 = vmatpush1.bf16.msra.mxu0 %v4930
        %4964 = vmatprep.subr.bf16.mxu0 0
        %4965 = vmatpush1.bf16.msra.mxu0 %v4931
        %4966 = vmatprep.subr.bf16.mxu0 0
        %4967 = vmatpush1.bf16.msra.mxu0 %v4932
        %4968 = vmatprep.subr.bf16.mxu0 0
        %4969 = vmatpush1.bf16.msra.mxu0 %v4933
        %4970 = vmatprep.subr.bf16.mxu0 0
        %4971 = vmatpush1.bf16.msra.mxu0 %v4934
        %4972 = vmatprep.subr.bf16.mxu0 0
        %4973 = vmatpush1.bf16.msra.mxu0 %v4935
        %4974 = vmatprep.subr.bf16.mxu0 0
        %4975 = vmatpush1.bf16.msra.mxu0 %v4936
        %4976 = vmatprep.subr.bf16.mxu0 0
        %4977 = vmatpush1.bf16.msra.mxu0 %v4937
        %4978 = vmatprep.subr.bf16.mxu0 0
        %4979 = vmatpush1.bf16.msra.mxu0 %v4938
        %4980 = vmatprep.subr.bf16.mxu0 0
        %4981 = vmatpush1.bf16.msra.mxu0 %v4939
        %4982 = vmatprep.subr.bf16.mxu0 0
        %4983 = vmatpush1.bf16.msra.mxu0 %v4940
        %4984 = vmatprep.subr.bf16.mxu0 0
        %4985 = vmatpush1.bf16.msra.mxu0 %v4941
        %4986 = vmatprep.subr.bf16.mxu0 0
        %4987 = vmatpush1.bf16.msra.mxu0 %v4942
        %4988 = vmatprep.subr.bf16.mxu0 0
        %4989 = vmatpush1.bf16.msra.mxu0 %v4943
        %4990 = vmatprep.subr.bf16.mxu0 0
        %4991 = vmatpush1.bf16.msra.mxu0 %v4944
        %4992 = vmatprep.subr.bf16.mxu0 0
        %4993 = vmatpush1.bf16.msra.mxu0 %v4945
        %4994 = vmatprep.mubr.bf16.mxu0 %v4664
        %4995 = vmatmul.mubr.bf16.gmra.mrb[0].mxu0 %v4663
        %v4996 = vpop.f32.mrb[0].mxu0
        %v4997 = vadd.f32 0.0, %v4996
        %v4998 = vpop.f32.mrb[0].mxu0
        %v4999 = vpop.f32.mrb[0].mxu0
        %v5000 = vpop.f32.mrb[0].mxu0
        %5001 = vdwg.mxu0
        %v5002 = vmax.f32 %v4828, %v4997
        %v5004 = vrot.slane %v5002, 7
        %v5006 = vsel %vm1613, 0.0, %v5004
        %v5007 = vrot.slane %v5002, 1
        %v5009 = vsel %vm1626, %v5007, 0.0
        %v5010 = vpack.c.bf16 %v5006, %v5006
        %v5011 = vpack.c.bf16 %v5002, %v5002
        %v5012 = vpack.c.bf16 %v5009, %v5009
        %v5013 = vld [vmem:[#allocation11] sm:$0xff]
        %v5014 = vld [vmem:[#allocation11 + $0x8] sm:$0xff]
        %v5015 = vld [vmem:[#allocation11 + $0x10] sm:$0xff]
        %v5016 = vld [vmem:[#allocation11 + $0x18] sm:$0xff]
        %v5017 = vld [vmem:[#allocation11 + $0x20] sm:$0xff]
        %v5018 = vld [vmem:[#allocation11 + $0x28] sm:$0xff]
        %v5019 = vld [vmem:[#allocation11 + $0x30] sm:$0xff]
        %v5020 = vld [vmem:[#allocation11 + $0x38] sm:$0xff]
        %v5021 = vld [vmem:[#allocation11 + $0x40] sm:$0xff]
        %v5022 = vld [vmem:[#allocation11 + $0x48] sm:$0xff]
        %v5023 = vld [vmem:[#allocation11 + $0x50] sm:$0xff]
        %v5024 = vld [vmem:[#allocation11 + $0x58] sm:$0xff]
        %v5025 = vld [vmem:[#allocation11 + $0x60] sm:$0xff]
        %v5026 = vld [vmem:[#allocation11 + $0x68] sm:$0xff]
        %v5027 = vld [vmem:[#allocation11 + $0x70] sm:$0xff]
        %v5028 = vld [vmem:[#allocation11 + $0x78] sm:$0xff]
        %v5029 = vld [vmem:[#allocation11 + $0x80] sm:$0xff]
        %v5030 = vld [vmem:[#allocation11 + $0x88] sm:$0xff]
        %v5031 = vld [vmem:[#allocation11 + $0x90] sm:$0xff]
        %v5032 = vld [vmem:[#allocation11 + $0x98] sm:$0xff]
        %v5033 = vld [vmem:[#allocation11 + $0xa0] sm:$0xff]
        %v5034 = vld [vmem:[#allocation11 + $0xa8] sm:$0xff]
        %v5035 = vld [vmem:[#allocation11 + $0xb0] sm:$0xff]
        %v5036 = vld [vmem:[#allocation11 + $0xb8] sm:$0xff]
        %v5037 = vld [vmem:[#allocation11 + $0xc0] sm:$0xff]
        %v5038 = vld [vmem:[#allocation11 + $0xc8] sm:$0xff]
        %v5039 = vld [vmem:[#allocation11 + $0xd0] sm:$0xff]
        %v5040 = vld [vmem:[#allocation11 + $0xd8] sm:$0xff]
        %v5041 = vld [vmem:[#allocation11 + $0xe0] sm:$0xff]
        %v5042 = vld [vmem:[#allocation11 + $0xe8] sm:$0xff]
        %v5043 = vld [vmem:[#allocation11 + $0xf0] sm:$0xff]
        %v5044 = vld [vmem:[#allocation11 + $0xf8] sm:$0xff]
        %v5045 = vld [vmem:[#allocation11 + $0x100] sm:$0xff]
        %v5046 = vld [vmem:[#allocation11 + $0x108] sm:$0xff]
        %v5047 = vld [vmem:[#allocation11 + $0x110] sm:$0xff]
        %v5048 = vld [vmem:[#allocation11 + $0x118] sm:$0xff]
        %v5049 = vld [vmem:[#allocation11 + $0x120] sm:$0xff]
        %v5050 = vld [vmem:[#allocation11 + $0x128] sm:$0xff]
        %v5051 = vld [vmem:[#allocation11 + $0x130] sm:$0xff]
        %v5052 = vld [vmem:[#allocation11 + $0x138] sm:$0xff]
        %v5053 = vld [vmem:[#allocation11 + $0x140] sm:$0xff]
        %v5054 = vld [vmem:[#allocation11 + $0x148] sm:$0xff]
        %v5055 = vld [vmem:[#allocation11 + $0x150] sm:$0xff]
        %v5056 = vld [vmem:[#allocation11 + $0x158] sm:$0xff]
        %v5057 = vld [vmem:[#allocation11 + $0x160] sm:$0xff]
        %v5058 = vld [vmem:[#allocation11 + $0x168] sm:$0xff]
        %v5059 = vld [vmem:[#allocation11 + $0x170] sm:$0xff]
        %v5060 = vld [vmem:[#allocation11 + $0x178] sm:$0xff]
        %v5061 = vld [vmem:[#allocation13] ss:$4 sm:$0x3]
        %v5063 = vlaneseq
        %v5064 = vshrl.u32 %v5063, 7
        %v5065 = vsub.s32 0, %v5064
        %v5066 = vrot.slane %v5061, %v5065
        %v5067 = vlaneseq
        %v5068 = vshrl.u32 %v5067, 7
        %v5069 = vsub.s32 1, %v5068
        %v5070 = vrot.slane %v5061, %v5069
        %v5121 = vunpack.c.l.b16 %v5013
        %v5122 = vunpack.c.h.b16 %v5013
        %v5123 = vunpack.c.l.b16 %v5014
        %v5124 = vunpack.c.h.b16 %v5014
        %v5125 = vunpack.c.l.b16 %v5015
        %v5126 = vunpack.c.h.b16 %v5015
        %v5127 = vunpack.c.l.b16 %v5016
        %v5128 = vunpack.c.h.b16 %v5016
        %v5129 = vunpack.c.l.b16 %v5017
        %v5130 = vunpack.c.h.b16 %v5017
        %v5131 = vunpack.c.l.b16 %v5018
        %v5132 = vunpack.c.h.b16 %v5018
        %v5133 = vunpack.c.l.b16 %v5019
        %v5134 = vunpack.c.h.b16 %v5019
        %v5135 = vunpack.c.l.b16 %v5020
        %v5136 = vunpack.c.h.b16 %v5020
        %v5137 = vunpack.c.l.b16 %v5021
        %v5138 = vunpack.c.h.b16 %v5021
        %v5139 = vunpack.c.l.b16 %v5022
        %v5140 = vunpack.c.h.b16 %v5022
        %v5141 = vunpack.c.l.b16 %v5023
        %v5142 = vunpack.c.h.b16 %v5023
        %v5143 = vunpack.c.l.b16 %v5024
        %v5144 = vunpack.c.h.b16 %v5024
        %v5145 = vunpack.c.l.b16 %v5025
        %v5146 = vunpack.c.h.b16 %v5025
        %v5147 = vunpack.c.l.b16 %v5026
        %v5148 = vunpack.c.h.b16 %v5026
        %v5149 = vunpack.c.l.b16 %v5027
        %v5150 = vunpack.c.h.b16 %v5027
        %v5151 = vunpack.c.l.b16 %v5028
        %v5152 = vunpack.c.h.b16 %v5028
        %v5153 = vunpack.c.l.b16 %v5029
        %v5154 = vunpack.c.h.b16 %v5029
        %v5155 = vunpack.c.l.b16 %v5030
        %v5156 = vunpack.c.h.b16 %v5030
        %v5157 = vunpack.c.l.b16 %v5031
        %v5158 = vunpack.c.h.b16 %v5031
        %v5159 = vunpack.c.l.b16 %v5032
        %v5160 = vunpack.c.h.b16 %v5032
        %v5161 = vunpack.c.l.b16 %v5033
        %v5162 = vunpack.c.h.b16 %v5033
        %v5163 = vunpack.c.l.b16 %v5034
        %v5164 = vunpack.c.h.b16 %v5034
        %v5165 = vunpack.c.l.b16 %v5035
        %v5166 = vunpack.c.h.b16 %v5035
        %v5167 = vunpack.c.l.b16 %v5036
        %v5168 = vunpack.c.h.b16 %v5036
        %v5169 = vunpack.c.l.b16 %v5037
        %v5170 = vunpack.c.h.b16 %v5037
        %v5171 = vunpack.c.l.b16 %v5038
        %v5172 = vunpack.c.h.b16 %v5038
        %v5173 = vunpack.c.l.b16 %v5039
        %v5174 = vunpack.c.h.b16 %v5039
        %v5175 = vunpack.c.l.b16 %v5040
        %v5176 = vunpack.c.h.b16 %v5040
        %v5177 = vunpack.c.l.b16 %v5041
        %v5178 = vunpack.c.h.b16 %v5041
        %v5179 = vunpack.c.l.b16 %v5042
        %v5180 = vunpack.c.h.b16 %v5042
        %v5181 = vunpack.c.l.b16 %v5043
        %v5182 = vunpack.c.h.b16 %v5043
        %v5183 = vunpack.c.l.b16 %v5044
        %v5184 = vunpack.c.h.b16 %v5044
        %v5185 = vunpack.c.l.b16 %v5045
        %v5186 = vunpack.c.h.b16 %v5045
        %v5187 = vunpack.c.l.b16 %v5046
        %v5188 = vunpack.c.h.b16 %v5046
        %v5189 = vunpack.c.l.b16 %v5047
        %v5190 = vunpack.c.h.b16 %v5047
        %v5191 = vunpack.c.l.b16 %v5048
        %v5192 = vunpack.c.h.b16 %v5048
        %v5193 = vunpack.c.l.b16 %v5049
        %v5194 = vunpack.c.h.b16 %v5049
        %v5195 = vunpack.c.l.b16 %v5050
        %v5196 = vunpack.c.h.b16 %v5050
        %v5197 = vunpack.c.l.b16 %v5051
        %v5198 = vunpack.c.h.b16 %v5051
        %v5199 = vunpack.c.l.b16 %v5052
        %v5200 = vunpack.c.h.b16 %v5052
        %v5201 = vunpack.c.l.b16 %v5053
        %v5202 = vunpack.c.h.b16 %v5053
        %v5203 = vunpack.c.l.b16 %v5054
        %v5204 = vunpack.c.h.b16 %v5054
        %v5205 = vunpack.c.l.b16 %v5055
        %v5206 = vunpack.c.h.b16 %v5055
        %v5207 = vunpack.c.l.b16 %v5056
        %v5208 = vunpack.c.h.b16 %v5056
        %v5209 = vunpack.c.l.b16 %v5057
        %v5210 = vunpack.c.h.b16 %v5057
        %v5211 = vunpack.c.l.b16 %v5058
        %v5212 = vunpack.c.h.b16 %v5058
        %v5213 = vunpack.c.l.b16 %v5059
        %v5214 = vunpack.c.h.b16 %v5059
        %v5215 = vunpack.c.l.b16 %v5060
        %v5216 = vunpack.c.h.b16 %v5060
        %v5217 = vpack.c.b16 %v5123, %v5121
        %v5218 = vpack.c.b16 %v5124, %v5122
        %v5219 = vpack.c.b16 %v5127, %v5125
        %v5220 = vpack.c.b16 %v5128, %v5126
        %v5221 = vpack.c.b16 %v5131, %v5129
        %v5222 = vpack.c.b16 %v5132, %v5130
        %v5223 = vpack.c.b16 %v5135, %v5133
        %v5224 = vpack.c.b16 %v5136, %v5134
        %v5225 = vpack.c.b16 %v5139, %v5137
        %v5226 = vpack.c.b16 %v5140, %v5138
        %v5227 = vpack.c.b16 %v5143, %v5141
        %v5228 = vpack.c.b16 %v5144, %v5142
        %v5229 = vpack.c.b16 %v5147, %v5145
        %v5230 = vpack.c.b16 %v5148, %v5146
        %v5231 = vpack.c.b16 %v5151, %v5149
        %v5232 = vpack.c.b16 %v5152, %v5150
        %v5233 = vpack.c.b16 %v5155, %v5153
        %v5234 = vpack.c.b16 %v5156, %v5154
        %v5235 = vpack.c.b16 %v5159, %v5157
        %v5236 = vpack.c.b16 %v5160, %v5158
        %v5237 = vpack.c.b16 %v5163, %v5161
        %v5238 = vpack.c.b16 %v5164, %v5162
        %v5239 = vpack.c.b16 %v5167, %v5165
        %v5240 = vpack.c.b16 %v5168, %v5166
        %v5241 = vpack.c.b16 %v5171, %v5169
        %v5242 = vpack.c.b16 %v5172, %v5170
        %v5243 = vpack.c.b16 %v5175, %v5173
        %v5244 = vpack.c.b16 %v5176, %v5174
        %v5245 = vpack.c.b16 %v5179, %v5177
        %v5246 = vpack.c.b16 %v5180, %v5178
        %v5247 = vpack.c.b16 %v5183, %v5181
        %v5248 = vpack.c.b16 %v5184, %v5182
        %v5249 = vpack.c.b16 %v5187, %v5185
        %v5250 = vpack.c.b16 %v5188, %v5186
        %v5251 = vpack.c.b16 %v5191, %v5189
        %v5252 = vpack.c.b16 %v5192, %v5190
        %v5253 = vpack.c.b16 %v5195, %v5193
        %v5254 = vpack.c.b16 %v5196, %v5194
        %v5255 = vpack.c.b16 %v5199, %v5197
        %v5256 = vpack.c.b16 %v5200, %v5198
        %v5257 = vpack.c.b16 %v5203, %v5201
        %v5258 = vpack.c.b16 %v5204, %v5202
        %v5259 = vpack.c.b16 %v5207, %v5205
        %v5260 = vpack.c.b16 %v5208, %v5206
        %v5261 = vpack.c.b16 %v5211, %v5209
        %v5262 = vpack.c.b16 %v5212, %v5210
        %v5263 = vpack.c.b16 %v5215, %v5213
        %v5264 = vpack.c.b16 %v5216, %v5214
        %5313 = vmatprep.subr.bf16.mxu0 %v5218
        %5314 = vmatpush1.bf16.msra.mxu0 %v5217
        %5315 = vmatprep.subr.bf16.mxu0 %v5220
        %5316 = vmatpush1.bf16.msra.mxu0 %v5219
        %5317 = vmatprep.subr.bf16.mxu0 %v5222
        %5318 = vmatpush1.bf16.msra.mxu0 %v5221
        %5319 = vmatprep.subr.bf16.mxu0 %v5224
        %5320 = vmatpush1.bf16.msra.mxu0 %v5223
        %5321 = vmatprep.subr.bf16.mxu0 %v5226
        %5322 = vmatpush1.bf16.msra.mxu0 %v5225
        %5323 = vmatprep.subr.bf16.mxu0 %v5228
        %5324 = vmatpush1.bf16.msra.mxu0 %v5227
        %5325 = vmatprep.subr.bf16.mxu0 %v5230
        %5326 = vmatpush1.bf16.msra.mxu0 %v5229
        %5327 = vmatprep.subr.bf16.mxu0 %v5232
        %5328 = vmatpush1.bf16.msra.mxu0 %v5231
        %5329 = vmatprep.subr.bf16.mxu0 %v5234
        %5330 = vmatpush1.bf16.msra.mxu0 %v5233
        %5331 = vmatprep.subr.bf16.mxu0 %v5236
        %5332 = vmatpush1.bf16.msra.mxu0 %v5235
        %5333 = vmatprep.subr.bf16.mxu0 %v5238
        %5334 = vmatpush1.bf16.msra.mxu0 %v5237
        %5335 = vmatprep.subr.bf16.mxu0 %v5240
        %5336 = vmatpush1.bf16.msra.mxu0 %v5239
        %5337 = vmatprep.subr.bf16.mxu0 %v5242
        %5338 = vmatpush1.bf16.msra.mxu0 %v5241
        %5339 = vmatprep.subr.bf16.mxu0 %v5244
        %5340 = vmatpush1.bf16.msra.mxu0 %v5243
        %5341 = vmatprep.subr.bf16.mxu0 %v5246
        %5342 = vmatpush1.bf16.msra.mxu0 %v5245
        %5343 = vmatprep.subr.bf16.mxu0 %v5248
        %5344 = vmatpush1.bf16.msra.mxu0 %v5247
        %5345 = vmatprep.mubr.bf16.mxu0 %v5011
        %5346 = vmatmul.mubr.bf16.gmra.mrb[0].mxu0 %v5010
        %v5347 = vpop.f32.mrb[0].mxu0
        %v5348 = vadd.f32 %v5066, %v5347
        %v5349 = vpop.f32.mrb[0].mxu0
        %v5350 = vadd.f32 %v5070, %v5349
        %v5351 = vpop.f32.mrb[0].mxu0
        %v5352 = vpop.f32.mrb[0].mxu0
        %5353 = vdwg.mxu0
        %5354 = vmatprep.subr.bf16.mxu0 %v5250
        %5355 = vmatpush1.bf16.msra.mxu0 %v5249
        %5356 = vmatprep.subr.bf16.mxu0 %v5252
        %5357 = vmatpush1.bf16.msra.mxu0 %v5251
        %5358 = vmatprep.subr.bf16.mxu0 %v5254
        %5359 = vmatpush1.bf16.msra.mxu0 %v5253
        %5360 = vmatprep.subr.bf16.mxu0 %v5256
        %5361 = vmatpush1.bf16.msra.mxu0 %v5255
        %5362 = vmatprep.subr.bf16.mxu0 %v5258
        %5363 = vmatpush1.bf16.msra.mxu0 %v5257
        %5364 = vmatprep.subr.bf16.mxu0 %v5260
        %5365 = vmatpush1.bf16.msra.mxu0 %v5259
        %5366 = vmatprep.subr.bf16.mxu0 %v5262
        %5367 = vmatpush1.bf16.msra.mxu0 %v5261
        %5368 = vmatprep.subr.bf16.mxu0 %v5264
        %5369 = vmatpush1.bf16.msra.mxu0 %v5263
        %5370 = vmatprep.subr.bf16.mxu0 0
        %5371 = vmatpush1.bf16.msra.mxu0 0
        %5372 = vmatprep.subr.bf16.mxu0 0
        %5373 = vmatpush1.bf16.msra.mxu0 0
        %5374 = vmatprep.subr.bf16.mxu0 0
        %5375 = vmatpush1.bf16.msra.mxu0 0
        %5376 = vmatprep.subr.bf16.mxu0 0
        %5377 = vmatpush1.bf16.msra.mxu0 0
        %5378 = vmatprep.subr.bf16.mxu0 0
        %5379 = vmatpush1.bf16.msra.mxu0 0
        %5380 = vmatprep.subr.bf16.mxu0 0
        %5381 = vmatpush1.bf16.msra.mxu0 0
        %5382 = vmatprep.subr.bf16.mxu0 0
        %5383 = vmatpush1.bf16.msra.mxu0 0
        %5384 = vmatprep.subr.bf16.mxu0 0
        %5385 = vmatpush1.bf16.msra.mxu0 0
        %5386 = vmatprep.mubr.bf16.mxu0 0
        %5387 = vmatmul.mubr.bf16.gmra.mrb[0].mxu0 %v5012
        %v5388 = vpop.f32.mrb[0].mxu0
        %v5389 = vadd.f32 %v5348, %v5388
        %v5390 = vpop.f32.mrb[0].mxu0
        %v5391 = vadd.f32 %v5350, %v5390
        %v5392 = vpop.f32.mrb[0].mxu0
        %v5393 = vpop.f32.mrb[0].mxu0
        %5394 = vdwg.mxu0
        %v5395 = vmax.f32 %v5389, 0.0
        %v5396 = vmax.f32 %v5391, 0.0
        %s5397 = scalar_lea.vmem [#allocation13], 1
        %v5398 = vld [vmem:[%s5397] ss:$4 sm:$0x3]
        %v5400 = vlaneseq
        %v5401 = vshrl.u32 %v5400, 7
        %v5402 = vsub.s32 0, %v5401
        %v5403 = vrot.slane %v5398, %v5402
        %v5404 = vlaneseq
        %v5405 = vshrl.u32 %v5404, 7
        %v5406 = vsub.s32 1, %v5405
        %v5407 = vrot.slane %v5398, %v5406
        %v5410 = vmul.f32 %v5395, %v5403
        %v5411 = vmul.f32 %v5396, %v5407
        %s5412 = scalar_lea.vmem [#allocation13], 2
        %v5413 = vld [vmem:[%s5412] ss:$4 sm:$0x3]
        %v5415 = vlaneseq
        %v5416 = vshrl.u32 %v5415, 7
        %v5417 = vsub.s32 0, %v5416
        %v5418 = vrot.slane %v5413, %v5417
        %v5419 = vlaneseq
        %v5420 = vshrl.u32 %v5419, 7
        %v5421 = vsub.s32 1, %v5420
        %v5422 = vrot.slane %v5413, %v5421
        %v5425 = vadd.f32 %v5410, %v5418
        %v5426 = vadd.f32 %v5411, %v5422
        %v5429 = vrot.slane %v5425, 7
        %v5430 = vrot.slane %v5426, 7
        %v5433 = vsel %vm1613, 0.0, %v5429
        %v5434 = vsel %vm1613, 0.0, %v5430
        %v5435 = vrot.slane %v5425, 1
        %v5436 = vrot.slane %v5426, 1
        %v5439 = vsel %vm1626, %v5435, 0.0
        %v5440 = vsel %vm1626, %v5436, 0.0
        %v5441 = vpack.c.bf16 %v5433, %v5433
        %v5442 = vpack.c.bf16 %v5434, %v5434
        %v5443 = vpack.c.bf16 %v5425, %v5425
        %v5444 = vpack.c.bf16 %v5426, %v5426
        %v5445 = vpack.c.bf16 %v5439, %v5439
        %v5446 = vpack.c.bf16 %v5440, %v5440
        %v5447 = vld [vmem:[#allocation14] sm:$0xff]
        %v5448 = vld [vmem:[#allocation14 + $0x8] sm:$0xff]
        %v5449 = vld [vmem:[#allocation14 + $0x10] sm:$0xff]
        %v5450 = vld [vmem:[#allocation14 + $0x18] sm:$0xff]
        %v5451 = vld [vmem:[#allocation14 + $0x20] sm:$0xff]
        %v5452 = vld [vmem:[#allocation14 + $0x28] sm:$0xff]
        %v5453 = vld [vmem:[#allocation14 + $0x30] sm:$0xff]
        %v5454 = vld [vmem:[#allocation14 + $0x38] sm:$0xff]
        %v5455 = vld [vmem:[#allocation14 + $0x40] sm:$0xff]
        %v5456 = vld [vmem:[#allocation14 + $0x48] sm:$0xff]
        %v5457 = vld [vmem:[#allocation14 + $0x50] sm:$0xff]
        %v5458 = vld [vmem:[#allocation14 + $0x58] sm:$0xff]
        %v5459 = vld [vmem:[#allocation14 + $0x60] sm:$0xff]
        %v5460 = vld [vmem:[#allocation14 + $0x68] sm:$0xff]
        %v5461 = vld [vmem:[#allocation14 + $0x70] sm:$0xff]
        %v5462 = vld [vmem:[#allocation14 + $0x78] sm:$0xff]
        %v5463 = vld [vmem:[#allocation14 + $0x80] sm:$0xff]
        %v5464 = vld [vmem:[#allocation14 + $0x88] sm:$0xff]
        %v5465 = vld [vmem:[#allocation14 + $0x90] sm:$0xff]
        %v5466 = vld [vmem:[#allocation14 + $0x98] sm:$0xff]
        %v5467 = vld [vmem:[#allocation14 + $0xa0] sm:$0xff]
        %v5468 = vld [vmem:[#allocation14 + $0xa8] sm:$0xff]
        %v5469 = vld [vmem:[#allocation14 + $0xb0] sm:$0xff]
        %v5470 = vld [vmem:[#allocation14 + $0xb8] sm:$0xff]
        %v5471 = vld [vmem:[#allocation14 + $0xc0] sm:$0xff]
        %v5472 = vld [vmem:[#allocation14 + $0xc8] sm:$0xff]
        %v5473 = vld [vmem:[#allocation14 + $0xd0] sm:$0xff]
        %v5474 = vld [vmem:[#allocation14 + $0xd8] sm:$0xff]
        %v5475 = vld [vmem:[#allocation14 + $0xe0] sm:$0xff]
        %v5476 = vld [vmem:[#allocation14 + $0xe8] sm:$0xff]
        %v5477 = vld [vmem:[#allocation14 + $0xf0] sm:$0xff]
        %v5478 = vld [vmem:[#allocation14 + $0xf8] sm:$0xff]
        %v5479 = vld [vmem:[#allocation14 + $0x100] sm:$0xff]
        %v5480 = vld [vmem:[#allocation14 + $0x108] sm:$0xff]
        %v5481 = vld [vmem:[#allocation14 + $0x110] sm:$0xff]
        %v5482 = vld [vmem:[#allocation14 + $0x118] sm:$0xff]
        %v5483 = vld [vmem:[#allocation14 + $0x120] sm:$0xff]
        %v5484 = vld [vmem:[#allocation14 + $0x128] sm:$0xff]
        %v5485 = vld [vmem:[#allocation14 + $0x130] sm:$0xff]
        %v5486 = vld [vmem:[#allocation14 + $0x138] sm:$0xff]
        %v5487 = vld [vmem:[#allocation14 + $0x140] sm:$0xff]
        %v5488 = vld [vmem:[#allocation14 + $0x148] sm:$0xff]
        %v5489 = vld [vmem:[#allocation14 + $0x150] sm:$0xff]
        %v5490 = vld [vmem:[#allocation14 + $0x158] sm:$0xff]
        %v5491 = vld [vmem:[#allocation14 + $0x160] sm:$0xff]
        %v5492 = vld [vmem:[#allocation14 + $0x168] sm:$0xff]
        %v5493 = vld [vmem:[#allocation14 + $0x170] sm:$0xff]
        %v5494 = vld [vmem:[#allocation14 + $0x178] sm:$0xff]
        %v5495 = vld [vmem:[#allocation14 + $0x180] sm:$0xff]
        %v5496 = vld [vmem:[#allocation14 + $0x188] sm:$0xff]
        %v5497 = vld [vmem:[#allocation14 + $0x190] sm:$0xff]
        %v5498 = vld [vmem:[#allocation14 + $0x198] sm:$0xff]
        %v5499 = vld [vmem:[#allocation14 + $0x1a0] sm:$0xff]
        %v5500 = vld [vmem:[#allocation14 + $0x1a8] sm:$0xff]
        %v5501 = vld [vmem:[#allocation14 + $0x1b0] sm:$0xff]
        %v5502 = vld [vmem:[#allocation14 + $0x1b8] sm:$0xff]
        %v5503 = vld [vmem:[#allocation14 + $0x1c0] sm:$0xff]
        %v5504 = vld [vmem:[#allocation14 + $0x1c8] sm:$0xff]
        %v5505 = vld [vmem:[#allocation14 + $0x1d0] sm:$0xff]
        %v5506 = vld [vmem:[#allocation14 + $0x1d8] sm:$0xff]
        %v5507 = vld [vmem:[#allocation14 + $0x1e0] sm:$0xff]
        %v5508 = vld [vmem:[#allocation14 + $0x1e8] sm:$0xff]
        %v5509 = vld [vmem:[#allocation14 + $0x1f0] sm:$0xff]
        %v5510 = vld [vmem:[#allocation14 + $0x1f8] sm:$0xff]
        %v5511 = vld [vmem:[#allocation14 + $0x200] sm:$0xff]
        %v5512 = vld [vmem:[#allocation14 + $0x208] sm:$0xff]
        %v5513 = vld [vmem:[#allocation14 + $0x210] sm:$0xff]
        %v5514 = vld [vmem:[#allocation14 + $0x218] sm:$0xff]
        %v5515 = vld [vmem:[#allocation14 + $0x220] sm:$0xff]
        %v5516 = vld [vmem:[#allocation14 + $0x228] sm:$0xff]
        %v5517 = vld [vmem:[#allocation14 + $0x230] sm:$0xff]
        %v5518 = vld [vmem:[#allocation14 + $0x238] sm:$0xff]
        %v5519 = vld [vmem:[#allocation14 + $0x240] sm:$0xff]
        %v5520 = vld [vmem:[#allocation14 + $0x248] sm:$0xff]
        %v5521 = vld [vmem:[#allocation14 + $0x250] sm:$0xff]
        %v5522 = vld [vmem:[#allocation14 + $0x258] sm:$0xff]
        %v5523 = vld [vmem:[#allocation14 + $0x260] sm:$0xff]
        %v5524 = vld [vmem:[#allocation14 + $0x268] sm:$0xff]
        %v5525 = vld [vmem:[#allocation14 + $0x270] sm:$0xff]
        %v5526 = vld [vmem:[#allocation14 + $0x278] sm:$0xff]
        %v5527 = vld [vmem:[#allocation14 + $0x280] sm:$0xff]
        %v5528 = vld [vmem:[#allocation14 + $0x288] sm:$0xff]
        %v5529 = vld [vmem:[#allocation14 + $0x290] sm:$0xff]
        %v5530 = vld [vmem:[#allocation14 + $0x298] sm:$0xff]
        %v5531 = vld [vmem:[#allocation14 + $0x2a0] sm:$0xff]
        %v5532 = vld [vmem:[#allocation14 + $0x2a8] sm:$0xff]
        %v5533 = vld [vmem:[#allocation14 + $0x2b0] sm:$0xff]
        %v5534 = vld [vmem:[#allocation14 + $0x2b8] sm:$0xff]
        %v5535 = vld [vmem:[#allocation14 + $0x2c0] sm:$0xff]
        %v5536 = vld [vmem:[#allocation14 + $0x2c8] sm:$0xff]
        %v5537 = vld [vmem:[#allocation14 + $0x2d0] sm:$0xff]
        %v5538 = vld [vmem:[#allocation14 + $0x2d8] sm:$0xff]
        %v5539 = vld [vmem:[#allocation14 + $0x2e0] sm:$0xff]
        %v5540 = vld [vmem:[#allocation14 + $0x2e8] sm:$0xff]
        %v5541 = vld [vmem:[#allocation14 + $0x2f0] sm:$0xff]
        %v5542 = vld [vmem:[#allocation14 + $0x2f8] sm:$0xff]
        %v5543 = vld [vmem:[%s25] ss:$4 sm:$0x3]
        %v5545 = vlaneseq
        %v5546 = vshrl.u32 %v5545, 7
        %v5547 = vsub.s32 0, %v5546
        %v5548 = vrot.slane %v5543, %v5547
        %v5549 = vlaneseq
        %v5550 = vshrl.u32 %v5549, 7
        %v5551 = vsub.s32 1, %v5550
        %v5552 = vrot.slane %v5543, %v5551
        %v5651 = vunpack.c.l.b16 %v5447
        %v5652 = vunpack.c.h.b16 %v5447
        %v5653 = vunpack.c.l.b16 %v5448
        %v5654 = vunpack.c.h.b16 %v5448
        %v5655 = vunpack.c.l.b16 %v5449
        %v5656 = vunpack.c.h.b16 %v5449
        %v5657 = vunpack.c.l.b16 %v5450
        %v5658 = vunpack.c.h.b16 %v5450
        %v5659 = vunpack.c.l.b16 %v5451
        %v5660 = vunpack.c.h.b16 %v5451
        %v5661 = vunpack.c.l.b16 %v5452
        %v5662 = vunpack.c.h.b16 %v5452
        %v5663 = vunpack.c.l.b16 %v5453
        %v5664 = vunpack.c.h.b16 %v5453
        %v5665 = vunpack.c.l.b16 %v5454
        %v5666 = vunpack.c.h.b16 %v5454
        %v5667 = vunpack.c.l.b16 %v5455
        %v5668 = vunpack.c.h.b16 %v5455
        %v5669 = vunpack.c.l.b16 %v5456
        %v5670 = vunpack.c.h.b16 %v5456
        %v5671 = vunpack.c.l.b16 %v5457
        %v5672 = vunpack.c.h.b16 %v5457
        %v5673 = vunpack.c.l.b16 %v5458
        %v5674 = vunpack.c.h.b16 %v5458
        %v5675 = vunpack.c.l.b16 %v5459
        %v5676 = vunpack.c.h.b16 %v5459
        %v5677 = vunpack.c.l.b16 %v5460
        %v5678 = vunpack.c.h.b16 %v5460
        %v5679 = vunpack.c.l.b16 %v5461
        %v5680 = vunpack.c.h.b16 %v5461
        %v5681 = vunpack.c.l.b16 %v5462
        %v5682 = vunpack.c.h.b16 %v5462
        %v5683 = vunpack.c.l.b16 %v5463
        %v5684 = vunpack.c.h.b16 %v5463
        %v5685 = vunpack.c.l.b16 %v5464
        %v5686 = vunpack.c.h.b16 %v5464
        %v5687 = vunpack.c.l.b16 %v5465
        %v5688 = vunpack.c.h.b16 %v5465
        %v5689 = vunpack.c.l.b16 %v5466
        %v5690 = vunpack.c.h.b16 %v5466
        %v5691 = vunpack.c.l.b16 %v5467
        %v5692 = vunpack.c.h.b16 %v5467
        %v5693 = vunpack.c.l.b16 %v5468
        %v5694 = vunpack.c.h.b16 %v5468
        %v5695 = vunpack.c.l.b16 %v5469
        %v5696 = vunpack.c.h.b16 %v5469
        %v5697 = vunpack.c.l.b16 %v5470
        %v5698 = vunpack.c.h.b16 %v5470
        %v5699 = vunpack.c.l.b16 %v5471
        %v5700 = vunpack.c.h.b16 %v5471
        %v5701 = vunpack.c.l.b16 %v5472
        %v5702 = vunpack.c.h.b16 %v5472
        %v5703 = vunpack.c.l.b16 %v5473
        %v5704 = vunpack.c.h.b16 %v5473
        %v5705 = vunpack.c.l.b16 %v5474
        %v5706 = vunpack.c.h.b16 %v5474
        %v5707 = vunpack.c.l.b16 %v5475
        %v5708 = vunpack.c.h.b16 %v5475
        %v5709 = vunpack.c.l.b16 %v5476
        %v5710 = vunpack.c.h.b16 %v5476
        %v5711 = vunpack.c.l.b16 %v5477
        %v5712 = vunpack.c.h.b16 %v5477
        %v5713 = vunpack.c.l.b16 %v5478
        %v5714 = vunpack.c.h.b16 %v5478
        %v5715 = vunpack.c.l.b16 %v5479
        %v5716 = vunpack.c.h.b16 %v5479
        %v5717 = vunpack.c.l.b16 %v5480
        %v5718 = vunpack.c.h.b16 %v5480
        %v5719 = vunpack.c.l.b16 %v5481
        %v5720 = vunpack.c.h.b16 %v5481
        %v5721 = vunpack.c.l.b16 %v5482
        %v5722 = vunpack.c.h.b16 %v5482
        %v5723 = vunpack.c.l.b16 %v5483
        %v5724 = vunpack.c.h.b16 %v5483
        %v5725 = vunpack.c.l.b16 %v5484
        %v5726 = vunpack.c.h.b16 %v5484
        %v5727 = vunpack.c.l.b16 %v5485
        %v5728 = vunpack.c.h.b16 %v5485
        %v5729 = vunpack.c.l.b16 %v5486
        %v5730 = vunpack.c.h.b16 %v5486
        %v5731 = vunpack.c.l.b16 %v5487
        %v5732 = vunpack.c.h.b16 %v5487
        %v5733 = vunpack.c.l.b16 %v5488
        %v5734 = vunpack.c.h.b16 %v5488
        %v5735 = vunpack.c.l.b16 %v5489
        %v5736 = vunpack.c.h.b16 %v5489
        %v5737 = vunpack.c.l.b16 %v5490
        %v5738 = vunpack.c.h.b16 %v5490
        %v5739 = vunpack.c.l.b16 %v5491
        %v5740 = vunpack.c.h.b16 %v5491
        %v5741 = vunpack.c.l.b16 %v5492
        %v5742 = vunpack.c.h.b16 %v5492
        %v5743 = vunpack.c.l.b16 %v5493
        %v5744 = vunpack.c.h.b16 %v5493
        %v5745 = vunpack.c.l.b16 %v5494
        %v5746 = vunpack.c.h.b16 %v5494
        %v5747 = vunpack.c.l.b16 %v5495
        %v5748 = vunpack.c.h.b16 %v5495
        %v5749 = vunpack.c.l.b16 %v5496
        %v5750 = vunpack.c.h.b16 %v5496
        %v5751 = vunpack.c.l.b16 %v5497
        %v5752 = vunpack.c.h.b16 %v5497
        %v5753 = vunpack.c.l.b16 %v5498
        %v5754 = vunpack.c.h.b16 %v5498
        %v5755 = vunpack.c.l.b16 %v5499
        %v5756 = vunpack.c.h.b16 %v5499
        %v5757 = vunpack.c.l.b16 %v5500
        %v5758 = vunpack.c.h.b16 %v5500
        %v5759 = vunpack.c.l.b16 %v5501
        %v5760 = vunpack.c.h.b16 %v5501
        %v5761 = vunpack.c.l.b16 %v5502
        %v5762 = vunpack.c.h.b16 %v5502
        %v5763 = vunpack.c.l.b16 %v5503
        %v5764 = vunpack.c.h.b16 %v5503
        %v5765 = vunpack.c.l.b16 %v5504
        %v5766 = vunpack.c.h.b16 %v5504
        %v5767 = vunpack.c.l.b16 %v5505
        %v5768 = vunpack.c.h.b16 %v5505
        %v5769 = vunpack.c.l.b16 %v5506
        %v5770 = vunpack.c.h.b16 %v5506
        %v5771 = vunpack.c.l.b16 %v5507
        %v5772 = vunpack.c.h.b16 %v5507
        %v5773 = vunpack.c.l.b16 %v5508
        %v5774 = vunpack.c.h.b16 %v5508
        %v5775 = vunpack.c.l.b16 %v5509
        %v5776 = vunpack.c.h.b16 %v5509
        %v5777 = vunpack.c.l.b16 %v5510
        %v5778 = vunpack.c.h.b16 %v5510
        %v5779 = vunpack.c.l.b16 %v5511
        %v5780 = vunpack.c.h.b16 %v5511
        %v5781 = vunpack.c.l.b16 %v5512
        %v5782 = vunpack.c.h.b16 %v5512
        %v5783 = vunpack.c.l.b16 %v5513
        %v5784 = vunpack.c.h.b16 %v5513
        %v5785 = vunpack.c.l.b16 %v5514
        %v5786 = vunpack.c.h.b16 %v5514
        %v5787 = vunpack.c.l.b16 %v5515
        %v5788 = vunpack.c.h.b16 %v5515
        %v5789 = vunpack.c.l.b16 %v5516
        %v5790 = vunpack.c.h.b16 %v5516
        %v5791 = vunpack.c.l.b16 %v5517
        %v5792 = vunpack.c.h.b16 %v5517
        %v5793 = vunpack.c.l.b16 %v5518
        %v5794 = vunpack.c.h.b16 %v5518
        %v5795 = vunpack.c.l.b16 %v5519
        %v5796 = vunpack.c.h.b16 %v5519
        %v5797 = vunpack.c.l.b16 %v5520
        %v5798 = vunpack.c.h.b16 %v5520
        %v5799 = vunpack.c.l.b16 %v5521
        %v5800 = vunpack.c.h.b16 %v5521
        %v5801 = vunpack.c.l.b16 %v5522
        %v5802 = vunpack.c.h.b16 %v5522
        %v5803 = vunpack.c.l.b16 %v5523
        %v5804 = vunpack.c.h.b16 %v5523
        %v5805 = vunpack.c.l.b16 %v5524
        %v5806 = vunpack.c.h.b16 %v5524
        %v5807 = vunpack.c.l.b16 %v5525
        %v5808 = vunpack.c.h.b16 %v5525
        %v5809 = vunpack.c.l.b16 %v5526
        %v5810 = vunpack.c.h.b16 %v5526
        %v5811 = vunpack.c.l.b16 %v5527
        %v5812 = vunpack.c.h.b16 %v5527
        %v5813 = vunpack.c.l.b16 %v5528
        %v5814 = vunpack.c.h.b16 %v5528
        %v5815 = vunpack.c.l.b16 %v5529
        %v5816 = vunpack.c.h.b16 %v5529
        %v5817 = vunpack.c.l.b16 %v5530
        %v5818 = vunpack.c.h.b16 %v5530
        %v5819 = vunpack.c.l.b16 %v5531
        %v5820 = vunpack.c.h.b16 %v5531
        %v5821 = vunpack.c.l.b16 %v5532
        %v5822 = vunpack.c.h.b16 %v5532
        %v5823 = vunpack.c.l.b16 %v5533
        %v5824 = vunpack.c.h.b16 %v5533
        %v5825 = vunpack.c.l.b16 %v5534
        %v5826 = vunpack.c.h.b16 %v5534
        %v5827 = vunpack.c.l.b16 %v5535
        %v5828 = vunpack.c.h.b16 %v5535
        %v5829 = vunpack.c.l.b16 %v5536
        %v5830 = vunpack.c.h.b16 %v5536
        %v5831 = vunpack.c.l.b16 %v5537
        %v5832 = vunpack.c.h.b16 %v5537
        %v5833 = vunpack.c.l.b16 %v5538
        %v5834 = vunpack.c.h.b16 %v5538
        %v5835 = vunpack.c.l.b16 %v5539
        %v5836 = vunpack.c.h.b16 %v5539
        %v5837 = vunpack.c.l.b16 %v5540
        %v5838 = vunpack.c.h.b16 %v5540
        %v5839 = vunpack.c.l.b16 %v5541
        %v5840 = vunpack.c.h.b16 %v5541
        %v5841 = vunpack.c.l.b16 %v5542
        %v5842 = vunpack.c.h.b16 %v5542
        %v5843 = vpack.c.b16 %v5653, %v5651
        %v5844 = vpack.c.b16 %v5654, %v5652
        %v5845 = vpack.c.b16 %v5657, %v5655
        %v5846 = vpack.c.b16 %v5658, %v5656
        %v5847 = vpack.c.b16 %v5661, %v5659
        %v5848 = vpack.c.b16 %v5662, %v5660
        %v5849 = vpack.c.b16 %v5665, %v5663
        %v5850 = vpack.c.b16 %v5666, %v5664
        %v5851 = vpack.c.b16 %v5669, %v5667
        %v5852 = vpack.c.b16 %v5670, %v5668
        %v5853 = vpack.c.b16 %v5673, %v5671
        %v5854 = vpack.c.b16 %v5674, %v5672
        %v5855 = vpack.c.b16 %v5677, %v5675
        %v5856 = vpack.c.b16 %v5678, %v5676
        %v5857 = vpack.c.b16 %v5681, %v5679
        %v5858 = vpack.c.b16 %v5682, %v5680
        %v5859 = vpack.c.b16 %v5685, %v5683
        %v5860 = vpack.c.b16 %v5686, %v5684
        %v5861 = vpack.c.b16 %v5689, %v5687
        %v5862 = vpack.c.b16 %v5690, %v5688
        %v5863 = vpack.c.b16 %v5693, %v5691
        %v5864 = vpack.c.b16 %v5694, %v5692
        %v5865 = vpack.c.b16 %v5697, %v5695
        %v5866 = vpack.c.b16 %v5698, %v5696
        %v5867 = vpack.c.b16 %v5701, %v5699
        %v5868 = vpack.c.b16 %v5702, %v5700
        %v5869 = vpack.c.b16 %v5705, %v5703
        %v5870 = vpack.c.b16 %v5706, %v5704
        %v5871 = vpack.c.b16 %v5709, %v5707
        %v5872 = vpack.c.b16 %v5710, %v5708
        %v5873 = vpack.c.b16 %v5713, %v5711
        %v5874 = vpack.c.b16 %v5714, %v5712
        %v5875 = vpack.c.b16 %v5717, %v5715
        %v5876 = vpack.c.b16 %v5718, %v5716
        %v5877 = vpack.c.b16 %v5721, %v5719
        %v5878 = vpack.c.b16 %v5722, %v5720
        %v5879 = vpack.c.b16 %v5725, %v5723
        %v5880 = vpack.c.b16 %v5726, %v5724
        %v5881 = vpack.c.b16 %v5729, %v5727
        %v5882 = vpack.c.b16 %v5730, %v5728
        %v5883 = vpack.c.b16 %v5733, %v5731
        %v5884 = vpack.c.b16 %v5734, %v5732
        %v5885 = vpack.c.b16 %v5737, %v5735
        %v5886 = vpack.c.b16 %v5738, %v5736
        %v5887 = vpack.c.b16 %v5741, %v5739
        %v5888 = vpack.c.b16 %v5742, %v5740
        %v5889 = vpack.c.b16 %v5745, %v5743
        %v5890 = vpack.c.b16 %v5746, %v5744
        %v5891 = vpack.c.b16 %v5749, %v5747
        %v5892 = vpack.c.b16 %v5750, %v5748
        %v5893 = vpack.c.b16 %v5753, %v5751
        %v5894 = vpack.c.b16 %v5754, %v5752
        %v5895 = vpack.c.b16 %v5757, %v5755
        %v5896 = vpack.c.b16 %v5758, %v5756
        %v5897 = vpack.c.b16 %v5761, %v5759
        %v5898 = vpack.c.b16 %v5762, %v5760
        %v5899 = vpack.c.b16 %v5765, %v5763
        %v5900 = vpack.c.b16 %v5766, %v5764
        %v5901 = vpack.c.b16 %v5769, %v5767
        %v5902 = vpack.c.b16 %v5770, %v5768
        %v5903 = vpack.c.b16 %v5773, %v5771
        %v5904 = vpack.c.b16 %v5774, %v5772
        %v5905 = vpack.c.b16 %v5777, %v5775
        %v5906 = vpack.c.b16 %v5778, %v5776
        %v5907 = vpack.c.b16 %v5781, %v5779
        %v5908 = vpack.c.b16 %v5782, %v5780
        %v5909 = vpack.c.b16 %v5785, %v5783
        %v5910 = vpack.c.b16 %v5786, %v5784
        %v5911 = vpack.c.b16 %v5789, %v5787
        %v5912 = vpack.c.b16 %v5790, %v5788
        %v5913 = vpack.c.b16 %v5793, %v5791
        %v5914 = vpack.c.b16 %v5794, %v5792
        %v5915 = vpack.c.b16 %v5797, %v5795
        %v5916 = vpack.c.b16 %v5798, %v5796
        %v5917 = vpack.c.b16 %v5801, %v5799
        %v5918 = vpack.c.b16 %v5802, %v5800
        %v5919 = vpack.c.b16 %v5805, %v5803
        %v5920 = vpack.c.b16 %v5806, %v5804
        %v5921 = vpack.c.b16 %v5809, %v5807
        %v5922 = vpack.c.b16 %v5810, %v5808
        %v5923 = vpack.c.b16 %v5813, %v5811
        %v5924 = vpack.c.b16 %v5814, %v5812
        %v5925 = vpack.c.b16 %v5817, %v5815
        %v5926 = vpack.c.b16 %v5818, %v5816
        %v5927 = vpack.c.b16 %v5821, %v5819
        %v5928 = vpack.c.b16 %v5822, %v5820
        %v5929 = vpack.c.b16 %v5825, %v5823
        %v5930 = vpack.c.b16 %v5826, %v5824
        %v5931 = vpack.c.b16 %v5829, %v5827
        %v5932 = vpack.c.b16 %v5830, %v5828
        %v5933 = vpack.c.b16 %v5833, %v5831
        %v5934 = vpack.c.b16 %v5834, %v5832
        %v5935 = vpack.c.b16 %v5837, %v5835
        %v5936 = vpack.c.b16 %v5838, %v5836
        %v5937 = vpack.c.b16 %v5841, %v5839
        %v5938 = vpack.c.b16 %v5842, %v5840
        %6035 = vmatprep.subr.bf16.mxu0 %v5844
        %6036 = vmatpush1.bf16.msra.mxu0 %v5843
        %6037 = vmatprep.subr.bf16.mxu0 %v5846
        %6038 = vmatpush1.bf16.msra.mxu0 %v5845
        %6039 = vmatprep.subr.bf16.mxu0 %v5848
        %6040 = vmatpush1.bf16.msra.mxu0 %v5847
        %6041 = vmatprep.subr.bf16.mxu0 %v5850
        %6042 = vmatpush1.bf16.msra.mxu0 %v5849
        %6043 = vmatprep.subr.bf16.mxu0 %v5852
        %6044 = vmatpush1.bf16.msra.mxu0 %v5851
        %6045 = vmatprep.subr.bf16.mxu0 %v5854
        %6046 = vmatpush1.bf16.msra.mxu0 %v5853
        %6047 = vmatprep.subr.bf16.mxu0 %v5856
        %6048 = vmatpush1.bf16.msra.mxu0 %v5855
        %6049 = vmatprep.subr.bf16.mxu0 %v5858
        %6050 = vmatpush1.bf16.msra.mxu0 %v5857
        %6051 = vmatprep.subr.bf16.mxu0 %v5860
        %6052 = vmatpush1.bf16.msra.mxu0 %v5859
        %6053 = vmatprep.subr.bf16.mxu0 %v5862
        %6054 = vmatpush1.bf16.msra.mxu0 %v5861
        %6055 = vmatprep.subr.bf16.mxu0 %v5864
        %6056 = vmatpush1.bf16.msra.mxu0 %v5863
        %6057 = vmatprep.subr.bf16.mxu0 %v5866
        %6058 = vmatpush1.bf16.msra.mxu0 %v5865
        %6059 = vmatprep.subr.bf16.mxu0 %v5868
        %6060 = vmatpush1.bf16.msra.mxu0 %v5867
        %6061 = vmatprep.subr.bf16.mxu0 %v5870
        %6062 = vmatpush1.bf16.msra.mxu0 %v5869
        %6063 = vmatprep.subr.bf16.mxu0 %v5872
        %6064 = vmatpush1.bf16.msra.mxu0 %v5871
        %6065 = vmatprep.subr.bf16.mxu0 %v5874
        %6066 = vmatpush1.bf16.msra.mxu0 %v5873
        %6067 = vmatprep.mubr.bf16.mxu0 %v5442
        %6068 = vmatmul.mubr.bf16.gmra.mrb[0].mxu0 %v5441
        %v6069 = vpop.f32.mrb[0].mxu0
        %v6070 = vadd.f32 %v5548, %v6069
        %v6071 = vpop.f32.mrb[0].mxu0
        %v6072 = vadd.f32 %v5552, %v6071
        %v6073 = vpop.f32.mrb[0].mxu0
        %v6074 = vpop.f32.mrb[0].mxu0
        %6075 = vdwg.mxu0
        %6076 = vmatprep.subr.bf16.mxu0 %v5876
        %6077 = vmatpush1.bf16.msra.mxu0 %v5875
        %6078 = vmatprep.subr.bf16.mxu0 %v5878
        %6079 = vmatpush1.bf16.msra.mxu0 %v5877
        %6080 = vmatprep.subr.bf16.mxu0 %v5880
        %6081 = vmatpush1.bf16.msra.mxu0 %v5879
        %6082 = vmatprep.subr.bf16.mxu0 %v5882
        %6083 = vmatpush1.bf16.msra.mxu0 %v5881
        %6084 = vmatprep.subr.bf16.mxu0 %v5884
        %6085 = vmatpush1.bf16.msra.mxu0 %v5883
        %6086 = vmatprep.subr.bf16.mxu0 %v5886
        %6087 = vmatpush1.bf16.msra.mxu0 %v5885
        %6088 = vmatprep.subr.bf16.mxu0 %v5888
        %6089 = vmatpush1.bf16.msra.mxu0 %v5887
        %6090 = vmatprep.subr.bf16.mxu0 %v5890
        %6091 = vmatpush1.bf16.msra.mxu0 %v5889
        %6092 = vmatprep.subr.bf16.mxu0 %v5892
        %6093 = vmatpush1.bf16.msra.mxu0 %v5891
        %6094 = vmatprep.subr.bf16.mxu0 %v5894
        %6095 = vmatpush1.bf16.msra.mxu0 %v5893
        %6096 = vmatprep.subr.bf16.mxu0 %v5896
        %6097 = vmatpush1.bf16.msra.mxu0 %v5895
        %6098 = vmatprep.subr.bf16.mxu0 %v5898
        %6099 = vmatpush1.bf16.msra.mxu0 %v5897
        %6100 = vmatprep.subr.bf16.mxu0 %v5900
        %6101 = vmatpush1.bf16.msra.mxu0 %v5899
        %6102 = vmatprep.subr.bf16.mxu0 %v5902
        %6103 = vmatpush1.bf16.msra.mxu0 %v5901
        %6104 = vmatprep.subr.bf16.mxu0 %v5904
        %6105 = vmatpush1.bf16.msra.mxu0 %v5903
        %6106 = vmatprep.subr.bf16.mxu0 %v5906
        %6107 = vmatpush1.bf16.msra.mxu0 %v5905
        %6108 = vmatprep.mubr.bf16.mxu0 %v5444
        %6109 = vmatmul.mubr.bf16.gmra.mrb[0].mxu0 %v5443
        %v6110 = vpop.f32.mrb[0].mxu0
        %v6111 = vadd.f32 %v6070, %v6110
        %v6112 = vpop.f32.mrb[0].mxu0
        %v6113 = vadd.f32 %v6072, %v6112
        %v6114 = vpop.f32.mrb[0].mxu0
        %v6115 = vpop.f32.mrb[0].mxu0
        %6116 = vdwg.mxu0
        %6117 = vmatprep.subr.bf16.mxu0 %v5908
        %6118 = vmatpush1.bf16.msra.mxu0 %v5907
        %6119 = vmatprep.subr.bf16.mxu0 %v5910
        %6120 = vmatpush1.bf16.msra.mxu0 %v5909
        %6121 = vmatprep.subr.bf16.mxu0 %v5912
        %6122 = vmatpush1.bf16.msra.mxu0 %v5911
        %6123 = vmatprep.subr.bf16.mxu0 %v5914
        %6124 = vmatpush1.bf16.msra.mxu0 %v5913
        %6125 = vmatprep.subr.bf16.mxu0 %v5916
        %6126 = vmatpush1.bf16.msra.mxu0 %v5915
        %6127 = vmatprep.subr.bf16.mxu0 %v5918
        %6128 = vmatpush1.bf16.msra.mxu0 %v5917
        %6129 = vmatprep.subr.bf16.mxu0 %v5920
        %6130 = vmatpush1.bf16.msra.mxu0 %v5919
        %6131 = vmatprep.subr.bf16.mxu0 %v5922
        %6132 = vmatpush1.bf16.msra.mxu0 %v5921
        %6133 = vmatprep.subr.bf16.mxu0 %v5924
        %6134 = vmatpush1.bf16.msra.mxu0 %v5923
        %6135 = vmatprep.subr.bf16.mxu0 %v5926
        %6136 = vmatpush1.bf16.msra.mxu0 %v5925
        %6137 = vmatprep.subr.bf16.mxu0 %v5928
        %6138 = vmatpush1.bf16.msra.mxu0 %v5927
        %6139 = vmatprep.subr.bf16.mxu0 %v5930
        %6140 = vmatpush1.bf16.msra.mxu0 %v5929
        %6141 = vmatprep.subr.bf16.mxu0 %v5932
        %6142 = vmatpush1.bf16.msra.mxu0 %v5931
        %6143 = vmatprep.subr.bf16.mxu0 %v5934
        %6144 = vmatpush1.bf16.msra.mxu0 %v5933
        %6145 = vmatprep.subr.bf16.mxu0 %v5936
        %6146 = vmatpush1.bf16.msra.mxu0 %v5935
        %6147 = vmatprep.subr.bf16.mxu0 %v5938
        %6148 = vmatpush1.bf16.msra.mxu0 %v5937
        %6149 = vmatprep.mubr.bf16.mxu0 %v5446
        %6150 = vmatmul.mubr.bf16.gmra.mrb[0].mxu0 %v5445
        %v6151 = vpop.f32.mrb[0].mxu0
        %v6152 = vadd.f32 %v6111, %v6151
        %v6153 = vpop.f32.mrb[0].mxu0
        %v6154 = vadd.f32 %v6113, %v6153
        %v6155 = vpop.f32.mrb[0].mxu0
        %v6156 = vpop.f32.mrb[0].mxu0
        %6157 = vdwg.mxu0
        %v6158 = vmax.f32 %v6152, 0.0
        %v6159 = vmax.f32 %v6154, 0.0
        %s6160 = scalar_lea.vmem %s25, 1
        %v6161 = vld [vmem:[%s6160] ss:$4 sm:$0x3]
        %v6163 = vlaneseq
        %v6164 = vshrl.u32 %v6163, 7
        %v6165 = vsub.s32 0, %v6164
        %v6166 = vrot.slane %v6161, %v6165
        %v6167 = vlaneseq
        %v6168 = vshrl.u32 %v6167, 7
        %v6169 = vsub.s32 1, %v6168
        %v6170 = vrot.slane %v6161, %v6169
        %v6173 = vmul.f32 %v6158, %v6166
        %v6174 = vmul.f32 %v6159, %v6170
        %s6175 = scalar_lea.vmem %s25, 2
        %v6176 = vld [vmem:[%s6175] ss:$4 sm:$0x3]
        %v6178 = vlaneseq
        %v6179 = vshrl.u32 %v6178, 7
        %v6180 = vsub.s32 0, %v6179
        %v6181 = vrot.slane %v6176, %v6180
        %v6182 = vlaneseq
        %v6183 = vshrl.u32 %v6182, 7
        %v6184 = vsub.s32 1, %v6183
        %v6185 = vrot.slane %v6176, %v6184
        %v6188 = vadd.f32 %v6173, %v6181
        %v6189 = vadd.f32 %v6174, %v6185
        %v6192 = vrot.slane %v6188, 7
        %v6193 = vrot.slane %v6189, 7
        %v6196 = vsel %vm1613, 0.0, %v6192
        %v6197 = vsel %vm1613, 0.0, %v6193
        %v6198 = vrot.slane %v6188, 1
        %v6199 = vrot.slane %v6189, 1
        %v6202 = vsel %vm1626, %v6198, 0.0
        %v6203 = vsel %vm1626, %v6199, 0.0
        %v6204 = vpack.c.bf16 %v6196, %v6196
        %v6205 = vpack.c.bf16 %v6197, %v6197
        %v6206 = vpack.c.bf16 %v6188, %v6188
        %v6207 = vpack.c.bf16 %v6189, %v6189
        %v6208 = vpack.c.bf16 %v6202, %v6202
        %v6209 = vpack.c.bf16 %v6203, %v6203
        %v6210 = vld [vmem:[#allocation16] sm:$0xff]
        %v6211 = vld [vmem:[#allocation16 + $0x8] sm:$0xff]
        %v6212 = vld [vmem:[#allocation16 + $0x10] sm:$0xff]
        %v6213 = vld [vmem:[#allocation16 + $0x18] sm:$0xff]
        %v6214 = vld [vmem:[#allocation16 + $0x20] sm:$0xff]
        %v6215 = vld [vmem:[#allocation16 + $0x28] sm:$0xff]
        %v6216 = vld [vmem:[#allocation16 + $0x30] sm:$0xff]
        %v6217 = vld [vmem:[#allocation16 + $0x38] sm:$0xff]
        %v6218 = vld [vmem:[#allocation16 + $0x40] sm:$0xff]
        %v6219 = vld [vmem:[#allocation16 + $0x48] sm:$0xff]
        %v6220 = vld [vmem:[#allocation16 + $0x50] sm:$0xff]
        %v6221 = vld [vmem:[#allocation16 + $0x58] sm:$0xff]
        %v6222 = vld [vmem:[#allocation16 + $0x60] sm:$0xff]
        %v6223 = vld [vmem:[#allocation16 + $0x68] sm:$0xff]
        %v6224 = vld [vmem:[#allocation16 + $0x70] sm:$0xff]
        %v6225 = vld [vmem:[#allocation16 + $0x78] sm:$0xff]
        %v6226 = vld [vmem:[#allocation16 + $0x80] sm:$0xff]
        %v6227 = vld [vmem:[#allocation16 + $0x88] sm:$0xff]
        %v6228 = vld [vmem:[#allocation16 + $0x90] sm:$0xff]
        %v6229 = vld [vmem:[#allocation16 + $0x98] sm:$0xff]
        %v6230 = vld [vmem:[#allocation16 + $0xa0] sm:$0xff]
        %v6231 = vld [vmem:[#allocation16 + $0xa8] sm:$0xff]
        %v6232 = vld [vmem:[#allocation16 + $0xb0] sm:$0xff]
        %v6233 = vld [vmem:[#allocation16 + $0xb8] sm:$0xff]
        %v6234 = vld [vmem:[#allocation16 + $0xc0] sm:$0xff]
        %v6235 = vld [vmem:[#allocation16 + $0xc8] sm:$0xff]
        %v6236 = vld [vmem:[#allocation16 + $0xd0] sm:$0xff]
        %v6237 = vld [vmem:[#allocation16 + $0xd8] sm:$0xff]
        %v6238 = vld [vmem:[#allocation16 + $0xe0] sm:$0xff]
        %v6239 = vld [vmem:[#allocation16 + $0xe8] sm:$0xff]
        %v6240 = vld [vmem:[#allocation16 + $0xf0] sm:$0xff]
        %v6241 = vld [vmem:[#allocation16 + $0xf8] sm:$0xff]
        %v6242 = vld [vmem:[#allocation16 + $0x100] sm:$0xff]
        %v6243 = vld [vmem:[#allocation16 + $0x108] sm:$0xff]
        %v6244 = vld [vmem:[#allocation16 + $0x110] sm:$0xff]
        %v6245 = vld [vmem:[#allocation16 + $0x118] sm:$0xff]
        %v6246 = vld [vmem:[#allocation16 + $0x120] sm:$0xff]
        %v6247 = vld [vmem:[#allocation16 + $0x128] sm:$0xff]
        %v6248 = vld [vmem:[#allocation16 + $0x130] sm:$0xff]
        %v6249 = vld [vmem:[#allocation16 + $0x138] sm:$0xff]
        %v6250 = vld [vmem:[#allocation16 + $0x140] sm:$0xff]
        %v6251 = vld [vmem:[#allocation16 + $0x148] sm:$0xff]
        %v6252 = vld [vmem:[#allocation16 + $0x150] sm:$0xff]
        %v6253 = vld [vmem:[#allocation16 + $0x158] sm:$0xff]
        %v6254 = vld [vmem:[#allocation16 + $0x160] sm:$0xff]
        %v6255 = vld [vmem:[#allocation16 + $0x168] sm:$0xff]
        %v6256 = vld [vmem:[#allocation16 + $0x170] sm:$0xff]
        %v6257 = vld [vmem:[#allocation16 + $0x178] sm:$0xff]
        %v6258 = vld [vmem:[#allocation16 + $0x180] sm:$0xff]
        %v6259 = vld [vmem:[#allocation16 + $0x188] sm:$0xff]
        %v6260 = vld [vmem:[#allocation16 + $0x190] sm:$0xff]
        %v6261 = vld [vmem:[#allocation16 + $0x198] sm:$0xff]
        %v6262 = vld [vmem:[#allocation16 + $0x1a0] sm:$0xff]
        %v6263 = vld [vmem:[#allocation16 + $0x1a8] sm:$0xff]
        %v6264 = vld [vmem:[#allocation16 + $0x1b0] sm:$0xff]
        %v6265 = vld [vmem:[#allocation16 + $0x1b8] sm:$0xff]
        %v6266 = vld [vmem:[#allocation16 + $0x1c0] sm:$0xff]
        %v6267 = vld [vmem:[#allocation16 + $0x1c8] sm:$0xff]
        %v6268 = vld [vmem:[#allocation16 + $0x1d0] sm:$0xff]
        %v6269 = vld [vmem:[#allocation16 + $0x1d8] sm:$0xff]
        %v6270 = vld [vmem:[#allocation16 + $0x1e0] sm:$0xff]
        %v6271 = vld [vmem:[#allocation16 + $0x1e8] sm:$0xff]
        %v6272 = vld [vmem:[#allocation16 + $0x1f0] sm:$0xff]
        %v6273 = vld [vmem:[#allocation16 + $0x1f8] sm:$0xff]
        %v6274 = vld [vmem:[#allocation16 + $0x200] sm:$0xff]
        %v6275 = vld [vmem:[#allocation16 + $0x208] sm:$0xff]
        %v6276 = vld [vmem:[#allocation16 + $0x210] sm:$0xff]
        %v6277 = vld [vmem:[#allocation16 + $0x218] sm:$0xff]
        %v6278 = vld [vmem:[#allocation16 + $0x220] sm:$0xff]
        %v6279 = vld [vmem:[#allocation16 + $0x228] sm:$0xff]
        %v6280 = vld [vmem:[#allocation16 + $0x230] sm:$0xff]
        %v6281 = vld [vmem:[#allocation16 + $0x238] sm:$0xff]
        %v6282 = vld [vmem:[#allocation16 + $0x240] sm:$0xff]
        %v6283 = vld [vmem:[#allocation16 + $0x248] sm:$0xff]
        %v6284 = vld [vmem:[#allocation16 + $0x250] sm:$0xff]
        %v6285 = vld [vmem:[#allocation16 + $0x258] sm:$0xff]
        %v6286 = vld [vmem:[#allocation16 + $0x260] sm:$0xff]
        %v6287 = vld [vmem:[#allocation16 + $0x268] sm:$0xff]
        %v6288 = vld [vmem:[#allocation16 + $0x270] sm:$0xff]
        %v6289 = vld [vmem:[#allocation16 + $0x278] sm:$0xff]
        %v6290 = vld [vmem:[#allocation16 + $0x280] sm:$0xff]
        %v6291 = vld [vmem:[#allocation16 + $0x288] sm:$0xff]
        %v6292 = vld [vmem:[#allocation16 + $0x290] sm:$0xff]
        %v6293 = vld [vmem:[#allocation16 + $0x298] sm:$0xff]
        %v6294 = vld [vmem:[#allocation16 + $0x2a0] sm:$0xff]
        %v6295 = vld [vmem:[#allocation16 + $0x2a8] sm:$0xff]
        %v6296 = vld [vmem:[#allocation16 + $0x2b0] sm:$0xff]
        %v6297 = vld [vmem:[#allocation16 + $0x2b8] sm:$0xff]
        %v6298 = vld [vmem:[#allocation16 + $0x2c0] sm:$0xff]
        %v6299 = vld [vmem:[#allocation16 + $0x2c8] sm:$0xff]
        %v6300 = vld [vmem:[#allocation16 + $0x2d0] sm:$0xff]
        %v6301 = vld [vmem:[#allocation16 + $0x2d8] sm:$0xff]
        %v6302 = vld [vmem:[#allocation16 + $0x2e0] sm:$0xff]
        %v6303 = vld [vmem:[#allocation16 + $0x2e8] sm:$0xff]
        %v6304 = vld [vmem:[#allocation16 + $0x2f0] sm:$0xff]
        %v6305 = vld [vmem:[#allocation16 + $0x2f8] sm:$0xff]
        %v6306 = vld [vmem:[%s29] ss:$4 sm:$0x3]
        %v6308 = vlaneseq
        %v6309 = vshrl.u32 %v6308, 7
        %v6310 = vsub.s32 0, %v6309
        %v6311 = vrot.slane %v6306, %v6310
        %v6312 = vlaneseq
        %v6313 = vshrl.u32 %v6312, 7
        %v6314 = vsub.s32 1, %v6313
        %v6315 = vrot.slane %v6306, %v6314
        %v6414 = vunpack.c.l.b16 %v6210
        %v6415 = vunpack.c.h.b16 %v6210
        %v6416 = vunpack.c.l.b16 %v6211
        %v6417 = vunpack.c.h.b16 %v6211
        %v6418 = vunpack.c.l.b16 %v6212
        %v6419 = vunpack.c.h.b16 %v6212
        %v6420 = vunpack.c.l.b16 %v6213
        %v6421 = vunpack.c.h.b16 %v6213
        %v6422 = vunpack.c.l.b16 %v6214
        %v6423 = vunpack.c.h.b16 %v6214
        %v6424 = vunpack.c.l.b16 %v6215
        %v6425 = vunpack.c.h.b16 %v6215
        %v6426 = vunpack.c.l.b16 %v6216
        %v6427 = vunpack.c.h.b16 %v6216
        %v6428 = vunpack.c.l.b16 %v6217
        %v6429 = vunpack.c.h.b16 %v6217
        %v6430 = vunpack.c.l.b16 %v6218
        %v6431 = vunpack.c.h.b16 %v6218
        %v6432 = vunpack.c.l.b16 %v6219
        %v6433 = vunpack.c.h.b16 %v6219
        %v6434 = vunpack.c.l.b16 %v6220
        %v6435 = vunpack.c.h.b16 %v6220
        %v6436 = vunpack.c.l.b16 %v6221
        %v6437 = vunpack.c.h.b16 %v6221
        %v6438 = vunpack.c.l.b16 %v6222
        %v6439 = vunpack.c.h.b16 %v6222
        %v6440 = vunpack.c.l.b16 %v6223
        %v6441 = vunpack.c.h.b16 %v6223
        %v6442 = vunpack.c.l.b16 %v6224
        %v6443 = vunpack.c.h.b16 %v6224
        %v6444 = vunpack.c.l.b16 %v6225
        %v6445 = vunpack.c.h.b16 %v6225
        %v6446 = vunpack.c.l.b16 %v6226
        %v6447 = vunpack.c.h.b16 %v6226
        %v6448 = vunpack.c.l.b16 %v6227
        %v6449 = vunpack.c.h.b16 %v6227
        %v6450 = vunpack.c.l.b16 %v6228
        %v6451 = vunpack.c.h.b16 %v6228
        %v6452 = vunpack.c.l.b16 %v6229
        %v6453 = vunpack.c.h.b16 %v6229
        %v6454 = vunpack.c.l.b16 %v6230
        %v6455 = vunpack.c.h.b16 %v6230
        %v6456 = vunpack.c.l.b16 %v6231
        %v6457 = vunpack.c.h.b16 %v6231
        %v6458 = vunpack.c.l.b16 %v6232
        %v6459 = vunpack.c.h.b16 %v6232
        %v6460 = vunpack.c.l.b16 %v6233
        %v6461 = vunpack.c.h.b16 %v6233
        %v6462 = vunpack.c.l.b16 %v6234
        %v6463 = vunpack.c.h.b16 %v6234
        %v6464 = vunpack.c.l.b16 %v6235
        %v6465 = vunpack.c.h.b16 %v6235
        %v6466 = vunpack.c.l.b16 %v6236
        %v6467 = vunpack.c.h.b16 %v6236
        %v6468 = vunpack.c.l.b16 %v6237
        %v6469 = vunpack.c.h.b16 %v6237
        %v6470 = vunpack.c.l.b16 %v6238
        %v6471 = vunpack.c.h.b16 %v6238
        %v6472 = vunpack.c.l.b16 %v6239
        %v6473 = vunpack.c.h.b16 %v6239
        %v6474 = vunpack.c.l.b16 %v6240
        %v6475 = vunpack.c.h.b16 %v6240
        %v6476 = vunpack.c.l.b16 %v6241
        %v6477 = vunpack.c.h.b16 %v6241
        %v6478 = vunpack.c.l.b16 %v6242
        %v6479 = vunpack.c.h.b16 %v6242
        %v6480 = vunpack.c.l.b16 %v6243
        %v6481 = vunpack.c.h.b16 %v6243
        %v6482 = vunpack.c.l.b16 %v6244
        %v6483 = vunpack.c.h.b16 %v6244
        %v6484 = vunpack.c.l.b16 %v6245
        %v6485 = vunpack.c.h.b16 %v6245
        %v6486 = vunpack.c.l.b16 %v6246
        %v6487 = vunpack.c.h.b16 %v6246
        %v6488 = vunpack.c.l.b16 %v6247
        %v6489 = vunpack.c.h.b16 %v6247
        %v6490 = vunpack.c.l.b16 %v6248
        %v6491 = vunpack.c.h.b16 %v6248
        %v6492 = vunpack.c.l.b16 %v6249
        %v6493 = vunpack.c.h.b16 %v6249
        %v6494 = vunpack.c.l.b16 %v6250
        %v6495 = vunpack.c.h.b16 %v6250
        %v6496 = vunpack.c.l.b16 %v6251
        %v6497 = vunpack.c.h.b16 %v6251
        %v6498 = vunpack.c.l.b16 %v6252
        %v6499 = vunpack.c.h.b16 %v6252
        %v6500 = vunpack.c.l.b16 %v6253
        %v6501 = vunpack.c.h.b16 %v6253
        %v6502 = vunpack.c.l.b16 %v6254
        %v6503 = vunpack.c.h.b16 %v6254
        %v6504 = vunpack.c.l.b16 %v6255
        %v6505 = vunpack.c.h.b16 %v6255
        %v6506 = vunpack.c.l.b16 %v6256
        %v6507 = vunpack.c.h.b16 %v6256
        %v6508 = vunpack.c.l.b16 %v6257
        %v6509 = vunpack.c.h.b16 %v6257
        %v6510 = vunpack.c.l.b16 %v6258
        %v6511 = vunpack.c.h.b16 %v6258
        %v6512 = vunpack.c.l.b16 %v6259
        %v6513 = vunpack.c.h.b16 %v6259
        %v6514 = vunpack.c.l.b16 %v6260
        %v6515 = vunpack.c.h.b16 %v6260
        %v6516 = vunpack.c.l.b16 %v6261
        %v6517 = vunpack.c.h.b16 %v6261
        %v6518 = vunpack.c.l.b16 %v6262
        %v6519 = vunpack.c.h.b16 %v6262
        %v6520 = vunpack.c.l.b16 %v6263
        %v6521 = vunpack.c.h.b16 %v6263
        %v6522 = vunpack.c.l.b16 %v6264
        %v6523 = vunpack.c.h.b16 %v6264
        %v6524 = vunpack.c.l.b16 %v6265
        %v6525 = vunpack.c.h.b16 %v6265
        %v6526 = vunpack.c.l.b16 %v6266
        %v6527 = vunpack.c.h.b16 %v6266
        %v6528 = vunpack.c.l.b16 %v6267
        %v6529 = vunpack.c.h.b16 %v6267
        %v6530 = vunpack.c.l.b16 %v6268
        %v6531 = vunpack.c.h.b16 %v6268
        %v6532 = vunpack.c.l.b16 %v6269
        %v6533 = vunpack.c.h.b16 %v6269
        %v6534 = vunpack.c.l.b16 %v6270
        %v6535 = vunpack.c.h.b16 %v6270
        %v6536 = vunpack.c.l.b16 %v6271
        %v6537 = vunpack.c.h.b16 %v6271
        %v6538 = vunpack.c.l.b16 %v6272
        %v6539 = vunpack.c.h.b16 %v6272
        %v6540 = vunpack.c.l.b16 %v6273
        %v6541 = vunpack.c.h.b16 %v6273
        %v6542 = vunpack.c.l.b16 %v6274
        %v6543 = vunpack.c.h.b16 %v6274
        %v6544 = vunpack.c.l.b16 %v6275
        %v6545 = vunpack.c.h.b16 %v6275
        %v6546 = vunpack.c.l.b16 %v6276
        %v6547 = vunpack.c.h.b16 %v6276
        %v6548 = vunpack.c.l.b16 %v6277
        %v6549 = vunpack.c.h.b16 %v6277
        %v6550 = vunpack.c.l.b16 %v6278
        %v6551 = vunpack.c.h.b16 %v6278
        %v6552 = vunpack.c.l.b16 %v6279
        %v6553 = vunpack.c.h.b16 %v6279
        %v6554 = vunpack.c.l.b16 %v6280
        %v6555 = vunpack.c.h.b16 %v6280
        %v6556 = vunpack.c.l.b16 %v6281
        %v6557 = vunpack.c.h.b16 %v6281
        %v6558 = vunpack.c.l.b16 %v6282
        %v6559 = vunpack.c.h.b16 %v6282
        %v6560 = vunpack.c.l.b16 %v6283
        %v6561 = vunpack.c.h.b16 %v6283
        %v6562 = vunpack.c.l.b16 %v6284
        %v6563 = vunpack.c.h.b16 %v6284
        %v6564 = vunpack.c.l.b16 %v6285
        %v6565 = vunpack.c.h.b16 %v6285
        %v6566 = vunpack.c.l.b16 %v6286
        %v6567 = vunpack.c.h.b16 %v6286
        %v6568 = vunpack.c.l.b16 %v6287
        %v6569 = vunpack.c.h.b16 %v6287
        %v6570 = vunpack.c.l.b16 %v6288
        %v6571 = vunpack.c.h.b16 %v6288
        %v6572 = vunpack.c.l.b16 %v6289
        %v6573 = vunpack.c.h.b16 %v6289
        %v6574 = vunpack.c.l.b16 %v6290
        %v6575 = vunpack.c.h.b16 %v6290
        %v6576 = vunpack.c.l.b16 %v6291
        %v6577 = vunpack.c.h.b16 %v6291
        %v6578 = vunpack.c.l.b16 %v6292
        %v6579 = vunpack.c.h.b16 %v6292
        %v6580 = vunpack.c.l.b16 %v6293
        %v6581 = vunpack.c.h.b16 %v6293
        %v6582 = vunpack.c.l.b16 %v6294
        %v6583 = vunpack.c.h.b16 %v6294
        %v6584 = vunpack.c.l.b16 %v6295
        %v6585 = vunpack.c.h.b16 %v6295
        %v6586 = vunpack.c.l.b16 %v6296
        %v6587 = vunpack.c.h.b16 %v6296
        %v6588 = vunpack.c.l.b16 %v6297
        %v6589 = vunpack.c.h.b16 %v6297
        %v6590 = vunpack.c.l.b16 %v6298
        %v6591 = vunpack.c.h.b16 %v6298
        %v6592 = vunpack.c.l.b16 %v6299
        %v6593 = vunpack.c.h.b16 %v6299
        %v6594 = vunpack.c.l.b16 %v6300
        %v6595 = vunpack.c.h.b16 %v6300
        %v6596 = vunpack.c.l.b16 %v6301
        %v6597 = vunpack.c.h.b16 %v6301
        %v6598 = vunpack.c.l.b16 %v6302
        %v6599 = vunpack.c.h.b16 %v6302
        %v6600 = vunpack.c.l.b16 %v6303
        %v6601 = vunpack.c.h.b16 %v6303
        %v6602 = vunpack.c.l.b16 %v6304
        %v6603 = vunpack.c.h.b16 %v6304
        %v6604 = vunpack.c.l.b16 %v6305
        %v6605 = vunpack.c.h.b16 %v6305
        %v6606 = vpack.c.b16 %v6416, %v6414
        %v6607 = vpack.c.b16 %v6417, %v6415
        %v6608 = vpack.c.b16 %v6420, %v6418
        %v6609 = vpack.c.b16 %v6421, %v6419
        %v6610 = vpack.c.b16 %v6424, %v6422
        %v6611 = vpack.c.b16 %v6425, %v6423
        %v6612 = vpack.c.b16 %v6428, %v6426
        %v6613 = vpack.c.b16 %v6429, %v6427
        %v6614 = vpack.c.b16 %v6432, %v6430
        %v6615 = vpack.c.b16 %v6433, %v6431
        %v6616 = vpack.c.b16 %v6436, %v6434
        %v6617 = vpack.c.b16 %v6437, %v6435
        %v6618 = vpack.c.b16 %v6440, %v6438
        %v6619 = vpack.c.b16 %v6441, %v6439
        %v6620 = vpack.c.b16 %v6444, %v6442
        %v6621 = vpack.c.b16 %v6445, %v6443
        %v6622 = vpack.c.b16 %v6448, %v6446
        %v6623 = vpack.c.b16 %v6449, %v6447
        %v6624 = vpack.c.b16 %v6452, %v6450
        %v6625 = vpack.c.b16 %v6453, %v6451
        %v6626 = vpack.c.b16 %v6456, %v6454
        %v6627 = vpack.c.b16 %v6457, %v6455
        %v6628 = vpack.c.b16 %v6460, %v6458
        %v6629 = vpack.c.b16 %v6461, %v6459
        %v6630 = vpack.c.b16 %v6464, %v6462
        %v6631 = vpack.c.b16 %v6465, %v6463
        %v6632 = vpack.c.b16 %v6468, %v6466
        %v6633 = vpack.c.b16 %v6469, %v6467
        %v6634 = vpack.c.b16 %v6472, %v6470
        %v6635 = vpack.c.b16 %v6473, %v6471
        %v6636 = vpack.c.b16 %v6476, %v6474
        %v6637 = vpack.c.b16 %v6477, %v6475
        %v6638 = vpack.c.b16 %v6480, %v6478
        %v6639 = vpack.c.b16 %v6481, %v6479
        %v6640 = vpack.c.b16 %v6484, %v6482
        %v6641 = vpack.c.b16 %v6485, %v6483
        %v6642 = vpack.c.b16 %v6488, %v6486
        %v6643 = vpack.c.b16 %v6489, %v6487
        %v6644 = vpack.c.b16 %v6492, %v6490
        %v6645 = vpack.c.b16 %v6493, %v6491
        %v6646 = vpack.c.b16 %v6496, %v6494
        %v6647 = vpack.c.b16 %v6497, %v6495
        %v6648 = vpack.c.b16 %v6500, %v6498
        %v6649 = vpack.c.b16 %v6501, %v6499
        %v6650 = vpack.c.b16 %v6504, %v6502
        %v6651 = vpack.c.b16 %v6505, %v6503
        %v6652 = vpack.c.b16 %v6508, %v6506
        %v6653 = vpack.c.b16 %v6509, %v6507
        %v6654 = vpack.c.b16 %v6512, %v6510
        %v6655 = vpack.c.b16 %v6513, %v6511
        %v6656 = vpack.c.b16 %v6516, %v6514
        %v6657 = vpack.c.b16 %v6517, %v6515
        %v6658 = vpack.c.b16 %v6520, %v6518
        %v6659 = vpack.c.b16 %v6521, %v6519
        %v6660 = vpack.c.b16 %v6524, %v6522
        %v6661 = vpack.c.b16 %v6525, %v6523
        %v6662 = vpack.c.b16 %v6528, %v6526
        %v6663 = vpack.c.b16 %v6529, %v6527
        %v6664 = vpack.c.b16 %v6532, %v6530
        %v6665 = vpack.c.b16 %v6533, %v6531
        %v6666 = vpack.c.b16 %v6536, %v6534
        %v6667 = vpack.c.b16 %v6537, %v6535
        %v6668 = vpack.c.b16 %v6540, %v6538
        %v6669 = vpack.c.b16 %v6541, %v6539
        %v6670 = vpack.c.b16 %v6544, %v6542
        %v6671 = vpack.c.b16 %v6545, %v6543
        %v6672 = vpack.c.b16 %v6548, %v6546
        %v6673 = vpack.c.b16 %v6549, %v6547
        %v6674 = vpack.c.b16 %v6552, %v6550
        %v6675 = vpack.c.b16 %v6553, %v6551
        %v6676 = vpack.c.b16 %v6556, %v6554
        %v6677 = vpack.c.b16 %v6557, %v6555
        %v6678 = vpack.c.b16 %v6560, %v6558
        %v6679 = vpack.c.b16 %v6561, %v6559
        %v6680 = vpack.c.b16 %v6564, %v6562
        %v6681 = vpack.c.b16 %v6565, %v6563
        %v6682 = vpack.c.b16 %v6568, %v6566
        %v6683 = vpack.c.b16 %v6569, %v6567
        %v6684 = vpack.c.b16 %v6572, %v6570
        %v6685 = vpack.c.b16 %v6573, %v6571
        %v6686 = vpack.c.b16 %v6576, %v6574
        %v6687 = vpack.c.b16 %v6577, %v6575
        %v6688 = vpack.c.b16 %v6580, %v6578
        %v6689 = vpack.c.b16 %v6581, %v6579
        %v6690 = vpack.c.b16 %v6584, %v6582
        %v6691 = vpack.c.b16 %v6585, %v6583
        %v6692 = vpack.c.b16 %v6588, %v6586
        %v6693 = vpack.c.b16 %v6589, %v6587
        %v6694 = vpack.c.b16 %v6592, %v6590
        %v6695 = vpack.c.b16 %v6593, %v6591
        %v6696 = vpack.c.b16 %v6596, %v6594
        %v6697 = vpack.c.b16 %v6597, %v6595
        %v6698 = vpack.c.b16 %v6600, %v6598
        %v6699 = vpack.c.b16 %v6601, %v6599
        %v6700 = vpack.c.b16 %v6604, %v6602
        %v6701 = vpack.c.b16 %v6605, %v6603
        %6798 = vmatprep.subr.bf16.mxu0 %v6607
        %6799 = vmatpush1.bf16.msra.mxu0 %v6606
        %6800 = vmatprep.subr.bf16.mxu0 %v6609
        %6801 = vmatpush1.bf16.msra.mxu0 %v6608
        %6802 = vmatprep.subr.bf16.mxu0 %v6611
        %6803 = vmatpush1.bf16.msra.mxu0 %v6610
        %6804 = vmatprep.subr.bf16.mxu0 %v6613
        %6805 = vmatpush1.bf16.msra.mxu0 %v6612
        %6806 = vmatprep.subr.bf16.mxu0 %v6615
        %6807 = vmatpush1.bf16.msra.mxu0 %v6614
        %6808 = vmatprep.subr.bf16.mxu0 %v6617
        %6809 = vmatpush1.bf16.msra.mxu0 %v6616
        %6810 = vmatprep.subr.bf16.mxu0 %v6619
        %6811 = vmatpush1.bf16.msra.mxu0 %v6618
        %6812 = vmatprep.subr.bf16.mxu0 %v6621
        %6813 = vmatpush1.bf16.msra.mxu0 %v6620
        %6814 = vmatprep.subr.bf16.mxu0 %v6623
        %6815 = vmatpush1.bf16.msra.mxu0 %v6622
        %6816 = vmatprep.subr.bf16.mxu0 %v6625
        %6817 = vmatpush1.bf16.msra.mxu0 %v6624
        %6818 = vmatprep.subr.bf16.mxu0 %v6627
        %6819 = vmatpush1.bf16.msra.mxu0 %v6626
        %6820 = vmatprep.subr.bf16.mxu0 %v6629
        %6821 = vmatpush1.bf16.msra.mxu0 %v6628
        %6822 = vmatprep.subr.bf16.mxu0 %v6631
        %6823 = vmatpush1.bf16.msra.mxu0 %v6630
        %6824 = vmatprep.subr.bf16.mxu0 %v6633
        %6825 = vmatpush1.bf16.msra.mxu0 %v6632
        %6826 = vmatprep.subr.bf16.mxu0 %v6635
        %6827 = vmatpush1.bf16.msra.mxu0 %v6634
        %6828 = vmatprep.subr.bf16.mxu0 %v6637
        %6829 = vmatpush1.bf16.msra.mxu0 %v6636
        %6830 = vmatprep.mubr.bf16.mxu0 %v6205
        %6831 = vmatmul.mubr.bf16.gmra.mrb[0].mxu0 %v6204
        %v6832 = vpop.f32.mrb[0].mxu0
        %v6833 = vadd.f32 %v6311, %v6832
        %v6834 = vpop.f32.mrb[0].mxu0
        %v6835 = vadd.f32 %v6315, %v6834
        %v6836 = vpop.f32.mrb[0].mxu0
        %v6837 = vpop.f32.mrb[0].mxu0
        %6838 = vdwg.mxu0
        %6839 = vmatprep.subr.bf16.mxu0 %v6639
        %6840 = vmatpush1.bf16.msra.mxu0 %v6638
        %6841 = vmatprep.subr.bf16.mxu0 %v6641
        %6842 = vmatpush1.bf16.msra.mxu0 %v6640
        %6843 = vmatprep.subr.bf16.mxu0 %v6643
        %6844 = vmatpush1.bf16.msra.mxu0 %v6642
        %6845 = vmatprep.subr.bf16.mxu0 %v6645
        %6846 = vmatpush1.bf16.msra.mxu0 %v6644
        %6847 = vmatprep.subr.bf16.mxu0 %v6647
        %6848 = vmatpush1.bf16.msra.mxu0 %v6646
        %6849 = vmatprep.subr.bf16.mxu0 %v6649
        %6850 = vmatpush1.bf16.msra.mxu0 %v6648
        %6851 = vmatprep.subr.bf16.mxu0 %v6651
        %6852 = vmatpush1.bf16.msra.mxu0 %v6650
        %6853 = vmatprep.subr.bf16.mxu0 %v6653
        %6854 = vmatpush1.bf16.msra.mxu0 %v6652
        %6855 = vmatprep.subr.bf16.mxu0 %v6655
        %6856 = vmatpush1.bf16.msra.mxu0 %v6654
        %6857 = vmatprep.subr.bf16.mxu0 %v6657
        %6858 = vmatpush1.bf16.msra.mxu0 %v6656
        %6859 = vmatprep.subr.bf16.mxu0 %v6659
        %6860 = vmatpush1.bf16.msra.mxu0 %v6658
        %6861 = vmatprep.subr.bf16.mxu0 %v6661
        %6862 = vmatpush1.bf16.msra.mxu0 %v6660
        %6863 = vmatprep.subr.bf16.mxu0 %v6663
        %6864 = vmatpush1.bf16.msra.mxu0 %v6662
        %6865 = vmatprep.subr.bf16.mxu0 %v6665
        %6866 = vmatpush1.bf16.msra.mxu0 %v6664
        %6867 = vmatprep.subr.bf16.mxu0 %v6667
        %6868 = vmatpush1.bf16.msra.mxu0 %v6666
        %6869 = vmatprep.subr.bf16.mxu0 %v6669
        %6870 = vmatpush1.bf16.msra.mxu0 %v6668
        %6871 = vmatprep.mubr.bf16.mxu0 %v6207
        %6872 = vmatmul.mubr.bf16.gmra.mrb[0].mxu0 %v6206
        %v6873 = vpop.f32.mrb[0].mxu0
        %v6874 = vadd.f32 %v6833, %v6873
        %v6875 = vpop.f32.mrb[0].mxu0
        %v6876 = vadd.f32 %v6835, %v6875
        %v6877 = vpop.f32.mrb[0].mxu0
        %v6878 = vpop.f32.mrb[0].mxu0
        %6879 = vdwg.mxu0
        %6880 = vmatprep.subr.bf16.mxu0 %v6671
        %6881 = vmatpush1.bf16.msra.mxu0 %v6670
        %6882 = vmatprep.subr.bf16.mxu0 %v6673
        %6883 = vmatpush1.bf16.msra.mxu0 %v6672
        %6884 = vmatprep.subr.bf16.mxu0 %v6675
        %6885 = vmatpush1.bf16.msra.mxu0 %v6674
        %6886 = vmatprep.subr.bf16.mxu0 %v6677
        %6887 = vmatpush1.bf16.msra.mxu0 %v6676
        %6888 = vmatprep.subr.bf16.mxu0 %v6679
        %6889 = vmatpush1.bf16.msra.mxu0 %v6678
        %6890 = vmatprep.subr.bf16.mxu0 %v6681
        %6891 = vmatpush1.bf16.msra.mxu0 %v6680
        %6892 = vmatprep.subr.bf16.mxu0 %v6683
        %6893 = vmatpush1.bf16.msra.mxu0 %v6682
        %6894 = vmatprep.subr.bf16.mxu0 %v6685
        %6895 = vmatpush1.bf16.msra.mxu0 %v6684
        %6896 = vmatprep.subr.bf16.mxu0 %v6687
        %6897 = vmatpush1.bf16.msra.mxu0 %v6686
        %6898 = vmatprep.subr.bf16.mxu0 %v6689
        %6899 = vmatpush1.bf16.msra.mxu0 %v6688
        %6900 = vmatprep.subr.bf16.mxu0 %v6691
        %6901 = vmatpush1.bf16.msra.mxu0 %v6690
        %6902 = vmatprep.subr.bf16.mxu0 %v6693
        %6903 = vmatpush1.bf16.msra.mxu0 %v6692
        %6904 = vmatprep.subr.bf16.mxu0 %v6695
        %6905 = vmatpush1.bf16.msra.mxu0 %v6694
        %6906 = vmatprep.subr.bf16.mxu0 %v6697
        %6907 = vmatpush1.bf16.msra.mxu0 %v6696
        %6908 = vmatprep.subr.bf16.mxu0 %v6699
        %6909 = vmatpush1.bf16.msra.mxu0 %v6698
        %6910 = vmatprep.subr.bf16.mxu0 %v6701
        %6911 = vmatpush1.bf16.msra.mxu0 %v6700
        %6912 = vmatprep.mubr.bf16.mxu0 %v6209
        %6913 = vmatmul.mubr.bf16.gmra.mrb[0].mxu0 %v6208
        %v6914 = vpop.f32.mrb[0].mxu0
        %v6915 = vadd.f32 %v6874, %v6914
        %v6916 = vpop.f32.mrb[0].mxu0
        %v6917 = vadd.f32 %v6876, %v6916
        %v6918 = vpop.f32.mrb[0].mxu0
        %v6919 = vpop.f32.mrb[0].mxu0
        %6920 = vdwg.mxu0
        %v6921 = vmax.f32 %v6915, 0.0
        %v6922 = vmax.f32 %v6917, 0.0
        %s6923 = scalar_lea.vmem %s29, 1
        %v6924 = vld [vmem:[%s6923] ss:$4 sm:$0x3]
        %v6926 = vlaneseq
        %v6927 = vshrl.u32 %v6926, 7
        %v6928 = vsub.s32 0, %v6927
        %v6929 = vrot.slane %v6924, %v6928
        %v6930 = vlaneseq
        %v6931 = vshrl.u32 %v6930, 7
        %v6932 = vsub.s32 1, %v6931
        %v6933 = vrot.slane %v6924, %v6932
        %v6936 = vmul.f32 %v6921, %v6929
        %v6937 = vmul.f32 %v6922, %v6933
        %s6938 = scalar_lea.vmem %s29, 2
        %v6939 = vld [vmem:[%s6938] ss:$4 sm:$0x3]
        %v6941 = vlaneseq
        %v6942 = vshrl.u32 %v6941, 7
        %v6943 = vsub.s32 0, %v6942
        %v6944 = vrot.slane %v6939, %v6943
        %v6945 = vlaneseq
        %v6946 = vshrl.u32 %v6945, 7
        %v6947 = vsub.s32 1, %v6946
        %v6948 = vrot.slane %v6939, %v6947
        %v6951 = vadd.f32 %v6936, %v6944
        %v6952 = vadd.f32 %v6937, %v6948
        %v6955 = vrot.slane %v6951, 1
        %v6956 = vrot.slane %v6952, 1
        %v6959 = vsel %vm1626, %v6955, 0.0
        %v6960 = vsel %vm1626, %v6956, 0.0
        %v6961 = vmax.f32 %v6951, %v6959
        %v6962 = vmax.f32 %v6952, %v6960
        %v6963 = vpack.c.bf16 %v6961, %v6961
        %v6964 = vpack.c.bf16 %v6962, %v6962
        %v6965 = vld [vmem:[%s63] sm:$0x3]
        %vm6966 = vcmask 64512
        %v6968 = vsel %vm6966, %v6965, 0
        %vm6970 = vcmask 1043456
        %v6972 = vsel %vm6970, %v6963, 0
        %v6975 = vsel %vm6970, %v6964, 0
        %6977 = vmatprep.subr.bf16.mxu0 %v6975
        %6978 = vmatpush1.bf16.msra.mxu0 %v6972
        %6979 = vmatprep.subr.bf16.mxu0 0
        %6980 = vmatpush1.bf16.msra.mxu0 0
        %6981 = vmatprep.subr.bf16.mxu0 0
        %6982 = vmatpush1.bf16.msra.mxu0 0
        %6983 = vmatprep.subr.bf16.mxu0 0
        %6984 = vmatpush1.bf16.msra.mxu0 0
        %6985 = vmatprep.subr.bf16.mxu0 0
        %6986 = vmatpush1.bf16.msra.mxu0 0
        %6987 = vmatprep.subr.bf16.mxu0 0
        %6988 = vmatpush1.bf16.msra.mxu0 0
        %6989 = vmatprep.subr.bf16.mxu0 0
        %6990 = vmatpush1.bf16.msra.mxu0 0
        %6991 = vmatprep.subr.bf16.mxu0 0
        %6992 = vmatpush1.bf16.msra.mxu0 0
        %6993 = vmatprep.subr.bf16.mxu0 0
        %6994 = vmatpush1.bf16.msra.mxu0 0
        %6995 = vmatprep.subr.bf16.mxu0 0
        %6996 = vmatpush1.bf16.msra.mxu0 0
        %6997 = vmatprep.subr.bf16.mxu0 0
        %6998 = vmatpush1.bf16.msra.mxu0 0
        %6999 = vmatprep.subr.bf16.mxu0 0
        %7000 = vmatpush1.bf16.msra.mxu0 0
        %7001 = vmatprep.subr.bf16.mxu0 0
        %7002 = vmatpush1.bf16.msra.mxu0 0
        %7003 = vmatprep.subr.bf16.mxu0 0
        %7004 = vmatpush1.bf16.msra.mxu0 0
        %7005 = vmatprep.subr.bf16.mxu0 0
        %7006 = vmatpush1.bf16.msra.mxu0 0
        %7007 = vmatprep.subr.bf16.mxu0 0
        %7008 = vmatpush1.bf16.msra.mxu0 0
        %7009 = vmatprep.mubr.bf16.mxu0 0
        %7010 = vmatmul.mubr.bf16.gmra.mrb[0].mxu0 %v6968
        %v7011 = vpop.f32.mrb[0].mxu0
        %v7012 = vadd.f32 0.0, %v7011
        %v7013 = vpop.f32.mrb[0].mxu0
        %v7014 = vadd.f32 0.0, %v7013
        %v7015 = vpop.f32.mrb[0].mxu0
        %v7016 = vpop.f32.mrb[0].mxu0
        %7017 = vdwg.mxu0
        %v7018 = vpack.c.bf16 %v7012, %v7012
        %v7019 = vpack.c.bf16 %v7014, %v7014
        %v7020 = vld [vmem:[#allocation37] sm:$0xf]
        %v7021 = vld [vmem:[#allocation37 + $0x4] sm:$0xf]
        %v7022 = vld [vmem:[#allocation37 + $0x8] sm:$0xf]
        %v7023 = vld [vmem:[#allocation37 + $0xc] sm:$0xf]
        %v7024 = vld [vmem:[#allocation37 + $0x10] sm:$0xf]
        %v7025 = vld [vmem:[#allocation37 + $0x14] sm:$0xf]
        %v7026 = vld [vmem:[#allocation37 + $0x18] sm:$0xf]
        %v7027 = vld [vmem:[#allocation37 + $0x1c] sm:$0xf]
        %v7028 = vld [vmem:[#allocation37 + $0x20] sm:$0xf]
        %v7029 = vld [vmem:[#allocation37 + $0x24] sm:$0xf]
        %v7030 = vld [vmem:[#allocation37 + $0x28] sm:$0xf]
        %v7031 = vld [vmem:[#allocation37 + $0x2c] sm:$0xf]
        %v7032 = vld [vmem:[#allocation37 + $0x30] sm:$0xf]
        %v7033 = vld [vmem:[#allocation37 + $0x34] sm:$0xf]
        %v7034 = vld [vmem:[#allocation37 + $0x38] sm:$0xf]
        %v7035 = vld [vmem:[#allocation37 + $0x3c] sm:$0xf]
        %v7036 = vld [vmem:[#allocation37 + $0x40] sm:$0xf]
        %v7037 = vld [vmem:[#allocation37 + $0x44] sm:$0xf]
        %v7038 = vld [vmem:[#allocation37 + $0x48] sm:$0xf]
        %v7039 = vld [vmem:[#allocation37 + $0x4c] sm:$0xf]
        %v7040 = vld [vmem:[#allocation37 + $0x50] sm:$0xf]
        %v7041 = vld [vmem:[#allocation37 + $0x54] sm:$0xf]
        %v7042 = vld [vmem:[#allocation37 + $0x58] sm:$0xf]
        %v7043 = vld [vmem:[#allocation37 + $0x5c] sm:$0xf]
        %v7044 = vld [vmem:[#allocation37 + $0x60] sm:$0xf]
        %v7045 = vld [vmem:[#allocation37 + $0x64] sm:$0xf]
        %v7046 = vld [vmem:[#allocation37 + $0x68] sm:$0xf]
        %v7047 = vld [vmem:[#allocation37 + $0x6c] sm:$0xf]
        %v7048 = vld [vmem:[#allocation37 + $0x70] sm:$0xf]
        %v7049 = vld [vmem:[#allocation37 + $0x74] sm:$0xf]
        %v7050 = vld [vmem:[#allocation37 + $0x78] sm:$0xf]
        %v7051 = vld [vmem:[#allocation37 + $0x7c] sm:$0xf]
        %v7084 = vunpack.c.l.b16 %v7020
        %v7085 = vunpack.c.l.b16 %v7021
        %v7086 = vunpack.c.l.b16 %v7022
        %v7087 = vunpack.c.l.b16 %v7023
        %v7088 = vunpack.c.l.b16 %v7024
        %v7089 = vunpack.c.l.b16 %v7025
        %v7090 = vunpack.c.l.b16 %v7026
        %v7091 = vunpack.c.l.b16 %v7027
        %v7092 = vunpack.c.l.b16 %v7028
        %v7093 = vunpack.c.l.b16 %v7029
        %v7094 = vunpack.c.l.b16 %v7030
        %v7095 = vunpack.c.l.b16 %v7031
        %v7096 = vunpack.c.l.b16 %v7032
        %v7097 = vunpack.c.l.b16 %v7033
        %v7098 = vunpack.c.l.b16 %v7034
        %v7099 = vunpack.c.l.b16 %v7035
        %v7100 = vunpack.c.l.b16 %v7036
        %v7101 = vunpack.c.l.b16 %v7037
        %v7102 = vunpack.c.l.b16 %v7038
        %v7103 = vunpack.c.l.b16 %v7039
        %v7104 = vunpack.c.l.b16 %v7040
        %v7105 = vunpack.c.l.b16 %v7041
        %v7106 = vunpack.c.l.b16 %v7042
        %v7107 = vunpack.c.l.b16 %v7043
        %v7108 = vunpack.c.l.b16 %v7044
        %v7109 = vunpack.c.l.b16 %v7045
        %v7110 = vunpack.c.l.b16 %v7046
        %v7111 = vunpack.c.l.b16 %v7047
        %v7112 = vunpack.c.l.b16 %v7048
        %v7113 = vunpack.c.l.b16 %v7049
        %v7114 = vunpack.c.l.b16 %v7050
        %v7115 = vunpack.c.l.b16 %v7051
        %v7116 = vpack.c.b16 %v7085, %v7084
        %v7117 = vpack.c.b16 %v7087, %v7086
        %v7118 = vpack.c.b16 %v7089, %v7088
        %v7119 = vpack.c.b16 %v7091, %v7090
        %v7120 = vpack.c.b16 %v7093, %v7092
        %v7121 = vpack.c.b16 %v7095, %v7094
        %v7122 = vpack.c.b16 %v7097, %v7096
        %v7123 = vpack.c.b16 %v7099, %v7098
        %v7124 = vpack.c.b16 %v7101, %v7100
        %v7125 = vpack.c.b16 %v7103, %v7102
        %v7126 = vpack.c.b16 %v7105, %v7104
        %v7127 = vpack.c.b16 %v7107, %v7106
        %v7128 = vpack.c.b16 %v7109, %v7108
        %v7129 = vpack.c.b16 %v7111, %v7110
        %v7130 = vpack.c.b16 %v7113, %v7112
        %v7131 = vpack.c.b16 %v7115, %v7114
        %7148 = vmatprep.subr.bf16.mxu0 0
        %7149 = vmatpush1.bf16.msra.mxu0 %v7116
        %7150 = vmatprep.subr.bf16.mxu0 0
        %7151 = vmatpush1.bf16.msra.mxu0 %v7117
        %7152 = vmatprep.subr.bf16.mxu0 0
        %7153 = vmatpush1.bf16.msra.mxu0 %v7118
        %7154 = vmatprep.subr.bf16.mxu0 0
        %7155 = vmatpush1.bf16.msra.mxu0 %v7119
        %7156 = vmatprep.subr.bf16.mxu0 0
        %7157 = vmatpush1.bf16.msra.mxu0 %v7120
        %7158 = vmatprep.subr.bf16.mxu0 0
        %7159 = vmatpush1.bf16.msra.mxu0 %v7121
        %7160 = vmatprep.subr.bf16.mxu0 0
        %7161 = vmatpush1.bf16.msra.mxu0 %v7122
        %7162 = vmatprep.subr.bf16.mxu0 0
        %7163 = vmatpush1.bf16.msra.mxu0 %v7123
        %7164 = vmatprep.subr.bf16.mxu0 0
        %7165 = vmatpush1.bf16.msra.mxu0 %v7124
        %7166 = vmatprep.subr.bf16.mxu0 0
        %7167 = vmatpush1.bf16.msra.mxu0 %v7125
        %7168 = vmatprep.subr.bf16.mxu0 0
        %7169 = vmatpush1.bf16.msra.mxu0 %v7126
        %7170 = vmatprep.subr.bf16.mxu0 0
        %7171 = vmatpush1.bf16.msra.mxu0 %v7127
        %7172 = vmatprep.subr.bf16.mxu0 0
        %7173 = vmatpush1.bf16.msra.mxu0 %v7128
        %7174 = vmatprep.subr.bf16.mxu0 0
        %7175 = vmatpush1.bf16.msra.mxu0 %v7129
        %7176 = vmatprep.subr.bf16.mxu0 0
        %7177 = vmatpush1.bf16.msra.mxu0 %v7130
        %7178 = vmatprep.subr.bf16.mxu0 0
        %7179 = vmatpush1.bf16.msra.mxu0 %v7131
        %7180 = vmatprep.mubr.bf16.mxu0 %v7019
        %7181 = vmatmul.mubr.bf16.gmra.mrb[0].mxu0 %v7018
        %v7182 = vpop.f32.mrb[0].mxu0
        %v7183 = vadd.f32 0.0, %v7182
        %v7184 = vpop.f32.mrb[0].mxu0
        %v7185 = vpop.f32.mrb[0].mxu0
        %v7186 = vpop.f32.mrb[0].mxu0
        %7187 = vdwg.mxu0
        %s7188 = scalar_lea.vmem [#allocation37], 128
        %v7189 = vld [vmem:[%s7188] sm:$0xf]
        %v7190 = vld [vmem:[%s7188 + $0x4] sm:$0xf]
        %v7191 = vld [vmem:[%s7188 + $0x8] sm:$0xf]
        %v7192 = vld [vmem:[%s7188 + $0xc] sm:$0xf]
        %v7193 = vld [vmem:[%s7188 + $0x10] sm:$0xf]
        %v7194 = vld [vmem:[%s7188 + $0x14] sm:$0xf]
        %v7195 = vld [vmem:[%s7188 + $0x18] sm:$0xf]
        %v7196 = vld [vmem:[%s7188 + $0x1c] sm:$0xf]
        %v7197 = vld [vmem:[%s7188 + $0x20] sm:$0xf]
        %v7198 = vld [vmem:[%s7188 + $0x24] sm:$0xf]
        %v7199 = vld [vmem:[%s7188 + $0x28] sm:$0xf]
        %v7200 = vld [vmem:[%s7188 + $0x2c] sm:$0xf]
        %v7201 = vld [vmem:[%s7188 + $0x30] sm:$0xf]
        %v7202 = vld [vmem:[%s7188 + $0x34] sm:$0xf]
        %v7203 = vld [vmem:[%s7188 + $0x38] sm:$0xf]
        %v7204 = vld [vmem:[%s7188 + $0x3c] sm:$0xf]
        %v7205 = vld [vmem:[%s7188 + $0x40] sm:$0xf]
        %v7206 = vld [vmem:[%s7188 + $0x44] sm:$0xf]
        %v7207 = vld [vmem:[%s7188 + $0x48] sm:$0xf]
        %v7208 = vld [vmem:[%s7188 + $0x4c] sm:$0xf]
        %v7209 = vld [vmem:[%s7188 + $0x50] sm:$0xf]
        %v7210 = vld [vmem:[%s7188 + $0x54] sm:$0xf]
        %v7211 = vld [vmem:[%s7188 + $0x58] sm:$0xf]
        %v7212 = vld [vmem:[%s7188 + $0x5c] sm:$0xf]
        %v7213 = vld [vmem:[%s7188 + $0x60] sm:$0xf]
        %v7214 = vld [vmem:[%s7188 + $0x64] sm:$0xf]
        %v7215 = vld [vmem:[%s7188 + $0x68] sm:$0xf]
        %v7216 = vld [vmem:[%s7188 + $0x6c] sm:$0xf]
        %v7217 = vld [vmem:[%s7188 + $0x70] sm:$0xf]
        %v7218 = vld [vmem:[%s7188 + $0x74] sm:$0xf]
        %v7219 = vld [vmem:[%s7188 + $0x78] sm:$0xf]
        %v7220 = vld [vmem:[%s7188 + $0x7c] sm:$0xf]
        %v7253 = vunpack.c.l.b16 %v7189
        %v7254 = vunpack.c.l.b16 %v7190
        %v7255 = vunpack.c.l.b16 %v7191
        %v7256 = vunpack.c.l.b16 %v7192
        %v7257 = vunpack.c.l.b16 %v7193
        %v7258 = vunpack.c.l.b16 %v7194
        %v7259 = vunpack.c.l.b16 %v7195
        %v7260 = vunpack.c.l.b16 %v7196
        %v7261 = vunpack.c.l.b16 %v7197
        %v7262 = vunpack.c.l.b16 %v7198
        %v7263 = vunpack.c.l.b16 %v7199
        %v7264 = vunpack.c.l.b16 %v7200
        %v7265 = vunpack.c.l.b16 %v7201
        %v7266 = vunpack.c.l.b16 %v7202
        %v7267 = vunpack.c.l.b16 %v7203
        %v7268 = vunpack.c.l.b16 %v7204
        %v7269 = vunpack.c.l.b16 %v7205
        %v7270 = vunpack.c.l.b16 %v7206
        %v7271 = vunpack.c.l.b16 %v7207
        %v7272 = vunpack.c.l.b16 %v7208
        %v7273 = vunpack.c.l.b16 %v7209
        %v7274 = vunpack.c.l.b16 %v7210
        %v7275 = vunpack.c.l.b16 %v7211
        %v7276 = vunpack.c.l.b16 %v7212
        %v7277 = vunpack.c.l.b16 %v7213
        %v7278 = vunpack.c.l.b16 %v7214
        %v7279 = vunpack.c.l.b16 %v7215
        %v7280 = vunpack.c.l.b16 %v7216
        %v7281 = vunpack.c.l.b16 %v7217
        %v7282 = vunpack.c.l.b16 %v7218
        %v7283 = vunpack.c.l.b16 %v7219
        %v7284 = vunpack.c.l.b16 %v7220
        %v7285 = vpack.c.b16 %v7254, %v7253
        %v7286 = vpack.c.b16 %v7256, %v7255
        %v7287 = vpack.c.b16 %v7258, %v7257
        %v7288 = vpack.c.b16 %v7260, %v7259
        %v7289 = vpack.c.b16 %v7262, %v7261
        %v7290 = vpack.c.b16 %v7264, %v7263
        %v7291 = vpack.c.b16 %v7266, %v7265
        %v7292 = vpack.c.b16 %v7268, %v7267
        %v7293 = vpack.c.b16 %v7270, %v7269
        %v7294 = vpack.c.b16 %v7272, %v7271
        %v7295 = vpack.c.b16 %v7274, %v7273
        %v7296 = vpack.c.b16 %v7276, %v7275
        %v7297 = vpack.c.b16 %v7278, %v7277
        %v7298 = vpack.c.b16 %v7280, %v7279
        %v7299 = vpack.c.b16 %v7282, %v7281
        %v7300 = vpack.c.b16 %v7284, %v7283
        %7317 = vmatprep.subr.bf16.mxu0 0
        %7318 = vmatpush1.bf16.msra.mxu0 %v7285
        %7319 = vmatprep.subr.bf16.mxu0 0
        %7320 = vmatpush1.bf16.msra.mxu0 %v7286
        %7321 = vmatprep.subr.bf16.mxu0 0
        %7322 = vmatpush1.bf16.msra.mxu0 %v7287
        %7323 = vmatprep.subr.bf16.mxu0 0
        %7324 = vmatpush1.bf16.msra.mxu0 %v7288
        %7325 = vmatprep.subr.bf16.mxu0 0
        %7326 = vmatpush1.bf16.msra.mxu0 %v7289
        %7327 = vmatprep.subr.bf16.mxu0 0
        %7328 = vmatpush1.bf16.msra.mxu0 %v7290
        %7329 = vmatprep.subr.bf16.mxu0 0
        %7330 = vmatpush1.bf16.msra.mxu0 %v7291
        %7331 = vmatprep.subr.bf16.mxu0 0
        %7332 = vmatpush1.bf16.msra.mxu0 %v7292
        %7333 = vmatprep.subr.bf16.mxu0 0
        %7334 = vmatpush1.bf16.msra.mxu0 %v7293
        %7335 = vmatprep.subr.bf16.mxu0 0
        %7336 = vmatpush1.bf16.msra.mxu0 %v7294
        %7337 = vmatprep.subr.bf16.mxu0 0
        %7338 = vmatpush1.bf16.msra.mxu0 %v7295
        %7339 = vmatprep.subr.bf16.mxu0 0
        %7340 = vmatpush1.bf16.msra.mxu0 %v7296
        %7341 = vmatprep.subr.bf16.mxu0 0
        %7342 = vmatpush1.bf16.msra.mxu0 %v7297
        %7343 = vmatprep.subr.bf16.mxu0 0
        %7344 = vmatpush1.bf16.msra.mxu0 %v7298
        %7345 = vmatprep.subr.bf16.mxu0 0
        %7346 = vmatpush1.bf16.msra.mxu0 %v7299
        %7347 = vmatprep.subr.bf16.mxu0 0
        %7348 = vmatpush1.bf16.msra.mxu0 %v7300
        %7349 = vmatprep.mubr.bf16.mxu0 %v7019
        %7350 = vmatmul.mubr.bf16.gmra.mrb[0].mxu0 %v7018
        %v7351 = vpop.f32.mrb[0].mxu0
        %v7352 = vadd.f32 0.0, %v7351
        %v7353 = vpop.f32.mrb[0].mxu0
        %v7354 = vpop.f32.mrb[0].mxu0
        %v7355 = vpop.f32.mrb[0].mxu0
        %7356 = vdwg.mxu0
        %v7357 = vmax.f32 %v7183, %v7352
        %v7359 = vrot.slane %v7357, 7
        %v7361 = vsel %vm1613, 0.0, %v7359
        %v7362 = vrot.slane %v7357, 1
        %vm7364 = vcmask 1042432
        %v7365 = vsel %vm7364, %v7362, 0.0
        %v7366 = vpack.c.bf16 %v7361, %v7361
        %v7367 = vpack.c.bf16 %v7357, %v7357
        %v7368 = vpack.c.bf16 %v7365, %v7365
        %v7369 = vld [vmem:[#allocation17] sm:$0xff]
        %v7370 = vld [vmem:[#allocation17 + $0x8] sm:$0xff]
        %v7371 = vld [vmem:[#allocation17 + $0x10] sm:$0xff]
        %v7372 = vld [vmem:[#allocation17 + $0x18] sm:$0xff]
        %v7373 = vld [vmem:[#allocation17 + $0x20] sm:$0xff]
        %v7374 = vld [vmem:[#allocation17 + $0x28] sm:$0xff]
        %v7375 = vld [vmem:[#allocation17 + $0x30] sm:$0xff]
        %v7376 = vld [vmem:[#allocation17 + $0x38] sm:$0xff]
        %v7377 = vld [vmem:[#allocation17 + $0x40] sm:$0xff]
        %v7378 = vld [vmem:[#allocation17 + $0x48] sm:$0xff]
        %v7379 = vld [vmem:[#allocation17 + $0x50] sm:$0xff]
        %v7380 = vld [vmem:[#allocation17 + $0x58] sm:$0xff]
        %v7381 = vld [vmem:[#allocation17 + $0x60] sm:$0xff]
        %v7382 = vld [vmem:[#allocation17 + $0x68] sm:$0xff]
        %v7383 = vld [vmem:[#allocation17 + $0x70] sm:$0xff]
        %v7384 = vld [vmem:[#allocation17 + $0x78] sm:$0xff]
        %v7385 = vld [vmem:[#allocation17 + $0x80] sm:$0xff]
        %v7386 = vld [vmem:[#allocation17 + $0x88] sm:$0xff]
        %v7387 = vld [vmem:[#allocation17 + $0x90] sm:$0xff]
        %v7388 = vld [vmem:[#allocation17 + $0x98] sm:$0xff]
        %v7389 = vld [vmem:[#allocation17 + $0xa0] sm:$0xff]
        %v7390 = vld [vmem:[#allocation17 + $0xa8] sm:$0xff]
        %v7391 = vld [vmem:[#allocation17 + $0xb0] sm:$0xff]
        %v7392 = vld [vmem:[#allocation17 + $0xb8] sm:$0xff]
        %v7393 = vld [vmem:[#allocation17 + $0xc0] sm:$0xff]
        %v7394 = vld [vmem:[#allocation17 + $0xc8] sm:$0xff]
        %v7395 = vld [vmem:[#allocation17 + $0xd0] sm:$0xff]
        %v7396 = vld [vmem:[#allocation17 + $0xd8] sm:$0xff]
        %v7397 = vld [vmem:[#allocation17 + $0xe0] sm:$0xff]
        %v7398 = vld [vmem:[#allocation17 + $0xe8] sm:$0xff]
        %v7399 = vld [vmem:[#allocation17 + $0xf0] sm:$0xff]
        %v7400 = vld [vmem:[#allocation17 + $0xf8] sm:$0xff]
        %v7401 = vld [vmem:[#allocation17 + $0x100] sm:$0xff]
        %v7402 = vld [vmem:[#allocation17 + $0x108] sm:$0xff]
        %v7403 = vld [vmem:[#allocation17 + $0x110] sm:$0xff]
        %v7404 = vld [vmem:[#allocation17 + $0x118] sm:$0xff]
        %v7405 = vld [vmem:[#allocation17 + $0x120] sm:$0xff]
        %v7406 = vld [vmem:[#allocation17 + $0x128] sm:$0xff]
        %v7407 = vld [vmem:[#allocation17 + $0x130] sm:$0xff]
        %v7408 = vld [vmem:[#allocation17 + $0x138] sm:$0xff]
        %v7409 = vld [vmem:[#allocation17 + $0x140] sm:$0xff]
        %v7410 = vld [vmem:[#allocation17 + $0x148] sm:$0xff]
        %v7411 = vld [vmem:[#allocation17 + $0x150] sm:$0xff]
        %v7412 = vld [vmem:[#allocation17 + $0x158] sm:$0xff]
        %v7413 = vld [vmem:[#allocation17 + $0x160] sm:$0xff]
        %v7414 = vld [vmem:[#allocation17 + $0x168] sm:$0xff]
        %v7415 = vld [vmem:[#allocation17 + $0x170] sm:$0xff]
        %v7416 = vld [vmem:[#allocation17 + $0x178] sm:$0xff]
        %v7417 = vld [vmem:[#allocation19] ss:$4 sm:$0x3]
        %v7419 = vlaneseq
        %v7420 = vshrl.u32 %v7419, 7
        %v7421 = vsub.s32 0, %v7420
        %v7422 = vrot.slane %v7417, %v7421
        %v7423 = vlaneseq
        %v7424 = vshrl.u32 %v7423, 7
        %v7425 = vsub.s32 1, %v7424
        %v7426 = vrot.slane %v7417, %v7425
        %v7477 = vunpack.c.l.b16 %v7369
        %v7478 = vunpack.c.h.b16 %v7369
        %v7479 = vunpack.c.l.b16 %v7370
        %v7480 = vunpack.c.h.b16 %v7370
        %v7481 = vunpack.c.l.b16 %v7371
        %v7482 = vunpack.c.h.b16 %v7371
        %v7483 = vunpack.c.l.b16 %v7372
        %v7484 = vunpack.c.h.b16 %v7372
        %v7485 = vunpack.c.l.b16 %v7373
        %v7486 = vunpack.c.h.b16 %v7373
        %v7487 = vunpack.c.l.b16 %v7374
        %v7488 = vunpack.c.h.b16 %v7374
        %v7489 = vunpack.c.l.b16 %v7375
        %v7490 = vunpack.c.h.b16 %v7375
        %v7491 = vunpack.c.l.b16 %v7376
        %v7492 = vunpack.c.h.b16 %v7376
        %v7493 = vunpack.c.l.b16 %v7377
        %v7494 = vunpack.c.h.b16 %v7377
        %v7495 = vunpack.c.l.b16 %v7378
        %v7496 = vunpack.c.h.b16 %v7378
        %v7497 = vunpack.c.l.b16 %v7379
        %v7498 = vunpack.c.h.b16 %v7379
        %v7499 = vunpack.c.l.b16 %v7380
        %v7500 = vunpack.c.h.b16 %v7380
        %v7501 = vunpack.c.l.b16 %v7381
        %v7502 = vunpack.c.h.b16 %v7381
        %v7503 = vunpack.c.l.b16 %v7382
        %v7504 = vunpack.c.h.b16 %v7382
        %v7505 = vunpack.c.l.b16 %v7383
        %v7506 = vunpack.c.h.b16 %v7383
        %v7507 = vunpack.c.l.b16 %v7384
        %v7508 = vunpack.c.h.b16 %v7384
        %v7509 = vunpack.c.l.b16 %v7385
        %v7510 = vunpack.c.h.b16 %v7385
        %v7511 = vunpack.c.l.b16 %v7386
        %v7512 = vunpack.c.h.b16 %v7386
        %v7513 = vunpack.c.l.b16 %v7387
        %v7514 = vunpack.c.h.b16 %v7387
        %v7515 = vunpack.c.l.b16 %v7388
        %v7516 = vunpack.c.h.b16 %v7388
        %v7517 = vunpack.c.l.b16 %v7389
        %v7518 = vunpack.c.h.b16 %v7389
        %v7519 = vunpack.c.l.b16 %v7390
        %v7520 = vunpack.c.h.b16 %v7390
        %v7521 = vunpack.c.l.b16 %v7391
        %v7522 = vunpack.c.h.b16 %v7391
        %v7523 = vunpack.c.l.b16 %v7392
        %v7524 = vunpack.c.h.b16 %v7392
        %v7525 = vunpack.c.l.b16 %v7393
        %v7526 = vunpack.c.h.b16 %v7393
        %v7527 = vunpack.c.l.b16 %v7394
        %v7528 = vunpack.c.h.b16 %v7394
        %v7529 = vunpack.c.l.b16 %v7395
        %v7530 = vunpack.c.h.b16 %v7395
        %v7531 = vunpack.c.l.b16 %v7396
        %v7532 = vunpack.c.h.b16 %v7396
        %v7533 = vunpack.c.l.b16 %v7397
        %v7534 = vunpack.c.h.b16 %v7397
        %v7535 = vunpack.c.l.b16 %v7398
        %v7536 = vunpack.c.h.b16 %v7398
        %v7537 = vunpack.c.l.b16 %v7399
        %v7538 = vunpack.c.h.b16 %v7399
        %v7539 = vunpack.c.l.b16 %v7400
        %v7540 = vunpack.c.h.b16 %v7400
        %v7541 = vunpack.c.l.b16 %v7401
        %v7542 = vunpack.c.h.b16 %v7401
        %v7543 = vunpack.c.l.b16 %v7402
        %v7544 = vunpack.c.h.b16 %v7402
        %v7545 = vunpack.c.l.b16 %v7403
        %v7546 = vunpack.c.h.b16 %v7403
        %v7547 = vunpack.c.l.b16 %v7404
        %v7548 = vunpack.c.h.b16 %v7404
        %v7549 = vunpack.c.l.b16 %v7405
        %v7550 = vunpack.c.h.b16 %v7405
        %v7551 = vunpack.c.l.b16 %v7406
        %v7552 = vunpack.c.h.b16 %v7406
        %v7553 = vunpack.c.l.b16 %v7407
        %v7554 = vunpack.c.h.b16 %v7407
        %v7555 = vunpack.c.l.b16 %v7408
        %v7556 = vunpack.c.h.b16 %v7408
        %v7557 = vunpack.c.l.b16 %v7409
        %v7558 = vunpack.c.h.b16 %v7409
        %v7559 = vunpack.c.l.b16 %v7410
        %v7560 = vunpack.c.h.b16 %v7410
        %v7561 = vunpack.c.l.b16 %v7411
        %v7562 = vunpack.c.h.b16 %v7411
        %v7563 = vunpack.c.l.b16 %v7412
        %v7564 = vunpack.c.h.b16 %v7412
        %v7565 = vunpack.c.l.b16 %v7413
        %v7566 = vunpack.c.h.b16 %v7413
        %v7567 = vunpack.c.l.b16 %v7414
        %v7568 = vunpack.c.h.b16 %v7414
        %v7569 = vunpack.c.l.b16 %v7415
        %v7570 = vunpack.c.h.b16 %v7415
        %v7571 = vunpack.c.l.b16 %v7416
        %v7572 = vunpack.c.h.b16 %v7416
        %v7573 = vpack.c.b16 %v7479, %v7477
        %v7574 = vpack.c.b16 %v7480, %v7478
        %v7575 = vpack.c.b16 %v7483, %v7481
        %v7576 = vpack.c.b16 %v7484, %v7482
        %v7577 = vpack.c.b16 %v7487, %v7485
        %v7578 = vpack.c.b16 %v7488, %v7486
        %v7579 = vpack.c.b16 %v7491, %v7489
        %v7580 = vpack.c.b16 %v7492, %v7490
        %v7581 = vpack.c.b16 %v7495, %v7493
        %v7582 = vpack.c.b16 %v7496, %v7494
        %v7583 = vpack.c.b16 %v7499, %v7497
        %v7584 = vpack.c.b16 %v7500, %v7498
        %v7585 = vpack.c.b16 %v7503, %v7501
        %v7586 = vpack.c.b16 %v7504, %v7502
        %v7587 = vpack.c.b16 %v7507, %v7505
        %v7588 = vpack.c.b16 %v7508, %v7506
        %v7589 = vpack.c.b16 %v7511, %v7509
        %v7590 = vpack.c.b16 %v7512, %v7510
        %v7591 = vpack.c.b16 %v7515, %v7513
        %v7592 = vpack.c.b16 %v7516, %v7514
        %v7593 = vpack.c.b16 %v7519, %v7517
        %v7594 = vpack.c.b16 %v7520, %v7518
        %v7595 = vpack.c.b16 %v7523, %v7521
        %v7596 = vpack.c.b16 %v7524, %v7522
        %v7597 = vpack.c.b16 %v7527, %v7525
        %v7598 = vpack.c.b16 %v7528, %v7526
        %v7599 = vpack.c.b16 %v7531, %v7529
        %v7600 = vpack.c.b16 %v7532, %v7530
        %v7601 = vpack.c.b16 %v7535, %v7533
        %v7602 = vpack.c.b16 %v7536, %v7534
        %v7603 = vpack.c.b16 %v7539, %v7537
        %v7604 = vpack.c.b16 %v7540, %v7538
        %v7605 = vpack.c.b16 %v7543, %v7541
        %v7606 = vpack.c.b16 %v7544, %v7542
        %v7607 = vpack.c.b16 %v7547, %v7545
        %v7608 = vpack.c.b16 %v7548, %v7546
        %v7609 = vpack.c.b16 %v7551, %v7549
        %v7610 = vpack.c.b16 %v7552, %v7550
        %v7611 = vpack.c.b16 %v7555, %v7553
        %v7612 = vpack.c.b16 %v7556, %v7554
        %v7613 = vpack.c.b16 %v7559, %v7557
        %v7614 = vpack.c.b16 %v7560, %v7558
        %v7615 = vpack.c.b16 %v7563, %v7561
        %v7616 = vpack.c.b16 %v7564, %v7562
        %v7617 = vpack.c.b16 %v7567, %v7565
        %v7618 = vpack.c.b16 %v7568, %v7566
        %v7619 = vpack.c.b16 %v7571, %v7569
        %v7620 = vpack.c.b16 %v7572, %v7570
        %7669 = vmatprep.subr.bf16.mxu0 %v7574
        %7670 = vmatpush1.bf16.msra.mxu0 %v7573
        %7671 = vmatprep.subr.bf16.mxu0 %v7576
        %7672 = vmatpush1.bf16.msra.mxu0 %v7575
        %7673 = vmatprep.subr.bf16.mxu0 %v7578
        %7674 = vmatpush1.bf16.msra.mxu0 %v7577
        %7675 = vmatprep.subr.bf16.mxu0 %v7580
        %7676 = vmatpush1.bf16.msra.mxu0 %v7579
        %7677 = vmatprep.subr.bf16.mxu0 %v7582
        %7678 = vmatpush1.bf16.msra.mxu0 %v7581
        %7679 = vmatprep.subr.bf16.mxu0 %v7584
        %7680 = vmatpush1.bf16.msra.mxu0 %v7583
        %7681 = vmatprep.subr.bf16.mxu0 %v7586
        %7682 = vmatpush1.bf16.msra.mxu0 %v7585
        %7683 = vmatprep.subr.bf16.mxu0 %v7588
        %7684 = vmatpush1.bf16.msra.mxu0 %v7587
        %7685 = vmatprep.subr.bf16.mxu0 %v7590
        %7686 = vmatpush1.bf16.msra.mxu0 %v7589
        %7687 = vmatprep.subr.bf16.mxu0 %v7592
        %7688 = vmatpush1.bf16.msra.mxu0 %v7591
        %7689 = vmatprep.subr.bf16.mxu0 %v7594
        %7690 = vmatpush1.bf16.msra.mxu0 %v7593
        %7691 = vmatprep.subr.bf16.mxu0 %v7596
        %7692 = vmatpush1.bf16.msra.mxu0 %v7595
        %7693 = vmatprep.subr.bf16.mxu0 %v7598
        %7694 = vmatpush1.bf16.msra.mxu0 %v7597
        %7695 = vmatprep.subr.bf16.mxu0 %v7600
        %7696 = vmatpush1.bf16.msra.mxu0 %v7599
        %7697 = vmatprep.subr.bf16.mxu0 %v7602
        %7698 = vmatpush1.bf16.msra.mxu0 %v7601
        %7699 = vmatprep.subr.bf16.mxu0 %v7604
        %7700 = vmatpush1.bf16.msra.mxu0 %v7603
        %7701 = vmatprep.mubr.bf16.mxu0 %v7367
        %7702 = vmatmul.mubr.bf16.gmra.mrb[0].mxu0 %v7366
        %v7703 = vpop.f32.mrb[0].mxu0
        %v7704 = vadd.f32 %v7422, %v7703
        %v7705 = vpop.f32.mrb[0].mxu0
        %v7706 = vadd.f32 %v7426, %v7705
        %v7707 = vpop.f32.mrb[0].mxu0
        %v7708 = vpop.f32.mrb[0].mxu0
        %7709 = vdwg.mxu0
        %7710 = vmatprep.subr.bf16.mxu0 %v7606
        %7711 = vmatpush1.bf16.msra.mxu0 %v7605
        %7712 = vmatprep.subr.bf16.mxu0 %v7608
        %7713 = vmatpush1.bf16.msra.mxu0 %v7607
        %7714 = vmatprep.subr.bf16.mxu0 %v7610
        %7715 = vmatpush1.bf16.msra.mxu0 %v7609
        %7716 = vmatprep.subr.bf16.mxu0 %v7612
        %7717 = vmatpush1.bf16.msra.mxu0 %v7611
        %7718 = vmatprep.subr.bf16.mxu0 %v7614
        %7719 = vmatpush1.bf16.msra.mxu0 %v7613
        %7720 = vmatprep.subr.bf16.mxu0 %v7616
        %7721 = vmatpush1.bf16.msra.mxu0 %v7615
        %7722 = vmatprep.subr.bf16.mxu0 %v7618
        %7723 = vmatpush1.bf16.msra.mxu0 %v7617
        %7724 = vmatprep.subr.bf16.mxu0 %v7620
        %7725 = vmatpush1.bf16.msra.mxu0 %v7619
        %7726 = vmatprep.subr.bf16.mxu0 0
        %7727 = vmatpush1.bf16.msra.mxu0 0
        %7728 = vmatprep.subr.bf16.mxu0 0
        %7729 = vmatpush1.bf16.msra.mxu0 0
        %7730 = vmatprep.subr.bf16.mxu0 0
        %7731 = vmatpush1.bf16.msra.mxu0 0
        %7732 = vmatprep.subr.bf16.mxu0 0
        %7733 = vmatpush1.bf16.msra.mxu0 0
        %7734 = vmatprep.subr.bf16.mxu0 0
        %7735 = vmatpush1.bf16.msra.mxu0 0
        %7736 = vmatprep.subr.bf16.mxu0 0
        %7737 = vmatpush1.bf16.msra.mxu0 0
        %7738 = vmatprep.subr.bf16.mxu0 0
        %7739 = vmatpush1.bf16.msra.mxu0 0
        %7740 = vmatprep.subr.bf16.mxu0 0
        %7741 = vmatpush1.bf16.msra.mxu0 0
        %7742 = vmatprep.mubr.bf16.mxu0 0
        %7743 = vmatmul.mubr.bf16.gmra.mrb[0].mxu0 %v7368
        %v7744 = vpop.f32.mrb[0].mxu0
        %v7745 = vadd.f32 %v7704, %v7744
        %v7746 = vpop.f32.mrb[0].mxu0
        %v7747 = vadd.f32 %v7706, %v7746
        %v7748 = vpop.f32.mrb[0].mxu0
        %v7749 = vpop.f32.mrb[0].mxu0
        %7750 = vdwg.mxu0
        %v7751 = vmax.f32 %v7745, 0.0
        %v7752 = vmax.f32 %v7747, 0.0
        %s7753 = scalar_lea.vmem [#allocation19], 1
        %v7754 = vld [vmem:[%s7753] ss:$4 sm:$0x3]
        %v7756 = vlaneseq
        %v7757 = vshrl.u32 %v7756, 7
        %v7758 = vsub.s32 0, %v7757
        %v7759 = vrot.slane %v7754, %v7758
        %v7760 = vlaneseq
        %v7761 = vshrl.u32 %v7760, 7
        %v7762 = vsub.s32 1, %v7761
        %v7763 = vrot.slane %v7754, %v7762
        %v7766 = vmul.f32 %v7751, %v7759
        %v7767 = vmul.f32 %v7752, %v7763
        %s7768 = scalar_lea.vmem [#allocation19], 2
        %v7769 = vld [vmem:[%s7768] ss:$4 sm:$0x3]
        %v7771 = vlaneseq
        %v7772 = vshrl.u32 %v7771, 7
        %v7773 = vsub.s32 0, %v7772
        %v7774 = vrot.slane %v7769, %v7773
        %v7775 = vlaneseq
        %v7776 = vshrl.u32 %v7775, 7
        %v7777 = vsub.s32 1, %v7776
        %v7778 = vrot.slane %v7769, %v7777
        %v7781 = vadd.f32 %v7766, %v7774
        %v7782 = vadd.f32 %v7767, %v7778
        %v7785 = vrot.slane %v7781, 7
        %v7786 = vrot.slane %v7782, 7
        %v7789 = vsel %vm1613, 0.0, %v7785
        %v7790 = vsel %vm1613, 0.0, %v7786
        %v7791 = vrot.slane %v7781, 1
        %v7792 = vrot.slane %v7782, 1
        %v7795 = vsel %vm7364, %v7791, 0.0
        %v7796 = vsel %vm7364, %v7792, 0.0
        %v7797 = vpack.c.bf16 %v7789, %v7789
        %v7798 = vpack.c.bf16 %v7790, %v7790
        %v7799 = vpack.c.bf16 %v7781, %v7781
        %v7800 = vpack.c.bf16 %v7782, %v7782
        %v7801 = vpack.c.bf16 %v7795, %v7795
        %v7802 = vpack.c.bf16 %v7796, %v7796
        %v7803 = vld [vmem:[#allocation20] sm:$0xff]
        %v7804 = vld [vmem:[#allocation20 + $0x8] sm:$0xff]
        %v7805 = vld [vmem:[#allocation20 + $0x10] sm:$0xff]
        %v7806 = vld [vmem:[#allocation20 + $0x18] sm:$0xff]
        %v7807 = vld [vmem:[#allocation20 + $0x20] sm:$0xff]
        %v7808 = vld [vmem:[#allocation20 + $0x28] sm:$0xff]
        %v7809 = vld [vmem:[#allocation20 + $0x30] sm:$0xff]
        %v7810 = vld [vmem:[#allocation20 + $0x38] sm:$0xff]
        %v7811 = vld [vmem:[#allocation20 + $0x40] sm:$0xff]
        %v7812 = vld [vmem:[#allocation20 + $0x48] sm:$0xff]
        %v7813 = vld [vmem:[#allocation20 + $0x50] sm:$0xff]
        %v7814 = vld [vmem:[#allocation20 + $0x58] sm:$0xff]
        %v7815 = vld [vmem:[#allocation20 + $0x60] sm:$0xff]
        %v7816 = vld [vmem:[#allocation20 + $0x68] sm:$0xff]
        %v7817 = vld [vmem:[#allocation20 + $0x70] sm:$0xff]
        %v7818 = vld [vmem:[#allocation20 + $0x78] sm:$0xff]
        %v7819 = vld [vmem:[#allocation20 + $0x80] sm:$0xff]
        %v7820 = vld [vmem:[#allocation20 + $0x88] sm:$0xff]
        %v7821 = vld [vmem:[#allocation20 + $0x90] sm:$0xff]
        %v7822 = vld [vmem:[#allocation20 + $0x98] sm:$0xff]
        %v7823 = vld [vmem:[#allocation20 + $0xa0] sm:$0xff]
        %v7824 = vld [vmem:[#allocation20 + $0xa8] sm:$0xff]
        %v7825 = vld [vmem:[#allocation20 + $0xb0] sm:$0xff]
        %v7826 = vld [vmem:[#allocation20 + $0xb8] sm:$0xff]
        %v7827 = vld [vmem:[#allocation20 + $0xc0] sm:$0xff]
        %v7828 = vld [vmem:[#allocation20 + $0xc8] sm:$0xff]
        %v7829 = vld [vmem:[#allocation20 + $0xd0] sm:$0xff]
        %v7830 = vld [vmem:[#allocation20 + $0xd8] sm:$0xff]
        %v7831 = vld [vmem:[#allocation20 + $0xe0] sm:$0xff]
        %v7832 = vld [vmem:[#allocation20 + $0xe8] sm:$0xff]
        %v7833 = vld [vmem:[#allocation20 + $0xf0] sm:$0xff]
        %v7834 = vld [vmem:[#allocation20 + $0xf8] sm:$0xff]
        %v7835 = vld [vmem:[#allocation20 + $0x100] sm:$0xff]
        %v7836 = vld [vmem:[#allocation20 + $0x108] sm:$0xff]
        %v7837 = vld [vmem:[#allocation20 + $0x110] sm:$0xff]
        %v7838 = vld [vmem:[#allocation20 + $0x118] sm:$0xff]
        %v7839 = vld [vmem:[#allocation20 + $0x120] sm:$0xff]
        %v7840 = vld [vmem:[#allocation20 + $0x128] sm:$0xff]
        %v7841 = vld [vmem:[#allocation20 + $0x130] sm:$0xff]
        %v7842 = vld [vmem:[#allocation20 + $0x138] sm:$0xff]
        %v7843 = vld [vmem:[#allocation20 + $0x140] sm:$0xff]
        %v7844 = vld [vmem:[#allocation20 + $0x148] sm:$0xff]
        %v7845 = vld [vmem:[#allocation20 + $0x150] sm:$0xff]
        %v7846 = vld [vmem:[#allocation20 + $0x158] sm:$0xff]
        %v7847 = vld [vmem:[#allocation20 + $0x160] sm:$0xff]
        %v7848 = vld [vmem:[#allocation20 + $0x168] sm:$0xff]
        %v7849 = vld [vmem:[#allocation20 + $0x170] sm:$0xff]
        %v7850 = vld [vmem:[#allocation20 + $0x178] sm:$0xff]
        %v7851 = vld [vmem:[#allocation20 + $0x180] sm:$0xff]
        %v7852 = vld [vmem:[#allocation20 + $0x188] sm:$0xff]
        %v7853 = vld [vmem:[#allocation20 + $0x190] sm:$0xff]
        %v7854 = vld [vmem:[#allocation20 + $0x198] sm:$0xff]
        %v7855 = vld [vmem:[#allocation20 + $0x1a0] sm:$0xff]
        %v7856 = vld [vmem:[#allocation20 + $0x1a8] sm:$0xff]
        %v7857 = vld [vmem:[#allocation20 + $0x1b0] sm:$0xff]
        %v7858 = vld [vmem:[#allocation20 + $0x1b8] sm:$0xff]
        %v7859 = vld [vmem:[#allocation20 + $0x1c0] sm:$0xff]
        %v7860 = vld [vmem:[#allocation20 + $0x1c8] sm:$0xff]
        %v7861 = vld [vmem:[#allocation20 + $0x1d0] sm:$0xff]
        %v7862 = vld [vmem:[#allocation20 + $0x1d8] sm:$0xff]
        %v7863 = vld [vmem:[#allocation20 + $0x1e0] sm:$0xff]
        %v7864 = vld [vmem:[#allocation20 + $0x1e8] sm:$0xff]
        %v7865 = vld [vmem:[#allocation20 + $0x1f0] sm:$0xff]
        %v7866 = vld [vmem:[#allocation20 + $0x1f8] sm:$0xff]
        %v7867 = vld [vmem:[#allocation20 + $0x200] sm:$0xff]
        %v7868 = vld [vmem:[#allocation20 + $0x208] sm:$0xff]
        %v7869 = vld [vmem:[#allocation20 + $0x210] sm:$0xff]
        %v7870 = vld [vmem:[#allocation20 + $0x218] sm:$0xff]
        %v7871 = vld [vmem:[#allocation20 + $0x220] sm:$0xff]
        %v7872 = vld [vmem:[#allocation20 + $0x228] sm:$0xff]
        %v7873 = vld [vmem:[#allocation20 + $0x230] sm:$0xff]
        %v7874 = vld [vmem:[#allocation20 + $0x238] sm:$0xff]
        %v7875 = vld [vmem:[#allocation20 + $0x240] sm:$0xff]
        %v7876 = vld [vmem:[#allocation20 + $0x248] sm:$0xff]
        %v7877 = vld [vmem:[#allocation20 + $0x250] sm:$0xff]
        %v7878 = vld [vmem:[#allocation20 + $0x258] sm:$0xff]
        %v7879 = vld [vmem:[#allocation20 + $0x260] sm:$0xff]
        %v7880 = vld [vmem:[#allocation20 + $0x268] sm:$0xff]
        %v7881 = vld [vmem:[#allocation20 + $0x270] sm:$0xff]
        %v7882 = vld [vmem:[#allocation20 + $0x278] sm:$0xff]
        %v7883 = vld [vmem:[#allocation20 + $0x280] sm:$0xff]
        %v7884 = vld [vmem:[#allocation20 + $0x288] sm:$0xff]
        %v7885 = vld [vmem:[#allocation20 + $0x290] sm:$0xff]
        %v7886 = vld [vmem:[#allocation20 + $0x298] sm:$0xff]
        %v7887 = vld [vmem:[#allocation20 + $0x2a0] sm:$0xff]
        %v7888 = vld [vmem:[#allocation20 + $0x2a8] sm:$0xff]
        %v7889 = vld [vmem:[#allocation20 + $0x2b0] sm:$0xff]
        %v7890 = vld [vmem:[#allocation20 + $0x2b8] sm:$0xff]
        %v7891 = vld [vmem:[#allocation20 + $0x2c0] sm:$0xff]
        %v7892 = vld [vmem:[#allocation20 + $0x2c8] sm:$0xff]
        %v7893 = vld [vmem:[#allocation20 + $0x2d0] sm:$0xff]
        %v7894 = vld [vmem:[#allocation20 + $0x2d8] sm:$0xff]
        %v7895 = vld [vmem:[#allocation20 + $0x2e0] sm:$0xff]
        %v7896 = vld [vmem:[#allocation20 + $0x2e8] sm:$0xff]
        %v7897 = vld [vmem:[#allocation20 + $0x2f0] sm:$0xff]
        %v7898 = vld [vmem:[#allocation20 + $0x2f8] sm:$0xff]
        %v7899 = vld [vmem:[#allocation22] ss:$4 sm:$0x3]
        %v7901 = vlaneseq
        %v7902 = vshrl.u32 %v7901, 7
        %v7903 = vsub.s32 0, %v7902
        %v7904 = vrot.slane %v7899, %v7903
        %v7905 = vlaneseq
        %v7906 = vshrl.u32 %v7905, 7
        %v7907 = vsub.s32 1, %v7906
        %v7908 = vrot.slane %v7899, %v7907
        %v8007 = vunpack.c.l.b16 %v7803
        %v8008 = vunpack.c.h.b16 %v7803
        %v8009 = vunpack.c.l.b16 %v7804
        %v8010 = vunpack.c.h.b16 %v7804
        %v8011 = vunpack.c.l.b16 %v7805
        %v8012 = vunpack.c.h.b16 %v7805
        %v8013 = vunpack.c.l.b16 %v7806
        %v8014 = vunpack.c.h.b16 %v7806
        %v8015 = vunpack.c.l.b16 %v7807
        %v8016 = vunpack.c.h.b16 %v7807
        %v8017 = vunpack.c.l.b16 %v7808
        %v8018 = vunpack.c.h.b16 %v7808
        %v8019 = vunpack.c.l.b16 %v7809
        %v8020 = vunpack.c.h.b16 %v7809
        %v8021 = vunpack.c.l.b16 %v7810
        %v8022 = vunpack.c.h.b16 %v7810
        %v8023 = vunpack.c.l.b16 %v7811
        %v8024 = vunpack.c.h.b16 %v7811
        %v8025 = vunpack.c.l.b16 %v7812
        %v8026 = vunpack.c.h.b16 %v7812
        %v8027 = vunpack.c.l.b16 %v7813
        %v8028 = vunpack.c.h.b16 %v7813
        %v8029 = vunpack.c.l.b16 %v7814
        %v8030 = vunpack.c.h.b16 %v7814
        %v8031 = vunpack.c.l.b16 %v7815
        %v8032 = vunpack.c.h.b16 %v7815
        %v8033 = vunpack.c.l.b16 %v7816
        %v8034 = vunpack.c.h.b16 %v7816
        %v8035 = vunpack.c.l.b16 %v7817
        %v8036 = vunpack.c.h.b16 %v7817
        %v8037 = vunpack.c.l.b16 %v7818
        %v8038 = vunpack.c.h.b16 %v7818
        %v8039 = vunpack.c.l.b16 %v7819
        %v8040 = vunpack.c.h.b16 %v7819
        %v8041 = vunpack.c.l.b16 %v7820
        %v8042 = vunpack.c.h.b16 %v7820
        %v8043 = vunpack.c.l.b16 %v7821
        %v8044 = vunpack.c.h.b16 %v7821
        %v8045 = vunpack.c.l.b16 %v7822
        %v8046 = vunpack.c.h.b16 %v7822
        %v8047 = vunpack.c.l.b16 %v7823
        %v8048 = vunpack.c.h.b16 %v7823
        %v8049 = vunpack.c.l.b16 %v7824
        %v8050 = vunpack.c.h.b16 %v7824
        %v8051 = vunpack.c.l.b16 %v7825
        %v8052 = vunpack.c.h.b16 %v7825
        %v8053 = vunpack.c.l.b16 %v7826
        %v8054 = vunpack.c.h.b16 %v7826
        %v8055 = vunpack.c.l.b16 %v7827
        %v8056 = vunpack.c.h.b16 %v7827
        %v8057 = vunpack.c.l.b16 %v7828
        %v8058 = vunpack.c.h.b16 %v7828
        %v8059 = vunpack.c.l.b16 %v7829
        %v8060 = vunpack.c.h.b16 %v7829
        %v8061 = vunpack.c.l.b16 %v7830
        %v8062 = vunpack.c.h.b16 %v7830
        %v8063 = vunpack.c.l.b16 %v7831
        %v8064 = vunpack.c.h.b16 %v7831
        %v8065 = vunpack.c.l.b16 %v7832
        %v8066 = vunpack.c.h.b16 %v7832
        %v8067 = vunpack.c.l.b16 %v7833
        %v8068 = vunpack.c.h.b16 %v7833
        %v8069 = vunpack.c.l.b16 %v7834
        %v8070 = vunpack.c.h.b16 %v7834
        %v8071 = vunpack.c.l.b16 %v7835
        %v8072 = vunpack.c.h.b16 %v7835
        %v8073 = vunpack.c.l.b16 %v7836
        %v8074 = vunpack.c.h.b16 %v7836
        %v8075 = vunpack.c.l.b16 %v7837
        %v8076 = vunpack.c.h.b16 %v7837
        %v8077 = vunpack.c.l.b16 %v7838
        %v8078 = vunpack.c.h.b16 %v7838
        %v8079 = vunpack.c.l.b16 %v7839
        %v8080 = vunpack.c.h.b16 %v7839
        %v8081 = vunpack.c.l.b16 %v7840
        %v8082 = vunpack.c.h.b16 %v7840
        %v8083 = vunpack.c.l.b16 %v7841
        %v8084 = vunpack.c.h.b16 %v7841
        %v8085 = vunpack.c.l.b16 %v7842
        %v8086 = vunpack.c.h.b16 %v7842
        %v8087 = vunpack.c.l.b16 %v7843
        %v8088 = vunpack.c.h.b16 %v7843
        %v8089 = vunpack.c.l.b16 %v7844
        %v8090 = vunpack.c.h.b16 %v7844
        %v8091 = vunpack.c.l.b16 %v7845
        %v8092 = vunpack.c.h.b16 %v7845
        %v8093 = vunpack.c.l.b16 %v7846
        %v8094 = vunpack.c.h.b16 %v7846
        %v8095 = vunpack.c.l.b16 %v7847
        %v8096 = vunpack.c.h.b16 %v7847
        %v8097 = vunpack.c.l.b16 %v7848
        %v8098 = vunpack.c.h.b16 %v7848
        %v8099 = vunpack.c.l.b16 %v7849
        %v8100 = vunpack.c.h.b16 %v7849
        %v8101 = vunpack.c.l.b16 %v7850
        %v8102 = vunpack.c.h.b16 %v7850
        %v8103 = vunpack.c.l.b16 %v7851
        %v8104 = vunpack.c.h.b16 %v7851
        %v8105 = vunpack.c.l.b16 %v7852
        %v8106 = vunpack.c.h.b16 %v7852
        %v8107 = vunpack.c.l.b16 %v7853
        %v8108 = vunpack.c.h.b16 %v7853
        %v8109 = vunpack.c.l.b16 %v7854
        %v8110 = vunpack.c.h.b16 %v7854
        %v8111 = vunpack.c.l.b16 %v7855
        %v8112 = vunpack.c.h.b16 %v7855
        %v8113 = vunpack.c.l.b16 %v7856
        %v8114 = vunpack.c.h.b16 %v7856
        %v8115 = vunpack.c.l.b16 %v7857
        %v8116 = vunpack.c.h.b16 %v7857
        %v8117 = vunpack.c.l.b16 %v7858
        %v8118 = vunpack.c.h.b16 %v7858
        %v8119 = vunpack.c.l.b16 %v7859
        %v8120 = vunpack.c.h.b16 %v7859
        %v8121 = vunpack.c.l.b16 %v7860
        %v8122 = vunpack.c.h.b16 %v7860
        %v8123 = vunpack.c.l.b16 %v7861
        %v8124 = vunpack.c.h.b16 %v7861
        %v8125 = vunpack.c.l.b16 %v7862
        %v8126 = vunpack.c.h.b16 %v7862
        %v8127 = vunpack.c.l.b16 %v7863
        %v8128 = vunpack.c.h.b16 %v7863
        %v8129 = vunpack.c.l.b16 %v7864
        %v8130 = vunpack.c.h.b16 %v7864
        %v8131 = vunpack.c.l.b16 %v7865
        %v8132 = vunpack.c.h.b16 %v7865
        %v8133 = vunpack.c.l.b16 %v7866
        %v8134 = vunpack.c.h.b16 %v7866
        %v8135 = vunpack.c.l.b16 %v7867
        %v8136 = vunpack.c.h.b16 %v7867
        %v8137 = vunpack.c.l.b16 %v7868
        %v8138 = vunpack.c.h.b16 %v7868
        %v8139 = vunpack.c.l.b16 %v7869
        %v8140 = vunpack.c.h.b16 %v7869
        %v8141 = vunpack.c.l.b16 %v7870
        %v8142 = vunpack.c.h.b16 %v7870
        %v8143 = vunpack.c.l.b16 %v7871
        %v8144 = vunpack.c.h.b16 %v7871
        %v8145 = vunpack.c.l.b16 %v7872
        %v8146 = vunpack.c.h.b16 %v7872
        %v8147 = vunpack.c.l.b16 %v7873
        %v8148 = vunpack.c.h.b16 %v7873
        %v8149 = vunpack.c.l.b16 %v7874
        %v8150 = vunpack.c.h.b16 %v7874
        %v8151 = vunpack.c.l.b16 %v7875
        %v8152 = vunpack.c.h.b16 %v7875
        %v8153 = vunpack.c.l.b16 %v7876
        %v8154 = vunpack.c.h.b16 %v7876
        %v8155 = vunpack.c.l.b16 %v7877
        %v8156 = vunpack.c.h.b16 %v7877
        %v8157 = vunpack.c.l.b16 %v7878
        %v8158 = vunpack.c.h.b16 %v7878
        %v8159 = vunpack.c.l.b16 %v7879
        %v8160 = vunpack.c.h.b16 %v7879
        %v8161 = vunpack.c.l.b16 %v7880
        %v8162 = vunpack.c.h.b16 %v7880
        %v8163 = vunpack.c.l.b16 %v7881
        %v8164 = vunpack.c.h.b16 %v7881
        %v8165 = vunpack.c.l.b16 %v7882
        %v8166 = vunpack.c.h.b16 %v7882
        %v8167 = vunpack.c.l.b16 %v7883
        %v8168 = vunpack.c.h.b16 %v7883
        %v8169 = vunpack.c.l.b16 %v7884
        %v8170 = vunpack.c.h.b16 %v7884
        %v8171 = vunpack.c.l.b16 %v7885
        %v8172 = vunpack.c.h.b16 %v7885
        %v8173 = vunpack.c.l.b16 %v7886
        %v8174 = vunpack.c.h.b16 %v7886
        %v8175 = vunpack.c.l.b16 %v7887
        %v8176 = vunpack.c.h.b16 %v7887
        %v8177 = vunpack.c.l.b16 %v7888
        %v8178 = vunpack.c.h.b16 %v7888
        %v8179 = vunpack.c.l.b16 %v7889
        %v8180 = vunpack.c.h.b16 %v7889
        %v8181 = vunpack.c.l.b16 %v7890
        %v8182 = vunpack.c.h.b16 %v7890
        %v8183 = vunpack.c.l.b16 %v7891
        %v8184 = vunpack.c.h.b16 %v7891
        %v8185 = vunpack.c.l.b16 %v7892
        %v8186 = vunpack.c.h.b16 %v7892
        %v8187 = vunpack.c.l.b16 %v7893
        %v8188 = vunpack.c.h.b16 %v7893
        %v8189 = vunpack.c.l.b16 %v7894
        %v8190 = vunpack.c.h.b16 %v7894
        %v8191 = vunpack.c.l.b16 %v7895
        %v8192 = vunpack.c.h.b16 %v7895
        %v8193 = vunpack.c.l.b16 %v7896
        %v8194 = vunpack.c.h.b16 %v7896
        %v8195 = vunpack.c.l.b16 %v7897
        %v8196 = vunpack.c.h.b16 %v7897
        %v8197 = vunpack.c.l.b16 %v7898
        %v8198 = vunpack.c.h.b16 %v7898
        %v8199 = vpack.c.b16 %v8009, %v8007
        %v8200 = vpack.c.b16 %v8010, %v8008
        %v8201 = vpack.c.b16 %v8013, %v8011
        %v8202 = vpack.c.b16 %v8014, %v8012
        %v8203 = vpack.c.b16 %v8017, %v8015
        %v8204 = vpack.c.b16 %v8018, %v8016
        %v8205 = vpack.c.b16 %v8021, %v8019
        %v8206 = vpack.c.b16 %v8022, %v8020
        %v8207 = vpack.c.b16 %v8025, %v8023
        %v8208 = vpack.c.b16 %v8026, %v8024
        %v8209 = vpack.c.b16 %v8029, %v8027
        %v8210 = vpack.c.b16 %v8030, %v8028
        %v8211 = vpack.c.b16 %v8033, %v8031
        %v8212 = vpack.c.b16 %v8034, %v8032
        %v8213 = vpack.c.b16 %v8037, %v8035
        %v8214 = vpack.c.b16 %v8038, %v8036
        %v8215 = vpack.c.b16 %v8041, %v8039
        %v8216 = vpack.c.b16 %v8042, %v8040
        %v8217 = vpack.c.b16 %v8045, %v8043
        %v8218 = vpack.c.b16 %v8046, %v8044
        %v8219 = vpack.c.b16 %v8049, %v8047
        %v8220 = vpack.c.b16 %v8050, %v8048
        %v8221 = vpack.c.b16 %v8053, %v8051
        %v8222 = vpack.c.b16 %v8054, %v8052
        %v8223 = vpack.c.b16 %v8057, %v8055
        %v8224 = vpack.c.b16 %v8058, %v8056
        %v8225 = vpack.c.b16 %v8061, %v8059
        %v8226 = vpack.c.b16 %v8062, %v8060
        %v8227 = vpack.c.b16 %v8065, %v8063
        %v8228 = vpack.c.b16 %v8066, %v8064
        %v8229 = vpack.c.b16 %v8069, %v8067
        %v8230 = vpack.c.b16 %v8070, %v8068
        %v8231 = vpack.c.b16 %v8073, %v8071
        %v8232 = vpack.c.b16 %v8074, %v8072
        %v8233 = vpack.c.b16 %v8077, %v8075
        %v8234 = vpack.c.b16 %v8078, %v8076
        %v8235 = vpack.c.b16 %v8081, %v8079
        %v8236 = vpack.c.b16 %v8082, %v8080
        %v8237 = vpack.c.b16 %v8085, %v8083
        %v8238 = vpack.c.b16 %v8086, %v8084
        %v8239 = vpack.c.b16 %v8089, %v8087
        %v8240 = vpack.c.b16 %v8090, %v8088
        %v8241 = vpack.c.b16 %v8093, %v8091
        %v8242 = vpack.c.b16 %v8094, %v8092
        %v8243 = vpack.c.b16 %v8097, %v8095
        %v8244 = vpack.c.b16 %v8098, %v8096
        %v8245 = vpack.c.b16 %v8101, %v8099
        %v8246 = vpack.c.b16 %v8102, %v8100
        %v8247 = vpack.c.b16 %v8105, %v8103
        %v8248 = vpack.c.b16 %v8106, %v8104
        %v8249 = vpack.c.b16 %v8109, %v8107
        %v8250 = vpack.c.b16 %v8110, %v8108
        %v8251 = vpack.c.b16 %v8113, %v8111
        %v8252 = vpack.c.b16 %v8114, %v8112
        %v8253 = vpack.c.b16 %v8117, %v8115
        %v8254 = vpack.c.b16 %v8118, %v8116
        %v8255 = vpack.c.b16 %v8121, %v8119
        %v8256 = vpack.c.b16 %v8122, %v8120
        %v8257 = vpack.c.b16 %v8125, %v8123
        %v8258 = vpack.c.b16 %v8126, %v8124
        %v8259 = vpack.c.b16 %v8129, %v8127
        %v8260 = vpack.c.b16 %v8130, %v8128
        %v8261 = vpack.c.b16 %v8133, %v8131
        %v8262 = vpack.c.b16 %v8134, %v8132
        %v8263 = vpack.c.b16 %v8137, %v8135
        %v8264 = vpack.c.b16 %v8138, %v8136
        %v8265 = vpack.c.b16 %v8141, %v8139
        %v8266 = vpack.c.b16 %v8142, %v8140
        %v8267 = vpack.c.b16 %v8145, %v8143
        %v8268 = vpack.c.b16 %v8146, %v8144
        %v8269 = vpack.c.b16 %v8149, %v8147
        %v8270 = vpack.c.b16 %v8150, %v8148
        %v8271 = vpack.c.b16 %v8153, %v8151
        %v8272 = vpack.c.b16 %v8154, %v8152
        %v8273 = vpack.c.b16 %v8157, %v8155
        %v8274 = vpack.c.b16 %v8158, %v8156
        %v8275 = vpack.c.b16 %v8161, %v8159
        %v8276 = vpack.c.b16 %v8162, %v8160
        %v8277 = vpack.c.b16 %v8165, %v8163
        %v8278 = vpack.c.b16 %v8166, %v8164
        %v8279 = vpack.c.b16 %v8169, %v8167
        %v8280 = vpack.c.b16 %v8170, %v8168
        %v8281 = vpack.c.b16 %v8173, %v8171
        %v8282 = vpack.c.b16 %v8174, %v8172
        %v8283 = vpack.c.b16 %v8177, %v8175
        %v8284 = vpack.c.b16 %v8178, %v8176
        %v8285 = vpack.c.b16 %v8181, %v8179
        %v8286 = vpack.c.b16 %v8182, %v8180
        %v8287 = vpack.c.b16 %v8185, %v8183
        %v8288 = vpack.c.b16 %v8186, %v8184
        %v8289 = vpack.c.b16 %v8189, %v8187
        %v8290 = vpack.c.b16 %v8190, %v8188
        %v8291 = vpack.c.b16 %v8193, %v8191
        %v8292 = vpack.c.b16 %v8194, %v8192
        %v8293 = vpack.c.b16 %v8197, %v8195
        %v8294 = vpack.c.b16 %v8198, %v8196
        %8391 = vmatprep.subr.bf16.mxu0 %v8200
        %8392 = vmatpush1.bf16.msra.mxu0 %v8199
        %8393 = vmatprep.subr.bf16.mxu0 %v8202
        %8394 = vmatpush1.bf16.msra.mxu0 %v8201
        %8395 = vmatprep.subr.bf16.mxu0 %v8204
        %8396 = vmatpush1.bf16.msra.mxu0 %v8203
        %8397 = vmatprep.subr.bf16.mxu0 %v8206
        %8398 = vmatpush1.bf16.msra.mxu0 %v8205
        %8399 = vmatprep.subr.bf16.mxu0 %v8208
        %8400 = vmatpush1.bf16.msra.mxu0 %v8207
        %8401 = vmatprep.subr.bf16.mxu0 %v8210
        %8402 = vmatpush1.bf16.msra.mxu0 %v8209
        %8403 = vmatprep.subr.bf16.mxu0 %v8212
        %8404 = vmatpush1.bf16.msra.mxu0 %v8211
        %8405 = vmatprep.subr.bf16.mxu0 %v8214
        %8406 = vmatpush1.bf16.msra.mxu0 %v8213
        %8407 = vmatprep.subr.bf16.mxu0 %v8216
        %8408 = vmatpush1.bf16.msra.mxu0 %v8215
        %8409 = vmatprep.subr.bf16.mxu0 %v8218
        %8410 = vmatpush1.bf16.msra.mxu0 %v8217
        %8411 = vmatprep.subr.bf16.mxu0 %v8220
        %8412 = vmatpush1.bf16.msra.mxu0 %v8219
        %8413 = vmatprep.subr.bf16.mxu0 %v8222
        %8414 = vmatpush1.bf16.msra.mxu0 %v8221
        %8415 = vmatprep.subr.bf16.mxu0 %v8224
        %8416 = vmatpush1.bf16.msra.mxu0 %v8223
        %8417 = vmatprep.subr.bf16.mxu0 %v8226
        %8418 = vmatpush1.bf16.msra.mxu0 %v8225
        %8419 = vmatprep.subr.bf16.mxu0 %v8228
        %8420 = vmatpush1.bf16.msra.mxu0 %v8227
        %8421 = vmatprep.subr.bf16.mxu0 %v8230
        %8422 = vmatpush1.bf16.msra.mxu0 %v8229
        %8423 = vmatprep.mubr.bf16.mxu0 %v7798
        %8424 = vmatmul.mubr.bf16.gmra.mrb[0].mxu0 %v7797
        %v8425 = vpop.f32.mrb[0].mxu0
        %v8426 = vadd.f32 %v7904, %v8425
        %v8427 = vpop.f32.mrb[0].mxu0
        %v8428 = vadd.f32 %v7908, %v8427
        %v8429 = vpop.f32.mrb[0].mxu0
        %v8430 = vpop.f32.mrb[0].mxu0
        %8431 = vdwg.mxu0
        %8432 = vmatprep.subr.bf16.mxu0 %v8232
        %8433 = vmatpush1.bf16.msra.mxu0 %v8231
        %8434 = vmatprep.subr.bf16.mxu0 %v8234
        %8435 = vmatpush1.bf16.msra.mxu0 %v8233
        %8436 = vmatprep.subr.bf16.mxu0 %v8236
        %8437 = vmatpush1.bf16.msra.mxu0 %v8235
        %8438 = vmatprep.subr.bf16.mxu0 %v8238
        %8439 = vmatpush1.bf16.msra.mxu0 %v8237
        %8440 = vmatprep.subr.bf16.mxu0 %v8240
        %8441 = vmatpush1.bf16.msra.mxu0 %v8239
        %8442 = vmatprep.subr.bf16.mxu0 %v8242
        %8443 = vmatpush1.bf16.msra.mxu0 %v8241
        %8444 = vmatprep.subr.bf16.mxu0 %v8244
        %8445 = vmatpush1.bf16.msra.mxu0 %v8243
        %8446 = vmatprep.subr.bf16.mxu0 %v8246
        %8447 = vmatpush1.bf16.msra.mxu0 %v8245
        %8448 = vmatprep.subr.bf16.mxu0 %v8248
        %8449 = vmatpush1.bf16.msra.mxu0 %v8247
        %8450 = vmatprep.subr.bf16.mxu0 %v8250
        %8451 = vmatpush1.bf16.msra.mxu0 %v8249
        %8452 = vmatprep.subr.bf16.mxu0 %v8252
        %8453 = vmatpush1.bf16.msra.mxu0 %v8251
        %8454 = vmatprep.subr.bf16.mxu0 %v8254
        %8455 = vmatpush1.bf16.msra.mxu0 %v8253
        %8456 = vmatprep.subr.bf16.mxu0 %v8256
        %8457 = vmatpush1.bf16.msra.mxu0 %v8255
        %8458 = vmatprep.subr.bf16.mxu0 %v8258
        %8459 = vmatpush1.bf16.msra.mxu0 %v8257
        %8460 = vmatprep.subr.bf16.mxu0 %v8260
        %8461 = vmatpush1.bf16.msra.mxu0 %v8259
        %8462 = vmatprep.subr.bf16.mxu0 %v8262
        %8463 = vmatpush1.bf16.msra.mxu0 %v8261
        %8464 = vmatprep.mubr.bf16.mxu0 %v7800
        %8465 = vmatmul.mubr.bf16.gmra.mrb[0].mxu0 %v7799
        %v8466 = vpop.f32.mrb[0].mxu0
        %v8467 = vadd.f32 %v8426, %v8466
        %v8468 = vpop.f32.mrb[0].mxu0
        %v8469 = vadd.f32 %v8428, %v8468
        %v8470 = vpop.f32.mrb[0].mxu0
        %v8471 = vpop.f32.mrb[0].mxu0
        %8472 = vdwg.mxu0
        %8473 = vmatprep.subr.bf16.mxu0 %v8264
        %8474 = vmatpush1.bf16.msra.mxu0 %v8263
        %8475 = vmatprep.subr.bf16.mxu0 %v8266
        %8476 = vmatpush1.bf16.msra.mxu0 %v8265
        %8477 = vmatprep.subr.bf16.mxu0 %v8268
        %8478 = vmatpush1.bf16.msra.mxu0 %v8267
        %8479 = vmatprep.subr.bf16.mxu0 %v8270
        %8480 = vmatpush1.bf16.msra.mxu0 %v8269
        %8481 = vmatprep.subr.bf16.mxu0 %v8272
        %8482 = vmatpush1.bf16.msra.mxu0 %v8271
        %8483 = vmatprep.subr.bf16.mxu0 %v8274
        %8484 = vmatpush1.bf16.msra.mxu0 %v8273
        %8485 = vmatprep.subr.bf16.mxu0 %v8276
        %8486 = vmatpush1.bf16.msra.mxu0 %v8275
        %8487 = vmatprep.subr.bf16.mxu0 %v8278
        %8488 = vmatpush1.bf16.msra.mxu0 %v8277
        %8489 = vmatprep.subr.bf16.mxu0 %v8280
        %8490 = vmatpush1.bf16.msra.mxu0 %v8279
        %8491 = vmatprep.subr.bf16.mxu0 %v8282
        %8492 = vmatpush1.bf16.msra.mxu0 %v8281
        %8493 = vmatprep.subr.bf16.mxu0 %v8284
        %8494 = vmatpush1.bf16.msra.mxu0 %v8283
        %8495 = vmatprep.subr.bf16.mxu0 %v8286
        %8496 = vmatpush1.bf16.msra.mxu0 %v8285
        %8497 = vmatprep.subr.bf16.mxu0 %v8288
        %8498 = vmatpush1.bf16.msra.mxu0 %v8287
        %8499 = vmatprep.subr.bf16.mxu0 %v8290
        %8500 = vmatpush1.bf16.msra.mxu0 %v8289
        %8501 = vmatprep.subr.bf16.mxu0 %v8292
        %8502 = vmatpush1.bf16.msra.mxu0 %v8291
        %8503 = vmatprep.subr.bf16.mxu0 %v8294
        %8504 = vmatpush1.bf16.msra.mxu0 %v8293
        %8505 = vmatprep.mubr.bf16.mxu0 %v7802
        %8506 = vmatmul.mubr.bf16.gmra.mrb[0].mxu0 %v7801
        %v8507 = vpop.f32.mrb[0].mxu0
        %v8508 = vadd.f32 %v8467, %v8507
        %v8509 = vpop.f32.mrb[0].mxu0
        %v8510 = vadd.f32 %v8469, %v8509
        %v8511 = vpop.f32.mrb[0].mxu0
        %v8512 = vpop.f32.mrb[0].mxu0
        %8513 = vdwg.mxu0
        %v8514 = vmax.f32 %v8508, 0.0
        %v8515 = vmax.f32 %v8510, 0.0
        %s8516 = scalar_lea.vmem [#allocation22], 1
        %v8517 = vld [vmem:[%s8516] ss:$4 sm:$0x3]
        %v8519 = vlaneseq
        %v8520 = vshrl.u32 %v8519, 7
        %v8521 = vsub.s32 0, %v8520
        %v8522 = vrot.slane %v8517, %v8521
        %v8523 = vlaneseq
        %v8524 = vshrl.u32 %v8523, 7
        %v8525 = vsub.s32 1, %v8524
        %v8526 = vrot.slane %v8517, %v8525
        %v8529 = vmul.f32 %v8514, %v8522
        %v8530 = vmul.f32 %v8515, %v8526
        %s8531 = scalar_lea.vmem [#allocation22], 2
        %v8532 = vld [vmem:[%s8531] ss:$4 sm:$0x3]
        %v8534 = vlaneseq
        %v8535 = vshrl.u32 %v8534, 7
        %v8536 = vsub.s32 0, %v8535
        %v8537 = vrot.slane %v8532, %v8536
        %v8538 = vlaneseq
        %v8539 = vshrl.u32 %v8538, 7
        %v8540 = vsub.s32 1, %v8539
        %v8541 = vrot.slane %v8532, %v8540
        %v8544 = vadd.f32 %v8529, %v8537
        %v8545 = vadd.f32 %v8530, %v8541
        %v8548 = vrot.slane %v8544, 7
        %v8549 = vrot.slane %v8545, 7
        %v8552 = vsel %vm1613, 0.0, %v8548
        %v8553 = vsel %vm1613, 0.0, %v8549
        %v8554 = vrot.slane %v8544, 1
        %v8555 = vrot.slane %v8545, 1
        %v8558 = vsel %vm7364, %v8554, 0.0
        %v8559 = vsel %vm7364, %v8555, 0.0
        %v8560 = vpack.c.bf16 %v8552, %v8552
        %v8561 = vpack.c.bf16 %v8553, %v8553
        %v8562 = vpack.c.bf16 %v8544, %v8544
        %v8563 = vpack.c.bf16 %v8545, %v8545
        %v8564 = vpack.c.bf16 %v8558, %v8558
        %v8565 = vpack.c.bf16 %v8559, %v8559
        %v8566 = vld [vmem:[#allocation23] sm:$0xff]
        %v8567 = vld [vmem:[#allocation23 + $0x8] sm:$0xff]
        %v8568 = vld [vmem:[#allocation23 + $0x10] sm:$0xff]
        %v8569 = vld [vmem:[#allocation23 + $0x18] sm:$0xff]
        %v8570 = vld [vmem:[#allocation23 + $0x20] sm:$0xff]
        %v8571 = vld [vmem:[#allocation23 + $0x28] sm:$0xff]
        %v8572 = vld [vmem:[#allocation23 + $0x30] sm:$0xff]
        %v8573 = vld [vmem:[#allocation23 + $0x38] sm:$0xff]
        %v8574 = vld [vmem:[#allocation23 + $0x40] sm:$0xff]
        %v8575 = vld [vmem:[#allocation23 + $0x48] sm:$0xff]
        %v8576 = vld [vmem:[#allocation23 + $0x50] sm:$0xff]
        %v8577 = vld [vmem:[#allocation23 + $0x58] sm:$0xff]
        %v8578 = vld [vmem:[#allocation23 + $0x60] sm:$0xff]
        %v8579 = vld [vmem:[#allocation23 + $0x68] sm:$0xff]
        %v8580 = vld [vmem:[#allocation23 + $0x70] sm:$0xff]
        %v8581 = vld [vmem:[#allocation23 + $0x78] sm:$0xff]
        %v8582 = vld [vmem:[#allocation23 + $0x80] sm:$0xff]
        %v8583 = vld [vmem:[#allocation23 + $0x88] sm:$0xff]
        %v8584 = vld [vmem:[#allocation23 + $0x90] sm:$0xff]
        %v8585 = vld [vmem:[#allocation23 + $0x98] sm:$0xff]
        %v8586 = vld [vmem:[#allocation23 + $0xa0] sm:$0xff]
        %v8587 = vld [vmem:[#allocation23 + $0xa8] sm:$0xff]
        %v8588 = vld [vmem:[#allocation23 + $0xb0] sm:$0xff]
        %v8589 = vld [vmem:[#allocation23 + $0xb8] sm:$0xff]
        %v8590 = vld [vmem:[#allocation23 + $0xc0] sm:$0xff]
        %v8591 = vld [vmem:[#allocation23 + $0xc8] sm:$0xff]
        %v8592 = vld [vmem:[#allocation23 + $0xd0] sm:$0xff]
        %v8593 = vld [vmem:[#allocation23 + $0xd8] sm:$0xff]
        %v8594 = vld [vmem:[#allocation23 + $0xe0] sm:$0xff]
        %v8595 = vld [vmem:[#allocation23 + $0xe8] sm:$0xff]
        %v8596 = vld [vmem:[#allocation23 + $0xf0] sm:$0xff]
        %v8597 = vld [vmem:[#allocation23 + $0xf8] sm:$0xff]
        %v8598 = vld [vmem:[#allocation23 + $0x100] sm:$0xff]
        %v8599 = vld [vmem:[#allocation23 + $0x108] sm:$0xff]
        %v8600 = vld [vmem:[#allocation23 + $0x110] sm:$0xff]
        %v8601 = vld [vmem:[#allocation23 + $0x118] sm:$0xff]
        %v8602 = vld [vmem:[#allocation23 + $0x120] sm:$0xff]
        %v8603 = vld [vmem:[#allocation23 + $0x128] sm:$0xff]
        %v8604 = vld [vmem:[#allocation23 + $0x130] sm:$0xff]
        %v8605 = vld [vmem:[#allocation23 + $0x138] sm:$0xff]
        %v8606 = vld [vmem:[#allocation23 + $0x140] sm:$0xff]
        %v8607 = vld [vmem:[#allocation23 + $0x148] sm:$0xff]
        %v8608 = vld [vmem:[#allocation23 + $0x150] sm:$0xff]
        %v8609 = vld [vmem:[#allocation23 + $0x158] sm:$0xff]
        %v8610 = vld [vmem:[#allocation23 + $0x160] sm:$0xff]
        %v8611 = vld [vmem:[#allocation23 + $0x168] sm:$0xff]
        %v8612 = vld [vmem:[#allocation23 + $0x170] sm:$0xff]
        %v8613 = vld [vmem:[#allocation23 + $0x178] sm:$0xff]
        %v8614 = vld [vmem:[#allocation23 + $0x180] sm:$0xff]
        %v8615 = vld [vmem:[#allocation23 + $0x188] sm:$0xff]
        %v8616 = vld [vmem:[#allocation23 + $0x190] sm:$0xff]
        %v8617 = vld [vmem:[#allocation23 + $0x198] sm:$0xff]
        %v8618 = vld [vmem:[#allocation23 + $0x1a0] sm:$0xff]
        %v8619 = vld [vmem:[#allocation23 + $0x1a8] sm:$0xff]
        %v8620 = vld [vmem:[#allocation23 + $0x1b0] sm:$0xff]
        %v8621 = vld [vmem:[#allocation23 + $0x1b8] sm:$0xff]
        %v8622 = vld [vmem:[#allocation23 + $0x1c0] sm:$0xff]
        %v8623 = vld [vmem:[#allocation23 + $0x1c8] sm:$0xff]
        %v8624 = vld [vmem:[#allocation23 + $0x1d0] sm:$0xff]
        %v8625 = vld [vmem:[#allocation23 + $0x1d8] sm:$0xff]
        %v8626 = vld [vmem:[#allocation23 + $0x1e0] sm:$0xff]
        %v8627 = vld [vmem:[#allocation23 + $0x1e8] sm:$0xff]
        %v8628 = vld [vmem:[#allocation23 + $0x1f0] sm:$0xff]
        %v8629 = vld [vmem:[#allocation23 + $0x1f8] sm:$0xff]
        %v8630 = vld [vmem:[#allocation23 + $0x200] sm:$0xff]
        %v8631 = vld [vmem:[#allocation23 + $0x208] sm:$0xff]
        %v8632 = vld [vmem:[#allocation23 + $0x210] sm:$0xff]
        %v8633 = vld [vmem:[#allocation23 + $0x218] sm:$0xff]
        %v8634 = vld [vmem:[#allocation23 + $0x220] sm:$0xff]
        %v8635 = vld [vmem:[#allocation23 + $0x228] sm:$0xff]
        %v8636 = vld [vmem:[#allocation23 + $0x230] sm:$0xff]
        %v8637 = vld [vmem:[#allocation23 + $0x238] sm:$0xff]
        %v8638 = vld [vmem:[#allocation23 + $0x240] sm:$0xff]
        %v8639 = vld [vmem:[#allocation23 + $0x248] sm:$0xff]
        %v8640 = vld [vmem:[#allocation23 + $0x250] sm:$0xff]
        %v8641 = vld [vmem:[#allocation23 + $0x258] sm:$0xff]
        %v8642 = vld [vmem:[#allocation23 + $0x260] sm:$0xff]
        %v8643 = vld [vmem:[#allocation23 + $0x268] sm:$0xff]
        %v8644 = vld [vmem:[#allocation23 + $0x270] sm:$0xff]
        %v8645 = vld [vmem:[#allocation23 + $0x278] sm:$0xff]
        %v8646 = vld [vmem:[#allocation23 + $0x280] sm:$0xff]
        %v8647 = vld [vmem:[#allocation23 + $0x288] sm:$0xff]
        %v8648 = vld [vmem:[#allocation23 + $0x290] sm:$0xff]
        %v8649 = vld [vmem:[#allocation23 + $0x298] sm:$0xff]
        %v8650 = vld [vmem:[#allocation23 + $0x2a0] sm:$0xff]
        %v8651 = vld [vmem:[#allocation23 + $0x2a8] sm:$0xff]
        %v8652 = vld [vmem:[#allocation23 + $0x2b0] sm:$0xff]
        %v8653 = vld [vmem:[#allocation23 + $0x2b8] sm:$0xff]
        %v8654 = vld [vmem:[#allocation23 + $0x2c0] sm:$0xff]
        %v8655 = vld [vmem:[#allocation23 + $0x2c8] sm:$0xff]
        %v8656 = vld [vmem:[#allocation23 + $0x2d0] sm:$0xff]
        %v8657 = vld [vmem:[#allocation23 + $0x2d8] sm:$0xff]
        %v8658 = vld [vmem:[#allocation23 + $0x2e0] sm:$0xff]
        %v8659 = vld [vmem:[#allocation23 + $0x2e8] sm:$0xff]
        %v8660 = vld [vmem:[#allocation23 + $0x2f0] sm:$0xff]
        %v8661 = vld [vmem:[#allocation23 + $0x2f8] sm:$0xff]
        %v8662 = vld [vmem:[#allocation25] ss:$4 sm:$0x3]
        %v8664 = vlaneseq
        %v8665 = vshrl.u32 %v8664, 7
        %v8666 = vsub.s32 0, %v8665
        %v8667 = vrot.slane %v8662, %v8666
        %v8668 = vlaneseq
        %v8669 = vshrl.u32 %v8668, 7
        %v8670 = vsub.s32 1, %v8669
        %v8671 = vrot.slane %v8662, %v8670
        %v8770 = vunpack.c.l.b16 %v8566
        %v8771 = vunpack.c.h.b16 %v8566
        %v8772 = vunpack.c.l.b16 %v8567
        %v8773 = vunpack.c.h.b16 %v8567
        %v8774 = vunpack.c.l.b16 %v8568
        %v8775 = vunpack.c.h.b16 %v8568
        %v8776 = vunpack.c.l.b16 %v8569
        %v8777 = vunpack.c.h.b16 %v8569
        %v8778 = vunpack.c.l.b16 %v8570
        %v8779 = vunpack.c.h.b16 %v8570
        %v8780 = vunpack.c.l.b16 %v8571
        %v8781 = vunpack.c.h.b16 %v8571
        %v8782 = vunpack.c.l.b16 %v8572
        %v8783 = vunpack.c.h.b16 %v8572
        %v8784 = vunpack.c.l.b16 %v8573
        %v8785 = vunpack.c.h.b16 %v8573
        %v8786 = vunpack.c.l.b16 %v8574
        %v8787 = vunpack.c.h.b16 %v8574
        %v8788 = vunpack.c.l.b16 %v8575
        %v8789 = vunpack.c.h.b16 %v8575
        %v8790 = vunpack.c.l.b16 %v8576
        %v8791 = vunpack.c.h.b16 %v8576
        %v8792 = vunpack.c.l.b16 %v8577
        %v8793 = vunpack.c.h.b16 %v8577
        %v8794 = vunpack.c.l.b16 %v8578
        %v8795 = vunpack.c.h.b16 %v8578
        %v8796 = vunpack.c.l.b16 %v8579
        %v8797 = vunpack.c.h.b16 %v8579
        %v8798 = vunpack.c.l.b16 %v8580
        %v8799 = vunpack.c.h.b16 %v8580
        %v8800 = vunpack.c.l.b16 %v8581
        %v8801 = vunpack.c.h.b16 %v8581
        %v8802 = vunpack.c.l.b16 %v8582
        %v8803 = vunpack.c.h.b16 %v8582
        %v8804 = vunpack.c.l.b16 %v8583
        %v8805 = vunpack.c.h.b16 %v8583
        %v8806 = vunpack.c.l.b16 %v8584
        %v8807 = vunpack.c.h.b16 %v8584
        %v8808 = vunpack.c.l.b16 %v8585
        %v8809 = vunpack.c.h.b16 %v8585
        %v8810 = vunpack.c.l.b16 %v8586
        %v8811 = vunpack.c.h.b16 %v8586
        %v8812 = vunpack.c.l.b16 %v8587
        %v8813 = vunpack.c.h.b16 %v8587
        %v8814 = vunpack.c.l.b16 %v8588
        %v8815 = vunpack.c.h.b16 %v8588
        %v8816 = vunpack.c.l.b16 %v8589
        %v8817 = vunpack.c.h.b16 %v8589
        %v8818 = vunpack.c.l.b16 %v8590
        %v8819 = vunpack.c.h.b16 %v8590
        %v8820 = vunpack.c.l.b16 %v8591
        %v8821 = vunpack.c.h.b16 %v8591
        %v8822 = vunpack.c.l.b16 %v8592
        %v8823 = vunpack.c.h.b16 %v8592
        %v8824 = vunpack.c.l.b16 %v8593
        %v8825 = vunpack.c.h.b16 %v8593
        %v8826 = vunpack.c.l.b16 %v8594
        %v8827 = vunpack.c.h.b16 %v8594
        %v8828 = vunpack.c.l.b16 %v8595
        %v8829 = vunpack.c.h.b16 %v8595
        %v8830 = vunpack.c.l.b16 %v8596
        %v8831 = vunpack.c.h.b16 %v8596
        %v8832 = vunpack.c.l.b16 %v8597
        %v8833 = vunpack.c.h.b16 %v8597
        %v8834 = vunpack.c.l.b16 %v8598
        %v8835 = vunpack.c.h.b16 %v8598
        %v8836 = vunpack.c.l.b16 %v8599
        %v8837 = vunpack.c.h.b16 %v8599
        %v8838 = vunpack.c.l.b16 %v8600
        %v8839 = vunpack.c.h.b16 %v8600
        %v8840 = vunpack.c.l.b16 %v8601
        %v8841 = vunpack.c.h.b16 %v8601
        %v8842 = vunpack.c.l.b16 %v8602
        %v8843 = vunpack.c.h.b16 %v8602
        %v8844 = vunpack.c.l.b16 %v8603
        %v8845 = vunpack.c.h.b16 %v8603
        %v8846 = vunpack.c.l.b16 %v8604
        %v8847 = vunpack.c.h.b16 %v8604
        %v8848 = vunpack.c.l.b16 %v8605
        %v8849 = vunpack.c.h.b16 %v8605
        %v8850 = vunpack.c.l.b16 %v8606
        %v8851 = vunpack.c.h.b16 %v8606
        %v8852 = vunpack.c.l.b16 %v8607
        %v8853 = vunpack.c.h.b16 %v8607
        %v8854 = vunpack.c.l.b16 %v8608
        %v8855 = vunpack.c.h.b16 %v8608
        %v8856 = vunpack.c.l.b16 %v8609
        %v8857 = vunpack.c.h.b16 %v8609
        %v8858 = vunpack.c.l.b16 %v8610
        %v8859 = vunpack.c.h.b16 %v8610
        %v8860 = vunpack.c.l.b16 %v8611
        %v8861 = vunpack.c.h.b16 %v8611
        %v8862 = vunpack.c.l.b16 %v8612
        %v8863 = vunpack.c.h.b16 %v8612
        %v8864 = vunpack.c.l.b16 %v8613
        %v8865 = vunpack.c.h.b16 %v8613
        %v8866 = vunpack.c.l.b16 %v8614
        %v8867 = vunpack.c.h.b16 %v8614
        %v8868 = vunpack.c.l.b16 %v8615
        %v8869 = vunpack.c.h.b16 %v8615
        %v8870 = vunpack.c.l.b16 %v8616
        %v8871 = vunpack.c.h.b16 %v8616
        %v8872 = vunpack.c.l.b16 %v8617
        %v8873 = vunpack.c.h.b16 %v8617
        %v8874 = vunpack.c.l.b16 %v8618
        %v8875 = vunpack.c.h.b16 %v8618
        %v8876 = vunpack.c.l.b16 %v8619
        %v8877 = vunpack.c.h.b16 %v8619
        %v8878 = vunpack.c.l.b16 %v8620
        %v8879 = vunpack.c.h.b16 %v8620
        %v8880 = vunpack.c.l.b16 %v8621
        %v8881 = vunpack.c.h.b16 %v8621
        %v8882 = vunpack.c.l.b16 %v8622
        %v8883 = vunpack.c.h.b16 %v8622
        %v8884 = vunpack.c.l.b16 %v8623
        %v8885 = vunpack.c.h.b16 %v8623
        %v8886 = vunpack.c.l.b16 %v8624
        %v8887 = vunpack.c.h.b16 %v8624
        %v8888 = vunpack.c.l.b16 %v8625
        %v8889 = vunpack.c.h.b16 %v8625
        %v8890 = vunpack.c.l.b16 %v8626
        %v8891 = vunpack.c.h.b16 %v8626
        %v8892 = vunpack.c.l.b16 %v8627
        %v8893 = vunpack.c.h.b16 %v8627
        %v8894 = vunpack.c.l.b16 %v8628
        %v8895 = vunpack.c.h.b16 %v8628
        %v8896 = vunpack.c.l.b16 %v8629
        %v8897 = vunpack.c.h.b16 %v8629
        %v8898 = vunpack.c.l.b16 %v8630
        %v8899 = vunpack.c.h.b16 %v8630
        %v8900 = vunpack.c.l.b16 %v8631
        %v8901 = vunpack.c.h.b16 %v8631
        %v8902 = vunpack.c.l.b16 %v8632
        %v8903 = vunpack.c.h.b16 %v8632
        %v8904 = vunpack.c.l.b16 %v8633
        %v8905 = vunpack.c.h.b16 %v8633
        %v8906 = vunpack.c.l.b16 %v8634
        %v8907 = vunpack.c.h.b16 %v8634
        %v8908 = vunpack.c.l.b16 %v8635
        %v8909 = vunpack.c.h.b16 %v8635
        %v8910 = vunpack.c.l.b16 %v8636
        %v8911 = vunpack.c.h.b16 %v8636
        %v8912 = vunpack.c.l.b16 %v8637
        %v8913 = vunpack.c.h.b16 %v8637
        %v8914 = vunpack.c.l.b16 %v8638
        %v8915 = vunpack.c.h.b16 %v8638
        %v8916 = vunpack.c.l.b16 %v8639
        %v8917 = vunpack.c.h.b16 %v8639
        %v8918 = vunpack.c.l.b16 %v8640
        %v8919 = vunpack.c.h.b16 %v8640
        %v8920 = vunpack.c.l.b16 %v8641
        %v8921 = vunpack.c.h.b16 %v8641
        %v8922 = vunpack.c.l.b16 %v8642
        %v8923 = vunpack.c.h.b16 %v8642
        %v8924 = vunpack.c.l.b16 %v8643
        %v8925 = vunpack.c.h.b16 %v8643
        %v8926 = vunpack.c.l.b16 %v8644
        %v8927 = vunpack.c.h.b16 %v8644
        %v8928 = vunpack.c.l.b16 %v8645
        %v8929 = vunpack.c.h.b16 %v8645
        %v8930 = vunpack.c.l.b16 %v8646
        %v8931 = vunpack.c.h.b16 %v8646
        %v8932 = vunpack.c.l.b16 %v8647
        %v8933 = vunpack.c.h.b16 %v8647
        %v8934 = vunpack.c.l.b16 %v8648
        %v8935 = vunpack.c.h.b16 %v8648
        %v8936 = vunpack.c.l.b16 %v8649
        %v8937 = vunpack.c.h.b16 %v8649
        %v8938 = vunpack.c.l.b16 %v8650
        %v8939 = vunpack.c.h.b16 %v8650
        %v8940 = vunpack.c.l.b16 %v8651
        %v8941 = vunpack.c.h.b16 %v8651
        %v8942 = vunpack.c.l.b16 %v8652
        %v8943 = vunpack.c.h.b16 %v8652
        %v8944 = vunpack.c.l.b16 %v8653
        %v8945 = vunpack.c.h.b16 %v8653
        %v8946 = vunpack.c.l.b16 %v8654
        %v8947 = vunpack.c.h.b16 %v8654
        %v8948 = vunpack.c.l.b16 %v8655
        %v8949 = vunpack.c.h.b16 %v8655
        %v8950 = vunpack.c.l.b16 %v8656
        %v8951 = vunpack.c.h.b16 %v8656
        %v8952 = vunpack.c.l.b16 %v8657
        %v8953 = vunpack.c.h.b16 %v8657
        %v8954 = vunpack.c.l.b16 %v8658
        %v8955 = vunpack.c.h.b16 %v8658
        %v8956 = vunpack.c.l.b16 %v8659
        %v8957 = vunpack.c.h.b16 %v8659
        %v8958 = vunpack.c.l.b16 %v8660
        %v8959 = vunpack.c.h.b16 %v8660
        %v8960 = vunpack.c.l.b16 %v8661
        %v8961 = vunpack.c.h.b16 %v8661
        %v8962 = vpack.c.b16 %v8772, %v8770
        %v8963 = vpack.c.b16 %v8773, %v8771
        %v8964 = vpack.c.b16 %v8776, %v8774
        %v8965 = vpack.c.b16 %v8777, %v8775
        %v8966 = vpack.c.b16 %v8780, %v8778
        %v8967 = vpack.c.b16 %v8781, %v8779
        %v8968 = vpack.c.b16 %v8784, %v8782
        %v8969 = vpack.c.b16 %v8785, %v8783
        %v8970 = vpack.c.b16 %v8788, %v8786
        %v8971 = vpack.c.b16 %v8789, %v8787
        %v8972 = vpack.c.b16 %v8792, %v8790
        %v8973 = vpack.c.b16 %v8793, %v8791
        %v8974 = vpack.c.b16 %v8796, %v8794
        %v8975 = vpack.c.b16 %v8797, %v8795
        %v8976 = vpack.c.b16 %v8800, %v8798
        %v8977 = vpack.c.b16 %v8801, %v8799
        %v8978 = vpack.c.b16 %v8804, %v8802
        %v8979 = vpack.c.b16 %v8805, %v8803
        %v8980 = vpack.c.b16 %v8808, %v8806
        %v8981 = vpack.c.b16 %v8809, %v8807
        %v8982 = vpack.c.b16 %v8812, %v8810
        %v8983 = vpack.c.b16 %v8813, %v8811
        %v8984 = vpack.c.b16 %v8816, %v8814
        %v8985 = vpack.c.b16 %v8817, %v8815
        %v8986 = vpack.c.b16 %v8820, %v8818
        %v8987 = vpack.c.b16 %v8821, %v8819
        %v8988 = vpack.c.b16 %v8824, %v8822
        %v8989 = vpack.c.b16 %v8825, %v8823
        %v8990 = vpack.c.b16 %v8828, %v8826
        %v8991 = vpack.c.b16 %v8829, %v8827
        %v8992 = vpack.c.b16 %v8832, %v8830
        %v8993 = vpack.c.b16 %v8833, %v8831
        %v8994 = vpack.c.b16 %v8836, %v8834
        %v8995 = vpack.c.b16 %v8837, %v8835
        %v8996 = vpack.c.b16 %v8840, %v8838
        %v8997 = vpack.c.b16 %v8841, %v8839
        %v8998 = vpack.c.b16 %v8844, %v8842
        %v8999 = vpack.c.b16 %v8845, %v8843
        %v9000 = vpack.c.b16 %v8848, %v8846
        %v9001 = vpack.c.b16 %v8849, %v8847
        %v9002 = vpack.c.b16 %v8852, %v8850
        %v9003 = vpack.c.b16 %v8853, %v8851
        %v9004 = vpack.c.b16 %v8856, %v8854
        %v9005 = vpack.c.b16 %v8857, %v8855
        %v9006 = vpack.c.b16 %v8860, %v8858
        %v9007 = vpack.c.b16 %v8861, %v8859
        %v9008 = vpack.c.b16 %v8864, %v8862
        %v9009 = vpack.c.b16 %v8865, %v8863
        %v9010 = vpack.c.b16 %v8868, %v8866
        %v9011 = vpack.c.b16 %v8869, %v8867
        %v9012 = vpack.c.b16 %v8872, %v8870
        %v9013 = vpack.c.b16 %v8873, %v8871
        %v9014 = vpack.c.b16 %v8876, %v8874
        %v9015 = vpack.c.b16 %v8877, %v8875
        %v9016 = vpack.c.b16 %v8880, %v8878
        %v9017 = vpack.c.b16 %v8881, %v8879
        %v9018 = vpack.c.b16 %v8884, %v8882
        %v9019 = vpack.c.b16 %v8885, %v8883
        %v9020 = vpack.c.b16 %v8888, %v8886
        %v9021 = vpack.c.b16 %v8889, %v8887
        %v9022 = vpack.c.b16 %v8892, %v8890
        %v9023 = vpack.c.b16 %v8893, %v8891
        %v9024 = vpack.c.b16 %v8896, %v8894
        %v9025 = vpack.c.b16 %v8897, %v8895
        %v9026 = vpack.c.b16 %v8900, %v8898
        %v9027 = vpack.c.b16 %v8901, %v8899
        %v9028 = vpack.c.b16 %v8904, %v8902
        %v9029 = vpack.c.b16 %v8905, %v8903
        %v9030 = vpack.c.b16 %v8908, %v8906
        %v9031 = vpack.c.b16 %v8909, %v8907
        %v9032 = vpack.c.b16 %v8912, %v8910
        %v9033 = vpack.c.b16 %v8913, %v8911
        %v9034 = vpack.c.b16 %v8916, %v8914
        %v9035 = vpack.c.b16 %v8917, %v8915
        %v9036 = vpack.c.b16 %v8920, %v8918
        %v9037 = vpack.c.b16 %v8921, %v8919
        %v9038 = vpack.c.b16 %v8924, %v8922
        %v9039 = vpack.c.b16 %v8925, %v8923
        %v9040 = vpack.c.b16 %v8928, %v8926
        %v9041 = vpack.c.b16 %v8929, %v8927
        %v9042 = vpack.c.b16 %v8932, %v8930
        %v9043 = vpack.c.b16 %v8933, %v8931
        %v9044 = vpack.c.b16 %v8936, %v8934
        %v9045 = vpack.c.b16 %v8937, %v8935
        %v9046 = vpack.c.b16 %v8940, %v8938
        %v9047 = vpack.c.b16 %v8941, %v8939
        %v9048 = vpack.c.b16 %v8944, %v8942
        %v9049 = vpack.c.b16 %v8945, %v8943
        %v9050 = vpack.c.b16 %v8948, %v8946
        %v9051 = vpack.c.b16 %v8949, %v8947
        %v9052 = vpack.c.b16 %v8952, %v8950
        %v9053 = vpack.c.b16 %v8953, %v8951
        %v9054 = vpack.c.b16 %v8956, %v8954
        %v9055 = vpack.c.b16 %v8957, %v8955
        %v9056 = vpack.c.b16 %v8960, %v8958
        %v9057 = vpack.c.b16 %v8961, %v8959
        %9154 = vmatprep.subr.bf16.mxu0 %v8963
        %9155 = vmatpush1.bf16.msra.mxu0 %v8962
        %9156 = vmatprep.subr.bf16.mxu0 %v8965
        %9157 = vmatpush1.bf16.msra.mxu0 %v8964
        %9158 = vmatprep.subr.bf16.mxu0 %v8967
        %9159 = vmatpush1.bf16.msra.mxu0 %v8966
        %9160 = vmatprep.subr.bf16.mxu0 %v8969
        %9161 = vmatpush1.bf16.msra.mxu0 %v8968
        %9162 = vmatprep.subr.bf16.mxu0 %v8971
        %9163 = vmatpush1.bf16.msra.mxu0 %v8970
        %9164 = vmatprep.subr.bf16.mxu0 %v8973
        %9165 = vmatpush1.bf16.msra.mxu0 %v8972
        %9166 = vmatprep.subr.bf16.mxu0 %v8975
        %9167 = vmatpush1.bf16.msra.mxu0 %v8974
        %9168 = vmatprep.subr.bf16.mxu0 %v8977
        %9169 = vmatpush1.bf16.msra.mxu0 %v8976
        %9170 = vmatprep.subr.bf16.mxu0 %v8979
        %9171 = vmatpush1.bf16.msra.mxu0 %v8978
        %9172 = vmatprep.subr.bf16.mxu0 %v8981
        %9173 = vmatpush1.bf16.msra.mxu0 %v8980
        %9174 = vmatprep.subr.bf16.mxu0 %v8983
        %9175 = vmatpush1.bf16.msra.mxu0 %v8982
        %9176 = vmatprep.subr.bf16.mxu0 %v8985
        %9177 = vmatpush1.bf16.msra.mxu0 %v8984
        %9178 = vmatprep.subr.bf16.mxu0 %v8987
        %9179 = vmatpush1.bf16.msra.mxu0 %v8986
        %9180 = vmatprep.subr.bf16.mxu0 %v8989
        %9181 = vmatpush1.bf16.msra.mxu0 %v8988
        %9182 = vmatprep.subr.bf16.mxu0 %v8991
        %9183 = vmatpush1.bf16.msra.mxu0 %v8990
        %9184 = vmatprep.subr.bf16.mxu0 %v8993
        %9185 = vmatpush1.bf16.msra.mxu0 %v8992
        %9186 = vmatprep.mubr.bf16.mxu0 %v8561
        %9187 = vmatmul.mubr.bf16.gmra.mrb[0].mxu0 %v8560
        %v9188 = vpop.f32.mrb[0].mxu0
        %v9189 = vadd.f32 %v8667, %v9188
        %v9190 = vpop.f32.mrb[0].mxu0
        %v9191 = vadd.f32 %v8671, %v9190
        %v9192 = vpop.f32.mrb[0].mxu0
        %v9193 = vpop.f32.mrb[0].mxu0
        %9194 = vdwg.mxu0
        %9195 = vmatprep.subr.bf16.mxu0 %v8995
        %9196 = vmatpush1.bf16.msra.mxu0 %v8994
        %9197 = vmatprep.subr.bf16.mxu0 %v8997
        %9198 = vmatpush1.bf16.msra.mxu0 %v8996
        %9199 = vmatprep.subr.bf16.mxu0 %v8999
        %9200 = vmatpush1.bf16.msra.mxu0 %v8998
        %9201 = vmatprep.subr.bf16.mxu0 %v9001
        %9202 = vmatpush1.bf16.msra.mxu0 %v9000
        %9203 = vmatprep.subr.bf16.mxu0 %v9003
        %9204 = vmatpush1.bf16.msra.mxu0 %v9002
        %9205 = vmatprep.subr.bf16.mxu0 %v9005
        %9206 = vmatpush1.bf16.msra.mxu0 %v9004
        %9207 = vmatprep.subr.bf16.mxu0 %v9007
        %9208 = vmatpush1.bf16.msra.mxu0 %v9006
        %9209 = vmatprep.subr.bf16.mxu0 %v9009
        %9210 = vmatpush1.bf16.msra.mxu0 %v9008
        %9211 = vmatprep.subr.bf16.mxu0 %v9011
        %9212 = vmatpush1.bf16.msra.mxu0 %v9010
        %9213 = vmatprep.subr.bf16.mxu0 %v9013
        %9214 = vmatpush1.bf16.msra.mxu0 %v9012
        %9215 = vmatprep.subr.bf16.mxu0 %v9015
        %9216 = vmatpush1.bf16.msra.mxu0 %v9014
        %9217 = vmatprep.subr.bf16.mxu0 %v9017
        %9218 = vmatpush1.bf16.msra.mxu0 %v9016
        %9219 = vmatprep.subr.bf16.mxu0 %v9019
        %9220 = vmatpush1.bf16.msra.mxu0 %v9018
        %9221 = vmatprep.subr.bf16.mxu0 %v9021
        %9222 = vmatpush1.bf16.msra.mxu0 %v9020
        %9223 = vmatprep.subr.bf16.mxu0 %v9023
        %9224 = vmatpush1.bf16.msra.mxu0 %v9022
        %9225 = vmatprep.subr.bf16.mxu0 %v9025
        %9226 = vmatpush1.bf16.msra.mxu0 %v9024
        %9227 = vmatprep.mubr.bf16.mxu0 %v8563
        %9228 = vmatmul.mubr.bf16.gmra.mrb[0].mxu0 %v8562
        %v9229 = vpop.f32.mrb[0].mxu0
        %v9230 = vadd.f32 %v9189, %v9229
        %v9231 = vpop.f32.mrb[0].mxu0
        %v9232 = vadd.f32 %v9191, %v9231
        %v9233 = vpop.f32.mrb[0].mxu0
        %v9234 = vpop.f32.mrb[0].mxu0
        %9235 = vdwg.mxu0
        %9236 = vmatprep.subr.bf16.mxu0 %v9027
        %9237 = vmatpush1.bf16.msra.mxu0 %v9026
        %9238 = vmatprep.subr.bf16.mxu0 %v9029
        %9239 = vmatpush1.bf16.msra.mxu0 %v9028
        %9240 = vmatprep.subr.bf16.mxu0 %v9031
        %9241 = vmatpush1.bf16.msra.mxu0 %v9030
        %9242 = vmatprep.subr.bf16.mxu0 %v9033
        %9243 = vmatpush1.bf16.msra.mxu0 %v9032
        %9244 = vmatprep.subr.bf16.mxu0 %v9035
        %9245 = vmatpush1.bf16.msra.mxu0 %v9034
        %9246 = vmatprep.subr.bf16.mxu0 %v9037
        %9247 = vmatpush1.bf16.msra.mxu0 %v9036
        %9248 = vmatprep.subr.bf16.mxu0 %v9039
        %9249 = vmatpush1.bf16.msra.mxu0 %v9038
        %9250 = vmatprep.subr.bf16.mxu0 %v9041
        %9251 = vmatpush1.bf16.msra.mxu0 %v9040
        %9252 = vmatprep.subr.bf16.mxu0 %v9043
        %9253 = vmatpush1.bf16.msra.mxu0 %v9042
        %9254 = vmatprep.subr.bf16.mxu0 %v9045
        %9255 = vmatpush1.bf16.msra.mxu0 %v9044
        %9256 = vmatprep.subr.bf16.mxu0 %v9047
        %9257 = vmatpush1.bf16.msra.mxu0 %v9046
        %9258 = vmatprep.subr.bf16.mxu0 %v9049
        %9259 = vmatpush1.bf16.msra.mxu0 %v9048
        %9260 = vmatprep.subr.bf16.mxu0 %v9051
        %9261 = vmatpush1.bf16.msra.mxu0 %v9050
        %9262 = vmatprep.subr.bf16.mxu0 %v9053
        %9263 = vmatpush1.bf16.msra.mxu0 %v9052
        %9264 = vmatprep.subr.bf16.mxu0 %v9055
        %9265 = vmatpush1.bf16.msra.mxu0 %v9054
        %9266 = vmatprep.subr.bf16.mxu0 %v9057
        %9267 = vmatpush1.bf16.msra.mxu0 %v9056
        %9268 = vmatprep.mubr.bf16.mxu0 %v8565
        %9269 = vmatmul.mubr.bf16.gmra.mrb[0].mxu0 %v8564
        %v9270 = vpop.f32.mrb[0].mxu0
        %v9271 = vadd.f32 %v9230, %v9270
        %v9272 = vpop.f32.mrb[0].mxu0
        %v9273 = vadd.f32 %v9232, %v9272
        %v9274 = vpop.f32.mrb[0].mxu0
        %v9275 = vpop.f32.mrb[0].mxu0
        %9276 = vdwg.mxu0
        %v9277 = vmax.f32 %v9271, 0.0
        %v9278 = vmax.f32 %v9273, 0.0
        %s9279 = scalar_lea.vmem [#allocation25], 1
        %v9280 = vld [vmem:[%s9279] ss:$4 sm:$0x3]
        %v9282 = vlaneseq
        %v9283 = vshrl.u32 %v9282, 7
        %v9284 = vsub.s32 0, %v9283
        %v9285 = vrot.slane %v9280, %v9284
        %v9286 = vlaneseq
        %v9287 = vshrl.u32 %v9286, 7
        %v9288 = vsub.s32 1, %v9287
        %v9289 = vrot.slane %v9280, %v9288
        %v9292 = vmul.f32 %v9277, %v9285
        %v9293 = vmul.f32 %v9278, %v9289
        %s9294 = scalar_lea.vmem [#allocation25], 2
        %v9295 = vld [vmem:[%s9294] ss:$4 sm:$0x3]
        %v9297 = vlaneseq
        %v9298 = vshrl.u32 %v9297, 7
        %v9299 = vsub.s32 0, %v9298
        %v9300 = vrot.slane %v9295, %v9299
        %v9301 = vlaneseq
        %v9302 = vshrl.u32 %v9301, 7
        %v9303 = vsub.s32 1, %v9302
        %v9304 = vrot.slane %v9295, %v9303
        %v9307 = vadd.f32 %v9292, %v9300
        %v9308 = vadd.f32 %v9293, %v9304
        %v9311 = vrot.slane %v9307, 1
        %v9312 = vrot.slane %v9308, 1
        %v9315 = vsel %vm7364, %v9311, 0.0
        %v9316 = vsel %vm7364, %v9312, 0.0
        %v9317 = vmax.f32 %v9307, %v9315
        %v9318 = vmax.f32 %v9308, %v9316
        %v9319 = vpack.c.bf16 %v9317, %v9317
        %v9320 = vpack.c.bf16 %v9318, %v9318
        %v9321 = vld [vmem:[%s67] sm:$0x1]
        %vm9322 = vcmask 31744
        %v9324 = vsel %vm9322, %v9321, 0
        %vm9326 = vcmask 1041408
        %v9328 = vsel %vm9326, %v9319, 0
        %v9331 = vsel %vm9326, %v9320, 0
        %9333 = vmatprep.subr.bf16.mxu0 %v9331
        %9334 = vmatpush1.bf16.msra.mxu0 %v9328
        %9335 = vmatprep.subr.bf16.mxu0 0
        %9336 = vmatpush1.bf16.msra.mxu0 0
        %9337 = vmatprep.subr.bf16.mxu0 0
        %9338 = vmatpush1.bf16.msra.mxu0 0
        %9339 = vmatprep.subr.bf16.mxu0 0
        %9340 = vmatpush1.bf16.msra.mxu0 0
        %9341 = vmatprep.subr.bf16.mxu0 0
        %9342 = vmatpush1.bf16.msra.mxu0 0
        %9343 = vmatprep.subr.bf16.mxu0 0
        %9344 = vmatpush1.bf16.msra.mxu0 0
        %9345 = vmatprep.subr.bf16.mxu0 0
        %9346 = vmatpush1.bf16.msra.mxu0 0
        %9347 = vmatprep.subr.bf16.mxu0 0
        %9348 = vmatpush1.bf16.msra.mxu0 0
        %9349 = vmatprep.subr.bf16.mxu0 0
        %9350 = vmatpush1.bf16.msra.mxu0 0
        %9351 = vmatprep.subr.bf16.mxu0 0
        %9352 = vmatpush1.bf16.msra.mxu0 0
        %9353 = vmatprep.subr.bf16.mxu0 0
        %9354 = vmatpush1.bf16.msra.mxu0 0
        %9355 = vmatprep.subr.bf16.mxu0 0
        %9356 = vmatpush1.bf16.msra.mxu0 0
        %9357 = vmatprep.subr.bf16.mxu0 0
        %9358 = vmatpush1.bf16.msra.mxu0 0
        %9359 = vmatprep.subr.bf16.mxu0 0
        %9360 = vmatpush1.bf16.msra.mxu0 0
        %9361 = vmatprep.subr.bf16.mxu0 0
        %9362 = vmatpush1.bf16.msra.mxu0 0
        %9363 = vmatprep.subr.bf16.mxu0 0
        %9364 = vmatpush1.bf16.msra.mxu0 0
        %9365 = vmatprep.mubr.bf16.mxu0 0
        %9366 = vmatmul.mubr.bf16.gmra.mrb[0].mxu0 %v9324
        %v9367 = vpop.f32.mrb[0].mxu0
        %v9368 = vadd.f32 0.0, %v9367
        %v9369 = vpop.f32.mrb[0].mxu0
        %v9370 = vadd.f32 0.0, %v9369
        %v9371 = vpop.f32.mrb[0].mxu0
        %v9372 = vpop.f32.mrb[0].mxu0
        %9373 = vdwg.mxu0
        %v9374 = vpack.c.bf16 %v9368, %v9368
        %v9375 = vpack.c.bf16 %v9370, %v9370
        %v9376 = vld [vmem:[#allocation38] sm:$0xf]
        %v9377 = vld [vmem:[#allocation38 + $0x4] sm:$0xf]
        %v9378 = vld [vmem:[#allocation38 + $0x8] sm:$0xf]
        %v9379 = vld [vmem:[#allocation38 + $0xc] sm:$0xf]
        %v9380 = vld [vmem:[#allocation38 + $0x10] sm:$0xf]
        %v9381 = vld [vmem:[#allocation38 + $0x14] sm:$0xf]
        %v9382 = vld [vmem:[#allocation38 + $0x18] sm:$0xf]
        %v9383 = vld [vmem:[#allocation38 + $0x1c] sm:$0xf]
        %v9384 = vld [vmem:[#allocation38 + $0x20] sm:$0xf]
        %v9385 = vld [vmem:[#allocation38 + $0x24] sm:$0xf]
        %v9386 = vld [vmem:[#allocation38 + $0x28] sm:$0xf]
        %v9387 = vld [vmem:[#allocation38 + $0x2c] sm:$0xf]
        %v9388 = vld [vmem:[#allocation38 + $0x30] sm:$0xf]
        %v9389 = vld [vmem:[#allocation38 + $0x34] sm:$0xf]
        %v9390 = vld [vmem:[#allocation38 + $0x38] sm:$0xf]
        %v9391 = vld [vmem:[#allocation38 + $0x3c] sm:$0xf]
        %v9392 = vld [vmem:[#allocation38 + $0x40] sm:$0xf]
        %v9393 = vld [vmem:[#allocation38 + $0x44] sm:$0xf]
        %v9394 = vld [vmem:[#allocation38 + $0x48] sm:$0xf]
        %v9395 = vld [vmem:[#allocation38 + $0x4c] sm:$0xf]
        %v9396 = vld [vmem:[#allocation38 + $0x50] sm:$0xf]
        %v9397 = vld [vmem:[#allocation38 + $0x54] sm:$0xf]
        %v9398 = vld [vmem:[#allocation38 + $0x58] sm:$0xf]
        %v9399 = vld [vmem:[#allocation38 + $0x5c] sm:$0xf]
        %v9400 = vld [vmem:[#allocation38 + $0x60] sm:$0xf]
        %v9401 = vld [vmem:[#allocation38 + $0x64] sm:$0xf]
        %v9402 = vld [vmem:[#allocation38 + $0x68] sm:$0xf]
        %v9403 = vld [vmem:[#allocation38 + $0x6c] sm:$0xf]
        %v9404 = vld [vmem:[#allocation38 + $0x70] sm:$0xf]
        %v9405 = vld [vmem:[#allocation38 + $0x74] sm:$0xf]
        %v9406 = vld [vmem:[#allocation38 + $0x78] sm:$0xf]
        %v9407 = vld [vmem:[#allocation38 + $0x7c] sm:$0xf]
        %v9440 = vunpack.c.l.b16 %v9376
        %v9441 = vunpack.c.l.b16 %v9377
        %v9442 = vunpack.c.l.b16 %v9378
        %v9443 = vunpack.c.l.b16 %v9379
        %v9444 = vunpack.c.l.b16 %v9380
        %v9445 = vunpack.c.l.b16 %v9381
        %v9446 = vunpack.c.l.b16 %v9382
        %v9447 = vunpack.c.l.b16 %v9383
        %v9448 = vunpack.c.l.b16 %v9384
        %v9449 = vunpack.c.l.b16 %v9385
        %v9450 = vunpack.c.l.b16 %v9386
        %v9451 = vunpack.c.l.b16 %v9387
        %v9452 = vunpack.c.l.b16 %v9388
        %v9453 = vunpack.c.l.b16 %v9389
        %v9454 = vunpack.c.l.b16 %v9390
        %v9455 = vunpack.c.l.b16 %v9391
        %v9456 = vunpack.c.l.b16 %v9392
        %v9457 = vunpack.c.l.b16 %v9393
        %v9458 = vunpack.c.l.b16 %v9394
        %v9459 = vunpack.c.l.b16 %v9395
        %v9460 = vunpack.c.l.b16 %v9396
        %v9461 = vunpack.c.l.b16 %v9397
        %v9462 = vunpack.c.l.b16 %v9398
        %v9463 = vunpack.c.l.b16 %v9399
        %v9464 = vunpack.c.l.b16 %v9400
        %v9465 = vunpack.c.l.b16 %v9401
        %v9466 = vunpack.c.l.b16 %v9402
        %v9467 = vunpack.c.l.b16 %v9403
        %v9468 = vunpack.c.l.b16 %v9404
        %v9469 = vunpack.c.l.b16 %v9405
        %v9470 = vunpack.c.l.b16 %v9406
        %v9471 = vunpack.c.l.b16 %v9407
        %v9472 = vpack.c.b16 %v9441, %v9440
        %v9473 = vpack.c.b16 %v9443, %v9442
        %v9474 = vpack.c.b16 %v9445, %v9444
        %v9475 = vpack.c.b16 %v9447, %v9446
        %v9476 = vpack.c.b16 %v9449, %v9448
        %v9477 = vpack.c.b16 %v9451, %v9450
        %v9478 = vpack.c.b16 %v9453, %v9452
        %v9479 = vpack.c.b16 %v9455, %v9454
        %v9480 = vpack.c.b16 %v9457, %v9456
        %v9481 = vpack.c.b16 %v9459, %v9458
        %v9482 = vpack.c.b16 %v9461, %v9460
        %v9483 = vpack.c.b16 %v9463, %v9462
        %v9484 = vpack.c.b16 %v9465, %v9464
        %v9485 = vpack.c.b16 %v9467, %v9466
        %v9486 = vpack.c.b16 %v9469, %v9468
        %v9487 = vpack.c.b16 %v9471, %v9470
        %9504 = vmatprep.subr.bf16.mxu0 0
        %9505 = vmatpush1.bf16.msra.mxu0 %v9472
        %9506 = vmatprep.subr.bf16.mxu0 0
        %9507 = vmatpush1.bf16.msra.mxu0 %v9473
        %9508 = vmatprep.subr.bf16.mxu0 0
        %9509 = vmatpush1.bf16.msra.mxu0 %v9474
        %9510 = vmatprep.subr.bf16.mxu0 0
        %9511 = vmatpush1.bf16.msra.mxu0 %v9475
        %9512 = vmatprep.subr.bf16.mxu0 0
        %9513 = vmatpush1.bf16.msra.mxu0 %v9476
        %9514 = vmatprep.subr.bf16.mxu0 0
        %9515 = vmatpush1.bf16.msra.mxu0 %v9477
        %9516 = vmatprep.subr.bf16.mxu0 0
        %9517 = vmatpush1.bf16.msra.mxu0 %v9478
        %9518 = vmatprep.subr.bf16.mxu0 0
        %9519 = vmatpush1.bf16.msra.mxu0 %v9479
        %9520 = vmatprep.subr.bf16.mxu0 0
        %9521 = vmatpush1.bf16.msra.mxu0 %v9480
        %9522 = vmatprep.subr.bf16.mxu0 0
        %9523 = vmatpush1.bf16.msra.mxu0 %v9481
        %9524 = vmatprep.subr.bf16.mxu0 0
        %9525 = vmatpush1.bf16.msra.mxu0 %v9482
        %9526 = vmatprep.subr.bf16.mxu0 0
        %9527 = vmatpush1.bf16.msra.mxu0 %v9483
        %9528 = vmatprep.subr.bf16.mxu0 0
        %9529 = vmatpush1.bf16.msra.mxu0 %v9484
        %9530 = vmatprep.subr.bf16.mxu0 0
        %9531 = vmatpush1.bf16.msra.mxu0 %v9485
        %9532 = vmatprep.subr.bf16.mxu0 0
        %9533 = vmatpush1.bf16.msra.mxu0 %v9486
        %9534 = vmatprep.subr.bf16.mxu0 0
        %9535 = vmatpush1.bf16.msra.mxu0 %v9487
        %9536 = vmatprep.mubr.bf16.mxu0 %v9375
        %9537 = vmatmul.mubr.bf16.gmra.mrb[0].mxu0 %v9374
        %v9538 = vpop.f32.mrb[0].mxu0
        %v9539 = vadd.f32 0.0, %v9538
        %v9540 = vpop.f32.mrb[0].mxu0
        %v9541 = vpop.f32.mrb[0].mxu0
        %v9542 = vpop.f32.mrb[0].mxu0
        %9543 = vdwg.mxu0
        %s9544 = scalar_lea.vmem [#allocation38], 128
        %v9545 = vld [vmem:[%s9544] sm:$0xf]
        %v9546 = vld [vmem:[%s9544 + $0x4] sm:$0xf]
        %v9547 = vld [vmem:[%s9544 + $0x8] sm:$0xf]
        %v9548 = vld [vmem:[%s9544 + $0xc] sm:$0xf]
        %v9549 = vld [vmem:[%s9544 + $0x10] sm:$0xf]
        %v9550 = vld [vmem:[%s9544 + $0x14] sm:$0xf]
        %v9551 = vld [vmem:[%s9544 + $0x18] sm:$0xf]
        %v9552 = vld [vmem:[%s9544 + $0x1c] sm:$0xf]
        %v9553 = vld [vmem:[%s9544 + $0x20] sm:$0xf]
        %v9554 = vld [vmem:[%s9544 + $0x24] sm:$0xf]
        %v9555 = vld [vmem:[%s9544 + $0x28] sm:$0xf]
        %v9556 = vld [vmem:[%s9544 + $0x2c] sm:$0xf]
        %v9557 = vld [vmem:[%s9544 + $0x30] sm:$0xf]
        %v9558 = vld [vmem:[%s9544 + $0x34] sm:$0xf]
        %v9559 = vld [vmem:[%s9544 + $0x38] sm:$0xf]
        %v9560 = vld [vmem:[%s9544 + $0x3c] sm:$0xf]
        %v9561 = vld [vmem:[%s9544 + $0x40] sm:$0xf]
        %v9562 = vld [vmem:[%s9544 + $0x44] sm:$0xf]
        %v9563 = vld [vmem:[%s9544 + $0x48] sm:$0xf]
        %v9564 = vld [vmem:[%s9544 + $0x4c] sm:$0xf]
        %v9565 = vld [vmem:[%s9544 + $0x50] sm:$0xf]
        %v9566 = vld [vmem:[%s9544 + $0x54] sm:$0xf]
        %v9567 = vld [vmem:[%s9544 + $0x58] sm:$0xf]
        %v9568 = vld [vmem:[%s9544 + $0x5c] sm:$0xf]
        %v9569 = vld [vmem:[%s9544 + $0x60] sm:$0xf]
        %v9570 = vld [vmem:[%s9544 + $0x64] sm:$0xf]
        %v9571 = vld [vmem:[%s9544 + $0x68] sm:$0xf]
        %v9572 = vld [vmem:[%s9544 + $0x6c] sm:$0xf]
        %v9573 = vld [vmem:[%s9544 + $0x70] sm:$0xf]
        %v9574 = vld [vmem:[%s9544 + $0x74] sm:$0xf]
        %v9575 = vld [vmem:[%s9544 + $0x78] sm:$0xf]
        %v9576 = vld [vmem:[%s9544 + $0x7c] sm:$0xf]
        %v9609 = vunpack.c.l.b16 %v9545
        %v9610 = vunpack.c.l.b16 %v9546
        %v9611 = vunpack.c.l.b16 %v9547
        %v9612 = vunpack.c.l.b16 %v9548
        %v9613 = vunpack.c.l.b16 %v9549
        %v9614 = vunpack.c.l.b16 %v9550
        %v9615 = vunpack.c.l.b16 %v9551
        %v9616 = vunpack.c.l.b16 %v9552
        %v9617 = vunpack.c.l.b16 %v9553
        %v9618 = vunpack.c.l.b16 %v9554
        %v9619 = vunpack.c.l.b16 %v9555
        %v9620 = vunpack.c.l.b16 %v9556
        %v9621 = vunpack.c.l.b16 %v9557
        %v9622 = vunpack.c.l.b16 %v9558
        %v9623 = vunpack.c.l.b16 %v9559
        %v9624 = vunpack.c.l.b16 %v9560
        %v9625 = vunpack.c.l.b16 %v9561
        %v9626 = vunpack.c.l.b16 %v9562
        %v9627 = vunpack.c.l.b16 %v9563
        %v9628 = vunpack.c.l.b16 %v9564
        %v9629 = vunpack.c.l.b16 %v9565
        %v9630 = vunpack.c.l.b16 %v9566
        %v9631 = vunpack.c.l.b16 %v9567
        %v9632 = vunpack.c.l.b16 %v9568
        %v9633 = vunpack.c.l.b16 %v9569
        %v9634 = vunpack.c.l.b16 %v9570
        %v9635 = vunpack.c.l.b16 %v9571
        %v9636 = vunpack.c.l.b16 %v9572
        %v9637 = vunpack.c.l.b16 %v9573
        %v9638 = vunpack.c.l.b16 %v9574
        %v9639 = vunpack.c.l.b16 %v9575
        %v9640 = vunpack.c.l.b16 %v9576
        %v9641 = vpack.c.b16 %v9610, %v9609
        %v9642 = vpack.c.b16 %v9612, %v9611
        %v9643 = vpack.c.b16 %v9614, %v9613
        %v9644 = vpack.c.b16 %v9616, %v9615
        %v9645 = vpack.c.b16 %v9618, %v9617
        %v9646 = vpack.c.b16 %v9620, %v9619
        %v9647 = vpack.c.b16 %v9622, %v9621
        %v9648 = vpack.c.b16 %v9624, %v9623
        %v9649 = vpack.c.b16 %v9626, %v9625
        %v9650 = vpack.c.b16 %v9628, %v9627
        %v9651 = vpack.c.b16 %v9630, %v9629
        %v9652 = vpack.c.b16 %v9632, %v9631
        %v9653 = vpack.c.b16 %v9634, %v9633
        %v9654 = vpack.c.b16 %v9636, %v9635
        %v9655 = vpack.c.b16 %v9638, %v9637
        %v9656 = vpack.c.b16 %v9640, %v9639
        %9673 = vmatprep.subr.bf16.mxu0 0
        %9674 = vmatpush1.bf16.msra.mxu0 %v9641
        %9675 = vmatprep.subr.bf16.mxu0 0
        %9676 = vmatpush1.bf16.msra.mxu0 %v9642
        %9677 = vmatprep.subr.bf16.mxu0 0
        %9678 = vmatpush1.bf16.msra.mxu0 %v9643
        %9679 = vmatprep.subr.bf16.mxu0 0
        %9680 = vmatpush1.bf16.msra.mxu0 %v9644
        %9681 = vmatprep.subr.bf16.mxu0 0
        %9682 = vmatpush1.bf16.msra.mxu0 %v9645
        %9683 = vmatprep.subr.bf16.mxu0 0
        %9684 = vmatpush1.bf16.msra.mxu0 %v9646
        %9685 = vmatprep.subr.bf16.mxu0 0
        %9686 = vmatpush1.bf16.msra.mxu0 %v9647
        %9687 = vmatprep.subr.bf16.mxu0 0
        %9688 = vmatpush1.bf16.msra.mxu0 %v9648
        %9689 = vmatprep.subr.bf16.mxu0 0
        %9690 = vmatpush1.bf16.msra.mxu0 %v9649
        %9691 = vmatprep.subr.bf16.mxu0 0
        %9692 = vmatpush1.bf16.msra.mxu0 %v9650
        %9693 = vmatprep.subr.bf16.mxu0 0
        %9694 = vmatpush1.bf16.msra.mxu0 %v9651
        %9695 = vmatprep.subr.bf16.mxu0 0
        %9696 = vmatpush1.bf16.msra.mxu0 %v9652
        %9697 = vmatprep.subr.bf16.mxu0 0
        %9698 = vmatpush1.bf16.msra.mxu0 %v9653
        %9699 = vmatprep.subr.bf16.mxu0 0
        %9700 = vmatpush1.bf16.msra.mxu0 %v9654
        %9701 = vmatprep.subr.bf16.mxu0 0
        %9702 = vmatpush1.bf16.msra.mxu0 %v9655
        %9703 = vmatprep.subr.bf16.mxu0 0
        %9704 = vmatpush1.bf16.msra.mxu0 %v9656
        %9705 = vmatprep.mubr.bf16.mxu0 %v9375
        %9706 = vmatmul.mubr.bf16.gmra.mrb[0].mxu0 %v9374
        %v9707 = vpop.f32.mrb[0].mxu0
        %v9708 = vadd.f32 0.0, %v9707
        %v9709 = vpop.f32.mrb[0].mxu0
        %v9710 = vpop.f32.mrb[0].mxu0
        %v9711 = vpop.f32.mrb[0].mxu0
        %9712 = vdwg.mxu0
        %v9713 = vmax.f32 %v9539, %v9708
        %v9715 = vrot.slane %v9713, 7
        %v9717 = vsel %vm1613, 0.0, %v9715
        %v9718 = vrot.slane %v9713, 1
        %v9720 = vsel %vm1613, %v9718, 0.0
        %v9721 = vpack.c.bf16 %v9717, %v9717
        %v9722 = vpack.c.bf16 %v9713, %v9713
        %v9723 = vpack.c.bf16 %v9720, %v9720
        %v9724 = vld [vmem:[#allocation26] sm:$0xf]
        %v9725 = vld [vmem:[#allocation26 + $0x4] sm:$0xf]
        %v9726 = vld [vmem:[#allocation26 + $0x8] sm:$0xf]
        %v9727 = vld [vmem:[#allocation26 + $0xc] sm:$0xf]
        %v9728 = vld [vmem:[#allocation26 + $0x10] sm:$0xf]
        %v9729 = vld [vmem:[#allocation26 + $0x14] sm:$0xf]
        %v9730 = vld [vmem:[#allocation26 + $0x18] sm:$0xf]
        %v9731 = vld [vmem:[#allocation26 + $0x1c] sm:$0xf]
        %v9732 = vld [vmem:[#allocation26 + $0x20] sm:$0xf]
        %v9733 = vld [vmem:[#allocation26 + $0x24] sm:$0xf]
        %v9734 = vld [vmem:[#allocation26 + $0x28] sm:$0xf]
        %v9735 = vld [vmem:[#allocation26 + $0x2c] sm:$0xf]
        %v9736 = vld [vmem:[#allocation26 + $0x30] sm:$0xf]
        %v9737 = vld [vmem:[#allocation26 + $0x34] sm:$0xf]
        %v9738 = vld [vmem:[#allocation26 + $0x38] sm:$0xf]
        %v9739 = vld [vmem:[#allocation26 + $0x3c] sm:$0xf]
        %v9740 = vld [vmem:[#allocation26 + $0x40] sm:$0xf]
        %v9741 = vld [vmem:[#allocation26 + $0x44] sm:$0xf]
        %v9742 = vld [vmem:[#allocation26 + $0x48] sm:$0xf]
        %v9743 = vld [vmem:[#allocation26 + $0x4c] sm:$0xf]
        %v9744 = vld [vmem:[#allocation26 + $0x50] sm:$0xf]
        %v9745 = vld [vmem:[#allocation26 + $0x54] sm:$0xf]
        %v9746 = vld [vmem:[#allocation26 + $0x58] sm:$0xf]
        %v9747 = vld [vmem:[#allocation26 + $0x5c] sm:$0xf]
        %v9748 = vld [vmem:[#allocation26 + $0x60] sm:$0xf]
        %v9749 = vld [vmem:[#allocation26 + $0x64] sm:$0xf]
        %v9750 = vld [vmem:[#allocation26 + $0x68] sm:$0xf]
        %v9751 = vld [vmem:[#allocation26 + $0x6c] sm:$0xf]
        %v9752 = vld [vmem:[#allocation26 + $0x70] sm:$0xf]
        %v9753 = vld [vmem:[#allocation26 + $0x74] sm:$0xf]
        %v9754 = vld [vmem:[#allocation26 + $0x78] sm:$0xf]
        %v9755 = vld [vmem:[#allocation26 + $0x7c] sm:$0xf]
        %v9756 = vld [vmem:[#allocation26 + $0x80] sm:$0xf]
        %v9757 = vld [vmem:[#allocation26 + $0x84] sm:$0xf]
        %v9758 = vld [vmem:[#allocation26 + $0x88] sm:$0xf]
        %v9759 = vld [vmem:[#allocation26 + $0x8c] sm:$0xf]
        %v9760 = vld [vmem:[#allocation26 + $0x90] sm:$0xf]
        %v9761 = vld [vmem:[#allocation26 + $0x94] sm:$0xf]
        %v9762 = vld [vmem:[#allocation26 + $0x98] sm:$0xf]
        %v9763 = vld [vmem:[#allocation26 + $0x9c] sm:$0xf]
        %v9764 = vld [vmem:[#allocation26 + $0xa0] sm:$0xf]
        %v9765 = vld [vmem:[#allocation26 + $0xa4] sm:$0xf]
        %v9766 = vld [vmem:[#allocation26 + $0xa8] sm:$0xf]
        %v9767 = vld [vmem:[#allocation26 + $0xac] sm:$0xf]
        %v9768 = vld [vmem:[#allocation26 + $0xb0] sm:$0xf]
        %v9769 = vld [vmem:[#allocation26 + $0xb4] sm:$0xf]
        %v9770 = vld [vmem:[#allocation26 + $0xb8] sm:$0xf]
        %v9771 = vld [vmem:[#allocation26 + $0xbc] sm:$0xf]
        %v9772 = vld [vmem:[#allocation28] sm:$0x1]
        %v9773 = vlaneseq
        %v9774 = vshrl.u32 %v9773, 7
        %v9775 = vsub.s32 0, %v9774
        %v9776 = vrot.slane %v9772, %v9775
        %v9825 = vunpack.c.l.b16 %v9724
        %v9826 = vunpack.c.l.b16 %v9725
        %v9827 = vunpack.c.l.b16 %v9726
        %v9828 = vunpack.c.l.b16 %v9727
        %v9829 = vunpack.c.l.b16 %v9728
        %v9830 = vunpack.c.l.b16 %v9729
        %v9831 = vunpack.c.l.b16 %v9730
        %v9832 = vunpack.c.l.b16 %v9731
        %v9833 = vunpack.c.l.b16 %v9732
        %v9834 = vunpack.c.l.b16 %v9733
        %v9835 = vunpack.c.l.b16 %v9734
        %v9836 = vunpack.c.l.b16 %v9735
        %v9837 = vunpack.c.l.b16 %v9736
        %v9838 = vunpack.c.l.b16 %v9737
        %v9839 = vunpack.c.l.b16 %v9738
        %v9840 = vunpack.c.l.b16 %v9739
        %v9841 = vunpack.c.l.b16 %v9740
        %v9842 = vunpack.c.l.b16 %v9741
        %v9843 = vunpack.c.l.b16 %v9742
        %v9844 = vunpack.c.l.b16 %v9743
        %v9845 = vunpack.c.l.b16 %v9744
        %v9846 = vunpack.c.l.b16 %v9745
        %v9847 = vunpack.c.l.b16 %v9746
        %v9848 = vunpack.c.l.b16 %v9747
        %v9849 = vunpack.c.l.b16 %v9748
        %v9850 = vunpack.c.l.b16 %v9749
        %v9851 = vunpack.c.l.b16 %v9750
        %v9852 = vunpack.c.l.b16 %v9751
        %v9853 = vunpack.c.l.b16 %v9752
        %v9854 = vunpack.c.l.b16 %v9753
        %v9855 = vunpack.c.l.b16 %v9754
        %v9856 = vunpack.c.l.b16 %v9755
        %v9857 = vunpack.c.l.b16 %v9756
        %v9858 = vunpack.c.l.b16 %v9757
        %v9859 = vunpack.c.l.b16 %v9758
        %v9860 = vunpack.c.l.b16 %v9759
        %v9861 = vunpack.c.l.b16 %v9760
        %v9862 = vunpack.c.l.b16 %v9761
        %v9863 = vunpack.c.l.b16 %v9762
        %v9864 = vunpack.c.l.b16 %v9763
        %v9865 = vunpack.c.l.b16 %v9764
        %v9866 = vunpack.c.l.b16 %v9765
        %v9867 = vunpack.c.l.b16 %v9766
        %v9868 = vunpack.c.l.b16 %v9767
        %v9869 = vunpack.c.l.b16 %v9768
        %v9870 = vunpack.c.l.b16 %v9769
        %v9871 = vunpack.c.l.b16 %v9770
        %v9872 = vunpack.c.l.b16 %v9771
        %v9873 = vpack.c.b16 %v9826, %v9825
        %v9874 = vpack.c.b16 %v9828, %v9827
        %v9875 = vpack.c.b16 %v9830, %v9829
        %v9876 = vpack.c.b16 %v9832, %v9831
        %v9877 = vpack.c.b16 %v9834, %v9833
        %v9878 = vpack.c.b16 %v9836, %v9835
        %v9879 = vpack.c.b16 %v9838, %v9837
        %v9880 = vpack.c.b16 %v9840, %v9839
        %v9881 = vpack.c.b16 %v9842, %v9841
        %v9882 = vpack.c.b16 %v9844, %v9843
        %v9883 = vpack.c.b16 %v9846, %v9845
        %v9884 = vpack.c.b16 %v9848, %v9847
        %v9885 = vpack.c.b16 %v9850, %v9849
        %v9886 = vpack.c.b16 %v9852, %v9851
        %v9887 = vpack.c.b16 %v9854, %v9853
        %v9888 = vpack.c.b16 %v9856, %v9855
        %v9889 = vpack.c.b16 %v9858, %v9857
        %v9890 = vpack.c.b16 %v9860, %v9859
        %v9891 = vpack.c.b16 %v9862, %v9861
        %v9892 = vpack.c.b16 %v9864, %v9863
        %v9893 = vpack.c.b16 %v9866, %v9865
        %v9894 = vpack.c.b16 %v9868, %v9867
        %v9895 = vpack.c.b16 %v9870, %v9869
        %v9896 = vpack.c.b16 %v9872, %v9871
        %9921 = vmatprep.subr.bf16.mxu0 0
        %9922 = vmatpush1.bf16.msra.mxu0 %v9873
        %9923 = vmatprep.subr.bf16.mxu0 0
        %9924 = vmatpush1.bf16.msra.mxu0 %v9874
        %9925 = vmatprep.subr.bf16.mxu0 0
        %9926 = vmatpush1.bf16.msra.mxu0 %v9875
        %9927 = vmatprep.subr.bf16.mxu0 0
        %9928 = vmatpush1.bf16.msra.mxu0 %v9876
        %9929 = vmatprep.subr.bf16.mxu0 0
        %9930 = vmatpush1.bf16.msra.mxu0 %v9877
        %9931 = vmatprep.subr.bf16.mxu0 0
        %9932 = vmatpush1.bf16.msra.mxu0 %v9878
        %9933 = vmatprep.subr.bf16.mxu0 0
        %9934 = vmatpush1.bf16.msra.mxu0 %v9879
        %9935 = vmatprep.subr.bf16.mxu0 0
        %9936 = vmatpush1.bf16.msra.mxu0 %v9880
        %9937 = vmatprep.subr.bf16.mxu0 0
        %9938 = vmatpush1.bf16.msra.mxu0 %v9881
        %9939 = vmatprep.subr.bf16.mxu0 0
        %9940 = vmatpush1.bf16.msra.mxu0 %v9882
        %9941 = vmatprep.subr.bf16.mxu0 0
        %9942 = vmatpush1.bf16.msra.mxu0 %v9883
        %9943 = vmatprep.subr.bf16.mxu0 0
        %9944 = vmatpush1.bf16.msra.mxu0 %v9884
        %9945 = vmatprep.subr.bf16.mxu0 0
        %9946 = vmatpush1.bf16.msra.mxu0 %v9885
        %9947 = vmatprep.subr.bf16.mxu0 0
        %9948 = vmatpush1.bf16.msra.mxu0 %v9886
        %9949 = vmatprep.subr.bf16.mxu0 0
        %9950 = vmatpush1.bf16.msra.mxu0 %v9887
        %9951 = vmatprep.subr.bf16.mxu0 0
        %9952 = vmatpush1.bf16.msra.mxu0 %v9888
        %9953 = vmatprep.mubr.bf16.mxu0 %v9722
        %9954 = vmatmul.mubr.bf16.gmra.mrb[0].mxu0 %v9721
        %v9955 = vpop.f32.mrb[0].mxu0
        %v9956 = vadd.f32 %v9776, %v9955
        %v9957 = vpop.f32.mrb[0].mxu0
        %v9958 = vpop.f32.mrb[0].mxu0
        %v9959 = vpop.f32.mrb[0].mxu0
        %9960 = vdwg.mxu0
        %9961 = vmatprep.subr.bf16.mxu0 0
        %9962 = vmatpush1.bf16.msra.mxu0 %v9889
        %9963 = vmatprep.subr.bf16.mxu0 0
        %9964 = vmatpush1.bf16.msra.mxu0 %v9890
        %9965 = vmatprep.subr.bf16.mxu0 0
        %9966 = vmatpush1.bf16.msra.mxu0 %v9891
        %9967 = vmatprep.subr.bf16.mxu0 0
        %9968 = vmatpush1.bf16.msra.mxu0 %v9892
        %9969 = vmatprep.subr.bf16.mxu0 0
        %9970 = vmatpush1.bf16.msra.mxu0 %v9893
        %9971 = vmatprep.subr.bf16.mxu0 0
        %9972 = vmatpush1.bf16.msra.mxu0 %v9894
        %9973 = vmatprep.subr.bf16.mxu0 0
        %9974 = vmatpush1.bf16.msra.mxu0 %v9895
        %9975 = vmatprep.subr.bf16.mxu0 0
        %9976 = vmatpush1.bf16.msra.mxu0 %v9896
        %9977 = vmatprep.subr.bf16.mxu0 0
        %9978 = vmatpush1.bf16.msra.mxu0 0
        %9979 = vmatprep.subr.bf16.mxu0 0
        %9980 = vmatpush1.bf16.msra.mxu0 0
        %9981 = vmatprep.subr.bf16.mxu0 0
        %9982 = vmatpush1.bf16.msra.mxu0 0
        %9983 = vmatprep.subr.bf16.mxu0 0
        %9984 = vmatpush1.bf16.msra.mxu0 0
        %9985 = vmatprep.subr.bf16.mxu0 0
        %9986 = vmatpush1.bf16.msra.mxu0 0
        %9987 = vmatprep.subr.bf16.mxu0 0
        %9988 = vmatpush1.bf16.msra.mxu0 0
        %9989 = vmatprep.subr.bf16.mxu0 0
        %9990 = vmatpush1.bf16.msra.mxu0 0
        %9991 = vmatprep.subr.bf16.mxu0 0
        %9992 = vmatpush1.bf16.msra.mxu0 0
        %9993 = vmatprep.mubr.bf16.mxu0 0
        %9994 = vmatmul.mubr.bf16.gmra.mrb[0].mxu0 %v9723
        %v9995 = vpop.f32.mrb[0].mxu0
        %v9996 = vadd.f32 %v9956, %v9995
        %v9997 = vpop.f32.mrb[0].mxu0
        %v9998 = vpop.f32.mrb[0].mxu0
        %v9999 = vpop.f32.mrb[0].mxu0
        %10000 = vdwg.mxu0
        %v10001 = vmax.f32 %v9996, 0.0
        %v10002 = vld [vmem:[#allocation28 + $0x1] sm:$0x1]
        %v10003 = vlaneseq
        %v10004 = vshrl.u32 %v10003, 7
        %v10005 = vsub.s32 0, %v10004
        %v10006 = vrot.slane %v10002, %v10005
        %v10007 = vmul.f32 %v10001, %v10006
        %v10008 = vld [vmem:[#allocation28 + $0x2] sm:$0x1]
        %v10009 = vlaneseq
        %v10010 = vshrl.u32 %v10009, 7
        %v10011 = vsub.s32 0, %v10010
        %v10012 = vrot.slane %v10008, %v10011
        %v10013 = vadd.f32 %v10007, %v10012
        %v10015 = vrot.slane %v10013, 7
        %v10017 = vsel %vm1613, 0.0, %v10015
        %v10018 = vrot.slane %v10013, 1
        %v10020 = vsel %vm1613, %v10018, 0.0
        %v10021 = vpack.c.bf16 %v10017, %v10017
        %v10022 = vpack.c.bf16 %v10013, %v10013
        %v10023 = vpack.c.bf16 %v10020, %v10020
        %v10024 = vld [vmem:[#allocation29] sm:$0xf]
        %v10025 = vld [vmem:[#allocation29 + $0x4] sm:$0xf]
        %v10026 = vld [vmem:[#allocation29 + $0x8] sm:$0xf]
        %v10027 = vld [vmem:[#allocation29 + $0xc] sm:$0xf]
        %v10028 = vld [vmem:[#allocation29 + $0x10] sm:$0xf]
        %v10029 = vld [vmem:[#allocation29 + $0x14] sm:$0xf]
        %v10030 = vld [vmem:[#allocation29 + $0x18] sm:$0xf]
        %v10031 = vld [vmem:[#allocation29 + $0x1c] sm:$0xf]
        %v10032 = vld [vmem:[#allocation29 + $0x20] sm:$0xf]
        %v10033 = vld [vmem:[#allocation29 + $0x24] sm:$0xf]
        %v10034 = vld [vmem:[#allocation29 + $0x28] sm:$0xf]
        %v10035 = vld [vmem:[#allocation29 + $0x2c] sm:$0xf]
        %v10036 = vld [vmem:[#allocation29 + $0x30] sm:$0xf]
        %v10037 = vld [vmem:[#allocation29 + $0x34] sm:$0xf]
        %v10038 = vld [vmem:[#allocation29 + $0x38] sm:$0xf]
        %v10039 = vld [vmem:[#allocation29 + $0x3c] sm:$0xf]
        %v10040 = vld [vmem:[#allocation29 + $0x40] sm:$0xf]
        %v10041 = vld [vmem:[#allocation29 + $0x44] sm:$0xf]
        %v10042 = vld [vmem:[#allocation29 + $0x48] sm:$0xf]
        %v10043 = vld [vmem:[#allocation29 + $0x4c] sm:$0xf]
        %v10044 = vld [vmem:[#allocation29 + $0x50] sm:$0xf]
        %v10045 = vld [vmem:[#allocation29 + $0x54] sm:$0xf]
        %v10046 = vld [vmem:[#allocation29 + $0x58] sm:$0xf]
        %v10047 = vld [vmem:[#allocation29 + $0x5c] sm:$0xf]
        %v10048 = vld [vmem:[#allocation29 + $0x60] sm:$0xf]
        %v10049 = vld [vmem:[#allocation29 + $0x64] sm:$0xf]
        %v10050 = vld [vmem:[#allocation29 + $0x68] sm:$0xf]
        %v10051 = vld [vmem:[#allocation29 + $0x6c] sm:$0xf]
        %v10052 = vld [vmem:[#allocation29 + $0x70] sm:$0xf]
        %v10053 = vld [vmem:[#allocation29 + $0x74] sm:$0xf]
        %v10054 = vld [vmem:[#allocation29 + $0x78] sm:$0xf]
        %v10055 = vld [vmem:[#allocation29 + $0x7c] sm:$0xf]
        %v10056 = vld [vmem:[#allocation29 + $0x80] sm:$0xf]
        %v10057 = vld [vmem:[#allocation29 + $0x84] sm:$0xf]
        %v10058 = vld [vmem:[#allocation29 + $0x88] sm:$0xf]
        %v10059 = vld [vmem:[#allocation29 + $0x8c] sm:$0xf]
        %v10060 = vld [vmem:[#allocation29 + $0x90] sm:$0xf]
        %v10061 = vld [vmem:[#allocation29 + $0x94] sm:$0xf]
        %v10062 = vld [vmem:[#allocation29 + $0x98] sm:$0xf]
        %v10063 = vld [vmem:[#allocation29 + $0x9c] sm:$0xf]
        %v10064 = vld [vmem:[#allocation29 + $0xa0] sm:$0xf]
        %v10065 = vld [vmem:[#allocation29 + $0xa4] sm:$0xf]
        %v10066 = vld [vmem:[#allocation29 + $0xa8] sm:$0xf]
        %v10067 = vld [vmem:[#allocation29 + $0xac] sm:$0xf]
        %v10068 = vld [vmem:[#allocation29 + $0xb0] sm:$0xf]
        %v10069 = vld [vmem:[#allocation29 + $0xb4] sm:$0xf]
        %v10070 = vld [vmem:[#allocation29 + $0xb8] sm:$0xf]
        %v10071 = vld [vmem:[#allocation29 + $0xbc] sm:$0xf]
        %v10072 = vld [vmem:[#allocation31] sm:$0x1]
        %v10073 = vlaneseq
        %v10074 = vshrl.u32 %v10073, 7
        %v10075 = vsub.s32 0, %v10074
        %v10076 = vrot.slane %v10072, %v10075
        %v10125 = vunpack.c.l.b16 %v10024
        %v10126 = vunpack.c.l.b16 %v10025
        %v10127 = vunpack.c.l.b16 %v10026
        %v10128 = vunpack.c.l.b16 %v10027
        %v10129 = vunpack.c.l.b16 %v10028
        %v10130 = vunpack.c.l.b16 %v10029
        %v10131 = vunpack.c.l.b16 %v10030
        %v10132 = vunpack.c.l.b16 %v10031
        %v10133 = vunpack.c.l.b16 %v10032
        %v10134 = vunpack.c.l.b16 %v10033
        %v10135 = vunpack.c.l.b16 %v10034
        %v10136 = vunpack.c.l.b16 %v10035
        %v10137 = vunpack.c.l.b16 %v10036
        %v10138 = vunpack.c.l.b16 %v10037
        %v10139 = vunpack.c.l.b16 %v10038
        %v10140 = vunpack.c.l.b16 %v10039
        %v10141 = vunpack.c.l.b16 %v10040
        %v10142 = vunpack.c.l.b16 %v10041
        %v10143 = vunpack.c.l.b16 %v10042
        %v10144 = vunpack.c.l.b16 %v10043
        %v10145 = vunpack.c.l.b16 %v10044
        %v10146 = vunpack.c.l.b16 %v10045
        %v10147 = vunpack.c.l.b16 %v10046
        %v10148 = vunpack.c.l.b16 %v10047
        %v10149 = vunpack.c.l.b16 %v10048
        %v10150 = vunpack.c.l.b16 %v10049
        %v10151 = vunpack.c.l.b16 %v10050
        %v10152 = vunpack.c.l.b16 %v10051
        %v10153 = vunpack.c.l.b16 %v10052
        %v10154 = vunpack.c.l.b16 %v10053
        %v10155 = vunpack.c.l.b16 %v10054
        %v10156 = vunpack.c.l.b16 %v10055
        %v10157 = vunpack.c.l.b16 %v10056
        %v10158 = vunpack.c.l.b16 %v10057
        %v10159 = vunpack.c.l.b16 %v10058
        %v10160 = vunpack.c.l.b16 %v10059
        %v10161 = vunpack.c.l.b16 %v10060
        %v10162 = vunpack.c.l.b16 %v10061
        %v10163 = vunpack.c.l.b16 %v10062
        %v10164 = vunpack.c.l.b16 %v10063
        %v10165 = vunpack.c.l.b16 %v10064
        %v10166 = vunpack.c.l.b16 %v10065
        %v10167 = vunpack.c.l.b16 %v10066
        %v10168 = vunpack.c.l.b16 %v10067
        %v10169 = vunpack.c.l.b16 %v10068
        %v10170 = vunpack.c.l.b16 %v10069
        %v10171 = vunpack.c.l.b16 %v10070
        %v10172 = vunpack.c.l.b16 %v10071
        %v10173 = vpack.c.b16 %v10126, %v10125
        %v10174 = vpack.c.b16 %v10128, %v10127
        %v10175 = vpack.c.b16 %v10130, %v10129
        %v10176 = vpack.c.b16 %v10132, %v10131
        %v10177 = vpack.c.b16 %v10134, %v10133
        %v10178 = vpack.c.b16 %v10136, %v10135
        %v10179 = vpack.c.b16 %v10138, %v10137
        %v10180 = vpack.c.b16 %v10140, %v10139
        %v10181 = vpack.c.b16 %v10142, %v10141
        %v10182 = vpack.c.b16 %v10144, %v10143
        %v10183 = vpack.c.b16 %v10146, %v10145
        %v10184 = vpack.c.b16 %v10148, %v10147
        %v10185 = vpack.c.b16 %v10150, %v10149
        %v10186 = vpack.c.b16 %v10152, %v10151
        %v10187 = vpack.c.b16 %v10154, %v10153
        %v10188 = vpack.c.b16 %v10156, %v10155
        %v10189 = vpack.c.b16 %v10158, %v10157
        %v10190 = vpack.c.b16 %v10160, %v10159
        %v10191 = vpack.c.b16 %v10162, %v10161
        %v10192 = vpack.c.b16 %v10164, %v10163
        %v10193 = vpack.c.b16 %v10166, %v10165
        %v10194 = vpack.c.b16 %v10168, %v10167
        %v10195 = vpack.c.b16 %v10170, %v10169
        %v10196 = vpack.c.b16 %v10172, %v10171
        %10221 = vmatprep.subr.bf16.mxu0 0
        %10222 = vmatpush1.bf16.msra.mxu0 %v10173
        %10223 = vmatprep.subr.bf16.mxu0 0
        %10224 = vmatpush1.bf16.msra.mxu0 %v10174
        %10225 = vmatprep.subr.bf16.mxu0 0
        %10226 = vmatpush1.bf16.msra.mxu0 %v10175
        %10227 = vmatprep.subr.bf16.mxu0 0
        %10228 = vmatpush1.bf16.msra.mxu0 %v10176
        %10229 = vmatprep.subr.bf16.mxu0 0
        %10230 = vmatpush1.bf16.msra.mxu0 %v10177
        %10231 = vmatprep.subr.bf16.mxu0 0
        %10232 = vmatpush1.bf16.msra.mxu0 %v10178
        %10233 = vmatprep.subr.bf16.mxu0 0
        %10234 = vmatpush1.bf16.msra.mxu0 %v10179
        %10235 = vmatprep.subr.bf16.mxu0 0
        %10236 = vmatpush1.bf16.msra.mxu0 %v10180
        %10237 = vmatprep.subr.bf16.mxu0 0
        %10238 = vmatpush1.bf16.msra.mxu0 %v10181
        %10239 = vmatprep.subr.bf16.mxu0 0
        %10240 = vmatpush1.bf16.msra.mxu0 %v10182
        %10241 = vmatprep.subr.bf16.mxu0 0
        %10242 = vmatpush1.bf16.msra.mxu0 %v10183
        %10243 = vmatprep.subr.bf16.mxu0 0
        %10244 = vmatpush1.bf16.msra.mxu0 %v10184
        %10245 = vmatprep.subr.bf16.mxu0 0
        %10246 = vmatpush1.bf16.msra.mxu0 %v10185
        %10247 = vmatprep.subr.bf16.mxu0 0
        %10248 = vmatpush1.bf16.msra.mxu0 %v10186
        %10249 = vmatprep.subr.bf16.mxu0 0
        %10250 = vmatpush1.bf16.msra.mxu0 %v10187
        %10251 = vmatprep.subr.bf16.mxu0 0
        %10252 = vmatpush1.bf16.msra.mxu0 %v10188
        %10253 = vmatprep.mubr.bf16.mxu0 %v10022
        %10254 = vmatmul.mubr.bf16.gmra.mrb[0].mxu0 %v10021
        %v10255 = vpop.f32.mrb[0].mxu0
        %v10256 = vadd.f32 %v10076, %v10255
        %v10257 = vpop.f32.mrb[0].mxu0
        %v10258 = vpop.f32.mrb[0].mxu0
        %v10259 = vpop.f32.mrb[0].mxu0
        %10260 = vdwg.mxu0
        %10261 = vmatprep.subr.bf16.mxu0 0
        %10262 = vmatpush1.bf16.msra.mxu0 %v10189
        %10263 = vmatprep.subr.bf16.mxu0 0
        %10264 = vmatpush1.bf16.msra.mxu0 %v10190
        %10265 = vmatprep.subr.bf16.mxu0 0
        %10266 = vmatpush1.bf16.msra.mxu0 %v10191
        %10267 = vmatprep.subr.bf16.mxu0 0
        %10268 = vmatpush1.bf16.msra.mxu0 %v10192
        %10269 = vmatprep.subr.bf16.mxu0 0
        %10270 = vmatpush1.bf16.msra.mxu0 %v10193
        %10271 = vmatprep.subr.bf16.mxu0 0
        %10272 = vmatpush1.bf16.msra.mxu0 %v10194
        %10273 = vmatprep.subr.bf16.mxu0 0
        %10274 = vmatpush1.bf16.msra.mxu0 %v10195
        %10275 = vmatprep.subr.bf16.mxu0 0
        %10276 = vmatpush1.bf16.msra.mxu0 %v10196
        %10277 = vmatprep.subr.bf16.mxu0 0
        %10278 = vmatpush1.bf16.msra.mxu0 0
        %10279 = vmatprep.subr.bf16.mxu0 0
        %10280 = vmatpush1.bf16.msra.mxu0 0
        %10281 = vmatprep.subr.bf16.mxu0 0
        %10282 = vmatpush1.bf16.msra.mxu0 0
        %10283 = vmatprep.subr.bf16.mxu0 0
        %10284 = vmatpush1.bf16.msra.mxu0 0
        %10285 = vmatprep.subr.bf16.mxu0 0
        %10286 = vmatpush1.bf16.msra.mxu0 0
        %10287 = vmatprep.subr.bf16.mxu0 0
        %10288 = vmatpush1.bf16.msra.mxu0 0
        %10289 = vmatprep.subr.bf16.mxu0 0
        %10290 = vmatpush1.bf16.msra.mxu0 0
        %10291 = vmatprep.subr.bf16.mxu0 0
        %10292 = vmatpush1.bf16.msra.mxu0 0
        %10293 = vmatprep.mubr.bf16.mxu0 0
        %10294 = vmatmul.mubr.bf16.gmra.mrb[0].mxu0 %v10023
        %v10295 = vpop.f32.mrb[0].mxu0
        %v10296 = vadd.f32 %v10256, %v10295
        %v10297 = vpop.f32.mrb[0].mxu0
        %v10298 = vpop.f32.mrb[0].mxu0
        %v10299 = vpop.f32.mrb[0].mxu0
        %10300 = vdwg.mxu0
        %v10301 = vmax.f32 %v10296, 0.0
        %v10302 = vld [vmem:[#allocation31 + $0x1] sm:$0x1]
        %v10303 = vlaneseq
        %v10304 = vshrl.u32 %v10303, 7
        %v10305 = vsub.s32 0, %v10304
        %v10306 = vrot.slane %v10302, %v10305
        %v10307 = vmul.f32 %v10301, %v10306
        %v10308 = vld [vmem:[#allocation31 + $0x2] sm:$0x1]
        %v10309 = vlaneseq
        %v10310 = vshrl.u32 %v10309, 7
        %v10311 = vsub.s32 0, %v10310
        %v10312 = vrot.slane %v10308, %v10311
        %v10313 = vadd.f32 %v10307, %v10312
        %v10315 = vrot.slane %v10313, 7
        %v10317 = vsel %vm1613, 0.0, %v10315
        %v10318 = vrot.slane %v10313, 1
        %v10320 = vsel %vm1613, %v10318, 0.0
        %v10321 = vpack.c.bf16 %v10317, %v10317
        %v10322 = vpack.c.bf16 %v10313, %v10313
        %v10323 = vpack.c.bf16 %v10320, %v10320
        %v10324 = vld [vmem:[#allocation32] sm:$0xf]
        %v10325 = vld [vmem:[#allocation32 + $0x4] sm:$0xf]
        %v10326 = vld [vmem:[#allocation32 + $0x8] sm:$0xf]
        %v10327 = vld [vmem:[#allocation32 + $0xc] sm:$0xf]
        %v10328 = vld [vmem:[#allocation32 + $0x10] sm:$0xf]
        %v10329 = vld [vmem:[#allocation32 + $0x14] sm:$0xf]
        %v10330 = vld [vmem:[#allocation32 + $0x18] sm:$0xf]
        %v10331 = vld [vmem:[#allocation32 + $0x1c] sm:$0xf]
        %v10332 = vld [vmem:[#allocation32 + $0x20] sm:$0xf]
        %v10333 = vld [vmem:[#allocation32 + $0x24] sm:$0xf]
        %v10334 = vld [vmem:[#allocation32 + $0x28] sm:$0xf]
        %v10335 = vld [vmem:[#allocation32 + $0x2c] sm:$0xf]
        %v10336 = vld [vmem:[#allocation32 + $0x30] sm:$0xf]
        %v10337 = vld [vmem:[#allocation32 + $0x34] sm:$0xf]
        %v10338 = vld [vmem:[#allocation32 + $0x38] sm:$0xf]
        %v10339 = vld [vmem:[#allocation32 + $0x3c] sm:$0xf]
        %v10340 = vld [vmem:[#allocation32 + $0x40] sm:$0xf]
        %v10341 = vld [vmem:[#allocation32 + $0x44] sm:$0xf]
        %v10342 = vld [vmem:[#allocation32 + $0x48] sm:$0xf]
        %v10343 = vld [vmem:[#allocation32 + $0x4c] sm:$0xf]
        %v10344 = vld [vmem:[#allocation32 + $0x50] sm:$0xf]
        %v10345 = vld [vmem:[#allocation32 + $0x54] sm:$0xf]
        %v10346 = vld [vmem:[#allocation32 + $0x58] sm:$0xf]
        %v10347 = vld [vmem:[#allocation32 + $0x5c] sm:$0xf]
        %v10348 = vld [vmem:[#allocation32 + $0x60] sm:$0xf]
        %v10349 = vld [vmem:[#allocation32 + $0x64] sm:$0xf]
        %v10350 = vld [vmem:[#allocation32 + $0x68] sm:$0xf]
        %v10351 = vld [vmem:[#allocation32 + $0x6c] sm:$0xf]
        %v10352 = vld [vmem:[#allocation32 + $0x70] sm:$0xf]
        %v10353 = vld [vmem:[#allocation32 + $0x74] sm:$0xf]
        %v10354 = vld [vmem:[#allocation32 + $0x78] sm:$0xf]
        %v10355 = vld [vmem:[#allocation32 + $0x7c] sm:$0xf]
        %v10356 = vld [vmem:[#allocation32 + $0x80] sm:$0xf]
        %v10357 = vld [vmem:[#allocation32 + $0x84] sm:$0xf]
        %v10358 = vld [vmem:[#allocation32 + $0x88] sm:$0xf]
        %v10359 = vld [vmem:[#allocation32 + $0x8c] sm:$0xf]
        %v10360 = vld [vmem:[#allocation32 + $0x90] sm:$0xf]
        %v10361 = vld [vmem:[#allocation32 + $0x94] sm:$0xf]
        %v10362 = vld [vmem:[#allocation32 + $0x98] sm:$0xf]
        %v10363 = vld [vmem:[#allocation32 + $0x9c] sm:$0xf]
        %v10364 = vld [vmem:[#allocation32 + $0xa0] sm:$0xf]
        %v10365 = vld [vmem:[#allocation32 + $0xa4] sm:$0xf]
        %v10366 = vld [vmem:[#allocation32 + $0xa8] sm:$0xf]
        %v10367 = vld [vmem:[#allocation32 + $0xac] sm:$0xf]
        %v10368 = vld [vmem:[#allocation32 + $0xb0] sm:$0xf]
        %v10369 = vld [vmem:[#allocation32 + $0xb4] sm:$0xf]
        %v10370 = vld [vmem:[#allocation32 + $0xb8] sm:$0xf]
        %v10371 = vld [vmem:[#allocation32 + $0xbc] sm:$0xf]
        %v10372 = vld [vmem:[#allocation34] sm:$0x1]
        %v10373 = vlaneseq
        %v10374 = vshrl.u32 %v10373, 7
        %v10375 = vsub.s32 0, %v10374
        %v10376 = vrot.slane %v10372, %v10375
        %v10425 = vunpack.c.l.b16 %v10324
        %v10426 = vunpack.c.l.b16 %v10325
        %v10427 = vunpack.c.l.b16 %v10326
        %v10428 = vunpack.c.l.b16 %v10327
        %v10429 = vunpack.c.l.b16 %v10328
        %v10430 = vunpack.c.l.b16 %v10329
        %v10431 = vunpack.c.l.b16 %v10330
        %v10432 = vunpack.c.l.b16 %v10331
        %v10433 = vunpack.c.l.b16 %v10332
        %v10434 = vunpack.c.l.b16 %v10333
        %v10435 = vunpack.c.l.b16 %v10334
        %v10436 = vunpack.c.l.b16 %v10335
        %v10437 = vunpack.c.l.b16 %v10336
        %v10438 = vunpack.c.l.b16 %v10337
        %v10439 = vunpack.c.l.b16 %v10338
        %v10440 = vunpack.c.l.b16 %v10339
        %v10441 = vunpack.c.l.b16 %v10340
        %v10442 = vunpack.c.l.b16 %v10341
        %v10443 = vunpack.c.l.b16 %v10342
        %v10444 = vunpack.c.l.b16 %v10343
        %v10445 = vunpack.c.l.b16 %v10344
        %v10446 = vunpack.c.l.b16 %v10345
        %v10447 = vunpack.c.l.b16 %v10346
        %v10448 = vunpack.c.l.b16 %v10347
        %v10449 = vunpack.c.l.b16 %v10348
        %v10450 = vunpack.c.l.b16 %v10349
        %v10451 = vunpack.c.l.b16 %v10350
        %v10452 = vunpack.c.l.b16 %v10351
        %v10453 = vunpack.c.l.b16 %v10352
        %v10454 = vunpack.c.l.b16 %v10353
        %v10455 = vunpack.c.l.b16 %v10354
        %v10456 = vunpack.c.l.b16 %v10355
        %v10457 = vunpack.c.l.b16 %v10356
        %v10458 = vunpack.c.l.b16 %v10357
        %v10459 = vunpack.c.l.b16 %v10358
        %v10460 = vunpack.c.l.b16 %v10359
        %v10461 = vunpack.c.l.b16 %v10360
        %v10462 = vunpack.c.l.b16 %v10361
        %v10463 = vunpack.c.l.b16 %v10362
        %v10464 = vunpack.c.l.b16 %v10363
        %v10465 = vunpack.c.l.b16 %v10364
        %v10466 = vunpack.c.l.b16 %v10365
        %v10467 = vunpack.c.l.b16 %v10366
        %v10468 = vunpack.c.l.b16 %v10367
        %v10469 = vunpack.c.l.b16 %v10368
        %v10470 = vunpack.c.l.b16 %v10369
        %v10471 = vunpack.c.l.b16 %v10370
        %v10472 = vunpack.c.l.b16 %v10371
        %v10473 = vpack.c.b16 %v10426, %v10425
        %v10474 = vpack.c.b16 %v10428, %v10427
        %v10475 = vpack.c.b16 %v10430, %v10429
        %v10476 = vpack.c.b16 %v10432, %v10431
        %v10477 = vpack.c.b16 %v10434, %v10433
        %v10478 = vpack.c.b16 %v10436, %v10435
        %v10479 = vpack.c.b16 %v10438, %v10437
        %v10480 = vpack.c.b16 %v10440, %v10439
        %v10481 = vpack.c.b16 %v10442, %v10441
        %v10482 = vpack.c.b16 %v10444, %v10443
        %v10483 = vpack.c.b16 %v10446, %v10445
        %v10484 = vpack.c.b16 %v10448, %v10447
        %v10485 = vpack.c.b16 %v10450, %v10449
        %v10486 = vpack.c.b16 %v10452, %v10451
        %v10487 = vpack.c.b16 %v10454, %v10453
        %v10488 = vpack.c.b16 %v10456, %v10455
        %v10489 = vpack.c.b16 %v10458, %v10457
        %v10490 = vpack.c.b16 %v10460, %v10459
        %v10491 = vpack.c.b16 %v10462, %v10461
        %v10492 = vpack.c.b16 %v10464, %v10463
        %v10493 = vpack.c.b16 %v10466, %v10465
        %v10494 = vpack.c.b16 %v10468, %v10467
        %v10495 = vpack.c.b16 %v10470, %v10469
        %v10496 = vpack.c.b16 %v10472, %v10471
        %10521 = vmatprep.subr.bf16.mxu0 0
        %10522 = vmatpush1.bf16.msra.mxu0 %v10473
        %10523 = vmatprep.subr.bf16.mxu0 0
        %10524 = vmatpush1.bf16.msra.mxu0 %v10474
        %10525 = vmatprep.subr.bf16.mxu0 0
        %10526 = vmatpush1.bf16.msra.mxu0 %v10475
        %10527 = vmatprep.subr.bf16.mxu0 0
        %10528 = vmatpush1.bf16.msra.mxu0 %v10476
        %10529 = vmatprep.subr.bf16.mxu0 0
        %10530 = vmatpush1.bf16.msra.mxu0 %v10477
        %10531 = vmatprep.subr.bf16.mxu0 0
        %10532 = vmatpush1.bf16.msra.mxu0 %v10478
        %10533 = vmatprep.subr.bf16.mxu0 0
        %10534 = vmatpush1.bf16.msra.mxu0 %v10479
        %10535 = vmatprep.subr.bf16.mxu0 0
        %10536 = vmatpush1.bf16.msra.mxu0 %v10480
        %10537 = vmatprep.subr.bf16.mxu0 0
        %10538 = vmatpush1.bf16.msra.mxu0 %v10481
        %10539 = vmatprep.subr.bf16.mxu0 0
        %10540 = vmatpush1.bf16.msra.mxu0 %v10482
        %10541 = vmatprep.subr.bf16.mxu0 0
        %10542 = vmatpush1.bf16.msra.mxu0 %v10483
        %10543 = vmatprep.subr.bf16.mxu0 0
        %10544 = vmatpush1.bf16.msra.mxu0 %v10484
        %10545 = vmatprep.subr.bf16.mxu0 0
        %10546 = vmatpush1.bf16.msra.mxu0 %v10485
        %10547 = vmatprep.subr.bf16.mxu0 0
        %10548 = vmatpush1.bf16.msra.mxu0 %v10486
        %10549 = vmatprep.subr.bf16.mxu0 0
        %10550 = vmatpush1.bf16.msra.mxu0 %v10487
        %10551 = vmatprep.subr.bf16.mxu0 0
        %10552 = vmatpush1.bf16.msra.mxu0 %v10488
        %10553 = vmatprep.mubr.bf16.mxu0 %v10322
        %10554 = vmatmul.mubr.bf16.gmra.mrb[0].mxu0 %v10321
        %v10555 = vpop.f32.mrb[0].mxu0
        %v10556 = vadd.f32 %v10376, %v10555
        %v10557 = vpop.f32.mrb[0].mxu0
        %v10558 = vpop.f32.mrb[0].mxu0
        %v10559 = vpop.f32.mrb[0].mxu0
        %10560 = vdwg.mxu0
        %10561 = vmatprep.subr.bf16.mxu0 0
        %10562 = vmatpush1.bf16.msra.mxu0 %v10489
        %10563 = vmatprep.subr.bf16.mxu0 0
        %10564 = vmatpush1.bf16.msra.mxu0 %v10490
        %10565 = vmatprep.subr.bf16.mxu0 0
        %10566 = vmatpush1.bf16.msra.mxu0 %v10491
        %10567 = vmatprep.subr.bf16.mxu0 0
        %10568 = vmatpush1.bf16.msra.mxu0 %v10492
        %10569 = vmatprep.subr.bf16.mxu0 0
        %10570 = vmatpush1.bf16.msra.mxu0 %v10493
        %10571 = vmatprep.subr.bf16.mxu0 0
        %10572 = vmatpush1.bf16.msra.mxu0 %v10494
        %10573 = vmatprep.subr.bf16.mxu0 0
        %10574 = vmatpush1.bf16.msra.mxu0 %v10495
        %10575 = vmatprep.subr.bf16.mxu0 0
        %10576 = vmatpush1.bf16.msra.mxu0 %v10496
        %10577 = vmatprep.subr.bf16.mxu0 0
        %10578 = vmatpush1.bf16.msra.mxu0 0
        %10579 = vmatprep.subr.bf16.mxu0 0
        %10580 = vmatpush1.bf16.msra.mxu0 0
        %10581 = vmatprep.subr.bf16.mxu0 0
        %10582 = vmatpush1.bf16.msra.mxu0 0
        %10583 = vmatprep.subr.bf16.mxu0 0
        %10584 = vmatpush1.bf16.msra.mxu0 0
        %10585 = vmatprep.subr.bf16.mxu0 0
        %10586 = vmatpush1.bf16.msra.mxu0 0
        %10587 = vmatprep.subr.bf16.mxu0 0
        %10588 = vmatpush1.bf16.msra.mxu0 0
        %10589 = vmatprep.subr.bf16.mxu0 0
        %10590 = vmatpush1.bf16.msra.mxu0 0
        %10591 = vmatprep.subr.bf16.mxu0 0
        %10592 = vmatpush1.bf16.msra.mxu0 0
        %10593 = vmatprep.mubr.bf16.mxu0 0
        %10594 = vmatmul.mubr.bf16.gmra.mrb[0].mxu0 %v10323
        %v10595 = vpop.f32.mrb[0].mxu0
        %v10596 = vadd.f32 %v10556, %v10595
        %v10597 = vpop.f32.mrb[0].mxu0
        %v10598 = vpop.f32.mrb[0].mxu0
        %v10599 = vpop.f32.mrb[0].mxu0
        %10600 = vdwg.mxu0
        %v10601 = vmax.f32 %v10596, 0.0
        %v10602 = vld [vmem:[#allocation34 + $0x1] sm:$0x1]
        %v10603 = vlaneseq
        %v10604 = vshrl.u32 %v10603, 7
        %v10605 = vsub.s32 0, %v10604
        %v10606 = vrot.slane %v10602, %v10605
        %v10607 = vmul.f32 %v10601, %v10606
        %v10608 = vld [vmem:[#allocation34 + $0x2] sm:$0x1]
        %v10609 = vlaneseq
        %v10610 = vshrl.u32 %v10609, 7
        %v10611 = vsub.s32 0, %v10610
        %v10612 = vrot.slane %v10608, %v10611
        %v10613 = vadd.f32 %v10607, %v10612
        %v10615 = vrot.slane %v10613, 1
        %v10617 = vsel %vm1613, %v10615, 0.0
        %v10618 = vmax.f32 %v10613, %v10617
        %v10619 = vpack.c.bf16 %v10618, %v10618
        %v10620 = vld [vmem:[%s71] sm:$0x1]
        %vm10621 = vcmask 15360
        %v10623 = vsel %vm10621, %v10620, 0
        %v10626 = vsel %vm1613, %v10619, 0
        %10628 = vmatprep.subr.bf16.mxu0 0
        %10629 = vmatpush1.bf16.msra.mxu0 %v10626
        %10630 = vmatprep.subr.bf16.mxu0 0
        %10631 = vmatpush1.bf16.msra.mxu0 0
        %10632 = vmatprep.subr.bf16.mxu0 0
        %10633 = vmatpush1.bf16.msra.mxu0 0
        %10634 = vmatprep.subr.bf16.mxu0 0
        %10635 = vmatpush1.bf16.msra.mxu0 0
        %10636 = vmatprep.subr.bf16.mxu0 0
        %10637 = vmatpush1.bf16.msra.mxu0 0
        %10638 = vmatprep.subr.bf16.mxu0 0
        %10639 = vmatpush1.bf16.msra.mxu0 0
        %10640 = vmatprep.subr.bf16.mxu0 0
        %10641 = vmatpush1.bf16.msra.mxu0 0
        %10642 = vmatprep.subr.bf16.mxu0 0
        %10643 = vmatpush1.bf16.msra.mxu0 0
        %10644 = vmatprep.subr.bf16.mxu0 0
        %10645 = vmatpush1.bf16.msra.mxu0 0
        %10646 = vmatprep.subr.bf16.mxu0 0
        %10647 = vmatpush1.bf16.msra.mxu0 0
        %10648 = vmatprep.subr.bf16.mxu0 0
        %10649 = vmatpush1.bf16.msra.mxu0 0
        %10650 = vmatprep.subr.bf16.mxu0 0
        %10651 = vmatpush1.bf16.msra.mxu0 0
        %10652 = vmatprep.subr.bf16.mxu0 0
        %10653 = vmatpush1.bf16.msra.mxu0 0
        %10654 = vmatprep.subr.bf16.mxu0 0
        %10655 = vmatpush1.bf16.msra.mxu0 0
        %10656 = vmatprep.subr.bf16.mxu0 0
        %10657 = vmatpush1.bf16.msra.mxu0 0
        %10658 = vmatprep.subr.bf16.mxu0 0
        %10659 = vmatpush1.bf16.msra.mxu0 0
        %10660 = vmatprep.mubr.bf16.mxu0 0
        %10661 = vmatmul.mubr.bf16.gmra.mrb[0].mxu0 %v10623
        %v10662 = vpop.f32.mrb[0].mxu0
        %v10663 = vadd.f32 0.0, %v10662
        %v10664 = vpop.f32.mrb[0].mxu0
        %v10665 = vpop.f32.mrb[0].mxu0
        %v10666 = vpop.f32.mrb[0].mxu0
        %10667 = vdwg.mxu0
        %v10668 = vpack.c.bf16 %v10663, %v10663
        %v10669 = vld [vmem:[#allocation40] sm:$0xf]
        %v10670 = vld [vmem:[#allocation40 + $0x4] sm:$0xf]
        %v10671 = vld [vmem:[#allocation40 + $0x8] sm:$0xf]
        %v10672 = vld [vmem:[#allocation40 + $0xc] sm:$0xf]
        %v10673 = vld [vmem:[#allocation40 + $0x10] sm:$0xf]
        %v10674 = vld [vmem:[#allocation40 + $0x14] sm:$0xf]
        %v10675 = vld [vmem:[#allocation40 + $0x18] sm:$0xf]
        %v10676 = vld [vmem:[#allocation40 + $0x1c] sm:$0xf]
        %v10677 = vld [vmem:[#allocation40 + $0x20] sm:$0xf]
        %v10678 = vld [vmem:[#allocation40 + $0x24] sm:$0xf]
        %v10679 = vld [vmem:[#allocation40 + $0x28] sm:$0xf]
        %v10680 = vld [vmem:[#allocation40 + $0x2c] sm:$0xf]
        %v10681 = vld [vmem:[#allocation40 + $0x30] sm:$0xf]
        %v10682 = vld [vmem:[#allocation40 + $0x34] sm:$0xf]
        %v10683 = vld [vmem:[#allocation40 + $0x38] sm:$0xf]
        %v10684 = vld [vmem:[#allocation40 + $0x3c] sm:$0xf]
        %v10701 = vunpack.c.l.b16 %v10669
        %v10702 = vunpack.c.l.b16 %v10670
        %v10703 = vunpack.c.l.b16 %v10671
        %v10704 = vunpack.c.l.b16 %v10672
        %v10705 = vunpack.c.l.b16 %v10673
        %v10706 = vunpack.c.l.b16 %v10674
        %v10707 = vunpack.c.l.b16 %v10675
        %v10708 = vunpack.c.l.b16 %v10676
        %v10709 = vunpack.c.l.b16 %v10677
        %v10710 = vunpack.c.l.b16 %v10678
        %v10711 = vunpack.c.l.b16 %v10679
        %v10712 = vunpack.c.l.b16 %v10680
        %v10713 = vunpack.c.l.b16 %v10681
        %v10714 = vunpack.c.l.b16 %v10682
        %v10715 = vunpack.c.l.b16 %v10683
        %v10716 = vunpack.c.l.b16 %v10684
        %v10717 = vpack.c.b16 %v10702, %v10701
        %v10718 = vpack.c.b16 %v10704, %v10703
        %v10719 = vpack.c.b16 %v10706, %v10705
        %v10720 = vpack.c.b16 %v10708, %v10707
        %v10721 = vpack.c.b16 %v10710, %v10709
        %v10722 = vpack.c.b16 %v10712, %v10711
        %v10723 = vpack.c.b16 %v10714, %v10713
        %v10724 = vpack.c.b16 %v10716, %v10715
        %10733 = vmatprep.subr.bf16.mxu0 0
        %10734 = vmatpush1.bf16.msra.mxu0 %v10717
        %10735 = vmatprep.subr.bf16.mxu0 0
        %10736 = vmatpush1.bf16.msra.mxu0 %v10718
        %10737 = vmatprep.subr.bf16.mxu0 0
        %10738 = vmatpush1.bf16.msra.mxu0 %v10719
        %10739 = vmatprep.subr.bf16.mxu0 0
        %10740 = vmatpush1.bf16.msra.mxu0 %v10720
        %10741 = vmatprep.subr.bf16.mxu0 0
        %10742 = vmatpush1.bf16.msra.mxu0 %v10721
        %10743 = vmatprep.subr.bf16.mxu0 0
        %10744 = vmatpush1.bf16.msra.mxu0 %v10722
        %10745 = vmatprep.subr.bf16.mxu0 0
        %10746 = vmatpush1.bf16.msra.mxu0 %v10723
        %10747 = vmatprep.subr.bf16.mxu0 0
        %10748 = vmatpush1.bf16.msra.mxu0 %v10724
        %10749 = vmatprep.subr.bf16.mxu0 0
        %10750 = vmatpush1.bf16.msra.mxu0 0
        %10751 = vmatprep.subr.bf16.mxu0 0
        %10752 = vmatpush1.bf16.msra.mxu0 0
        %10753 = vmatprep.subr.bf16.mxu0 0
        %10754 = vmatpush1.bf16.msra.mxu0 0
        %10755 = vmatprep.subr.bf16.mxu0 0
        %10756 = vmatpush1.bf16.msra.mxu0 0
        %10757 = vmatprep.subr.bf16.mxu0 0
        %10758 = vmatpush1.bf16.msra.mxu0 0
        %10759 = vmatprep.subr.bf16.mxu0 0
        %10760 = vmatpush1.bf16.msra.mxu0 0
        %10761 = vmatprep.subr.bf16.mxu0 0
        %10762 = vmatpush1.bf16.msra.mxu0 0
        %10763 = vmatprep.subr.bf16.mxu0 0
        %10764 = vmatpush1.bf16.msra.mxu0 0
        %10765 = vmatprep.mubr.bf16.mxu0 0
        %10766 = vmatmul.mubr.bf16.gmra.mrb[0].mxu0 %v10668
        %v10767 = vpop.f32.mrb[0].mxu0
        %v10768 = vadd.f32 0.0, %v10767
        %v10769 = vpop.f32.mrb[0].mxu0
        %v10770 = vpop.f32.mrb[0].mxu0
        %v10771 = vpop.f32.mrb[0].mxu0
        %10772 = vdwg.mxu0
        %s10773 = scalar_lea.vmem [#allocation40], 64
        %v10774 = vld [vmem:[%s10773] sm:$0xf]
        %v10775 = vld [vmem:[%s10773 + $0x4] sm:$0xf]
        %v10776 = vld [vmem:[%s10773 + $0x8] sm:$0xf]
        %v10777 = vld [vmem:[%s10773 + $0xc] sm:$0xf]
        %v10778 = vld [vmem:[%s10773 + $0x10] sm:$0xf]
        %v10779 = vld [vmem:[%s10773 + $0x14] sm:$0xf]
        %v10780 = vld [vmem:[%s10773 + $0x18] sm:$0xf]
        %v10781 = vld [vmem:[%s10773 + $0x1c] sm:$0xf]
        %v10782 = vld [vmem:[%s10773 + $0x20] sm:$0xf]
        %v10783 = vld [vmem:[%s10773 + $0x24] sm:$0xf]
        %v10784 = vld [vmem:[%s10773 + $0x28] sm:$0xf]
        %v10785 = vld [vmem:[%s10773 + $0x2c] sm:$0xf]
        %v10786 = vld [vmem:[%s10773 + $0x30] sm:$0xf]
        %v10787 = vld [vmem:[%s10773 + $0x34] sm:$0xf]
        %v10788 = vld [vmem:[%s10773 + $0x38] sm:$0xf]
        %v10789 = vld [vmem:[%s10773 + $0x3c] sm:$0xf]
        %v10806 = vunpack.c.l.b16 %v10774
        %v10807 = vunpack.c.l.b16 %v10775
        %v10808 = vunpack.c.l.b16 %v10776
        %v10809 = vunpack.c.l.b16 %v10777
        %v10810 = vunpack.c.l.b16 %v10778
        %v10811 = vunpack.c.l.b16 %v10779
        %v10812 = vunpack.c.l.b16 %v10780
        %v10813 = vunpack.c.l.b16 %v10781
        %v10814 = vunpack.c.l.b16 %v10782
        %v10815 = vunpack.c.l.b16 %v10783
        %v10816 = vunpack.c.l.b16 %v10784
        %v10817 = vunpack.c.l.b16 %v10785
        %v10818 = vunpack.c.l.b16 %v10786
        %v10819 = vunpack.c.l.b16 %v10787
        %v10820 = vunpack.c.l.b16 %v10788
        %v10821 = vunpack.c.l.b16 %v10789
        %v10822 = vpack.c.b16 %v10807, %v10806
        %v10823 = vpack.c.b16 %v10809, %v10808
        %v10824 = vpack.c.b16 %v10811, %v10810
        %v10825 = vpack.c.b16 %v10813, %v10812
        %v10826 = vpack.c.b16 %v10815, %v10814
        %v10827 = vpack.c.b16 %v10817, %v10816
        %v10828 = vpack.c.b16 %v10819, %v10818
        %v10829 = vpack.c.b16 %v10821, %v10820
        %10838 = vmatprep.subr.bf16.mxu0 0
        %10839 = vmatpush1.bf16.msra.mxu0 %v10822
        %10840 = vmatprep.subr.bf16.mxu0 0
        %10841 = vmatpush1.bf16.msra.mxu0 %v10823
        %10842 = vmatprep.subr.bf16.mxu0 0
        %10843 = vmatpush1.bf16.msra.mxu0 %v10824
        %10844 = vmatprep.subr.bf16.mxu0 0
        %10845 = vmatpush1.bf16.msra.mxu0 %v10825
        %10846 = vmatprep.subr.bf16.mxu0 0
        %10847 = vmatpush1.bf16.msra.mxu0 %v10826
        %10848 = vmatprep.subr.bf16.mxu0 0
        %10849 = vmatpush1.bf16.msra.mxu0 %v10827
        %10850 = vmatprep.subr.bf16.mxu0 0
        %10851 = vmatpush1.bf16.msra.mxu0 %v10828
        %10852 = vmatprep.subr.bf16.mxu0 0
        %10853 = vmatpush1.bf16.msra.mxu0 %v10829
        %10854 = vmatprep.subr.bf16.mxu0 0
        %10855 = vmatpush1.bf16.msra.mxu0 0
        %10856 = vmatprep.subr.bf16.mxu0 0
        %10857 = vmatpush1.bf16.msra.mxu0 0
        %10858 = vmatprep.subr.bf16.mxu0 0
        %10859 = vmatpush1.bf16.msra.mxu0 0
        %10860 = vmatprep.subr.bf16.mxu0 0
        %10861 = vmatpush1.bf16.msra.mxu0 0
        %10862 = vmatprep.subr.bf16.mxu0 0
        %10863 = vmatpush1.bf16.msra.mxu0 0
        %10864 = vmatprep.subr.bf16.mxu0 0
        %10865 = vmatpush1.bf16.msra.mxu0 0
        %10866 = vmatprep.subr.bf16.mxu0 0
        %10867 = vmatpush1.bf16.msra.mxu0 0
        %10868 = vmatprep.subr.bf16.mxu0 0
        %10869 = vmatpush1.bf16.msra.mxu0 0
        %10870 = vmatprep.mubr.bf16.mxu0 0
        %10871 = vmatmul.mubr.bf16.gmra.mrb[0].mxu0 %v10668
        %v10872 = vpop.f32.mrb[0].mxu0
        %v10873 = vadd.f32 0.0, %v10872
        %v10874 = vpop.f32.mrb[0].mxu0
        %v10875 = vpop.f32.mrb[0].mxu0
        %v10876 = vpop.f32.mrb[0].mxu0
        %10877 = vdwg.mxu0
        %v10878 = vmax.f32 %v10768, %v10873
        %v10879 = vpack.c.bf16 %v10878, %v10878
        %v10880 = vld [vmem:[%s75] sm:$0xf]
        %v10881 = vld [vmem:[%s75 + $0x4] sm:$0xf]
        %v10882 = vld [vmem:[%s75 + $0x8] sm:$0xf]
        %v10883 = vld [vmem:[%s75 + $0xc] sm:$0xf]
        %v10884 = vld [vmem:[%s75 + $0x10] sm:$0xf]
        %v10885 = vld [vmem:[%s75 + $0x14] sm:$0xf]
        %v10886 = vld [vmem:[%s75 + $0x18] sm:$0xf]
        %v10887 = vld [vmem:[%s75 + $0x1c] sm:$0xf]
        %v10888 = vld [vmem:[#allocation41] sm:$0x1]
        %v10897 = vunpack.c.l.b16 %v10880
        %v10898 = vunpack.c.l.b16 %v10881
        %v10899 = vunpack.c.l.b16 %v10882
        %v10900 = vunpack.c.l.b16 %v10883
        %v10901 = vunpack.c.l.b16 %v10884
        %v10902 = vunpack.c.l.b16 %v10885
        %v10903 = vunpack.c.l.b16 %v10886
        %v10904 = vunpack.c.l.b16 %v10887
        %v10905 = vpack.c.b16 %v10898, %v10897
        %v10906 = vpack.c.b16 %v10900, %v10899
        %v10907 = vpack.c.b16 %v10902, %v10901
        %v10908 = vpack.c.b16 %v10904, %v10903
        %vm10913 = vcmask 523264
        %v10915 = vsel %vm10913, %v10879, 0
        %10917 = vmatprep.subr.bf16.mxu0 0
        %10918 = vmatpush1.bf16.msra.mxu0 %v10905
        %10919 = vmatprep.subr.bf16.mxu0 0
        %10920 = vmatpush1.bf16.msra.mxu0 %v10906
        %10921 = vmatprep.subr.bf16.mxu0 0
        %10922 = vmatpush1.bf16.msra.mxu0 %v10907
        %10923 = vmatprep.subr.bf16.mxu0 0
        %10924 = vmatpush1.bf16.msra.mxu0 %v10908
        %10925 = vmatprep.subr.bf16.mxu0 0
        %10926 = vmatpush1.bf16.msra.mxu0 0
        %10927 = vmatprep.subr.bf16.mxu0 0
        %10928 = vmatpush1.bf16.msra.mxu0 0
        %10929 = vmatprep.subr.bf16.mxu0 0
        %10930 = vmatpush1.bf16.msra.mxu0 0
        %10931 = vmatprep.subr.bf16.mxu0 0
        %10932 = vmatpush1.bf16.msra.mxu0 0
        %10933 = vmatprep.subr.bf16.mxu0 0
        %10934 = vmatpush1.bf16.msra.mxu0 0
        %10935 = vmatprep.subr.bf16.mxu0 0
        %10936 = vmatpush1.bf16.msra.mxu0 0
        %10937 = vmatprep.subr.bf16.mxu0 0
        %10938 = vmatpush1.bf16.msra.mxu0 0
        %10939 = vmatprep.subr.bf16.mxu0 0
        %10940 = vmatpush1.bf16.msra.mxu0 0
        %10941 = vmatprep.subr.bf16.mxu0 0
        %10942 = vmatpush1.bf16.msra.mxu0 0
        %10943 = vmatprep.subr.bf16.mxu0 0
        %10944 = vmatpush1.bf16.msra.mxu0 0
        %10945 = vmatprep.subr.bf16.mxu0 0
        %10946 = vmatpush1.bf16.msra.mxu0 0
        %10947 = vmatprep.subr.bf16.mxu0 0
        %10948 = vmatpush1.bf16.msra.mxu0 0
        %10949 = vmatprep.mubr.bf16.mxu0 0
        %10950 = vmatmul.mubr.bf16.gmra.mrb[0].mxu0 %v10915
        %v10951 = vpop.f32.mrb[0].mxu0
        %v10952 = vadd.f32 %v10888, %v10951
        %v10953 = vpop.f32.mrb[0].mxu0
        %v10954 = vpop.f32.mrb[0].mxu0
        %v10955 = vpop.f32.mrb[0].mxu0
        %10956 = vdwg.mxu0
        %v10957 = vmax.f32 %v10952, 0.0
        %v10958 = vpack.c.bf16 %v10957, %v10957
        %v10959 = vld [vmem:[%s79] sm:$0xf]
        %v10960 = vld [vmem:[%s79 + $0x4] sm:$0xf]
        %v10961 = vld [vmem:[%s79 + $0x8] sm:$0xf]
        %v10962 = vld [vmem:[%s79 + $0xc] sm:$0xf]
        %v10963 = vld [vmem:[#allocation43] sm:$0x1]
        %v10968 = vunpack.c.l.b16 %v10959
        %v10969 = vunpack.c.l.b16 %v10960
        %v10970 = vunpack.c.l.b16 %v10961
        %v10971 = vunpack.c.l.b16 %v10962
        %v10972 = vpack.c.b16 %v10969, %v10968
        %v10973 = vpack.c.b16 %v10971, %v10970
        %v10977 = vsel %vm2975, %v10958, 0
        %10979 = vmatprep.subr.bf16.mxu0 0
        %10980 = vmatpush1.bf16.msra.mxu0 %v10972
        %10981 = vmatprep.subr.bf16.mxu0 0
        %10982 = vmatpush1.bf16.msra.mxu0 %v10973
        %10983 = vmatprep.subr.bf16.mxu0 0
        %10984 = vmatpush1.bf16.msra.mxu0 0
        %10985 = vmatprep.subr.bf16.mxu0 0
        %10986 = vmatpush1.bf16.msra.mxu0 0
        %10987 = vmatprep.subr.bf16.mxu0 0
        %10988 = vmatpush1.bf16.msra.mxu0 0
        %10989 = vmatprep.subr.bf16.mxu0 0
        %10990 = vmatpush1.bf16.msra.mxu0 0
        %10991 = vmatprep.subr.bf16.mxu0 0
        %10992 = vmatpush1.bf16.msra.mxu0 0
        %10993 = vmatprep.subr.bf16.mxu0 0
        %10994 = vmatpush1.bf16.msra.mxu0 0
        %10995 = vmatprep.subr.bf16.mxu0 0
        %10996 = vmatpush1.bf16.msra.mxu0 0
        %10997 = vmatprep.subr.bf16.mxu0 0
        %10998 = vmatpush1.bf16.msra.mxu0 0
        %10999 = vmatprep.subr.bf16.mxu0 0
        %11000 = vmatpush1.bf16.msra.mxu0 0
        %11001 = vmatprep.subr.bf16.mxu0 0
        %11002 = vmatpush1.bf16.msra.mxu0 0
        %11003 = vmatprep.subr.bf16.mxu0 0
        %11004 = vmatpush1.bf16.msra.mxu0 0
        %11005 = vmatprep.subr.bf16.mxu0 0
        %11006 = vmatpush1.bf16.msra.mxu0 0
        %11007 = vmatprep.subr.bf16.mxu0 0
        %11008 = vmatpush1.bf16.msra.mxu0 0
        %11009 = vmatprep.subr.bf16.mxu0 0
        %11010 = vmatpush1.bf16.msra.mxu0 0
        %11011 = vmatprep.mubr.bf16.mxu0 0
        %11012 = vmatmul.mubr.bf16.gmra.mrb[0].mxu0 %v10977
        %v11013 = vpop.f32.mrb[0].mxu0
        %v11014 = vadd.f32 %v10963, %v11013
        %v11015 = vpop.f32.mrb[0].mxu0
        %v11016 = vpop.f32.mrb[0].mxu0
        %v11017 = vpop.f32.mrb[0].mxu0
        %11018 = vdwg.mxu0
        %vm11019 = vcmask 73728
        %v11020 = vsel %vm11019, %v11014, -inf
        %11021 = vmax.xlane.f32.xlu0 %v11020
        %v11022 = vpop.xlane.xlu0 %11021
        %v11023 = vsub.f32 %v11014, %v11022
        %v11024 = vmul.f32 %v11023, 1.442695
        %v11025 = vpow.pop %v11024
        %v11026 = vsel %vm11019, %v11025, 0.0
        %11027 = vadd.xlane.f32.xlu0 %v11026
        %v11028 = vpop.xlane.xlu0 %11027
        %v11029 = vlog2.pop %v11028
        %v11030 = vmul.f32 %v11029, 0.6931472
        %v11031 = vsub.f32 %v11023, %v11030
        %11032 = vst.msk [vmem:[%s1598] sm:$0x1] %vm11019, %v11031
        %s11033 = sand.u32 %s985, 1
        %s11034 = scalar_lea.sflag [#allocation4], %s11033
        %s11035 = sand.u32 %s985, 1
        %s11036 = scalar_lea.vmem [#allocation44], %s11035
        // Predicated region
        $region293: #{vgg16_forward.1} parent=183 // pred_check
          %p11037 = pneg %p995
        $region294: #{vgg16_forward.1} parent=183 // pred_check_branch
          %11039 = sbr.rel (%p11037) target = $region296
        $region295: #{vgg16_forward.1} parent=183 // pred_region
          %s11041 = ssub.s32 16, 16
          %11042 = vsyncadd %s11034, %s11041
          %s11043 = smul.addr %s111, 16
          %s11044 = scalar_lea.hbm %s83, %s11043
          %s11046 = sshll.u32 %s11036, 4
          %s11047 = int_to_ptr.vmem [resolvable:$true] %s11046
          %11049 = dma.vmem_to_hbm [thread:$0]  %s11047, 16, %s11044, %s11034
        $region296: #{vgg16_forward.1} parent=183 // pred_fallthru
          _
      $region184: #{vgg16_forward.1} parent=5 // pred_fallthru
        _
      %p11050 = scmp.le.s32.totalorder 2, %s106
      // Predicated region
      $region297: #{vgg16_forward.1} parent=5 // pred_check
        %p11051 = pneg %p11050
      $region298: #{vgg16_forward.1} parent=5 // pred_check_branch
        %11053 = sbr.rel (%p11051) target = $region300
      $region299: #{vgg16_forward.1} parent=5 // pred_region
        %s11054 = ssub.s32 %s106, 2
        // Predicated region
        $region301: #{vgg16_forward.1} parent=299 // pred_check
          %p11055 = pneg %p1001
        $region302: #{vgg16_forward.1} parent=299 // pred_check_branch
          %11057 = sbr.rel (%p11055) target = $region304
        $region303: #{vgg16_forward.1} parent=299 // pred_region
          %s11058 = sand.u32 %s986, 1
          %s11059 = scalar_lea.sflag [#allocation4], %s11058
          %s11060 = sand.u32 %s986, 1
          %s11061 = scalar_lea.vmem [#allocation44], %s11060
          %11062 = dma.done %s11059, 16
        $region304: #{vgg16_forward.1} parent=299 // pred_fallthru
          _
      $region300: #{vgg16_forward.1} parent=5 // pred_fallthru
        _
    $region6: #{vgg16_forward.1} parent=1 // loop_footer
      %s110 = sadd.s32 1, %s106
    $region7: #{vgg16_forward.1} parent=1 // loop_footer_branch
      %105 = sbr.rel target = $region3
    $region8: #{vgg16_forward.1} parent=1 // loop_exit
      _
    %11063 = vsyncpa [#allocation3], 1
    %s11064 = scalar_lea.sflag [#allocation3], 1
    %11065 = vsyncpa %s11064, 1
    %11066 = vsyncpa [#allocation6], 1
    %11067 = vsyncpa [#allocation9], 1
    %11068 = vsyncpa [#allocation12], 1
    %11069 = vsyncpa [#allocation15], 1
    %11070 = vsyncpa [#allocation18], 1
    %11071 = vsyncpa [#allocation21], 1
    %11072 = vsyncpa [#allocation24], 1
    %11073 = vsyncpa [#allocation27], 1
    %11074 = vsyncpa [#allocation30], 1
    %11075 = vsyncpa [#allocation33], 1
    %11076 = vsyncpa [#allocation36], 1
    %11077 = vsyncpa [#allocation39], 1
    %11078 = vsyncpa [#allocation42], 1
    %11079 = vsyncpa [#allocation4], 1
    %s11080 = scalar_lea.sflag [#allocation4], 1
    %11081 = vsyncpa %s11080, 1

</llo_original>
